<compile_context>
chip_gen: v7x
topology: tpu7x:2x2x1
jax: 0.10.0
libtpu: 0.0.40
codegen_flags: <defaults>
</compile_context>

<pallas_src>
import functools

import jax
import jax.numpy as jnp
from jax import lax
from jax.experimental import pallas as pl
from jax.experimental.pallas import tpu as pltpu

EPS = 1e-5


# -----------------------------------------------------------------------------
# In-kernel building blocks
# -----------------------------------------------------------------------------
def _layer_norm(x, gamma, beta):
    # x: (S, D) f32; gamma/beta: (1, D) f32 — LN statistics stay in f32.
    mean = jnp.mean(x, axis=-1, keepdims=True)
    var = jnp.mean((x - mean) ** 2, axis=-1, keepdims=True)
    return (x - mean) * lax.rsqrt(var + EPS) * gamma + beta


def _mha(q_src, kv_src, mask,
         wq_ref, bq_ref, wk_ref, bk_ref, wv_ref, bv_ref, wo_ref, bo_ref,
         *, num_heads):
    """Multi-head attention.

    q_src (S, D) / kv_src (S_kv, D) are f32 values.  Weight refs hold bf16 matrices
    (1/sqrt(dh) is pre-folded into W_q / b_q on the host); bias refs are f32 (1, D).
    `mask` is a bool array of shape (S or 1, S_kv); size-1 query dim broadcasts.
    Returns f32 (S, D).
    """
    S, D = q_src.shape
    dh = D // num_heads
    bf = jnp.bfloat16

    qb = q_src.astype(bf)
    kb = kv_src.astype(bf)
    # Projections: bf16 operands, f32 accumulation on the MXU.
    q = jnp.dot(qb, wq_ref[...], preferred_element_type=jnp.float32) + bq_ref[...]
    k = jnp.dot(kb, wk_ref[...], preferred_element_type=jnp.float32) + bk_ref[...]
    v = jnp.dot(kb, wv_ref[...], preferred_element_type=jnp.float32) + bv_ref[...]

    # Static per-head loop: only ONE (S, S_kv) f32 score buffer is live at a time and
    # there is no head split/merge copy — the output projection is accumulated per head.
    out = jnp.zeros((S, D), jnp.float32)
    for h in range(num_heads):
        lo = h * dh                                     # lane-aligned (dh % 128 == 0)
        qh = q[:, lo:lo + dh].astype(bf)
        kh = k[:, lo:lo + dh].astype(bf)
        vh = v[:, lo:lo + dh].astype(bf)
        # scores = qh @ kh^T without materializing a transpose.
        s = lax.dot_general(qh, kh, (((1,), (1,)), ((), ())),
                            preferred_element_type=jnp.float32)        # (S, S_kv)
        s = jnp.where(mask, s, -1e9)
        s = s - jnp.max(s, axis=-1, keepdims=True)                     # f32 softmax
        p = jnp.exp(s)
        p = p * pl.reciprocal(jnp.sum(p, axis=-1, keepdims=True), approx=True)
        ctx = jnp.dot(p.astype(bf), vh, preferred_element_type=jnp.float32)   # (S, dh)
        out = out + jnp.dot(ctx.astype(bf), wo_ref[lo:lo + dh, :],
                            preferred_element_type=jnp.float32)
    return out + bo_ref[...]


def _ffn(xn, w1_ref, b1_ref, w2_ref, b2_ref, *, n_chunks):
    """Position-wise FFN, chunked over d_ff so the (S, d_ff) intermediate stays small."""
    S, D = xn.shape
    d_ff = w1_ref.shape[1]
    chunk = d_ff // n_chunks
    xb = xn.astype(jnp.bfloat16)
    acc = jnp.zeros((S, D), jnp.float32)
    for c in range(n_chunks):                 # static unroll; chunk offsets lane-aligned
        lo = c * chunk
        h = jnp.dot(xb, w1_ref[:, lo:lo + chunk],
                    preferred_element_type=jnp.float32) + b1_ref[:, lo:lo + chunk]
        h = jnp.maximum(h, 0.0)               # ReLU
        acc = acc + jnp.dot(h.astype(jnp.bfloat16), w2_ref[lo:lo + chunk, :],
                            preferred_element_type=jnp.float32)
    return acc + b2_ref[...]


# -----------------------------------------------------------------------------
# Single fused kernel: one grid step == one batch element; the residual stream
# lives in VMEM/vregs across all three sublayers.
# -----------------------------------------------------------------------------
def decoder_layer_kernel(
        x_ref, enc_ref, tmask_ref, smask_ref,
        ln1_g_ref, ln1_b_ref,
        sq_w_ref, sq_b_ref, sk_w_ref, sk_b_ref, sv_w_ref, sv_b_ref, so_w_ref, so_b_ref,
        ln2_g_ref, ln2_b_ref,
        cq_w_ref, cq_b_ref, ck_w_ref, ck_b_ref, cv_w_ref, cv_b_ref, co_w_ref, co_b_ref,
        ln3_g_ref, ln3_b_ref,
        w1_ref, b1_ref, w2_ref, b2_ref,
        out_ref, *, num_heads, ffn_chunks):
    x = x_ref[0].astype(jnp.float32)          # (S, D) residual stream
    enc = enc_ref[0].astype(jnp.float32)      # (S_src, D) raw encoder output (K/V source)
    tmask = tmask_ref[0] != 0                 # (S or 1, S)      bool, from int8
    smask = smask_ref[0] != 0                 # (S or 1, S_src)  bool, from int8

    # -- sublayer 1: masked self-attention (pre-norm residual) --
    xn = _layer_norm(x, ln1_g_ref[...], ln1_b_ref[...])
    x = x + _mha(xn, xn, tmask,
                 sq_w_ref, sq_b_ref, sk_w_ref, sk_b_ref, sv_w_ref, sv_b_ref,
                 so_w_ref, so_b_ref, num_heads=num_heads)

    # -- sublayer 2: cross-attention over the (un-normalized) encoder output --
    xn = _layer_norm(x, ln2_g_ref[...], ln2_b_ref[...])
    x = x + _mha(xn, enc, smask,
                 cq_w_ref, cq_b_ref, ck_w_ref, ck_b_ref, cv_w_ref, cv_b_ref,
                 co_w_ref, co_b_ref, num_heads=num_heads)

    # -- sublayer 3: position-wise feed-forward --
    xn = _layer_norm(x, ln3_g_ref[...], ln3_b_ref[...])
    x = x + _ffn(xn, w1_ref, b1_ref, w2_ref, b2_ref, n_chunks=ffn_chunks)

    out_ref[0] = x.astype(out_ref.dtype)


# -----------------------------------------------------------------------------
# Host-side helpers
# -----------------------------------------------------------------------------
def prepare_decoder_params(params, *, num_heads):
    """One-time host-side prep: bf16 weight matrices, f32 biases, 1/sqrt(dh) folded into
    W_q / b_q.  Call once at parameter-load time, not on every forward."""
    bf = jnp.bfloat16

    def prep_attn(p):
        wq, bq, wk, bk, wv, bv, wo, bo = p
        dh = wq.shape[1] // num_heads
        scale = 1.0 / (dh ** 0.5)
        return [(wq * scale).astype(bf), bq * scale,
                wk.astype(bf), bk, wv.astype(bf), bv, wo.astype(bf), bo]

    w1, b1, w2, b2 = params["ffn"]
    return [
        params["ln1_g"], params["ln1_b"], *prep_attn(params["self_attn"]),
        params["ln2_g"], params["ln2_b"], *prep_attn(params["enc_attn"]),
        params["ln3_g"], params["ln3_b"],
        w1.astype(bf), b1, w2.astype(bf), b2,
    ]


def _pick_vmem_limit_bytes():
    """Per-generation scoped-VMEM budget (leave headroom below physical capacity)."""
    try:
        cap = int(pltpu.get_tpu_info().vmem_capacity_bytes)
    except Exception:
        return None                    # unknown chip: keep compiler default (toy shapes fit)
    if cap <= (64 << 20):              # v7x-class: 64 MiB physical VMEM
        return 52 << 20
    return 100 << 20                   # v5e / v6e / v5p: 128 MiB physical VMEM


def _const_index_map(ndim):
    return lambda b, _n=ndim: (0,) * _n


def _spec(shape, index_map, single_buffer):
    # Constant-index blocks (weights, batch-invariant masks) need no double-buffering.
    if single_buffer:
        try:
            return pl.BlockSpec(shape, index_map, pipeline_mode=pl.Buffered(1))
        except Exception:              # older JAX without pipeline_mode
            pass
    return pl.BlockSpec(shape, index_map)


def decoder_layer_forward(inputs, encoder_output, source_mask, target_mask,
                          flat_params, *, num_heads, ffn_chunk=1024,
                          vmem_limit_bytes=None):
    """inputs (B,S,D) f32, encoder_output (B,S_src,D) f32.
    Masks may use broadcast dims: target_mask (B or 1, S or 1, S), source_mask
    (B or 1, S or 1, S_src); nonzero == attend. flat_params from prepare_decoder_params."""
    B, S, D = inputs.shape
    S_src = encoder_output.shape[1]
    assert D % num_heads == 0

    # Masks as int8 (4x fewer HBM/DMA bytes than f32); broadcast dims stay size 1.
    target_mask = (target_mask != 0).astype(jnp.int8)
    source_mask = (source_mask != 0).astype(jnp.int8)

    d_ff = flat_params[-4].shape[1]     # w1: (D, d_ff)
    ffn_chunks = (d_ff // ffn_chunk
                  if (ffn_chunk and d_ff % ffn_chunk == 0 and d_ff > ffn_chunk) else 1)

    kernel = functools.partial(decoder_layer_kernel,
                               num_heads=num_heads, ffn_chunks=ffn_chunks)

    if vmem_limit_bytes is None:
        vmem_limit_bytes = _pick_vmem_limit_bytes()

    def mask_spec(m, single_buffer):
        bs = (1,) + m.shape[1:]
        if m.shape[0] == 1:             # batch-invariant: constant index_map -> DMA'd once
            return _spec(bs, lambda b: (0, 0, 0), single_buffer)
        return pl.BlockSpec(bs, lambda b: (b, 0, 0))

    def build(single_buffer_consts):
        in_specs = [
            pl.BlockSpec((1, S, D), lambda b: (b, 0, 0)),       # residual stream x
            pl.BlockSpec((1, S_src, D), lambda b: (b, 0, 0)),   # encoder output (K/V)
            mask_spec(target_mask, single_buffer_consts),       # self-attn mask (int8)
            mask_spec(source_mask, single_buffer_consts),       # cross-attn mask (int8)
        ] + [_spec(p.shape, _const_index_map(p.ndim), single_buffer_consts)
             for p in flat_params]
        return pl.pallas_call(
            kernel,
            out_shape=jax.ShapeDtypeStruct((B, S, D), inputs.dtype),
            grid=(B,),                                          # self-attn needs the full sequence per step
            in_specs=in_specs,
            out_specs=pl.BlockSpec((1, S, D), lambda b: (b, 0, 0)),
            input_output_aliases={0: 0},                        # out = x + f(x): reuse x's HBM buffer
            compiler_params=pltpu.CompilerParams(
                dimension_semantics=("parallel",),              # batch steps shard across TCs (B >= 2 here)
                vmem_limit_bytes=vmem_limit_bytes,
            ),
        )(inputs, encoder_output, target_mask, source_mask, *flat_params)

    try:
        return build(True)
    except Exception:
        # Retry with default double-buffering if single-buffered specs fail to lower.
        return build(False)


# -----------------------------------------------------------------------------
# Pure-JAX f32 reference (ground-truth semantics) for the correctness check
# -----------------------------------------------------------------------------
def _ref_attn(qn, kvn, mask, wq, bq, wk, bk, wv, bv, wo, bo, num_heads):
    q = qn @ wq + bq
    k = kvn @ wk + bk
    v = kvn @ wv + bv
    D = q.shape[-1]
    dh = D // num_heads
    outs = []
    for h in range(num_heads):
        qh, kh, vh = (t[:, h * dh:(h + 1) * dh] for t in (q, k, v))
        s = (qh @ kh.T) / (dh ** 0.5)
        s = jnp.where(mask, s, -1e9)
        p = jax.nn.softmax(s, axis=-1)
        outs.append(p @ vh)
    return jnp.concatenate(outs, axis=-1) @ wo + bo


def reference_forward(inputs, enc, src_mask, tgt_mask, params, *, num_heads):
    B, S, D = inputs.shape
    S_src = enc.shape[1]
    tm = jnp.broadcast_to(tgt_mask != 0, (B, S, S))
    sm = jnp.broadcast_to(src_mask != 0, (B, S, S_src))

    def ln(x, g, b):
        m = jnp.mean(x, -1, keepdims=True)
        v = jnp.mean((x - m) ** 2, -1, keepdims=True)
        return (x - m) * lax.rsqrt(v + EPS) * g + b

    def per_batch(x_b, enc_b, sm_b, tm_b):
        xn = ln(x_b, params["ln1_g"], params["ln1_b"])
        y = x_b + _ref_attn(xn, xn, tm_b, *params["self_attn"], num_heads)
        yn = ln(y, params["ln2_g"], params["ln2_b"])
        y = y + _ref_attn(yn, enc_b, sm_b, *params["enc_attn"], num_heads)
        yn = ln(y, params["ln3_g"], params["ln3_b"])
        w1, b1, w2, b2 = params["ffn"]
        return y + (jnp.maximum(yn @ w1 + b1, 0.0) @ w2 + b2)

    return jax.vmap(per_batch)(inputs, enc, sm, tm)


# -----------------------------------------------------------------------------
# Deterministic parameter init + example run
# -----------------------------------------------------------------------------
def init_linear(key, d_in, d_out):
    kw, kb = jax.random.split(key)
    w = jax.random.normal(kw, (d_in, d_out), jnp.float32) / jnp.sqrt(float(d_in))
    b = 0.01 * jax.random.normal(kb, (1, d_out), jnp.float32)
    return w, b


def init_params(key, d_model, d_ff):
    keys = jax.random.split(key, 10)
    wq, bq = init_linear(keys[0], d_model, d_model)
    wk, bk = init_linear(keys[1], d_model, d_model)
    wv, bv = init_linear(keys[2], d_model, d_model)
    wo, bo = init_linear(keys[3], d_model, d_model)
    cq, cbq = init_linear(keys[4], d_model, d_model)
    ck, cbk = init_linear(keys[5], d_model, d_model)
    cv, cbv = init_linear(keys[6], d_model, d_model)
    co, cbo = init_linear(keys[7], d_model, d_model)
    w1, b1 = init_linear(keys[8], d_model, d_ff)
    w2, b2 = init_linear(keys[9], d_ff, d_model)
    ones = jnp.ones((1, d_model), jnp.float32)
    zeros = jnp.zeros((1, d_model), jnp.float32)
    return dict(
        self_attn=[wq, bq, wk, bk, wv, bv, wo, bo],
        enc_attn=[cq, cbq, ck, cbk, cv, cbv, co, cbo],
        ffn=[w1, b1, w2, b2],
        ln1_g=ones, ln1_b=zeros,
        ln2_g=ones, ln2_b=zeros,
        ln3_g=ones, ln3_b=zeros,
    )


if __name__ == "__main__":
    # Small but lane-dense shapes: D and dh are multiples of 128 so per-head slices and
    # the d_ff chunking are 128-lane aligned.  dropout_rate is ignored (eval mode).
    B, S_TGT, S_SRC, D, H, D_FF = 2, 8, 16, 256, 2, 512

    key = jax.random.PRNGKey(0)
    k_x, k_enc, k_p = jax.random.split(key, 3)
    inputs = jax.random.normal(k_x, (B, S_TGT, D), jnp.float32)
    encoder_output = jax.random.normal(k_enc, (B, S_SRC, D), jnp.float32)

    # Causal target mask shared across batch -> (1, S, S): DMA'd once (constant index_map).
    target_mask = jnp.tril(jnp.ones((S_TGT, S_TGT), jnp.float32))[None]
    # Per-key padding source mask -> (B, 1, S_src); batch 1 masks the last 4 source keys.
    source_mask = jnp.ones((B, 1, S_SRC), jnp.float32).at[1, :, -4:].set(0.0)

    params = init_params(k_p, D, D_FF)
    flat_params = prepare_decoder_params(params, num_heads=H)   # one-time host-side prep

    # f32 ground-truth reference (computed first; kernel aliases the x buffer).
    ref = reference_forward(inputs, encoder_output, source_mask, target_mask,
                            params, num_heads=H)

    out = decoder_layer_forward(inputs, encoder_output, source_mask, target_mask,
                                flat_params, num_heads=H, ffn_chunk=256)  # 2 d_ff chunks
    out = jax.block_until_ready(out)

    assert out.shape == (B, S_TGT, D)
    diff = (out - ref).astype(jnp.float32)
    max_err = float(jnp.max(jnp.abs(diff)))
    rel_err = float(jnp.sqrt(jnp.sum(diff * diff)) /
                    jnp.sqrt(jnp.sum(ref.astype(jnp.float32) ** 2)))
    # bf16 matmuls vs f32 reference: allow small mixed-precision noise only.
    assert max_err < 0.15 and rel_err < 3e-2, f"mismatch: max={max_err} rel={rel_err}"

    print("KERNEL_OK")
</pallas_src>

<mosaic_0001>
module attributes {stable_mosaic.version = 11 : i64} {
  func.func @decoder_layer_kernel(%arg0: i32, %arg1: memref<1x8x256xf32, #tpu.memory_space<vmem>>, %arg2: memref<1x16x256xf32, #tpu.memory_space<vmem>>, %arg3: memref<1x8x8xi8, #tpu.memory_space<vmem>>, %arg4: memref<1x1x16xi8, #tpu.memory_space<vmem>>, %arg5: memref<1x256xf32, #tpu.memory_space<vmem>>, %arg6: memref<1x256xf32, #tpu.memory_space<vmem>>, %arg7: memref<256x256xbf16, #tpu.memory_space<vmem>>, %arg8: memref<1x256xf32, #tpu.memory_space<vmem>>, %arg9: memref<256x256xbf16, #tpu.memory_space<vmem>>, %arg10: memref<1x256xf32, #tpu.memory_space<vmem>>, %arg11: memref<256x256xbf16, #tpu.memory_space<vmem>>, %arg12: memref<1x256xf32, #tpu.memory_space<vmem>>, %arg13: memref<256x256xbf16, #tpu.memory_space<vmem>>, %arg14: memref<1x256xf32, #tpu.memory_space<vmem>>, %arg15: memref<1x256xf32, #tpu.memory_space<vmem>>, %arg16: memref<1x256xf32, #tpu.memory_space<vmem>>, %arg17: memref<256x256xbf16, #tpu.memory_space<vmem>>, %arg18: memref<1x256xf32, #tpu.memory_space<vmem>>, %arg19: memref<256x256xbf16, #tpu.memory_space<vmem>>, %arg20: memref<1x256xf32, #tpu.memory_space<vmem>>, %arg21: memref<256x256xbf16, #tpu.memory_space<vmem>>, %arg22: memref<1x256xf32, #tpu.memory_space<vmem>>, %arg23: memref<256x256xbf16, #tpu.memory_space<vmem>>, %arg24: memref<1x256xf32, #tpu.memory_space<vmem>>, %arg25: memref<1x256xf32, #tpu.memory_space<vmem>>, %arg26: memref<1x256xf32, #tpu.memory_space<vmem>>, %arg27: memref<256x512xbf16, #tpu.memory_space<vmem>>, %arg28: memref<1x512xf32, #tpu.memory_space<vmem>>, %arg29: memref<512x256xbf16, #tpu.memory_space<vmem>>, %arg30: memref<1x256xf32, #tpu.memory_space<vmem>>, %arg31: memref<1x8x256xf32, #tpu.memory_space<vmem>>) attributes {dimension_semantics = [#tpu.dimension_semantics<parallel>], iteration_bounds = array<i64: 2>, scalar_prefetch = 0 : i64, scratch_operands = 0 : i64, tpu.core_type = #tpu.core_type<tc>, window_params = [{transform_indices = @transform_0, window_bounds = array<i64: 1, 8, 256>}, {transform_indices = @transform_1, window_bounds = array<i64: 1, 16, 256>}, {pipeline_mode = #tpu.pipeline_mode<synchronous>, transform_indices = @transform_2, window_bounds = array<i64: 1, 8, 8>}, {transform_indices = @transform_3, window_bounds = array<i64: 1, 1, 16>}, {pipeline_mode = #tpu.pipeline_mode<synchronous>, transform_indices = @transform_4, window_bounds = array<i64: 1, 256>}, {pipeline_mode = #tpu.pipeline_mode<synchronous>, transform_indices = @transform_5, window_bounds = array<i64: 1, 256>}, {pipeline_mode = #tpu.pipeline_mode<synchronous>, transform_indices = @transform_6, window_bounds = array<i64: 256, 256>}, {pipeline_mode = #tpu.pipeline_mode<synchronous>, transform_indices = @transform_7, window_bounds = array<i64: 1, 256>}, {pipeline_mode = #tpu.pipeline_mode<synchronous>, transform_indices = @transform_8, window_bounds = array<i64: 256, 256>}, {pipeline_mode = #tpu.pipeline_mode<synchronous>, transform_indices = @transform_9, window_bounds = array<i64: 1, 256>}, {pipeline_mode = #tpu.pipeline_mode<synchronous>, transform_indices = @transform_10, window_bounds = array<i64: 256, 256>}, {pipeline_mode = #tpu.pipeline_mode<synchronous>, transform_indices = @transform_11, window_bounds = array<i64: 1, 256>}, {pipeline_mode = #tpu.pipeline_mode<synchronous>, transform_indices = @transform_12, window_bounds = array<i64: 256, 256>}, {pipeline_mode = #tpu.pipeline_mode<synchronous>, transform_indices = @transform_13, window_bounds = array<i64: 1, 256>}, {pipeline_mode = #tpu.pipeline_mode<synchronous>, transform_indices = @transform_14, window_bounds = array<i64: 1, 256>}, {pipeline_mode = #tpu.pipeline_mode<synchronous>, transform_indices = @transform_15, window_bounds = array<i64: 1, 256>}, {pipeline_mode = #tpu.pipeline_mode<synchronous>, transform_indices = @transform_16, window_bounds = array<i64: 256, 256>}, {pipeline_mode = #tpu.pipeline_mode<synchronous>, transform_indices = @transform_17, window_bounds = array<i64: 1, 256>}, {pipeline_mode = #tpu.pipeline_mode<synchronous>, transform_indices = @transform_18, window_bounds = array<i64: 256, 256>}, {pipeline_mode = #tpu.pipeline_mode<synchronous>, transform_indices = @transform_19, window_bounds = array<i64: 1, 256>}, {pipeline_mode = #tpu.pipeline_mode<synchronous>, transform_indices = @transform_20, window_bounds = array<i64: 256, 256>}, {pipeline_mode = #tpu.pipeline_mode<synchronous>, transform_indices = @transform_21, window_bounds = array<i64: 1, 256>}, {pipeline_mode = #tpu.pipeline_mode<synchronous>, transform_indices = @transform_22, window_bounds = array<i64: 256, 256>}, {pipeline_mode = #tpu.pipeline_mode<synchronous>, transform_indices = @transform_23, window_bounds = array<i64: 1, 256>}, {pipeline_mode = #tpu.pipeline_mode<synchronous>, transform_indices = @transform_24, window_bounds = array<i64: 1, 256>}, {pipeline_mode = #tpu.pipeline_mode<synchronous>, transform_indices = @transform_25, window_bounds = array<i64: 1, 256>}, {pipeline_mode = #tpu.pipeline_mode<synchronous>, transform_indices = @transform_26, window_bounds = array<i64: 256, 512>}, {pipeline_mode = #tpu.pipeline_mode<synchronous>, transform_indices = @transform_27, window_bounds = array<i64: 1, 512>}, {pipeline_mode = #tpu.pipeline_mode<synchronous>, transform_indices = @transform_28, window_bounds = array<i64: 512, 256>}, {pipeline_mode = #tpu.pipeline_mode<synchronous>, transform_indices = @transform_29, window_bounds = array<i64: 1, 256>}, {transform_indices = @transform_30, window_bounds = array<i64: 1, 8, 256>}]} {
    %c0 = arith.constant 0 : index
    %c0_0 = arith.constant 0 : index
    %c0_1 = arith.constant 0 : index
    %0 = vector.load %arg1[%c0, %c0_0, %c0_1] : memref<1x8x256xf32, #tpu.memory_space<vmem>>, vector<1x8x256xf32>
    %1 = vector.shape_cast %0 : vector<1x8x256xf32> to vector<8x256xf32>
    %c0_2 = arith.constant 0 : index
    %c0_3 = arith.constant 0 : index
    %c0_4 = arith.constant 0 : index
    %2 = vector.load %arg2[%c0_2, %c0_3, %c0_4] : memref<1x16x256xf32, #tpu.memory_space<vmem>>, vector<1x16x256xf32>
    %3 = vector.shape_cast %2 : vector<1x16x256xf32> to vector<16x256xf32>
    %c0_5 = arith.constant 0 : index
    %c0_6 = arith.constant 0 : index
    %c0_7 = arith.constant 0 : index
    %4 = vector.load %arg3[%c0_5, %c0_6, %c0_7] : memref<1x8x8xi8, #tpu.memory_space<vmem>>, vector<1x8x8xi8>
    %5 = vector.shape_cast %4 : vector<1x8x8xi8> to vector<8x8xi8>
    %c0_i8 = arith.constant 0 : i8
    %6 = vector.broadcast %c0_i8 : i8 to vector<8x8xi8>
    %7 = arith.cmpi ne, %5, %6 : vector<8x8xi8>
    %c0_8 = arith.constant 0 : index
    %c0_9 = arith.constant 0 : index
    %c0_10 = arith.constant 0 : index
    %8 = vector.load %arg4[%c0_8, %c0_9, %c0_10] : memref<1x1x16xi8, #tpu.memory_space<vmem>>, vector<1x1x16xi8>
    %9 = vector.shape_cast %8 : vector<1x1x16xi8> to vector<1x16xi8>
    %c0_i8_11 = arith.constant 0 : i8
    %10 = vector.broadcast %c0_i8_11 : i8 to vector<1x16xi8>
    %11 = arith.cmpi ne, %9, %10 : vector<1x16xi8>
    %c0_12 = arith.constant 0 : index
    %c0_13 = arith.constant 0 : index
    %12 = vector.load %arg5[%c0_12, %c0_13] : memref<1x256xf32, #tpu.memory_space<vmem>>, vector<1x256xf32>
    %c0_14 = arith.constant 0 : index
    %c0_15 = arith.constant 0 : index
    %13 = vector.load %arg6[%c0_14, %c0_15] : memref<1x256xf32, #tpu.memory_space<vmem>>, vector<1x256xf32>
    %cst = arith.constant dense<0.000000e+00> : vector<8xf32>
    %14 = vector.multi_reduction <add>, %1, %cst [1] : vector<8x256xf32> to vector<8xf32>
    %15 = vector.shape_cast %14 : vector<8xf32> to vector<8x1xf32>
    %cst_16 = arith.constant 2.560000e+02 : f32
    %16 = vector.broadcast %cst_16 : f32 to vector<8x1xf32>
    %17 = arith.divf %15, %16 : vector<8x1xf32>
    %18 = vector.broadcast %17 : vector<8x1xf32> to vector<8x256xf32>
    %19 = arith.subf %1, %18 : vector<8x256xf32>
    %20 = arith.mulf %19, %19 : vector<8x256xf32>
    %cst_17 = arith.constant dense<0.000000e+00> : vector<8xf32>
    %21 = vector.multi_reduction <add>, %20, %cst_17 [1] : vector<8x256xf32> to vector<8xf32>
    %22 = vector.shape_cast %21 : vector<8xf32> to vector<8x1xf32>
    %cst_18 = arith.constant 2.560000e+02 : f32
    %23 = vector.broadcast %cst_18 : f32 to vector<8x1xf32>
    %24 = arith.divf %22, %23 : vector<8x1xf32>
    %25 = vector.broadcast %17 : vector<8x1xf32> to vector<8x256xf32>
    %26 = arith.subf %1, %25 : vector<8x256xf32>
    %cst_19 = arith.constant 9.99999974E-6 : f32
    %27 = vector.broadcast %cst_19 : f32 to vector<8x1xf32>
    %28 = arith.addf %24, %27 : vector<8x1xf32>
    %29 = math.rsqrt %28 : vector<8x1xf32>
    %30 = vector.broadcast %29 : vector<8x1xf32> to vector<8x256xf32>
    %31 = arith.mulf %26, %30 : vector<8x256xf32>
    %32 = vector.broadcast %12 : vector<1x256xf32> to vector<8x256xf32>
    %33 = arith.mulf %31, %32 : vector<8x256xf32>
    %34 = vector.broadcast %13 : vector<1x256xf32> to vector<8x256xf32>
    %35 = arith.addf %33, %34 : vector<8x256xf32>
    %36 = arith.truncf %35 : vector<8x256xf32> to vector<8x256xbf16>
    %37 = arith.truncf %35 : vector<8x256xf32> to vector<8x256xbf16>
    %c0_20 = arith.constant 0 : index
    %c0_21 = arith.constant 0 : index
    %38 = vector.load %arg7[%c0_20, %c0_21] : memref<256x256xbf16, #tpu.memory_space<vmem>>, vector<256x256xbf16>
    %cst_22 = arith.constant dense<0.000000e+00> : vector<8x256xf32>
    %39 = tpu.matmul %36, %38, %cst_22 {dimension_numbers = #tpu.dot_dimension_numbers<[1], [0], [0], [1], [0, 0, 1, 1], [], []>} : vector<8x256xbf16>, vector<256x256xbf16>, vector<8x256xf32> -> vector<8x256xf32>
    %c0_23 = arith.constant 0 : index
    %c0_24 = arith.constant 0 : index
    %40 = vector.load %arg8[%c0_23, %c0_24] : memref<1x256xf32, #tpu.memory_space<vmem>>, vector<1x256xf32>
    %41 = vector.broadcast %40 : vector<1x256xf32> to vector<8x256xf32>
    %42 = arith.addf %39, %41 : vector<8x256xf32>
    %c0_25 = arith.constant 0 : index
    %c0_26 = arith.constant 0 : index
    %43 = vector.load %arg9[%c0_25, %c0_26] : memref<256x256xbf16, #tpu.memory_space<vmem>>, vector<256x256xbf16>
    %cst_27 = arith.constant dense<0.000000e+00> : vector<8x256xf32>
    %44 = tpu.matmul %37, %43, %cst_27 {dimension_numbers = #tpu.dot_dimension_numbers<[1], [0], [0], [1], [0, 0, 1, 1], [], []>} : vector<8x256xbf16>, vector<256x256xbf16>, vector<8x256xf32> -> vector<8x256xf32>
    %c0_28 = arith.constant 0 : index
    %c0_29 = arith.constant 0 : index
    %45 = vector.load %arg10[%c0_28, %c0_29] : memref<1x256xf32, #tpu.memory_space<vmem>>, vector<1x256xf32>
    %46 = vector.broadcast %45 : vector<1x256xf32> to vector<8x256xf32>
    %47 = arith.addf %44, %46 : vector<8x256xf32>
    %c0_30 = arith.constant 0 : index
    %c0_31 = arith.constant 0 : index
    %48 = vector.load %arg11[%c0_30, %c0_31] : memref<256x256xbf16, #tpu.memory_space<vmem>>, vector<256x256xbf16>
    %cst_32 = arith.constant dense<0.000000e+00> : vector<8x256xf32>
    %49 = tpu.matmul %37, %48, %cst_32 {dimension_numbers = #tpu.dot_dimension_numbers<[1], [0], [0], [1], [0, 0, 1, 1], [], []>} : vector<8x256xbf16>, vector<256x256xbf16>, vector<8x256xf32> -> vector<8x256xf32>
    %c0_33 = arith.constant 0 : index
    %c0_34 = arith.constant 0 : index
    %50 = vector.load %arg12[%c0_33, %c0_34] : memref<1x256xf32, #tpu.memory_space<vmem>>, vector<1x256xf32>
    %51 = vector.broadcast %50 : vector<1x256xf32> to vector<8x256xf32>
    %52 = arith.addf %49, %51 : vector<8x256xf32>
    %cst_35 = arith.constant 0.000000e+00 : f32
    %53 = vector.broadcast %cst_35 : f32 to vector<8x256xf32>
    %54 = vector.extract_strided_slice %42 {offsets = [0, 0], sizes = [8, 128], strides = [1, 1]} : vector<8x256xf32> to vector<8x128xf32>
    %55 = arith.truncf %54 : vector<8x128xf32> to vector<8x128xbf16>
    %56 = vector.extract_strided_slice %47 {offsets = [0, 0], sizes = [8, 128], strides = [1, 1]} : vector<8x256xf32> to vector<8x128xf32>
    %57 = arith.truncf %56 : vector<8x128xf32> to vector<8x128xbf16>
    %58 = vector.extract_strided_slice %52 {offsets = [0, 0], sizes = [8, 128], strides = [1, 1]} : vector<8x256xf32> to vector<8x128xf32>
    %59 = arith.truncf %58 : vector<8x128xf32> to vector<8x128xbf16>
    %cst_36 = arith.constant dense<0.000000e+00> : vector<8x8xf32>
    %60 = tpu.matmul %55, %57, %cst_36 {dimension_numbers = #tpu.dot_dimension_numbers<[1], [1], [0], [0], [0, 0, 1, 0], [], []>} : vector<8x128xbf16>, vector<8x128xbf16>, vector<8x8xf32> -> vector<8x8xf32>
    %cst_37 = arith.constant -1.000000e+09 : f32
    %61 = vector.broadcast %cst_37 : f32 to vector<8x8xf32>
    %62 = arith.select %7, %60, %61 : vector<8x8xi1>, vector<8x8xf32>
    %cst_38 = arith.constant dense<0xFF800000> : vector<8xf32>
    %63 = vector.multi_reduction <maximumf>, %62, %cst_38 [1] : vector<8x8xf32> to vector<8xf32>
    %64 = vector.shape_cast %63 : vector<8xf32> to vector<8x1xf32>
    %65 = vector.broadcast %64 : vector<8x1xf32> to vector<8x8xf32>
    %66 = arith.subf %62, %65 : vector<8x8xf32>
    %67 = math.exp %66 : vector<8x8xf32>
    %cst_39 = arith.constant dense<0.000000e+00> : vector<8xf32>
    %68 = vector.multi_reduction <add>, %67, %cst_39 [1] : vector<8x8xf32> to vector<8xf32>
    %69 = vector.shape_cast %68 : vector<8xf32> to vector<8x1xf32>
    %70 = tpu.reciprocal %69 {approx = true} : vector<8x1xf32> -> vector<8x1xf32>
    %71 = vector.broadcast %70 : vector<8x1xf32> to vector<8x8xf32>
    %72 = arith.mulf %67, %71 : vector<8x8xf32>
    %73 = arith.truncf %72 : vector<8x8xf32> to vector<8x8xbf16>
    %cst_40 = arith.constant dense<0.000000e+00> : vector<8x128xf32>
    %74 = tpu.matmul %73, %59, %cst_40 {dimension_numbers = #tpu.dot_dimension_numbers<[1], [0], [0], [1], [0, 0, 1, 1], [], []>} : vector<8x8xbf16>, vector<8x128xbf16>, vector<8x128xf32> -> vector<8x128xf32>
    %75 = arith.truncf %74 : vector<8x128xf32> to vector<8x128xbf16>
    %c0_41 = arith.constant 0 : index
    %c0_42 = arith.constant 0 : index
    %76 = vector.load %arg13[%c0_41, %c0_42] : memref<256x256xbf16, #tpu.memory_space<vmem>>, vector<128x256xbf16>
    %cst_43 = arith.constant dense<0.000000e+00> : vector<8x256xf32>
    %77 = tpu.matmul %75, %76, %cst_43 {dimension_numbers = #tpu.dot_dimension_numbers<[1], [0], [0], [1], [0, 0, 1, 1], [], []>} : vector<8x128xbf16>, vector<128x256xbf16>, vector<8x256xf32> -> vector<8x256xf32>
    %78 = arith.addf %53, %77 : vector<8x256xf32>
    %79 = vector.extract_strided_slice %42 {offsets = [0, 128], sizes = [8, 128], strides = [1, 1]} : vector<8x256xf32> to vector<8x128xf32>
    %80 = arith.truncf %79 : vector<8x128xf32> to vector<8x128xbf16>
    %81 = vector.extract_strided_slice %47 {offsets = [0, 128], sizes = [8, 128], strides = [1, 1]} : vector<8x256xf32> to vector<8x128xf32>
    %82 = arith.truncf %81 : vector<8x128xf32> to vector<8x128xbf16>
    %83 = vector.extract_strided_slice %52 {offsets = [0, 128], sizes = [8, 128], strides = [1, 1]} : vector<8x256xf32> to vector<8x128xf32>
    %84 = arith.truncf %83 : vector<8x128xf32> to vector<8x128xbf16>
    %cst_44 = arith.constant dense<0.000000e+00> : vector<8x8xf32>
    %85 = tpu.matmul %80, %82, %cst_44 {dimension_numbers = #tpu.dot_dimension_numbers<[1], [1], [0], [0], [0, 0, 1, 0], [], []>} : vector<8x128xbf16>, vector<8x128xbf16>, vector<8x8xf32> -> vector<8x8xf32>
    %cst_45 = arith.constant -1.000000e+09 : f32
    %86 = vector.broadcast %cst_45 : f32 to vector<8x8xf32>
    %87 = arith.select %7, %85, %86 : vector<8x8xi1>, vector<8x8xf32>
    %cst_46 = arith.constant dense<0xFF800000> : vector<8xf32>
    %88 = vector.multi_reduction <maximumf>, %87, %cst_46 [1] : vector<8x8xf32> to vector<8xf32>
    %89 = vector.shape_cast %88 : vector<8xf32> to vector<8x1xf32>
    %90 = vector.broadcast %89 : vector<8x1xf32> to vector<8x8xf32>
    %91 = arith.subf %87, %90 : vector<8x8xf32>
    %92 = math.exp %91 : vector<8x8xf32>
    %cst_47 = arith.constant dense<0.000000e+00> : vector<8xf32>
    %93 = vector.multi_reduction <add>, %92, %cst_47 [1] : vector<8x8xf32> to vector<8xf32>
    %94 = vector.shape_cast %93 : vector<8xf32> to vector<8x1xf32>
    %95 = tpu.reciprocal %94 {approx = true} : vector<8x1xf32> -> vector<8x1xf32>
    %96 = vector.broadcast %95 : vector<8x1xf32> to vector<8x8xf32>
    %97 = arith.mulf %92, %96 : vector<8x8xf32>
    %98 = arith.truncf %97 : vector<8x8xf32> to vector<8x8xbf16>
    %cst_48 = arith.constant dense<0.000000e+00> : vector<8x128xf32>
    %99 = tpu.matmul %98, %84, %cst_48 {dimension_numbers = #tpu.dot_dimension_numbers<[1], [0], [0], [1], [0, 0, 1, 1], [], []>} : vector<8x8xbf16>, vector<8x128xbf16>, vector<8x128xf32> -> vector<8x128xf32>
    %100 = arith.truncf %99 : vector<8x128xf32> to vector<8x128xbf16>
    %c128 = arith.constant 128 : index
    %c0_49 = arith.constant 0 : index
    %101 = vector.load %arg13[%c128, %c0_49] : memref<256x256xbf16, #tpu.memory_space<vmem>>, vector<128x256xbf16>
    %cst_50 = arith.constant dense<0.000000e+00> : vector<8x256xf32>
    %102 = tpu.matmul %100, %101, %cst_50 {dimension_numbers = #tpu.dot_dimension_numbers<[1], [0], [0], [1], [0, 0, 1, 1], [], []>} : vector<8x128xbf16>, vector<128x256xbf16>, vector<8x256xf32> -> vector<8x256xf32>
    %103 = arith.addf %78, %102 : vector<8x256xf32>
    %c0_51 = arith.constant 0 : index
    %c0_52 = arith.constant 0 : index
    %104 = vector.load %arg14[%c0_51, %c0_52] : memref<1x256xf32, #tpu.memory_space<vmem>>, vector<1x256xf32>
    %105 = vector.broadcast %104 : vector<1x256xf32> to vector<8x256xf32>
    %106 = arith.addf %103, %105 : vector<8x256xf32>
    %107 = arith.addf %1, %106 : vector<8x256xf32>
    %c0_53 = arith.constant 0 : index
    %c0_54 = arith.constant 0 : index
    %108 = vector.load %arg15[%c0_53, %c0_54] : memref<1x256xf32, #tpu.memory_space<vmem>>, vector<1x256xf32>
    %c0_55 = arith.constant 0 : index
    %c0_56 = arith.constant 0 : index
    %109 = vector.load %arg16[%c0_55, %c0_56] : memref<1x256xf32, #tpu.memory_space<vmem>>, vector<1x256xf32>
    %cst_57 = arith.constant dense<0.000000e+00> : vector<8xf32>
    %110 = vector.multi_reduction <add>, %107, %cst_57 [1] : vector<8x256xf32> to vector<8xf32>
    %111 = vector.shape_cast %110 : vector<8xf32> to vector<8x1xf32>
    %cst_58 = arith.constant 2.560000e+02 : f32
    %112 = vector.broadcast %cst_58 : f32 to vector<8x1xf32>
    %113 = arith.divf %111, %112 : vector<8x1xf32>
    %114 = vector.broadcast %113 : vector<8x1xf32> to vector<8x256xf32>
    %115 = arith.subf %107, %114 : vector<8x256xf32>
    %116 = arith.mulf %115, %115 : vector<8x256xf32>
    %cst_59 = arith.constant dense<0.000000e+00> : vector<8xf32>
    %117 = vector.multi_reduction <add>, %116, %cst_59 [1] : vector<8x256xf32> to vector<8xf32>
    %118 = vector.shape_cast %117 : vector<8xf32> to vector<8x1xf32>
    %cst_60 = arith.constant 2.560000e+02 : f32
    %119 = vector.broadcast %cst_60 : f32 to vector<8x1xf32>
    %120 = arith.divf %118, %119 : vector<8x1xf32>
    %121 = vector.broadcast %113 : vector<8x1xf32> to vector<8x256xf32>
    %122 = arith.subf %107, %121 : vector<8x256xf32>
    %cst_61 = arith.constant 9.99999974E-6 : f32
    %123 = vector.broadcast %cst_61 : f32 to vector<8x1xf32>
    %124 = arith.addf %120, %123 : vector<8x1xf32>
    %125 = math.rsqrt %124 : vector<8x1xf32>
    %126 = vector.broadcast %125 : vector<8x1xf32> to vector<8x256xf32>
    %127 = arith.mulf %122, %126 : vector<8x256xf32>
    %128 = vector.broadcast %108 : vector<1x256xf32> to vector<8x256xf32>
    %129 = arith.mulf %127, %128 : vector<8x256xf32>
    %130 = vector.broadcast %109 : vector<1x256xf32> to vector<8x256xf32>
    %131 = arith.addf %129, %130 : vector<8x256xf32>
    %132 = arith.truncf %131 : vector<8x256xf32> to vector<8x256xbf16>
    %133 = arith.truncf %3 : vector<16x256xf32> to vector<16x256xbf16>
    %c0_62 = arith.constant 0 : index
    %c0_63 = arith.constant 0 : index
    %134 = vector.load %arg17[%c0_62, %c0_63] : memref<256x256xbf16, #tpu.memory_space<vmem>>, vector<256x256xbf16>
    %cst_64 = arith.constant dense<0.000000e+00> : vector<8x256xf32>
    %135 = tpu.matmul %132, %134, %cst_64 {dimension_numbers = #tpu.dot_dimension_numbers<[1], [0], [0], [1], [0, 0, 1, 1], [], []>} : vector<8x256xbf16>, vector<256x256xbf16>, vector<8x256xf32> -> vector<8x256xf32>
    %c0_65 = arith.constant 0 : index
    %c0_66 = arith.constant 0 : index
    %136 = vector.load %arg18[%c0_65, %c0_66] : memref<1x256xf32, #tpu.memory_space<vmem>>, vector<1x256xf32>
    %137 = vector.broadcast %136 : vector<1x256xf32> to vector<8x256xf32>
    %138 = arith.addf %135, %137 : vector<8x256xf32>
    %c0_67 = arith.constant 0 : index
    %c0_68 = arith.constant 0 : index
    %139 = vector.load %arg19[%c0_67, %c0_68] : memref<256x256xbf16, #tpu.memory_space<vmem>>, vector<256x256xbf16>
    %cst_69 = arith.constant dense<0.000000e+00> : vector<16x256xf32>
    %140 = tpu.matmul %133, %139, %cst_69 {dimension_numbers = #tpu.dot_dimension_numbers<[1], [0], [0], [1], [0, 0, 1, 1], [], []>} : vector<16x256xbf16>, vector<256x256xbf16>, vector<16x256xf32> -> vector<16x256xf32>
    %c0_70 = arith.constant 0 : index
    %c0_71 = arith.constant 0 : index
    %141 = vector.load %arg20[%c0_70, %c0_71] : memref<1x256xf32, #tpu.memory_space<vmem>>, vector<1x256xf32>
    %142 = vector.broadcast %141 : vector<1x256xf32> to vector<16x256xf32>
    %143 = arith.addf %140, %142 : vector<16x256xf32>
    %c0_72 = arith.constant 0 : index
    %c0_73 = arith.constant 0 : index
    %144 = vector.load %arg21[%c0_72, %c0_73] : memref<256x256xbf16, #tpu.memory_space<vmem>>, vector<256x256xbf16>
    %cst_74 = arith.constant dense<0.000000e+00> : vector<16x256xf32>
    %145 = tpu.matmul %133, %144, %cst_74 {dimension_numbers = #tpu.dot_dimension_numbers<[1], [0], [0], [1], [0, 0, 1, 1], [], []>} : vector<16x256xbf16>, vector<256x256xbf16>, vector<16x256xf32> -> vector<16x256xf32>
    %c0_75 = arith.constant 0 : index
    %c0_76 = arith.constant 0 : index
    %146 = vector.load %arg22[%c0_75, %c0_76] : memref<1x256xf32, #tpu.memory_space<vmem>>, vector<1x256xf32>
    %147 = vector.broadcast %146 : vector<1x256xf32> to vector<16x256xf32>
    %148 = arith.addf %145, %147 : vector<16x256xf32>
    %cst_77 = arith.constant 0.000000e+00 : f32
    %149 = vector.broadcast %cst_77 : f32 to vector<8x256xf32>
    %150 = vector.extract_strided_slice %138 {offsets = [0, 0], sizes = [8, 128], strides = [1, 1]} : vector<8x256xf32> to vector<8x128xf32>
    %151 = arith.truncf %150 : vector<8x128xf32> to vector<8x128xbf16>
    %152 = vector.extract_strided_slice %143 {offsets = [0, 0], sizes = [16, 128], strides = [1, 1]} : vector<16x256xf32> to vector<16x128xf32>
    %153 = arith.truncf %152 : vector<16x128xf32> to vector<16x128xbf16>
    %154 = vector.extract_strided_slice %148 {offsets = [0, 0], sizes = [16, 128], strides = [1, 1]} : vector<16x256xf32> to vector<16x128xf32>
    %155 = arith.truncf %154 : vector<16x128xf32> to vector<16x128xbf16>
    %cst_78 = arith.constant dense<0.000000e+00> : vector<8x16xf32>
    %156 = tpu.matmul %151, %153, %cst_78 {dimension_numbers = #tpu.dot_dimension_numbers<[1], [1], [0], [0], [0, 0, 1, 0], [], []>} : vector<8x128xbf16>, vector<16x128xbf16>, vector<8x16xf32> -> vector<8x16xf32>
    %cst_79 = arith.constant -1.000000e+09 : f32
    %157 = vector.shape_cast %11 : vector<1x16xi1> to vector<1x16xi1>
    %158 = vector.broadcast %157 : vector<1x16xi1> to vector<8x16xi1>
    %159 = vector.broadcast %cst_79 : f32 to vector<8x16xf32>
    %160 = arith.select %158, %156, %159 : vector<8x16xi1>, vector<8x16xf32>
    %cst_80 = arith.constant dense<0xFF800000> : vector<8xf32>
    %161 = vector.multi_reduction <maximumf>, %160, %cst_80 [1] : vector<8x16xf32> to vector<8xf32>
    %162 = vector.shape_cast %161 : vector<8xf32> to vector<8x1xf32>
    %163 = vector.broadcast %162 : vector<8x1xf32> to vector<8x16xf32>
    %164 = arith.subf %160, %163 : vector<8x16xf32>
    %165 = math.exp %164 : vector<8x16xf32>
    %cst_81 = arith.constant dense<0.000000e+00> : vector<8xf32>
    %166 = vector.multi_reduction <add>, %165, %cst_81 [1] : vector<8x16xf32> to vector<8xf32>
    %167 = vector.shape_cast %166 : vector<8xf32> to vector<8x1xf32>
    %168 = tpu.reciprocal %167 {approx = true} : vector<8x1xf32> -> vector<8x1xf32>
    %169 = vector.broadcast %168 : vector<8x1xf32> to vector<8x16xf32>
    %170 = arith.mulf %165, %169 : vector<8x16xf32>
    %171 = arith.truncf %170 : vector<8x16xf32> to vector<8x16xbf16>
    %cst_82 = arith.constant dense<0.000000e+00> : vector<8x128xf32>
    %172 = tpu.matmul %171, %155, %cst_82 {dimension_numbers = #tpu.dot_dimension_numbers<[1], [0], [0], [1], [0, 0, 1, 1], [], []>} : vector<8x16xbf16>, vector<16x128xbf16>, vector<8x128xf32> -> vector<8x128xf32>
    %173 = arith.truncf %172 : vector<8x128xf32> to vector<8x128xbf16>
    %c0_83 = arith.constant 0 : index
    %c0_84 = arith.constant 0 : index
    %174 = vector.load %arg23[%c0_83, %c0_84] : memref<256x256xbf16, #tpu.memory_space<vmem>>, vector<128x256xbf16>
    %cst_85 = arith.constant dense<0.000000e+00> : vector<8x256xf32>
    %175 = tpu.matmul %173, %174, %cst_85 {dimension_numbers = #tpu.dot_dimension_numbers<[1], [0], [0], [1], [0, 0, 1, 1], [], []>} : vector<8x128xbf16>, vector<128x256xbf16>, vector<8x256xf32> -> vector<8x256xf32>
    %176 = arith.addf %149, %175 : vector<8x256xf32>
    %177 = vector.extract_strided_slice %138 {offsets = [0, 128], sizes = [8, 128], strides = [1, 1]} : vector<8x256xf32> to vector<8x128xf32>
    %178 = arith.truncf %177 : vector<8x128xf32> to vector<8x128xbf16>
    %179 = vector.extract_strided_slice %143 {offsets = [0, 128], sizes = [16, 128], strides = [1, 1]} : vector<16x256xf32> to vector<16x128xf32>
    %180 = arith.truncf %179 : vector<16x128xf32> to vector<16x128xbf16>
    %181 = vector.extract_strided_slice %148 {offsets = [0, 128], sizes = [16, 128], strides = [1, 1]} : vector<16x256xf32> to vector<16x128xf32>
    %182 = arith.truncf %181 : vector<16x128xf32> to vector<16x128xbf16>
    %cst_86 = arith.constant dense<0.000000e+00> : vector<8x16xf32>
    %183 = tpu.matmul %178, %180, %cst_86 {dimension_numbers = #tpu.dot_dimension_numbers<[1], [1], [0], [0], [0, 0, 1, 0], [], []>} : vector<8x128xbf16>, vector<16x128xbf16>, vector<8x16xf32> -> vector<8x16xf32>
    %cst_87 = arith.constant -1.000000e+09 : f32
    %184 = vector.shape_cast %11 : vector<1x16xi1> to vector<1x16xi1>
    %185 = vector.broadcast %184 : vector<1x16xi1> to vector<8x16xi1>
    %186 = vector.broadcast %cst_87 : f32 to vector<8x16xf32>
    %187 = arith.select %185, %183, %186 : vector<8x16xi1>, vector<8x16xf32>
    %cst_88 = arith.constant dense<0xFF800000> : vector<8xf32>
    %188 = vector.multi_reduction <maximumf>, %187, %cst_88 [1] : vector<8x16xf32> to vector<8xf32>
    %189 = vector.shape_cast %188 : vector<8xf32> to vector<8x1xf32>
    %190 = vector.broadcast %189 : vector<8x1xf32> to vector<8x16xf32>
    %191 = arith.subf %187, %190 : vector<8x16xf32>
    %192 = math.exp %191 : vector<8x16xf32>
    %cst_89 = arith.constant dense<0.000000e+00> : vector<8xf32>
    %193 = vector.multi_reduction <add>, %192, %cst_89 [1] : vector<8x16xf32> to vector<8xf32>
    %194 = vector.shape_cast %193 : vector<8xf32> to vector<8x1xf32>
    %195 = tpu.reciprocal %194 {approx = true} : vector<8x1xf32> -> vector<8x1xf32>
    %196 = vector.broadcast %195 : vector<8x1xf32> to vector<8x16xf32>
    %197 = arith.mulf %192, %196 : vector<8x16xf32>
    %198 = arith.truncf %197 : vector<8x16xf32> to vector<8x16xbf16>
    %cst_90 = arith.constant dense<0.000000e+00> : vector<8x128xf32>
    %199 = tpu.matmul %198, %182, %cst_90 {dimension_numbers = #tpu.dot_dimension_numbers<[1], [0], [0], [1], [0, 0, 1, 1], [], []>} : vector<8x16xbf16>, vector<16x128xbf16>, vector<8x128xf32> -> vector<8x128xf32>
    %200 = arith.truncf %199 : vector<8x128xf32> to vector<8x128xbf16>
    %c128_91 = arith.constant 128 : index
    %c0_92 = arith.constant 0 : index
    %201 = vector.load %arg23[%c128_91, %c0_92] : memref<256x256xbf16, #tpu.memory_space<vmem>>, vector<128x256xbf16>
    %cst_93 = arith.constant dense<0.000000e+00> : vector<8x256xf32>
    %202 = tpu.matmul %200, %201, %cst_93 {dimension_numbers = #tpu.dot_dimension_numbers<[1], [0], [0], [1], [0, 0, 1, 1], [], []>} : vector<8x128xbf16>, vector<128x256xbf16>, vector<8x256xf32> -> vector<8x256xf32>
    %203 = arith.addf %176, %202 : vector<8x256xf32>
    %c0_94 = arith.constant 0 : index
    %c0_95 = arith.constant 0 : index
    %204 = vector.load %arg24[%c0_94, %c0_95] : memref<1x256xf32, #tpu.memory_space<vmem>>, vector<1x256xf32>
    %205 = vector.broadcast %204 : vector<1x256xf32> to vector<8x256xf32>
    %206 = arith.addf %203, %205 : vector<8x256xf32>
    %207 = arith.addf %107, %206 : vector<8x256xf32>
    %c0_96 = arith.constant 0 : index
    %c0_97 = arith.constant 0 : index
    %208 = vector.load %arg25[%c0_96, %c0_97] : memref<1x256xf32, #tpu.memory_space<vmem>>, vector<1x256xf32>
    %c0_98 = arith.constant 0 : index
    %c0_99 = arith.constant 0 : index
    %209 = vector.load %arg26[%c0_98, %c0_99] : memref<1x256xf32, #tpu.memory_space<vmem>>, vector<1x256xf32>
    %cst_100 = arith.constant dense<0.000000e+00> : vector<8xf32>
    %210 = vector.multi_reduction <add>, %207, %cst_100 [1] : vector<8x256xf32> to vector<8xf32>
    %211 = vector.shape_cast %210 : vector<8xf32> to vector<8x1xf32>
    %cst_101 = arith.constant 2.560000e+02 : f32
    %212 = vector.broadcast %cst_101 : f32 to vector<8x1xf32>
    %213 = arith.divf %211, %212 : vector<8x1xf32>
    %214 = vector.broadcast %213 : vector<8x1xf32> to vector<8x256xf32>
    %215 = arith.subf %207, %214 : vector<8x256xf32>
    %216 = arith.mulf %215, %215 : vector<8x256xf32>
    %cst_102 = arith.constant dense<0.000000e+00> : vector<8xf32>
    %217 = vector.multi_reduction <add>, %216, %cst_102 [1] : vector<8x256xf32> to vector<8xf32>
    %218 = vector.shape_cast %217 : vector<8xf32> to vector<8x1xf32>
    %cst_103 = arith.constant 2.560000e+02 : f32
    %219 = vector.broadcast %cst_103 : f32 to vector<8x1xf32>
    %220 = arith.divf %218, %219 : vector<8x1xf32>
    %221 = vector.broadcast %213 : vector<8x1xf32> to vector<8x256xf32>
    %222 = arith.subf %207, %221 : vector<8x256xf32>
    %cst_104 = arith.constant 9.99999974E-6 : f32
    %223 = vector.broadcast %cst_104 : f32 to vector<8x1xf32>
    %224 = arith.addf %220, %223 : vector<8x1xf32>
    %225 = math.rsqrt %224 : vector<8x1xf32>
    %226 = vector.broadcast %225 : vector<8x1xf32> to vector<8x256xf32>
    %227 = arith.mulf %222, %226 : vector<8x256xf32>
    %228 = vector.broadcast %208 : vector<1x256xf32> to vector<8x256xf32>
    %229 = arith.mulf %227, %228 : vector<8x256xf32>
    %230 = vector.broadcast %209 : vector<1x256xf32> to vector<8x256xf32>
    %231 = arith.addf %229, %230 : vector<8x256xf32>
    %232 = arith.truncf %231 : vector<8x256xf32> to vector<8x256xbf16>
    %cst_105 = arith.constant 0.000000e+00 : f32
    %233 = vector.broadcast %cst_105 : f32 to vector<8x256xf32>
    %c0_106 = arith.constant 0 : index
    %c0_107 = arith.constant 0 : index
    %234 = vector.load %arg27[%c0_106, %c0_107] : memref<256x512xbf16, #tpu.memory_space<vmem>>, vector<256x256xbf16>
    %cst_108 = arith.constant dense<0.000000e+00> : vector<8x256xf32>
    %235 = tpu.matmul %232, %234, %cst_108 {dimension_numbers = #tpu.dot_dimension_numbers<[1], [0], [0], [1], [0, 0, 1, 1], [], []>} : vector<8x256xbf16>, vector<256x256xbf16>, vector<8x256xf32> -> vector<8x256xf32>
    %c0_109 = arith.constant 0 : index
    %c0_110 = arith.constant 0 : index
    %236 = vector.load %arg28[%c0_109, %c0_110] : memref<1x512xf32, #tpu.memory_space<vmem>>, vector<1x256xf32>
    %237 = vector.broadcast %236 : vector<1x256xf32> to vector<8x256xf32>
    %238 = arith.addf %235, %237 : vector<8x256xf32>
    %cst_111 = arith.constant 0.000000e+00 : f32
    %239 = vector.broadcast %cst_111 : f32 to vector<8x256xf32>
    %240 = arith.maximumf %238, %239 : vector<8x256xf32>
    %241 = arith.truncf %240 : vector<8x256xf32> to vector<8x256xbf16>
    %c0_112 = arith.constant 0 : index
    %c0_113 = arith.constant 0 : index
    %242 = vector.load %arg29[%c0_112, %c0_113] : memref<512x256xbf16, #tpu.memory_space<vmem>>, vector<256x256xbf16>
    %cst_114 = arith.constant dense<0.000000e+00> : vector<8x256xf32>
    %243 = tpu.matmul %241, %242, %cst_114 {dimension_numbers = #tpu.dot_dimension_numbers<[1], [0], [0], [1], [0, 0, 1, 1], [], []>} : vector<8x256xbf16>, vector<256x256xbf16>, vector<8x256xf32> -> vector<8x256xf32>
    %244 = arith.addf %233, %243 : vector<8x256xf32>
    %c0_115 = arith.constant 0 : index
    %c256 = arith.constant 256 : index
    %245 = vector.load %arg27[%c0_115, %c256] : memref<256x512xbf16, #tpu.memory_space<vmem>>, vector<256x256xbf16>
    %cst_116 = arith.constant dense<0.000000e+00> : vector<8x256xf32>
    %246 = tpu.matmul %232, %245, %cst_116 {dimension_numbers = #tpu.dot_dimension_numbers<[1], [0], [0], [1], [0, 0, 1, 1], [], []>} : vector<8x256xbf16>, vector<256x256xbf16>, vector<8x256xf32> -> vector<8x256xf32>
    %c0_117 = arith.constant 0 : index
    %c256_118 = arith.constant 256 : index
    %247 = vector.load %arg28[%c0_117, %c256_118] : memref<1x512xf32, #tpu.memory_space<vmem>>, vector<1x256xf32>
    %248 = vector.broadcast %247 : vector<1x256xf32> to vector<8x256xf32>
    %249 = arith.addf %246, %248 : vector<8x256xf32>
    %cst_119 = arith.constant 0.000000e+00 : f32
    %250 = vector.broadcast %cst_119 : f32 to vector<8x256xf32>
    %251 = arith.maximumf %249, %250 : vector<8x256xf32>
    %252 = arith.truncf %251 : vector<8x256xf32> to vector<8x256xbf16>
    %c256_120 = arith.constant 256 : index
    %c0_121 = arith.constant 0 : index
    %253 = vector.load %arg29[%c256_120, %c0_121] : memref<512x256xbf16, #tpu.memory_space<vmem>>, vector<256x256xbf16>
    %cst_122 = arith.constant dense<0.000000e+00> : vector<8x256xf32>
    %254 = tpu.matmul %252, %253, %cst_122 {dimension_numbers = #tpu.dot_dimension_numbers<[1], [0], [0], [1], [0, 0, 1, 1], [], []>} : vector<8x256xbf16>, vector<256x256xbf16>, vector<8x256xf32> -> vector<8x256xf32>
    %255 = arith.addf %244, %254 : vector<8x256xf32>
    %c0_123 = arith.constant 0 : index
    %c0_124 = arith.constant 0 : index
    %256 = vector.load %arg30[%c0_123, %c0_124] : memref<1x256xf32, #tpu.memory_space<vmem>>, vector<1x256xf32>
    %257 = vector.broadcast %256 : vector<1x256xf32> to vector<8x256xf32>
    %258 = arith.addf %255, %257 : vector<8x256xf32>
    %259 = arith.addf %207, %258 : vector<8x256xf32>
    %c0_125 = arith.constant 0 : index
    %c0_126 = arith.constant 0 : index
    %c0_127 = arith.constant 0 : index
    %260 = vector.load %arg31[%c0_125, %c0_126, %c0_127] : memref<1x8x256xf32, #tpu.memory_space<vmem>>, vector<1x8x256xf32>
    %261 = vector.shape_cast %260 : vector<1x8x256xf32> to vector<8x256xf32>
    %262 = vector.shape_cast %259 : vector<8x256xf32> to vector<1x8x256xf32>
    tpu.vector_store %arg31[%c0_125, %c0_126, %c0_127], %262 {strides = array<i32>} : memref<1x8x256xf32, #tpu.memory_space<vmem>>, vector<1x8x256xf32>,
    return
  }
  func.func @transform_0(%arg0: i32) -> (i32, i32, i32) {
    %c0_i32 = arith.constant 0 : i32
    %c0_i32_0 = arith.constant 0 : i32
    %c0_i32_1 = arith.constant 0 : i32
    return %arg0, %c0_i32, %c0_i32_0 : i32, i32, i32
  }
  func.func @transform_1(%arg0: i32) -> (i32, i32, i32) {
    %c0_i32 = arith.constant 0 : i32
    %c0_i32_0 = arith.constant 0 : i32
    %c0_i32_1 = arith.constant 0 : i32
    return %arg0, %c0_i32, %c0_i32_0 : i32, i32, i32
  }
  func.func @transform_2(%arg0: i32) -> (i32, i32, i32) {
    %c0_i32 = arith.constant 0 : i32
    %c0_i32_0 = arith.constant 0 : i32
    %c0_i32_1 = arith.constant 0 : i32
    %c0_i32_2 = arith.constant 0 : i32
    return %c0_i32, %c0_i32_0, %c0_i32_1 : i32, i32, i32
  }
  func.func @transform_3(%arg0: i32) -> (i32, i32, i32) {
    %c0_i32 = arith.constant 0 : i32
    %c0_i32_0 = arith.constant 0 : i32
    %c0_i32_1 = arith.constant 0 : i32
    return %arg0, %c0_i32, %c0_i32_0 : i32, i32, i32
  }
  func.func @transform_4(%arg0: i32) -> (i32, i32) {
    %c0_i32 = arith.constant 0 : i32
    %c0_i32_0 = arith.constant 0 : i32
    %c0_i32_1 = arith.constant 0 : i32
    return %c0_i32, %c0_i32_0 : i32, i32
  }
  func.func @transform_5(%arg0: i32) -> (i32, i32) {
    %c0_i32 = arith.constant 0 : i32
    %c0_i32_0 = arith.constant 0 : i32
    %c0_i32_1 = arith.constant 0 : i32
    return %c0_i32, %c0_i32_0 : i32, i32
  }
  func.func @transform_6(%arg0: i32) -> (i32, i32) {
    %c0_i32 = arith.constant 0 : i32
    %c0_i32_0 = arith.constant 0 : i32
    %c0_i32_1 = arith.constant 0 : i32
    return %c0_i32, %c0_i32_0 : i32, i32
  }
  func.func @transform_7(%arg0: i32) -> (i32, i32) {
    %c0_i32 = arith.constant 0 : i32
    %c0_i32_0 = arith.constant 0 : i32
    %c0_i32_1 = arith.constant 0 : i32
    return %c0_i32, %c0_i32_0 : i32, i32
  }
  func.func @transform_8(%arg0: i32) -> (i32, i32) {
    %c0_i32 = arith.constant 0 : i32
    %c0_i32_0 = arith.constant 0 : i32
    %c0_i32_1 = arith.constant 0 : i32
    return %c0_i32, %c0_i32_0 : i32, i32
  }
  func.func @transform_9(%arg0: i32) -> (i32, i32) {
    %c0_i32 = arith.constant 0 : i32
    %c0_i32_0 = arith.constant 0 : i32
    %c0_i32_1 = arith.constant 0 : i32
    return %c0_i32, %c0_i32_0 : i32, i32
  }
  func.func @transform_10(%arg0: i32) -> (i32, i32) {
    %c0_i32 = arith.constant 0 : i32
    %c0_i32_0 = arith.constant 0 : i32
    %c0_i32_1 = arith.constant 0 : i32
    return %c0_i32, %c0_i32_0 : i32, i32
  }
  func.func @transform_11(%arg0: i32) -> (i32, i32) {
    %c0_i32 = arith.constant 0 : i32
    %c0_i32_0 = arith.constant 0 : i32
    %c0_i32_1 = arith.constant 0 : i32
    return %c0_i32, %c0_i32_0 : i32, i32
  }
  func.func @transform_12(%arg0: i32) -> (i32, i32) {
    %c0_i32 = arith.constant 0 : i32
    %c0_i32_0 = arith.constant 0 : i32
    %c0_i32_1 = arith.constant 0 : i32
    return %c0_i32, %c0_i32_0 : i32, i32
  }
  func.func @transform_13(%arg0: i32) -> (i32, i32) {
    %c0_i32 = arith.constant 0 : i32
    %c0_i32_0 = arith.constant 0 : i32
    %c0_i32_1 = arith.constant 0 : i32
    return %c0_i32, %c0_i32_0 : i32, i32
  }
  func.func @transform_14(%arg0: i32) -> (i32, i32) {
    %c0_i32 = arith.constant 0 : i32
    %c0_i32_0 = arith.constant 0 : i32
    %c0_i32_1 = arith.constant 0 : i32
    return %c0_i32, %c0_i32_0 : i32, i32
  }
  func.func @transform_15(%arg0: i32) -> (i32, i32) {
    %c0_i32 = arith.constant 0 : i32
    %c0_i32_0 = arith.constant 0 : i32
    %c0_i32_1 = arith.constant 0 : i32
    return %c0_i32, %c0_i32_0 : i32, i32
  }
  func.func @transform_16(%arg0: i32) -> (i32, i32) {
    %c0_i32 = arith.constant 0 : i32
    %c0_i32_0 = arith.constant 0 : i32
    %c0_i32_1 = arith.constant 0 : i32
    return %c0_i32, %c0_i32_0 : i32, i32
  }
  func.func @transform_17(%arg0: i32) -> (i32, i32) {
    %c0_i32 = arith.constant 0 : i32
    %c0_i32_0 = arith.constant 0 : i32
    %c0_i32_1 = arith.constant 0 : i32
    return %c0_i32, %c0_i32_0 : i32, i32
  }
  func.func @transform_18(%arg0: i32) -> (i32, i32) {
    %c0_i32 = arith.constant 0 : i32
    %c0_i32_0 = arith.constant 0 : i32
    %c0_i32_1 = arith.constant 0 : i32
    return %c0_i32, %c0_i32_0 : i32, i32
  }
  func.func @transform_19(%arg0: i32) -> (i32, i32) {
    %c0_i32 = arith.constant 0 : i32
    %c0_i32_0 = arith.constant 0 : i32
    %c0_i32_1 = arith.constant 0 : i32
    return %c0_i32, %c0_i32_0 : i32, i32
  }
  func.func @transform_20(%arg0: i32) -> (i32, i32) {
    %c0_i32 = arith.constant 0 : i32
    %c0_i32_0 = arith.constant 0 : i32
    %c0_i32_1 = arith.constant 0 : i32
    return %c0_i32, %c0_i32_0 : i32, i32
  }
  func.func @transform_21(%arg0: i32) -> (i32, i32) {
    %c0_i32 = arith.constant 0 : i32
    %c0_i32_0 = arith.constant 0 : i32
    %c0_i32_1 = arith.constant 0 : i32
    return %c0_i32, %c0_i32_0 : i32, i32
  }
  func.func @transform_22(%arg0: i32) -> (i32, i32) {
    %c0_i32 = arith.constant 0 : i32
    %c0_i32_0 = arith.constant 0 : i32
    %c0_i32_1 = arith.constant 0 : i32
    return %c0_i32, %c0_i32_0 : i32, i32
  }
  func.func @transform_23(%arg0: i32) -> (i32, i32) {
    %c0_i32 = arith.constant 0 : i32
    %c0_i32_0 = arith.constant 0 : i32
    %c0_i32_1 = arith.constant 0 : i32
    return %c0_i32, %c0_i32_0 : i32, i32
  }
  func.func @transform_24(%arg0: i32) -> (i32, i32) {
    %c0_i32 = arith.constant 0 : i32
    %c0_i32_0 = arith.constant 0 : i32
    %c0_i32_1 = arith.constant 0 : i32
    return %c0_i32, %c0_i32_0 : i32, i32
  }
  func.func @transform_25(%arg0: i32) -> (i32, i32) {
    %c0_i32 = arith.constant 0 : i32
    %c0_i32_0 = arith.constant 0 : i32
    %c0_i32_1 = arith.constant 0 : i32
    return %c0_i32, %c0_i32_0 : i32, i32
  }
  func.func @transform_26(%arg0: i32) -> (i32, i32) {
    %c0_i32 = arith.constant 0 : i32
    %c0_i32_0 = arith.constant 0 : i32
    %c0_i32_1 = arith.constant 0 : i32
    return %c0_i32, %c0_i32_0 : i32, i32
  }
  func.func @transform_27(%arg0: i32) -> (i32, i32) {
    %c0_i32 = arith.constant 0 : i32
    %c0_i32_0 = arith.constant 0 : i32
    %c0_i32_1 = arith.constant 0 : i32
    return %c0_i32, %c0_i32_0 : i32, i32
  }
  func.func @transform_28(%arg0: i32) -> (i32, i32) {
    %c0_i32 = arith.constant 0 : i32
    %c0_i32_0 = arith.constant 0 : i32
    %c0_i32_1 = arith.constant 0 : i32
    return %c0_i32, %c0_i32_0 : i32, i32
  }
  func.func @transform_29(%arg0: i32) -> (i32, i32) {
    %c0_i32 = arith.constant 0 : i32
    %c0_i32_0 = arith.constant 0 : i32
    %c0_i32_1 = arith.constant 0 : i32
    return %c0_i32, %c0_i32_0 : i32, i32
  }
  func.func @transform_30(%arg0: i32) -> (i32, i32, i32) {
    %c0_i32 = arith.constant 0 : i32
    %c0_i32_0 = arith.constant 0 : i32
    %c0_i32_1 = arith.constant 0 : i32
    return %arg0, %c0_i32, %c0_i32_0 : i32, i32, i32
  }
}

module attributes {stable_mosaic.version = 11 : i64} {
  func.func @decoder_layer_kernel(%arg0: i32, %arg1: memref<1x8x256xf32, #tpu.memory_space<vmem>>, %arg2: memref<1x16x256xf32, #tpu.memory_space<vmem>>, %arg3: memref<1x8x8xi8, #tpu.memory_space<vmem>>, %arg4: memref<1x1x16xi8, #tpu.memory_space<vmem>>, %arg5: memref<1x256xf32, #tpu.memory_space<vmem>>, %arg6: memref<1x256xf32, #tpu.memory_space<vmem>>, %arg7: memref<256x256xbf16, #tpu.memory_space<vmem>>, %arg8: memref<1x256xf32, #tpu.memory_space<vmem>>, %arg9: memref<256x256xbf16, #tpu.memory_space<vmem>>, %arg10: memref<1x256xf32, #tpu.memory_space<vmem>>, %arg11: memref<256x256xbf16, #tpu.memory_space<vmem>>, %arg12: memref<1x256xf32, #tpu.memory_space<vmem>>, %arg13: memref<256x256xbf16, #tpu.memory_space<vmem>>, %arg14: memref<1x256xf32, #tpu.memory_space<vmem>>, %arg15: memref<1x256xf32, #tpu.memory_space<vmem>>, %arg16: memref<1x256xf32, #tpu.memory_space<vmem>>, %arg17: memref<256x256xbf16, #tpu.memory_space<vmem>>, %arg18: memref<1x256xf32, #tpu.memory_space<vmem>>, %arg19: memref<256x256xbf16, #tpu.memory_space<vmem>>, %arg20: memref<1x256xf32, #tpu.memory_space<vmem>>, %arg21: memref<256x256xbf16, #tpu.memory_space<vmem>>, %arg22: memref<1x256xf32, #tpu.memory_space<vmem>>, %arg23: memref<256x256xbf16, #tpu.memory_space<vmem>>, %arg24: memref<1x256xf32, #tpu.memory_space<vmem>>, %arg25: memref<1x256xf32, #tpu.memory_space<vmem>>, %arg26: memref<1x256xf32, #tpu.memory_space<vmem>>, %arg27: memref<256x512xbf16, #tpu.memory_space<vmem>>, %arg28: memref<1x512xf32, #tpu.memory_space<vmem>>, %arg29: memref<512x256xbf16, #tpu.memory_space<vmem>>, %arg30: memref<1x256xf32, #tpu.memory_space<vmem>>, %arg31: memref<1x8x256xf32, #tpu.memory_space<vmem>>) attributes {dimension_semantics = [#tpu.dimension_semantics<parallel>], iteration_bounds = array<i64: 2>, scalar_prefetch = 0 : i64, scratch_operands = 0 : i64, tpu.core_type = #tpu.core_type<tc>, window_params = [{transform_indices = @transform_0, window_bounds = array<i64: 1, 8, 256>}, {transform_indices = @transform_1, window_bounds = array<i64: 1, 16, 256>}, {pipeline_mode = #tpu.pipeline_mode<synchronous>, transform_indices = @transform_2, window_bounds = array<i64: 1, 8, 8>}, {transform_indices = @transform_3, window_bounds = array<i64: 1, 1, 16>}, {pipeline_mode = #tpu.pipeline_mode<synchronous>, transform_indices = @transform_4, window_bounds = array<i64: 1, 256>}, {pipeline_mode = #tpu.pipeline_mode<synchronous>, transform_indices = @transform_5, window_bounds = array<i64: 1, 256>}, {pipeline_mode = #tpu.pipeline_mode<synchronous>, transform_indices = @transform_6, window_bounds = array<i64: 256, 256>}, {pipeline_mode = #tpu.pipeline_mode<synchronous>, transform_indices = @transform_7, window_bounds = array<i64: 1, 256>}, {pipeline_mode = #tpu.pipeline_mode<synchronous>, transform_indices = @transform_8, window_bounds = array<i64: 256, 256>}, {pipeline_mode = #tpu.pipeline_mode<synchronous>, transform_indices = @transform_9, window_bounds = array<i64: 1, 256>}, {pipeline_mode = #tpu.pipeline_mode<synchronous>, transform_indices = @transform_10, window_bounds = array<i64: 256, 256>}, {pipeline_mode = #tpu.pipeline_mode<synchronous>, transform_indices = @transform_11, window_bounds = array<i64: 1, 256>}, {pipeline_mode = #tpu.pipeline_mode<synchronous>, transform_indices = @transform_12, window_bounds = array<i64: 256, 256>}, {pipeline_mode = #tpu.pipeline_mode<synchronous>, transform_indices = @transform_13, window_bounds = array<i64: 1, 256>}, {pipeline_mode = #tpu.pipeline_mode<synchronous>, transform_indices = @transform_14, window_bounds = array<i64: 1, 256>}, {pipeline_mode = #tpu.pipeline_mode<synchronous>, transform_indices = @transform_15, window_bounds = array<i64: 1, 256>}, {pipeline_mode = #tpu.pipeline_mode<synchronous>, transform_indices = @transform_16, window_bounds = array<i64: 256, 256>}, {pipeline_mode = #tpu.pipeline_mode<synchronous>, transform_indices = @transform_17, window_bounds = array<i64: 1, 256>}, {pipeline_mode = #tpu.pipeline_mode<synchronous>, transform_indices = @transform_18, window_bounds = array<i64: 256, 256>}, {pipeline_mode = #tpu.pipeline_mode<synchronous>, transform_indices = @transform_19, window_bounds = array<i64: 1, 256>}, {pipeline_mode = #tpu.pipeline_mode<synchronous>, transform_indices = @transform_20, window_bounds = array<i64: 256, 256>}, {pipeline_mode = #tpu.pipeline_mode<synchronous>, transform_indices = @transform_21, window_bounds = array<i64: 1, 256>}, {pipeline_mode = #tpu.pipeline_mode<synchronous>, transform_indices = @transform_22, window_bounds = array<i64: 256, 256>}, {pipeline_mode = #tpu.pipeline_mode<synchronous>, transform_indices = @transform_23, window_bounds = array<i64: 1, 256>}, {pipeline_mode = #tpu.pipeline_mode<synchronous>, transform_indices = @transform_24, window_bounds = array<i64: 1, 256>}, {pipeline_mode = #tpu.pipeline_mode<synchronous>, transform_indices = @transform_25, window_bounds = array<i64: 1, 256>}, {pipeline_mode = #tpu.pipeline_mode<synchronous>, transform_indices = @transform_26, window_bounds = array<i64: 256, 512>}, {pipeline_mode = #tpu.pipeline_mode<synchronous>, transform_indices = @transform_27, window_bounds = array<i64: 1, 512>}, {pipeline_mode = #tpu.pipeline_mode<synchronous>, transform_indices = @transform_28, window_bounds = array<i64: 512, 256>}, {pipeline_mode = #tpu.pipeline_mode<synchronous>, transform_indices = @transform_29, window_bounds = array<i64: 1, 256>}, {transform_indices = @transform_30, window_bounds = array<i64: 1, 8, 256>}]} {
    %c0 = arith.constant 0 : index
    %c0_0 = arith.constant 0 : index
    %c0_1 = arith.constant 0 : index
    %0 = vector.load %arg1[%c0, %c0_0, %c0_1] : memref<1x8x256xf32, #tpu.memory_space<vmem>>, vector<1x8x256xf32>
    %1 = vector.shape_cast %0 : vector<1x8x256xf32> to vector<8x256xf32>
    %c0_2 = arith.constant 0 : index
    %c0_3 = arith.constant 0 : index
    %c0_4 = arith.constant 0 : index
    %2 = vector.load %arg2[%c0_2, %c0_3, %c0_4] : memref<1x16x256xf32, #tpu.memory_space<vmem>>, vector<1x16x256xf32>
    %3 = vector.shape_cast %2 : vector<1x16x256xf32> to vector<16x256xf32>
    %c0_5 = arith.constant 0 : index
    %c0_6 = arith.constant 0 : index
    %c0_7 = arith.constant 0 : index
    %4 = vector.load %arg3[%c0_5, %c0_6, %c0_7] : memref<1x8x8xi8, #tpu.memory_space<vmem>>, vector<1x8x8xi8>
    %5 = vector.shape_cast %4 : vector<1x8x8xi8> to vector<8x8xi8>
    %c0_i8 = arith.constant 0 : i8
    %6 = vector.broadcast %c0_i8 : i8 to vector<8x8xi8>
    %7 = arith.cmpi ne, %5, %6 : vector<8x8xi8>
    %c0_8 = arith.constant 0 : index
    %c0_9 = arith.constant 0 : index
    %c0_10 = arith.constant 0 : index
    %8 = vector.load %arg4[%c0_8, %c0_9, %c0_10] : memref<1x1x16xi8, #tpu.memory_space<vmem>>, vector<1x1x16xi8>
    %9 = vector.shape_cast %8 : vector<1x1x16xi8> to vector<1x16xi8>
    %c0_i8_11 = arith.constant 0 : i8
    %10 = vector.broadcast %c0_i8_11 : i8 to vector<1x16xi8>
    %11 = arith.cmpi ne, %9, %10 : vector<1x16xi8>
    %c0_12 = arith.constant 0 : index
    %c0_13 = arith.constant 0 : index
    %12 = vector.load %arg5[%c0_12, %c0_13] : memref<1x256xf32, #tpu.memory_space<vmem>>, vector<1x256xf32>
    %c0_14 = arith.constant 0 : index
    %c0_15 = arith.constant 0 : index
    %13 = vector.load %arg6[%c0_14, %c0_15] : memref<1x256xf32, #tpu.memory_space<vmem>>, vector<1x256xf32>
    %cst = arith.constant dense<0.000000e+00> : vector<8xf32>
    %14 = vector.multi_reduction <add>, %1, %cst [1] : vector<8x256xf32> to vector<8xf32>
    %15 = vector.shape_cast %14 : vector<8xf32> to vector<8x1xf32>
    %cst_16 = arith.constant 2.560000e+02 : f32
    %16 = vector.broadcast %cst_16 : f32 to vector<8x1xf32>
    %17 = arith.divf %15, %16 : vector<8x1xf32>
    %18 = vector.broadcast %17 : vector<8x1xf32> to vector<8x256xf32>
    %19 = arith.subf %1, %18 : vector<8x256xf32>
    %20 = arith.mulf %19, %19 : vector<8x256xf32>
    %cst_17 = arith.constant dense<0.000000e+00> : vector<8xf32>
    %21 = vector.multi_reduction <add>, %20, %cst_17 [1] : vector<8x256xf32> to vector<8xf32>
    %22 = vector.shape_cast %21 : vector<8xf32> to vector<8x1xf32>
    %cst_18 = arith.constant 2.560000e+02 : f32
    %23 = vector.broadcast %cst_18 : f32 to vector<8x1xf32>
    %24 = arith.divf %22, %23 : vector<8x1xf32>
    %25 = vector.broadcast %17 : vector<8x1xf32> to vector<8x256xf32>
    %26 = arith.subf %1, %25 : vector<8x256xf32>
    %cst_19 = arith.constant 9.99999974E-6 : f32
    %27 = vector.broadcast %cst_19 : f32 to vector<8x1xf32>
    %28 = arith.addf %24, %27 : vector<8x1xf32>
    %29 = math.rsqrt %28 : vector<8x1xf32>
    %30 = vector.broadcast %29 : vector<8x1xf32> to vector<8x256xf32>
    %31 = arith.mulf %26, %30 : vector<8x256xf32>
    %32 = vector.broadcast %12 : vector<1x256xf32> to vector<8x256xf32>
    %33 = arith.mulf %31, %32 : vector<8x256xf32>
    %34 = vector.broadcast %13 : vector<1x256xf32> to vector<8x256xf32>
    %35 = arith.addf %33, %34 : vector<8x256xf32>
    %36 = arith.truncf %35 : vector<8x256xf32> to vector<8x256xbf16>
    %37 = arith.truncf %35 : vector<8x256xf32> to vector<8x256xbf16>
    %c0_20 = arith.constant 0 : index
    %c0_21 = arith.constant 0 : index
    %38 = vector.load %arg7[%c0_20, %c0_21] : memref<256x256xbf16, #tpu.memory_space<vmem>>, vector<256x256xbf16>
    %cst_22 = arith.constant dense<0.000000e+00> : vector<8x256xf32>
    %39 = tpu.matmul %36, %38, %cst_22 {dimension_numbers = #tpu.dot_dimension_numbers<[1], [0], [0], [1], [0, 0, 1, 1], [], []>} : vector<8x256xbf16>, vector<256x256xbf16>, vector<8x256xf32> -> vector<8x256xf32>
    %c0_23 = arith.constant 0 : index
    %c0_24 = arith.constant 0 : index
    %40 = vector.load %arg8[%c0_23, %c0_24] : memref<1x256xf32, #tpu.memory_space<vmem>>, vector<1x256xf32>
    %41 = vector.broadcast %40 : vector<1x256xf32> to vector<8x256xf32>
    %42 = arith.addf %39, %41 : vector<8x256xf32>
    %c0_25 = arith.constant 0 : index
    %c0_26 = arith.constant 0 : index
    %43 = vector.load %arg9[%c0_25, %c0_26] : memref<256x256xbf16, #tpu.memory_space<vmem>>, vector<256x256xbf16>
    %cst_27 = arith.constant dense<0.000000e+00> : vector<8x256xf32>
    %44 = tpu.matmul %37, %43, %cst_27 {dimension_numbers = #tpu.dot_dimension_numbers<[1], [0], [0], [1], [0, 0, 1, 1], [], []>} : vector<8x256xbf16>, vector<256x256xbf16>, vector<8x256xf32> -> vector<8x256xf32>
    %c0_28 = arith.constant 0 : index
    %c0_29 = arith.constant 0 : index
    %45 = vector.load %arg10[%c0_28, %c0_29] : memref<1x256xf32, #tpu.memory_space<vmem>>, vector<1x256xf32>
    %46 = vector.broadcast %45 : vector<1x256xf32> to vector<8x256xf32>
    %47 = arith.addf %44, %46 : vector<8x256xf32>
    %c0_30 = arith.constant 0 : index
    %c0_31 = arith.constant 0 : index
    %48 = vector.load %arg11[%c0_30, %c0_31] : memref<256x256xbf16, #tpu.memory_space<vmem>>, vector<256x256xbf16>
    %cst_32 = arith.constant dense<0.000000e+00> : vector<8x256xf32>
    %49 = tpu.matmul %37, %48, %cst_32 {dimension_numbers = #tpu.dot_dimension_numbers<[1], [0], [0], [1], [0, 0, 1, 1], [], []>} : vector<8x256xbf16>, vector<256x256xbf16>, vector<8x256xf32> -> vector<8x256xf32>
    %c0_33 = arith.constant 0 : index
    %c0_34 = arith.constant 0 : index
    %50 = vector.load %arg12[%c0_33, %c0_34] : memref<1x256xf32, #tpu.memory_space<vmem>>, vector<1x256xf32>
    %51 = vector.broadcast %50 : vector<1x256xf32> to vector<8x256xf32>
    %52 = arith.addf %49, %51 : vector<8x256xf32>
    %cst_35 = arith.constant 0.000000e+00 : f32
    %53 = vector.broadcast %cst_35 : f32 to vector<8x256xf32>
    %54 = vector.extract_strided_slice %42 {offsets = [0, 0], sizes = [8, 128], strides = [1, 1]} : vector<8x256xf32> to vector<8x128xf32>
    %55 = arith.truncf %54 : vector<8x128xf32> to vector<8x128xbf16>
    %56 = vector.extract_strided_slice %47 {offsets = [0, 0], sizes = [8, 128], strides = [1, 1]} : vector<8x256xf32> to vector<8x128xf32>
    %57 = arith.truncf %56 : vector<8x128xf32> to vector<8x128xbf16>
    %58 = vector.extract_strided_slice %52 {offsets = [0, 0], sizes = [8, 128], strides = [1, 1]} : vector<8x256xf32> to vector<8x128xf32>
    %59 = arith.truncf %58 : vector<8x128xf32> to vector<8x128xbf16>
    %cst_36 = arith.constant dense<0.000000e+00> : vector<8x8xf32>
    %60 = tpu.matmul %55, %57, %cst_36 {dimension_numbers = #tpu.dot_dimension_numbers<[1], [1], [0], [0], [0, 0, 1, 0], [], []>} : vector<8x128xbf16>, vector<8x128xbf16>, vector<8x8xf32> -> vector<8x8xf32>
    %cst_37 = arith.constant -1.000000e+09 : f32
    %61 = vector.broadcast %cst_37 : f32 to vector<8x8xf32>
    %62 = arith.select %7, %60, %61 : vector<8x8xi1>, vector<8x8xf32>
    %cst_38 = arith.constant dense<0xFF800000> : vector<8xf32>
    %63 = vector.multi_reduction <maximumf>, %62, %cst_38 [1] : vector<8x8xf32> to vector<8xf32>
    %64 = vector.shape_cast %63 : vector<8xf32> to vector<8x1xf32>
    %65 = vector.broadcast %64 : vector<8x1xf32> to vector<8x8xf32>
    %66 = arith.subf %62, %65 : vector<8x8xf32>
    %67 = math.exp %66 : vector<8x8xf32>
    %cst_39 = arith.constant dense<0.000000e+00> : vector<8xf32>
    %68 = vector.multi_reduction <add>, %67, %cst_39 [1] : vector<8x8xf32> to vector<8xf32>
    %69 = vector.shape_cast %68 : vector<8xf32> to vector<8x1xf32>
    %70 = tpu.reciprocal %69 {approx = true} : vector<8x1xf32> -> vector<8x1xf32>
    %71 = vector.broadcast %70 : vector<8x1xf32> to vector<8x8xf32>
    %72 = arith.mulf %67, %71 : vector<8x8xf32>
    %73 = arith.truncf %72 : vector<8x8xf32> to vector<8x8xbf16>
    %cst_40 = arith.constant dense<0.000000e+00> : vector<8x128xf32>
    %74 = tpu.matmul %73, %59, %cst_40 {dimension_numbers = #tpu.dot_dimension_numbers<[1], [0], [0], [1], [0, 0, 1, 1], [], []>} : vector<8x8xbf16>, vector<8x128xbf16>, vector<8x128xf32> -> vector<8x128xf32>
    %75 = arith.truncf %74 : vector<8x128xf32> to vector<8x128xbf16>
    %c0_41 = arith.constant 0 : index
    %c0_42 = arith.constant 0 : index
    %76 = vector.load %arg13[%c0_41, %c0_42] : memref<256x256xbf16, #tpu.memory_space<vmem>>, vector<128x256xbf16>
    %cst_43 = arith.constant dense<0.000000e+00> : vector<8x256xf32>
    %77 = tpu.matmul %75, %76, %cst_43 {dimension_numbers = #tpu.dot_dimension_numbers<[1], [0], [0], [1], [0, 0, 1, 1], [], []>} : vector<8x128xbf16>, vector<128x256xbf16>, vector<8x256xf32> -> vector<8x256xf32>
    %78 = arith.addf %53, %77 : vector<8x256xf32>
    %79 = vector.extract_strided_slice %42 {offsets = [0, 128], sizes = [8, 128], strides = [1, 1]} : vector<8x256xf32> to vector<8x128xf32>
    %80 = arith.truncf %79 : vector<8x128xf32> to vector<8x128xbf16>
    %81 = vector.extract_strided_slice %47 {offsets = [0, 128], sizes = [8, 128], strides = [1, 1]} : vector<8x256xf32> to vector<8x128xf32>
    %82 = arith.truncf %81 : vector<8x128xf32> to vector<8x128xbf16>
    %83 = vector.extract_strided_slice %52 {offsets = [0, 128], sizes = [8, 128], strides = [1, 1]} : vector<8x256xf32> to vector<8x128xf32>
    %84 = arith.truncf %83 : vector<8x128xf32> to vector<8x128xbf16>
    %cst_44 = arith.constant dense<0.000000e+00> : vector<8x8xf32>
    %85 = tpu.matmul %80, %82, %cst_44 {dimension_numbers = #tpu.dot_dimension_numbers<[1], [1], [0], [0], [0, 0, 1, 0], [], []>} : vector<8x128xbf16>, vector<8x128xbf16>, vector<8x8xf32> -> vector<8x8xf32>
    %cst_45 = arith.constant -1.000000e+09 : f32
    %86 = vector.broadcast %cst_45 : f32 to vector<8x8xf32>
    %87 = arith.select %7, %85, %86 : vector<8x8xi1>, vector<8x8xf32>
    %cst_46 = arith.constant dense<0xFF800000> : vector<8xf32>
    %88 = vector.multi_reduction <maximumf>, %87, %cst_46 [1] : vector<8x8xf32> to vector<8xf32>
    %89 = vector.shape_cast %88 : vector<8xf32> to vector<8x1xf32>
    %90 = vector.broadcast %89 : vector<8x1xf32> to vector<8x8xf32>
    %91 = arith.subf %87, %90 : vector<8x8xf32>
    %92 = math.exp %91 : vector<8x8xf32>
    %cst_47 = arith.constant dense<0.000000e+00> : vector<8xf32>
    %93 = vector.multi_reduction <add>, %92, %cst_47 [1] : vector<8x8xf32> to vector<8xf32>
    %94 = vector.shape_cast %93 : vector<8xf32> to vector<8x1xf32>
    %95 = tpu.reciprocal %94 {approx = true} : vector<8x1xf32> -> vector<8x1xf32>
    %96 = vector.broadcast %95 : vector<8x1xf32> to vector<8x8xf32>
    %97 = arith.mulf %92, %96 : vector<8x8xf32>
    %98 = arith.truncf %97 : vector<8x8xf32> to vector<8x8xbf16>
    %cst_48 = arith.constant dense<0.000000e+00> : vector<8x128xf32>
    %99 = tpu.matmul %98, %84, %cst_48 {dimension_numbers = #tpu.dot_dimension_numbers<[1], [0], [0], [1], [0, 0, 1, 1], [], []>} : vector<8x8xbf16>, vector<8x128xbf16>, vector<8x128xf32> -> vector<8x128xf32>
    %100 = arith.truncf %99 : vector<8x128xf32> to vector<8x128xbf16>
    %c128 = arith.constant 128 : index
    %c0_49 = arith.constant 0 : index
    %101 = vector.load %arg13[%c128, %c0_49] : memref<256x256xbf16, #tpu.memory_space<vmem>>, vector<128x256xbf16>
    %cst_50 = arith.constant dense<0.000000e+00> : vector<8x256xf32>
    %102 = tpu.matmul %100, %101, %cst_50 {dimension_numbers = #tpu.dot_dimension_numbers<[1], [0], [0], [1], [0, 0, 1, 1], [], []>} : vector<8x128xbf16>, vector<128x256xbf16>, vector<8x256xf32> -> vector<8x256xf32>
    %103 = arith.addf %78, %102 : vector<8x256xf32>
    %c0_51 = arith.constant 0 : index
    %c0_52 = arith.constant 0 : index
    %104 = vector.load %arg14[%c0_51, %c0_52] : memref<1x256xf32, #tpu.memory_space<vmem>>, vector<1x256xf32>
    %105 = vector.broadcast %104 : vector<1x256xf32> to vector<8x256xf32>
    %106 = arith.addf %103, %105 : vector<8x256xf32>
    %107 = arith.addf %1, %106 : vector<8x256xf32>
    %c0_53 = arith.constant 0 : index
    %c0_54 = arith.constant 0 : index
    %108 = vector.load %arg15[%c0_53, %c0_54] : memref<1x256xf32, #tpu.memory_space<vmem>>, vector<1x256xf32>
    %c0_55 = arith.constant 0 : index
    %c0_56 = arith.constant 0 : index
    %109 = vector.load %arg16[%c0_55, %c0_56] : memref<1x256xf32, #tpu.memory_space<vmem>>, vector<1x256xf32>
    %cst_57 = arith.constant dense<0.000000e+00> : vector<8xf32>
    %110 = vector.multi_reduction <add>, %107, %cst_57 [1] : vector<8x256xf32> to vector<8xf32>
    %111 = vector.shape_cast %110 : vector<8xf32> to vector<8x1xf32>
    %cst_58 = arith.constant 2.560000e+02 : f32
    %112 = vector.broadcast %cst_58 : f32 to vector<8x1xf32>
    %113 = arith.divf %111, %112 : vector<8x1xf32>
    %114 = vector.broadcast %113 : vector<8x1xf32> to vector<8x256xf32>
    %115 = arith.subf %107, %114 : vector<8x256xf32>
    %116 = arith.mulf %115, %115 : vector<8x256xf32>
    %cst_59 = arith.constant dense<0.000000e+00> : vector<8xf32>
    %117 = vector.multi_reduction <add>, %116, %cst_59 [1] : vector<8x256xf32> to vector<8xf32>
    %118 = vector.shape_cast %117 : vector<8xf32> to vector<8x1xf32>
    %cst_60 = arith.constant 2.560000e+02 : f32
    %119 = vector.broadcast %cst_60 : f32 to vector<8x1xf32>
    %120 = arith.divf %118, %119 : vector<8x1xf32>
    %121 = vector.broadcast %113 : vector<8x1xf32> to vector<8x256xf32>
    %122 = arith.subf %107, %121 : vector<8x256xf32>
    %cst_61 = arith.constant 9.99999974E-6 : f32
    %123 = vector.broadcast %cst_61 : f32 to vector<8x1xf32>
    %124 = arith.addf %120, %123 : vector<8x1xf32>
    %125 = math.rsqrt %124 : vector<8x1xf32>
    %126 = vector.broadcast %125 : vector<8x1xf32> to vector<8x256xf32>
    %127 = arith.mulf %122, %126 : vector<8x256xf32>
    %128 = vector.broadcast %108 : vector<1x256xf32> to vector<8x256xf32>
    %129 = arith.mulf %127, %128 : vector<8x256xf32>
    %130 = vector.broadcast %109 : vector<1x256xf32> to vector<8x256xf32>
    %131 = arith.addf %129, %130 : vector<8x256xf32>
    %132 = arith.truncf %131 : vector<8x256xf32> to vector<8x256xbf16>
    %133 = arith.truncf %3 : vector<16x256xf32> to vector<16x256xbf16>
    %c0_62 = arith.constant 0 : index
    %c0_63 = arith.constant 0 : index
    %134 = vector.load %arg17[%c0_62, %c0_63] : memref<256x256xbf16, #tpu.memory_space<vmem>>, vector<256x256xbf16>
    %cst_64 = arith.constant dense<0.000000e+00> : vector<8x256xf32>
    %135 = tpu.matmul %132, %134, %cst_64 {dimension_numbers = #tpu.dot_dimension_numbers<[1], [0], [0], [1], [0, 0, 1, 1], [], []>} : vector<8x256xbf16>, vector<256x256xbf16>, vector<8x256xf32> -> vector<8x256xf32>
    %c0_65 = arith.constant 0 : index
    %c0_66 = arith.constant 0 : index
    %136 = vector.load %arg18[%c0_65, %c0_66] : memref<1x256xf32, #tpu.memory_space<vmem>>, vector<1x256xf32>
    %137 = vector.broadcast %136 : vector<1x256xf32> to vector<8x256xf32>
    %138 = arith.addf %135, %137 : vector<8x256xf32>
    %c0_67 = arith.constant 0 : index
    %c0_68 = arith.constant 0 : index
    %139 = vector.load %arg19[%c0_67, %c0_68] : memref<256x256xbf16, #tpu.memory_space<vmem>>, vector<256x256xbf16>
    %cst_69 = arith.constant dense<0.000000e+00> : vector<16x256xf32>
    %140 = tpu.matmul %133, %139, %cst_69 {dimension_numbers = #tpu.dot_dimension_numbers<[1], [0], [0], [1], [0, 0, 1, 1], [], []>} : vector<16x256xbf16>, vector<256x256xbf16>, vector<16x256xf32> -> vector<16x256xf32>
    %c0_70 = arith.constant 0 : index
    %c0_71 = arith.constant 0 : index
    %141 = vector.load %arg20[%c0_70, %c0_71] : memref<1x256xf32, #tpu.memory_space<vmem>>, vector<1x256xf32>
    %142 = vector.broadcast %141 : vector<1x256xf32> to vector<16x256xf32>
    %143 = arith.addf %140, %142 : vector<16x256xf32>
    %c0_72 = arith.constant 0 : index
    %c0_73 = arith.constant 0 : index
    %144 = vector.load %arg21[%c0_72, %c0_73] : memref<256x256xbf16, #tpu.memory_space<vmem>>, vector<256x256xbf16>
    %cst_74 = arith.constant dense<0.000000e+00> : vector<16x256xf32>
    %145 = tpu.matmul %133, %144, %cst_74 {dimension_numbers = #tpu.dot_dimension_numbers<[1], [0], [0], [1], [0, 0, 1, 1], [], []>} : vector<16x256xbf16>, vector<256x256xbf16>, vector<16x256xf32> -> vector<16x256xf32>
    %c0_75 = arith.constant 0 : index
    %c0_76 = arith.constant 0 : index
    %146 = vector.load %arg22[%c0_75, %c0_76] : memref<1x256xf32, #tpu.memory_space<vmem>>, vector<1x256xf32>
    %147 = vector.broadcast %146 : vector<1x256xf32> to vector<16x256xf32>
    %148 = arith.addf %145, %147 : vector<16x256xf32>
    %cst_77 = arith.constant 0.000000e+00 : f32
    %149 = vector.broadcast %cst_77 : f32 to vector<8x256xf32>
    %150 = vector.extract_strided_slice %138 {offsets = [0, 0], sizes = [8, 128], strides = [1, 1]} : vector<8x256xf32> to vector<8x128xf32>
    %151 = arith.truncf %150 : vector<8x128xf32> to vector<8x128xbf16>
    %152 = vector.extract_strided_slice %143 {offsets = [0, 0], sizes = [16, 128], strides = [1, 1]} : vector<16x256xf32> to vector<16x128xf32>
    %153 = arith.truncf %152 : vector<16x128xf32> to vector<16x128xbf16>
    %154 = vector.extract_strided_slice %148 {offsets = [0, 0], sizes = [16, 128], strides = [1, 1]} : vector<16x256xf32> to vector<16x128xf32>
    %155 = arith.truncf %154 : vector<16x128xf32> to vector<16x128xbf16>
    %cst_78 = arith.constant dense<0.000000e+00> : vector<8x16xf32>
    %156 = tpu.matmul %151, %153, %cst_78 {dimension_numbers = #tpu.dot_dimension_numbers<[1], [1], [0], [0], [0, 0, 1, 0], [], []>} : vector<8x128xbf16>, vector<16x128xbf16>, vector<8x16xf32> -> vector<8x16xf32>
    %cst_79 = arith.constant -1.000000e+09 : f32
    %157 = vector.shape_cast %11 : vector<1x16xi1> to vector<1x16xi1>
    %158 = vector.broadcast %157 : vector<1x16xi1> to vector<8x16xi1>
    %159 = vector.broadcast %cst_79 : f32 to vector<8x16xf32>
    %160 = arith.select %158, %156, %159 : vector<8x16xi1>, vector<8x16xf32>
    %cst_80 = arith.constant dense<0xFF800000> : vector<8xf32>
    %161 = vector.multi_reduction <maximumf>, %160, %cst_80 [1] : vector<8x16xf32> to vector<8xf32>
    %162 = vector.shape_cast %161 : vector<8xf32> to vector<8x1xf32>
    %163 = vector.broadcast %162 : vector<8x1xf32> to vector<8x16xf32>
    %164 = arith.subf %160, %163 : vector<8x16xf32>
    %165 = math.exp %164 : vector<8x16xf32>
    %cst_81 = arith.constant dense<0.000000e+00> : vector<8xf32>
    %166 = vector.multi_reduction <add>, %165, %cst_81 [1] : vector<8x16xf32> to vector<8xf32>
    %167 = vector.shape_cast %166 : vector<8xf32> to vector<8x1xf32>
    %168 = tpu.reciprocal %167 {approx = true} : vector<8x1xf32> -> vector<8x1xf32>
    %169 = vector.broadcast %168 : vector<8x1xf32> to vector<8x16xf32>
    %170 = arith.mulf %165, %169 : vector<8x16xf32>
    %171 = arith.truncf %170 : vector<8x16xf32> to vector<8x16xbf16>
    %cst_82 = arith.constant dense<0.000000e+00> : vector<8x128xf32>
    %172 = tpu.matmul %171, %155, %cst_82 {dimension_numbers = #tpu.dot_dimension_numbers<[1], [0], [0], [1], [0, 0, 1, 1], [], []>} : vector<8x16xbf16>, vector<16x128xbf16>, vector<8x128xf32> -> vector<8x128xf32>
    %173 = arith.truncf %172 : vector<8x128xf32> to vector<8x128xbf16>
    %c0_83 = arith.constant 0 : index
    %c0_84 = arith.constant 0 : index
    %174 = vector.load %arg23[%c0_83, %c0_84] : memref<256x256xbf16, #tpu.memory_space<vmem>>, vector<128x256xbf16>
    %cst_85 = arith.constant dense<0.000000e+00> : vector<8x256xf32>
    %175 = tpu.matmul %173, %174, %cst_85 {dimension_numbers = #tpu.dot_dimension_numbers<[1], [0], [0], [1], [0, 0, 1, 1], [], []>} : vector<8x128xbf16>, vector<128x256xbf16>, vector<8x256xf32> -> vector<8x256xf32>
    %176 = arith.addf %149, %175 : vector<8x256xf32>
    %177 = vector.extract_strided_slice %138 {offsets = [0, 128], sizes = [8, 128], strides = [1, 1]} : vector<8x256xf32> to vector<8x128xf32>
    %178 = arith.truncf %177 : vector<8x128xf32> to vector<8x128xbf16>
    %179 = vector.extract_strided_slice %143 {offsets = [0, 128], sizes = [16, 128], strides = [1, 1]} : vector<16x256xf32> to vector<16x128xf32>
    %180 = arith.truncf %179 : vector<16x128xf32> to vector<16x128xbf16>
    %181 = vector.extract_strided_slice %148 {offsets = [0, 128], sizes = [16, 128], strides = [1, 1]} : vector<16x256xf32> to vector<16x128xf32>
    %182 = arith.truncf %181 : vector<16x128xf32> to vector<16x128xbf16>
    %cst_86 = arith.constant dense<0.000000e+00> : vector<8x16xf32>
    %183 = tpu.matmul %178, %180, %cst_86 {dimension_numbers = #tpu.dot_dimension_numbers<[1], [1], [0], [0], [0, 0, 1, 0], [], []>} : vector<8x128xbf16>, vector<16x128xbf16>, vector<8x16xf32> -> vector<8x16xf32>
    %cst_87 = arith.constant -1.000000e+09 : f32
    %184 = vector.shape_cast %11 : vector<1x16xi1> to vector<1x16xi1>
    %185 = vector.broadcast %184 : vector<1x16xi1> to vector<8x16xi1>
    %186 = vector.broadcast %cst_87 : f32 to vector<8x16xf32>
    %187 = arith.select %185, %183, %186 : vector<8x16xi1>, vector<8x16xf32>
    %cst_88 = arith.constant dense<0xFF800000> : vector<8xf32>
    %188 = vector.multi_reduction <maximumf>, %187, %cst_88 [1] : vector<8x16xf32> to vector<8xf32>
    %189 = vector.shape_cast %188 : vector<8xf32> to vector<8x1xf32>
    %190 = vector.broadcast %189 : vector<8x1xf32> to vector<8x16xf32>
    %191 = arith.subf %187, %190 : vector<8x16xf32>
    %192 = math.exp %191 : vector<8x16xf32>
    %cst_89 = arith.constant dense<0.000000e+00> : vector<8xf32>
    %193 = vector.multi_reduction <add>, %192, %cst_89 [1] : vector<8x16xf32> to vector<8xf32>
    %194 = vector.shape_cast %193 : vector<8xf32> to vector<8x1xf32>
    %195 = tpu.reciprocal %194 {approx = true} : vector<8x1xf32> -> vector<8x1xf32>
    %196 = vector.broadcast %195 : vector<8x1xf32> to vector<8x16xf32>
    %197 = arith.mulf %192, %196 : vector<8x16xf32>
    %198 = arith.truncf %197 : vector<8x16xf32> to vector<8x16xbf16>
    %cst_90 = arith.constant dense<0.000000e+00> : vector<8x128xf32>
    %199 = tpu.matmul %198, %182, %cst_90 {dimension_numbers = #tpu.dot_dimension_numbers<[1], [0], [0], [1], [0, 0, 1, 1], [], []>} : vector<8x16xbf16>, vector<16x128xbf16>, vector<8x128xf32> -> vector<8x128xf32>
    %200 = arith.truncf %199 : vector<8x128xf32> to vector<8x128xbf16>
    %c128_91 = arith.constant 128 : index
    %c0_92 = arith.constant 0 : index
    %201 = vector.load %arg23[%c128_91, %c0_92] : memref<256x256xbf16, #tpu.memory_space<vmem>>, vector<128x256xbf16>
    %cst_93 = arith.constant dense<0.000000e+00> : vector<8x256xf32>
    %202 = tpu.matmul %200, %201, %cst_93 {dimension_numbers = #tpu.dot_dimension_numbers<[1], [0], [0], [1], [0, 0, 1, 1], [], []>} : vector<8x128xbf16>, vector<128x256xbf16>, vector<8x256xf32> -> vector<8x256xf32>
    %203 = arith.addf %176, %202 : vector<8x256xf32>
    %c0_94 = arith.constant 0 : index
    %c0_95 = arith.constant 0 : index
    %204 = vector.load %arg24[%c0_94, %c0_95] : memref<1x256xf32, #tpu.memory_space<vmem>>, vector<1x256xf32>
    %205 = vector.broadcast %204 : vector<1x256xf32> to vector<8x256xf32>
    %206 = arith.addf %203, %205 : vector<8x256xf32>
    %207 = arith.addf %107, %206 : vector<8x256xf32>
    %c0_96 = arith.constant 0 : index
    %c0_97 = arith.constant 0 : index
    %208 = vector.load %arg25[%c0_96, %c0_97] : memref<1x256xf32, #tpu.memory_space<vmem>>, vector<1x256xf32>
    %c0_98 = arith.constant 0 : index
    %c0_99 = arith.constant 0 : index
    %209 = vector.load %arg26[%c0_98, %c0_99] : memref<1x256xf32, #tpu.memory_space<vmem>>, vector<1x256xf32>
    %cst_100 = arith.constant dense<0.000000e+00> : vector<8xf32>
    %210 = vector.multi_reduction <add>, %207, %cst_100 [1] : vector<8x256xf32> to vector<8xf32>
    %211 = vector.shape_cast %210 : vector<8xf32> to vector<8x1xf32>
    %cst_101 = arith.constant 2.560000e+02 : f32
    %212 = vector.broadcast %cst_101 : f32 to vector<8x1xf32>
    %213 = arith.divf %211, %212 : vector<8x1xf32>
    %214 = vector.broadcast %213 : vector<8x1xf32> to vector<8x256xf32>
    %215 = arith.subf %207, %214 : vector<8x256xf32>
    %216 = arith.mulf %215, %215 : vector<8x256xf32>
    %cst_102 = arith.constant dense<0.000000e+00> : vector<8xf32>
    %217 = vector.multi_reduction <add>, %216, %cst_102 [1] : vector<8x256xf32> to vector<8xf32>
    %218 = vector.shape_cast %217 : vector<8xf32> to vector<8x1xf32>
    %cst_103 = arith.constant 2.560000e+02 : f32
    %219 = vector.broadcast %cst_103 : f32 to vector<8x1xf32>
    %220 = arith.divf %218, %219 : vector<8x1xf32>
    %221 = vector.broadcast %213 : vector<8x1xf32> to vector<8x256xf32>
    %222 = arith.subf %207, %221 : vector<8x256xf32>
    %cst_104 = arith.constant 9.99999974E-6 : f32
    %223 = vector.broadcast %cst_104 : f32 to vector<8x1xf32>
    %224 = arith.addf %220, %223 : vector<8x1xf32>
    %225 = math.rsqrt %224 : vector<8x1xf32>
    %226 = vector.broadcast %225 : vector<8x1xf32> to vector<8x256xf32>
    %227 = arith.mulf %222, %226 : vector<8x256xf32>
    %228 = vector.broadcast %208 : vector<1x256xf32> to vector<8x256xf32>
    %229 = arith.mulf %227, %228 : vector<8x256xf32>
    %230 = vector.broadcast %209 : vector<1x256xf32> to vector<8x256xf32>
    %231 = arith.addf %229, %230 : vector<8x256xf32>
    %232 = arith.truncf %231 : vector<8x256xf32> to vector<8x256xbf16>
    %cst_105 = arith.constant 0.000000e+00 : f32
    %233 = vector.broadcast %cst_105 : f32 to vector<8x256xf32>
    %c0_106 = arith.constant 0 : index
    %c0_107 = arith.constant 0 : index
    %234 = vector.load %arg27[%c0_106, %c0_107] : memref<256x512xbf16, #tpu.memory_space<vmem>>, vector<256x256xbf16>
    %cst_108 = arith.constant dense<0.000000e+00> : vector<8x256xf32>
    %235 = tpu.matmul %232, %234, %cst_108 {dimension_numbers = #tpu.dot_dimension_numbers<[1], [0], [0], [1], [0, 0, 1, 1], [], []>} : vector<8x256xbf16>, vector<256x256xbf16>, vector<8x256xf32> -> vector<8x256xf32>
    %c0_109 = arith.constant 0 : index
    %c0_110 = arith.constant 0 : index
    %236 = vector.load %arg28[%c0_109, %c0_110] : memref<1x512xf32, #tpu.memory_space<vmem>>, vector<1x256xf32>
    %237 = vector.broadcast %236 : vector<1x256xf32> to vector<8x256xf32>
    %238 = arith.addf %235, %237 : vector<8x256xf32>
    %cst_111 = arith.constant 0.000000e+00 : f32
    %239 = vector.broadcast %cst_111 : f32 to vector<8x256xf32>
    %240 = arith.maximumf %238, %239 : vector<8x256xf32>
    %241 = arith.truncf %240 : vector<8x256xf32> to vector<8x256xbf16>
    %c0_112 = arith.constant 0 : index
    %c0_113 = arith.constant 0 : index
    %242 = vector.load %arg29[%c0_112, %c0_113] : memref<512x256xbf16, #tpu.memory_space<vmem>>, vector<256x256xbf16>
    %cst_114 = arith.constant dense<0.000000e+00> : vector<8x256xf32>
    %243 = tpu.matmul %241, %242, %cst_114 {dimension_numbers = #tpu.dot_dimension_numbers<[1], [0], [0], [1], [0, 0, 1, 1], [], []>} : vector<8x256xbf16>, vector<256x256xbf16>, vector<8x256xf32> -> vector<8x256xf32>
    %244 = arith.addf %233, %243 : vector<8x256xf32>
    %c0_115 = arith.constant 0 : index
    %c256 = arith.constant 256 : index
    %245 = vector.load %arg27[%c0_115, %c256] : memref<256x512xbf16, #tpu.memory_space<vmem>>, vector<256x256xbf16>
    %cst_116 = arith.constant dense<0.000000e+00> : vector<8x256xf32>
    %246 = tpu.matmul %232, %245, %cst_116 {dimension_numbers = #tpu.dot_dimension_numbers<[1], [0], [0], [1], [0, 0, 1, 1], [], []>} : vector<8x256xbf16>, vector<256x256xbf16>, vector<8x256xf32> -> vector<8x256xf32>
    %c0_117 = arith.constant 0 : index
    %c256_118 = arith.constant 256 : index
    %247 = vector.load %arg28[%c0_117, %c256_118] : memref<1x512xf32, #tpu.memory_space<vmem>>, vector<1x256xf32>
    %248 = vector.broadcast %247 : vector<1x256xf32> to vector<8x256xf32>
    %249 = arith.addf %246, %248 : vector<8x256xf32>
    %cst_119 = arith.constant 0.000000e+00 : f32
    %250 = vector.broadcast %cst_119 : f32 to vector<8x256xf32>
    %251 = arith.maximumf %249, %250 : vector<8x256xf32>
    %252 = arith.truncf %251 : vector<8x256xf32> to vector<8x256xbf16>
    %c256_120 = arith.constant 256 : index
    %c0_121 = arith.constant 0 : index
    %253 = vector.load %arg29[%c256_120, %c0_121] : memref<512x256xbf16, #tpu.memory_space<vmem>>, vector<256x256xbf16>
    %cst_122 = arith.constant dense<0.000000e+00> : vector<8x256xf32>
    %254 = tpu.matmul %252, %253, %cst_122 {dimension_numbers = #tpu.dot_dimension_numbers<[1], [0], [0], [1], [0, 0, 1, 1], [], []>} : vector<8x256xbf16>, vector<256x256xbf16>, vector<8x256xf32> -> vector<8x256xf32>
    %255 = arith.addf %244, %254 : vector<8x256xf32>
    %c0_123 = arith.constant 0 : index
    %c0_124 = arith.constant 0 : index
    %256 = vector.load %arg30[%c0_123, %c0_124] : memref<1x256xf32, #tpu.memory_space<vmem>>, vector<1x256xf32>
    %257 = vector.broadcast %256 : vector<1x256xf32> to vector<8x256xf32>
    %258 = arith.addf %255, %257 : vector<8x256xf32>
    %259 = arith.addf %207, %258 : vector<8x256xf32>
    %c0_125 = arith.constant 0 : index
    %c0_126 = arith.constant 0 : index
    %c0_127 = arith.constant 0 : index
    %260 = vector.load %arg31[%c0_125, %c0_126, %c0_127] : memref<1x8x256xf32, #tpu.memory_space<vmem>>, vector<1x8x256xf32>
    %261 = vector.shape_cast %260 : vector<1x8x256xf32> to vector<8x256xf32>
    %262 = vector.shape_cast %259 : vector<8x256xf32> to vector<1x8x256xf32>
    tpu.vector_store %arg31[%c0_125, %c0_126, %c0_127], %262 {strides = array<i32>} : memref<1x8x256xf32, #tpu.memory_space<vmem>>, vector<1x8x256xf32>,
    return
  }
  func.func @transform_0(%arg0: i32) -> (i32, i32, i32) {
    %c0_i32 = arith.constant 0 : i32
    %c0_i32_0 = arith.constant 0 : i32
    %c0_i32_1 = arith.constant 0 : i32
    return %arg0, %c0_i32, %c0_i32_0 : i32, i32, i32
  }
  func.func @transform_1(%arg0: i32) -> (i32, i32, i32) {
    %c0_i32 = arith.constant 0 : i32
    %c0_i32_0 = arith.constant 0 : i32
    %c0_i32_1 = arith.constant 0 : i32
    return %arg0, %c0_i32, %c0_i32_0 : i32, i32, i32
  }
  func.func @transform_2(%arg0: i32) -> (i32, i32, i32) {
    %c0_i32 = arith.constant 0 : i32
    %c0_i32_0 = arith.constant 0 : i32
    %c0_i32_1 = arith.constant 0 : i32
    %c0_i32_2 = arith.constant 0 : i32
    return %c0_i32, %c0_i32_0, %c0_i32_1 : i32, i32, i32
  }
  func.func @transform_3(%arg0: i32) -> (i32, i32, i32) {
    %c0_i32 = arith.constant 0 : i32
    %c0_i32_0 = arith.constant 0 : i32
    %c0_i32_1 = arith.constant 0 : i32
    return %arg0, %c0_i32, %c0_i32_0 : i32, i32, i32
  }
  func.func @transform_4(%arg0: i32) -> (i32, i32) {
    %c0_i32 = arith.constant 0 : i32
    %c0_i32_0 = arith.constant 0 : i32
    %c0_i32_1 = arith.constant 0 : i32
    return %c0_i32, %c0_i32_0 : i32, i32
  }
  func.func @transform_5(%arg0: i32) -> (i32, i32) {
    %c0_i32 = arith.constant 0 : i32
    %c0_i32_0 = arith.constant 0 : i32
    %c0_i32_1 = arith.constant 0 : i32
    return %c0_i32, %c0_i32_0 : i32, i32
  }
  func.func @transform_6(%arg0: i32) -> (i32, i32) {
    %c0_i32 = arith.constant 0 : i32
    %c0_i32_0 = arith.constant 0 : i32
    %c0_i32_1 = arith.constant 0 : i32
    return %c0_i32, %c0_i32_0 : i32, i32
  }
  func.func @transform_7(%arg0: i32) -> (i32, i32) {
    %c0_i32 = arith.constant 0 : i32
    %c0_i32_0 = arith.constant 0 : i32
    %c0_i32_1 = arith.constant 0 : i32
    return %c0_i32, %c0_i32_0 : i32, i32
  }
  func.func @transform_8(%arg0: i32) -> (i32, i32) {
    %c0_i32 = arith.constant 0 : i32
    %c0_i32_0 = arith.constant 0 : i32
    %c0_i32_1 = arith.constant 0 : i32
    return %c0_i32, %c0_i32_0 : i32, i32
  }
  func.func @transform_9(%arg0: i32) -> (i32, i32) {
    %c0_i32 = arith.constant 0 : i32
    %c0_i32_0 = arith.constant 0 : i32
    %c0_i32_1 = arith.constant 0 : i32
    return %c0_i32, %c0_i32_0 : i32, i32
  }
  func.func @transform_10(%arg0: i32) -> (i32, i32) {
    %c0_i32 = arith.constant 0 : i32
    %c0_i32_0 = arith.constant 0 : i32
    %c0_i32_1 = arith.constant 0 : i32
    return %c0_i32, %c0_i32_0 : i32, i32
  }
  func.func @transform_11(%arg0: i32) -> (i32, i32) {
    %c0_i32 = arith.constant 0 : i32
    %c0_i32_0 = arith.constant 0 : i32
    %c0_i32_1 = arith.constant 0 : i32
    return %c0_i32, %c0_i32_0 : i32, i32
  }
  func.func @transform_12(%arg0: i32) -> (i32, i32) {
    %c0_i32 = arith.constant 0 : i32
    %c0_i32_0 = arith.constant 0 : i32
    %c0_i32_1 = arith.constant 0 : i32
    return %c0_i32, %c0_i32_0 : i32, i32
  }
  func.func @transform_13(%arg0: i32) -> (i32, i32) {
    %c0_i32 = arith.constant 0 : i32
    %c0_i32_0 = arith.constant 0 : i32
    %c0_i32_1 = arith.constant 0 : i32
    return %c0_i32, %c0_i32_0 : i32, i32
  }
  func.func @transform_14(%arg0: i32) -> (i32, i32) {
    %c0_i32 = arith.constant 0 : i32
    %c0_i32_0 = arith.constant 0 : i32
    %c0_i32_1 = arith.constant 0 : i32
    return %c0_i32, %c0_i32_0 : i32, i32
  }
  func.func @transform_15(%arg0: i32) -> (i32, i32) {
    %c0_i32 = arith.constant 0 : i32
    %c0_i32_0 = arith.constant 0 : i32
    %c0_i32_1 = arith.constant 0 : i32
    return %c0_i32, %c0_i32_0 : i32, i32
  }
  func.func @transform_16(%arg0: i32) -> (i32, i32) {
    %c0_i32 = arith.constant 0 : i32
    %c0_i32_0 = arith.constant 0 : i32
    %c0_i32_1 = arith.constant 0 : i32
    return %c0_i32, %c0_i32_0 : i32, i32
  }
  func.func @transform_17(%arg0: i32) -> (i32, i32) {
    %c0_i32 = arith.constant 0 : i32
    %c0_i32_0 = arith.constant 0 : i32
    %c0_i32_1 = arith.constant 0 : i32
    return %c0_i32, %c0_i32_0 : i32, i32
  }
  func.func @transform_18(%arg0: i32) -> (i32, i32) {
    %c0_i32 = arith.constant 0 : i32
    %c0_i32_0 = arith.constant 0 : i32
    %c0_i32_1 = arith.constant 0 : i32
    return %c0_i32, %c0_i32_0 : i32, i32
  }
  func.func @transform_19(%arg0: i32) -> (i32, i32) {
    %c0_i32 = arith.constant 0 : i32
    %c0_i32_0 = arith.constant 0 : i32
    %c0_i32_1 = arith.constant 0 : i32
    return %c0_i32, %c0_i32_0 : i32, i32
  }
  func.func @transform_20(%arg0: i32) -> (i32, i32) {
    %c0_i32 = arith.constant 0 : i32
    %c0_i32_0 = arith.constant 0 : i32
    %c0_i32_1 = arith.constant 0 : i32
    return %c0_i32, %c0_i32_0 : i32, i32
  }
  func.func @transform_21(%arg0: i32) -> (i32, i32) {
    %c0_i32 = arith.constant 0 : i32
    %c0_i32_0 = arith.constant 0 : i32
    %c0_i32_1 = arith.constant 0 : i32
    return %c0_i32, %c0_i32_0 : i32, i32
  }
  func.func @transform_22(%arg0: i32) -> (i32, i32) {
    %c0_i32 = arith.constant 0 : i32
    %c0_i32_0 = arith.constant 0 : i32
    %c0_i32_1 = arith.constant 0 : i32
    return %c0_i32, %c0_i32_0 : i32, i32
  }
  func.func @transform_23(%arg0: i32) -> (i32, i32) {
    %c0_i32 = arith.constant 0 : i32
    %c0_i32_0 = arith.constant 0 : i32
    %c0_i32_1 = arith.constant 0 : i32
    return %c0_i32, %c0_i32_0 : i32, i32
  }
  func.func @transform_24(%arg0: i32) -> (i32, i32) {
    %c0_i32 = arith.constant 0 : i32
    %c0_i32_0 = arith.constant 0 : i32
    %c0_i32_1 = arith.constant 0 : i32
    return %c0_i32, %c0_i32_0 : i32, i32
  }
  func.func @transform_25(%arg0: i32) -> (i32, i32) {
    %c0_i32 = arith.constant 0 : i32
    %c0_i32_0 = arith.constant 0 : i32
    %c0_i32_1 = arith.constant 0 : i32
    return %c0_i32, %c0_i32_0 : i32, i32
  }
  func.func @transform_26(%arg0: i32) -> (i32, i32) {
    %c0_i32 = arith.constant 0 : i32
    %c0_i32_0 = arith.constant 0 : i32
    %c0_i32_1 = arith.constant 0 : i32
    return %c0_i32, %c0_i32_0 : i32, i32
  }
  func.func @transform_27(%arg0: i32) -> (i32, i32) {
    %c0_i32 = arith.constant 0 : i32
    %c0_i32_0 = arith.constant 0 : i32
    %c0_i32_1 = arith.constant 0 : i32
    return %c0_i32, %c0_i32_0 : i32, i32
  }
  func.func @transform_28(%arg0: i32) -> (i32, i32) {
    %c0_i32 = arith.constant 0 : i32
    %c0_i32_0 = arith.constant 0 : i32
    %c0_i32_1 = arith.constant 0 : i32
    return %c0_i32, %c0_i32_0 : i32, i32
  }
  func.func @transform_29(%arg0: i32) -> (i32, i32) {
    %c0_i32 = arith.constant 0 : i32
    %c0_i32_0 = arith.constant 0 : i32
    %c0_i32_1 = arith.constant 0 : i32
    return %c0_i32, %c0_i32_0 : i32, i32
  }
  func.func @transform_30(%arg0: i32) -> (i32, i32, i32) {
    %c0_i32 = arith.constant 0 : i32
    %c0_i32_0 = arith.constant 0 : i32
    %c0_i32_1 = arith.constant 0 : i32
    return %arg0, %c0_i32, %c0_i32_0 : i32, i32, i32
  }
}

</mosaic_0001>

<llo_original>
// kernel: tpu_custom_call.1
$region0: #{tpu_custom_call.1}
  #allocation0 [shape = 'u32[]', space=smem, size = 0x4, offset = 0x4, fixed_abs, tag = 'smem constant byte address 0x4 - core index']
  #allocation1 [shape = 'u32[144,128]{1,0:T(1,128)}', space=vmem, size = 0x12000, scoped, tag = 'internal scratch']
  %s0 = inlined_call_operand.smem [shape: u32[31], index: -1, kind: input, shape index: {}]
  %s1 = sld [smem:[%s0]]
  %s2 = scalar_lea.smem %s0, 1
  %s3 = sld [smem:[%s2]]
  %s4 = scalar_lea.smem %s0, 2
  %s5 = sld [smem:[%s4]]
  %s6 = scalar_lea.smem %s0, 3
  %s7 = sld [smem:[%s6]]
  %s8 = scalar_lea.smem %s0, 4
  %s9 = sld [smem:[%s8]]
  %s10 = scalar_lea.smem %s0, 5
  %s11 = sld [smem:[%s10]]
  %s12 = scalar_lea.smem %s0, 6
  %s13 = sld [smem:[%s12]]
  %s14 = scalar_lea.smem %s0, 7
  %s15 = sld [smem:[%s14]]
  %s16 = scalar_lea.smem %s0, 8
  %s17 = sld [smem:[%s16]]
  %s18 = scalar_lea.smem %s0, 9
  %s19 = sld [smem:[%s18]]
  %s20 = scalar_lea.smem %s0, 10
  %s21 = sld [smem:[%s20]]
  %s22 = scalar_lea.smem %s0, 11
  %s23 = sld [smem:[%s22]]
  %s24 = scalar_lea.smem %s0, 12
  %s25 = sld [smem:[%s24]]
  %s26 = scalar_lea.smem %s0, 13
  %s27 = sld [smem:[%s26]]
  %s28 = scalar_lea.smem %s0, 14
  %s29 = sld [smem:[%s28]]
  %s30 = scalar_lea.smem %s0, 15
  %s31 = sld [smem:[%s30]]
  %s32 = scalar_lea.smem %s0, 16
  %s33 = sld [smem:[%s32]]
  %s34 = scalar_lea.smem %s0, 17
  %s35 = sld [smem:[%s34]]
  %s36 = scalar_lea.smem %s0, 18
  %s37 = sld [smem:[%s36]]
  %s38 = scalar_lea.smem %s0, 19
  %s39 = sld [smem:[%s38]]
  %s40 = scalar_lea.smem %s0, 20
  %s41 = sld [smem:[%s40]]
  %s42 = scalar_lea.smem %s0, 21
  %s43 = sld [smem:[%s42]]
  %s44 = scalar_lea.smem %s0, 22
  %s45 = sld [smem:[%s44]]
  %s46 = scalar_lea.smem %s0, 23
  %s47 = sld [smem:[%s46]]
  %s48 = scalar_lea.smem %s0, 24
  %s49 = sld [smem:[%s48]]
  %s50 = scalar_lea.smem %s0, 25
  %s51 = sld [smem:[%s50]]
  %s52 = scalar_lea.smem %s0, 26
  %s53 = sld [smem:[%s52]]
  %s54 = scalar_lea.smem %s0, 27
  %s55 = sld [smem:[%s54]]
  %s56 = scalar_lea.smem %s0, 28
  %s57 = sld [smem:[%s56]]
  %s58 = scalar_lea.smem %s0, 29
  %s59 = sld [smem:[%s58]]
  %s60 = scalar_lea.smem %s0, 30
  %s61 = sld [smem:[%s60]]
  %s62 = sld [smem:[#allocation0]]
  $region197: #{tpu_custom_call.1} parent=0
    _
  %s64 = ssub.s32 1, %s62
  %s65 = scalar_select 0, %s64, %s62
  $region1: #{tpu_custom_call.1} parent=0
    #allocation2 [shape = 'u8[16384]{0}', space=vmem, size = 0x4000, scoped, tag = 'input window, operand 0']
    #allocation3 [shape = 's32[2]{0}', space=sflag, size = 0x8, scoped, tag = 'scoped memory for tpu_custom_call.1']
    #allocation4 [shape = 's32[2]{0}', space=sflag, size = 0x8, scoped, tag = 'scoped memory for tpu_custom_call.1']
    #allocation5 [shape = 'u8[131072]{0}', space=vmem, size = 0x20000, scoped, tag = 'input window, operand 6, single buffered']
    #allocation6 [shape = 's32[1]{0}', space=sflag, size = 0x4, scoped, tag = 'scoped memory for tpu_custom_call.1']
    #allocation7 [shape = 'u8[131072]{0}', space=vmem, size = 0x20000, scoped, tag = 'input window, operand 8, single buffered']
    #allocation8 [shape = 'u8[131072]{0}', space=vmem, size = 0x20000, scoped, tag = 'input window, operand 10, single buffered']
    #allocation9 [shape = 's32[1]{0}', space=sflag, size = 0x4, scoped, tag = 'scoped memory for tpu_custom_call.1']
    #allocation10 [shape = 'u8[131072]{0}', space=vmem, size = 0x20000, scoped, tag = 'input window, operand 12, single buffered']
    #allocation11 [shape = 'u8[131072]{0}', space=vmem, size = 0x20000, scoped, tag = 'input window, operand 16, single buffered']
    #allocation12 [shape = 's32[1]{0}', space=sflag, size = 0x4, scoped, tag = 'scoped memory for tpu_custom_call.1']
    #allocation13 [shape = 'u8[131072]{0}', space=vmem, size = 0x20000, scoped, tag = 'input window, operand 18, single buffered']
    #allocation14 [shape = 'u8[131072]{0}', space=vmem, size = 0x20000, scoped, tag = 'input window, operand 20, single buffered']
    #allocation15 [shape = 's32[1]{0}', space=sflag, size = 0x4, scoped, tag = 'scoped memory for tpu_custom_call.1']
    #allocation16 [shape = 'u8[131072]{0}', space=vmem, size = 0x20000, scoped, tag = 'input window, operand 22, single buffered']
    #allocation17 [shape = 'u8[262144]{0}', space=vmem, size = 0x40000, scoped, tag = 'input window, operand 26, single buffered']
    #allocation18 [shape = 's32[1]{0}', space=sflag, size = 0x4, scoped, tag = 'scoped memory for tpu_custom_call.1']
    #allocation19 [shape = 'u8[262144]{0}', space=vmem, size = 0x40000, scoped, tag = 'input window, operand 28, single buffered']
    #allocation20 [shape = 'u8[16384]{0}', space=vmem, size = 0x4000, scoped, tag = 'output window, operand 0']
    %66 = vsyncpa [#allocation3], 0
    %s67 = scalar_lea.sflag [#allocation3], 1
    %68 = vsyncpa %s67, 0
    %69 = vsyncpa [#allocation6], 0
    %70 = vsyncpa [#allocation9], 0
    %71 = vsyncpa [#allocation12], 0
    %72 = vsyncpa [#allocation15], 0
    %73 = vsyncpa [#allocation18], 0
    %74 = vsyncpa [#allocation4], 0
    %s75 = scalar_lea.sflag [#allocation4], 1
    %76 = vsyncpa %s75, 0
    loop: start=0, step=1, limit=4
    $region2: #{tpu_custom_call.1} parent=1 // loop_pre_header
      _
    $region3: #{tpu_custom_call.1} parent=1 // loop_header
      %s78 = sphi 0, %s82
      %p79 = scmp.ge.s32.totalorder %s78, 4
      %s88 = sphi 0, %s90
      %s91 = sphi 0, %s88
      %s92 = sphi 0, %s91
      %s108 = sphi 0, %s92
      %s114 = sphi 0, %s116
      %s117 = sphi 0, %s114
      %s118 = sphi 0, %s117
      %s134 = sphi 0, %s118
      %s138 = sphi 0, %s138
      %s140 = sphi 0, %s138
      %s141 = sphi 0, %s140
      %s155 = sphi 0, %s141
      %s161 = sphi 0, %s163
      %s164 = sphi 0, %s161
      %s165 = sphi 0, %s164
      %s181 = sphi 0, %s165
      %s185 = sphi 0, %s185
      %s187 = sphi 0, %s185
      %s188 = sphi 0, %s187
      %s202 = sphi 0, %s188
      %s206 = sphi 0, %s206
      %s208 = sphi 0, %s206
      %s209 = sphi 0, %s208
      %s223 = sphi 0, %s209
      %s227 = sphi 0, %s227
      %s229 = sphi 0, %s227
      %s230 = sphi 0, %s229
      %s244 = sphi 0, %s230
      %s248 = sphi 0, %s248
      %s250 = sphi 0, %s248
      %s251 = sphi 0, %s250
      %s265 = sphi 0, %s251
      %s269 = sphi 0, %s269
      %s271 = sphi 0, %s269
      %s272 = sphi 0, %s271
      %s286 = sphi 0, %s272
      %s290 = sphi 0, %s290
      %s292 = sphi 0, %s290
      %s293 = sphi 0, %s292
      %s307 = sphi 0, %s293
      %s311 = sphi 0, %s311
      %s313 = sphi 0, %s311
      %s314 = sphi 0, %s313
      %s328 = sphi 0, %s314
      %s332 = sphi 0, %s332
      %s334 = sphi 0, %s332
      %s335 = sphi 0, %s334
      %s349 = sphi 0, %s335
      %s353 = sphi 0, %s353
      %s355 = sphi 0, %s353
      %s356 = sphi 0, %s355
      %s370 = sphi 0, %s356
      %s374 = sphi 0, %s374
      %s376 = sphi 0, %s374
      %s377 = sphi 0, %s376
      %s391 = sphi 0, %s377
      %s395 = sphi 0, %s395
      %s397 = sphi 0, %s395
      %s398 = sphi 0, %s397
      %s412 = sphi 0, %s398
      %s416 = sphi 0, %s416
      %s418 = sphi 0, %s416
      %s419 = sphi 0, %s418
      %s433 = sphi 0, %s419
      %s437 = sphi 0, %s437
      %s439 = sphi 0, %s437
      %s440 = sphi 0, %s439
      %s454 = sphi 0, %s440
      %s458 = sphi 0, %s458
      %s460 = sphi 0, %s458
      %s461 = sphi 0, %s460
      %s475 = sphi 0, %s461
      %s479 = sphi 0, %s479
      %s481 = sphi 0, %s479
      %s482 = sphi 0, %s481
      %s496 = sphi 0, %s482
      %s500 = sphi 0, %s500
      %s502 = sphi 0, %s500
      %s503 = sphi 0, %s502
      %s517 = sphi 0, %s503
      %s521 = sphi 0, %s521
      %s523 = sphi 0, %s521
      %s524 = sphi 0, %s523
      %s538 = sphi 0, %s524
      %s542 = sphi 0, %s542
      %s544 = sphi 0, %s542
      %s545 = sphi 0, %s544
      %s559 = sphi 0, %s545
      %s563 = sphi 0, %s563
      %s565 = sphi 0, %s563
      %s566 = sphi 0, %s565
      %s580 = sphi 0, %s566
      %s584 = sphi 0, %s584
      %s586 = sphi 0, %s584
      %s587 = sphi 0, %s586
      %s601 = sphi 0, %s587
      %s605 = sphi 0, %s605
      %s607 = sphi 0, %s605
      %s608 = sphi 0, %s607
      %s622 = sphi 0, %s608
      %s626 = sphi 0, %s626
      %s628 = sphi 0, %s626
      %s629 = sphi 0, %s628
      %s643 = sphi 0, %s629
      %s647 = sphi 0, %s647
      %s649 = sphi 0, %s647
      %s650 = sphi 0, %s649
      %s664 = sphi 0, %s650
      %s668 = sphi 0, %s668
      %s670 = sphi 0, %s668
      %s671 = sphi 0, %s670
      %s685 = sphi 0, %s671
      %s689 = sphi 0, %s689
      %s691 = sphi 0, %s689
      %s692 = sphi 0, %s691
      %s706 = sphi 0, %s692
      %s710 = sphi 0, %s710
      %s712 = sphi 0, %s710
      %s713 = sphi 0, %s712
      %s727 = sphi 0, %s713
      %s733 = sphi 0, %s735
      %s736 = sphi 0, %s733
      %s737 = sphi 0, %s736
      %s753 = sphi 0, %s737
    $region4: #{tpu_custom_call.1} parent=1 // loop_header_branch
      %81 = sbr.rel (%p79) target = $region8
    $region5: #{tpu_custom_call.1} parent=1 // loop_body
      %s83 = ssub.s32 %s78, 1
      %s84 = ssub.s32 %s78, 2
      %s85 = sadd.s32 %s78, 1
      %s86 = ssub.s32 %s78, %s85
      %p87 = scmp.eq.s32.totalorder %s86, 0
      %s89 = sadd.s32 %s88, 1
      %s90 = scalar_select %p87, %s88, %s89
      %p93 = pneg %p87
      %p94 = scmp.eq.s32.totalorder %s78, 1
      %p95 = por %p93, %p94
      %p96 = scmp.ne.s32.totalorder %s88, %s91
      %p97 = scmp.eq.s32.totalorder %s78, 0
      %p98 = por %p96, %p97
      %p99 = scmp.ne.s32.totalorder %s88, %s91
      %p100 = scmp.eq.s32.totalorder %s83, 1
      %p101 = por %p99, %p100
      %p102 = scmp.ne.s32.totalorder %s91, %s92
      %p103 = scmp.eq.s32.totalorder %s83, 0
      %p104 = por %p102, %p103
      %p105 = scmp.ne.s32.totalorder %s91, %s92
      %p106 = scmp.eq.s32.totalorder %s84, 1
      %p107 = por %p105, %p106
      %p109 = scmp.ne.s32.totalorder %s92, %s108
      %p110 = scmp.eq.s32.totalorder %s84, 0
      %p111 = por %p109, %p110
      %s112 = ssub.s32 %s78, %s85
      %p113 = scmp.eq.s32.totalorder %s112, 0
      %s115 = sadd.s32 %s114, 1
      %s116 = scalar_select %p113, %s114, %s115
      %p119 = pneg %p113
      %p120 = scmp.eq.s32.totalorder %s78, 1
      %p121 = por %p119, %p120
      %p122 = scmp.ne.s32.totalorder %s114, %s117
      %p123 = scmp.eq.s32.totalorder %s78, 0
      %p124 = por %p122, %p123
      %p125 = scmp.ne.s32.totalorder %s114, %s117
      %p126 = scmp.eq.s32.totalorder %s83, 1
      %p127 = por %p125, %p126
      %p128 = scmp.ne.s32.totalorder %s117, %s118
      %p129 = scmp.eq.s32.totalorder %s83, 0
      %p130 = por %p128, %p129
      %p131 = scmp.ne.s32.totalorder %s117, %s118
      %p132 = scmp.eq.s32.totalorder %s84, 1
      %p133 = por %p131, %p132
      %p135 = scmp.ne.s32.totalorder %s118, %s134
      %p136 = scmp.eq.s32.totalorder %s84, 0
      %p137 = por %p135, %p136
      %s139 = sadd.s32 %s138, 1
      %p142 = scmp.eq.s32.totalorder %s78, 1
      %p143 = scmp.ne.s32.totalorder %s138, %s140
      %p144 = scmp.eq.s32.totalorder %s78, 0
      %p145 = por %p143, %p144
      %p146 = scmp.ne.s32.totalorder %s138, %s140
      %p147 = scmp.eq.s32.totalorder %s83, 1
      %p148 = por %p146, %p147
      %p149 = scmp.ne.s32.totalorder %s140, %s141
      %p150 = scmp.eq.s32.totalorder %s83, 0
      %p151 = por %p149, %p150
      %p152 = scmp.ne.s32.totalorder %s140, %s141
      %p153 = scmp.eq.s32.totalorder %s84, 1
      %p154 = por %p152, %p153
      %p156 = scmp.ne.s32.totalorder %s141, %s155
      %p157 = scmp.eq.s32.totalorder %s84, 0
      %p158 = por %p156, %p157
      %s159 = ssub.s32 %s78, %s85
      %p160 = scmp.eq.s32.totalorder %s159, 0
      %s162 = sadd.s32 %s161, 1
      %s163 = scalar_select %p160, %s161, %s162
      %p166 = pneg %p160
      %p167 = scmp.eq.s32.totalorder %s78, 1
      %p168 = por %p166, %p167
      %p169 = scmp.ne.s32.totalorder %s161, %s164
      %p170 = scmp.eq.s32.totalorder %s78, 0
      %p171 = por %p169, %p170
      %p172 = scmp.ne.s32.totalorder %s161, %s164
      %p173 = scmp.eq.s32.totalorder %s83, 1
      %p174 = por %p172, %p173
      %p175 = scmp.ne.s32.totalorder %s164, %s165
      %p176 = scmp.eq.s32.totalorder %s83, 0
      %p177 = por %p175, %p176
      %p178 = scmp.ne.s32.totalorder %s164, %s165
      %p179 = scmp.eq.s32.totalorder %s84, 1
      %p180 = por %p178, %p179
      %p182 = scmp.ne.s32.totalorder %s165, %s181
      %p183 = scmp.eq.s32.totalorder %s84, 0
      %p184 = por %p182, %p183
      %s186 = sadd.s32 %s185, 1
      %p189 = scmp.eq.s32.totalorder %s78, 1
      %p190 = scmp.ne.s32.totalorder %s185, %s187
      %p191 = scmp.eq.s32.totalorder %s78, 0
      %p192 = por %p190, %p191
      %p193 = scmp.ne.s32.totalorder %s185, %s187
      %p194 = scmp.eq.s32.totalorder %s83, 1
      %p195 = por %p193, %p194
      %p196 = scmp.ne.s32.totalorder %s187, %s188
      %p197 = scmp.eq.s32.totalorder %s83, 0
      %p198 = por %p196, %p197
      %p199 = scmp.ne.s32.totalorder %s187, %s188
      %p200 = scmp.eq.s32.totalorder %s84, 1
      %p201 = por %p199, %p200
      %p203 = scmp.ne.s32.totalorder %s188, %s202
      %p204 = scmp.eq.s32.totalorder %s84, 0
      %p205 = por %p203, %p204
      %s207 = sadd.s32 %s206, 1
      %p210 = scmp.eq.s32.totalorder %s78, 1
      %p211 = scmp.ne.s32.totalorder %s206, %s208
      %p212 = scmp.eq.s32.totalorder %s78, 0
      %p213 = por %p211, %p212
      %p214 = scmp.ne.s32.totalorder %s206, %s208
      %p215 = scmp.eq.s32.totalorder %s83, 1
      %p216 = por %p214, %p215
      %p217 = scmp.ne.s32.totalorder %s208, %s209
      %p218 = scmp.eq.s32.totalorder %s83, 0
      %p219 = por %p217, %p218
      %p220 = scmp.ne.s32.totalorder %s208, %s209
      %p221 = scmp.eq.s32.totalorder %s84, 1
      %p222 = por %p220, %p221
      %p224 = scmp.ne.s32.totalorder %s209, %s223
      %p225 = scmp.eq.s32.totalorder %s84, 0
      %p226 = por %p224, %p225
      %s228 = sadd.s32 %s227, 1
      %p231 = scmp.eq.s32.totalorder %s78, 1
      %p232 = scmp.ne.s32.totalorder %s227, %s229
      %p233 = scmp.eq.s32.totalorder %s78, 0
      %p234 = por %p232, %p233
      %p235 = scmp.ne.s32.totalorder %s227, %s229
      %p236 = scmp.eq.s32.totalorder %s83, 1
      %p237 = por %p235, %p236
      %p238 = scmp.ne.s32.totalorder %s229, %s230
      %p239 = scmp.eq.s32.totalorder %s83, 0
      %p240 = por %p238, %p239
      %p241 = scmp.ne.s32.totalorder %s229, %s230
      %p242 = scmp.eq.s32.totalorder %s84, 1
      %p243 = por %p241, %p242
      %p245 = scmp.ne.s32.totalorder %s230, %s244
      %p246 = scmp.eq.s32.totalorder %s84, 0
      %p247 = por %p245, %p246
      %s249 = sadd.s32 %s248, 1
      %p252 = scmp.eq.s32.totalorder %s78, 1
      %p253 = scmp.ne.s32.totalorder %s248, %s250
      %p254 = scmp.eq.s32.totalorder %s78, 0
      %p255 = por %p253, %p254
      %p256 = scmp.ne.s32.totalorder %s248, %s250
      %p257 = scmp.eq.s32.totalorder %s83, 1
      %p258 = por %p256, %p257
      %p259 = scmp.ne.s32.totalorder %s250, %s251
      %p260 = scmp.eq.s32.totalorder %s83, 0
      %p261 = por %p259, %p260
      %p262 = scmp.ne.s32.totalorder %s250, %s251
      %p263 = scmp.eq.s32.totalorder %s84, 1
      %p264 = por %p262, %p263
      %p266 = scmp.ne.s32.totalorder %s251, %s265
      %p267 = scmp.eq.s32.totalorder %s84, 0
      %p268 = por %p266, %p267
      %s270 = sadd.s32 %s269, 1
      %p273 = scmp.eq.s32.totalorder %s78, 1
      %p274 = scmp.ne.s32.totalorder %s269, %s271
      %p275 = scmp.eq.s32.totalorder %s78, 0
      %p276 = por %p274, %p275
      %p277 = scmp.ne.s32.totalorder %s269, %s271
      %p278 = scmp.eq.s32.totalorder %s83, 1
      %p279 = por %p277, %p278
      %p280 = scmp.ne.s32.totalorder %s271, %s272
      %p281 = scmp.eq.s32.totalorder %s83, 0
      %p282 = por %p280, %p281
      %p283 = scmp.ne.s32.totalorder %s271, %s272
      %p284 = scmp.eq.s32.totalorder %s84, 1
      %p285 = por %p283, %p284
      %p287 = scmp.ne.s32.totalorder %s272, %s286
      %p288 = scmp.eq.s32.totalorder %s84, 0
      %p289 = por %p287, %p288
      %s291 = sadd.s32 %s290, 1
      %p294 = scmp.eq.s32.totalorder %s78, 1
      %p295 = scmp.ne.s32.totalorder %s290, %s292
      %p296 = scmp.eq.s32.totalorder %s78, 0
      %p297 = por %p295, %p296
      %p298 = scmp.ne.s32.totalorder %s290, %s292
      %p299 = scmp.eq.s32.totalorder %s83, 1
      %p300 = por %p298, %p299
      %p301 = scmp.ne.s32.totalorder %s292, %s293
      %p302 = scmp.eq.s32.totalorder %s83, 0
      %p303 = por %p301, %p302
      %p304 = scmp.ne.s32.totalorder %s292, %s293
      %p305 = scmp.eq.s32.totalorder %s84, 1
      %p306 = por %p304, %p305
      %p308 = scmp.ne.s32.totalorder %s293, %s307
      %p309 = scmp.eq.s32.totalorder %s84, 0
      %p310 = por %p308, %p309
      %s312 = sadd.s32 %s311, 1
      %p315 = scmp.eq.s32.totalorder %s78, 1
      %p316 = scmp.ne.s32.totalorder %s311, %s313
      %p317 = scmp.eq.s32.totalorder %s78, 0
      %p318 = por %p316, %p317
      %p319 = scmp.ne.s32.totalorder %s311, %s313
      %p320 = scmp.eq.s32.totalorder %s83, 1
      %p321 = por %p319, %p320
      %p322 = scmp.ne.s32.totalorder %s313, %s314
      %p323 = scmp.eq.s32.totalorder %s83, 0
      %p324 = por %p322, %p323
      %p325 = scmp.ne.s32.totalorder %s313, %s314
      %p326 = scmp.eq.s32.totalorder %s84, 1
      %p327 = por %p325, %p326
      %p329 = scmp.ne.s32.totalorder %s314, %s328
      %p330 = scmp.eq.s32.totalorder %s84, 0
      %p331 = por %p329, %p330
      %s333 = sadd.s32 %s332, 1
      %p336 = scmp.eq.s32.totalorder %s78, 1
      %p337 = scmp.ne.s32.totalorder %s332, %s334
      %p338 = scmp.eq.s32.totalorder %s78, 0
      %p339 = por %p337, %p338
      %p340 = scmp.ne.s32.totalorder %s332, %s334
      %p341 = scmp.eq.s32.totalorder %s83, 1
      %p342 = por %p340, %p341
      %p343 = scmp.ne.s32.totalorder %s334, %s335
      %p344 = scmp.eq.s32.totalorder %s83, 0
      %p345 = por %p343, %p344
      %p346 = scmp.ne.s32.totalorder %s334, %s335
      %p347 = scmp.eq.s32.totalorder %s84, 1
      %p348 = por %p346, %p347
      %p350 = scmp.ne.s32.totalorder %s335, %s349
      %p351 = scmp.eq.s32.totalorder %s84, 0
      %p352 = por %p350, %p351
      %s354 = sadd.s32 %s353, 1
      %p357 = scmp.eq.s32.totalorder %s78, 1
      %p358 = scmp.ne.s32.totalorder %s353, %s355
      %p359 = scmp.eq.s32.totalorder %s78, 0
      %p360 = por %p358, %p359
      %p361 = scmp.ne.s32.totalorder %s353, %s355
      %p362 = scmp.eq.s32.totalorder %s83, 1
      %p363 = por %p361, %p362
      %p364 = scmp.ne.s32.totalorder %s355, %s356
      %p365 = scmp.eq.s32.totalorder %s83, 0
      %p366 = por %p364, %p365
      %p367 = scmp.ne.s32.totalorder %s355, %s356
      %p368 = scmp.eq.s32.totalorder %s84, 1
      %p369 = por %p367, %p368
      %p371 = scmp.ne.s32.totalorder %s356, %s370
      %p372 = scmp.eq.s32.totalorder %s84, 0
      %p373 = por %p371, %p372
      %s375 = sadd.s32 %s374, 1
      %p378 = scmp.eq.s32.totalorder %s78, 1
      %p379 = scmp.ne.s32.totalorder %s374, %s376
      %p380 = scmp.eq.s32.totalorder %s78, 0
      %p381 = por %p379, %p380
      %p382 = scmp.ne.s32.totalorder %s374, %s376
      %p383 = scmp.eq.s32.totalorder %s83, 1
      %p384 = por %p382, %p383
      %p385 = scmp.ne.s32.totalorder %s376, %s377
      %p386 = scmp.eq.s32.totalorder %s83, 0
      %p387 = por %p385, %p386
      %p388 = scmp.ne.s32.totalorder %s376, %s377
      %p389 = scmp.eq.s32.totalorder %s84, 1
      %p390 = por %p388, %p389
      %p392 = scmp.ne.s32.totalorder %s377, %s391
      %p393 = scmp.eq.s32.totalorder %s84, 0
      %p394 = por %p392, %p393
      %s396 = sadd.s32 %s395, 1
      %p399 = scmp.eq.s32.totalorder %s78, 1
      %p400 = scmp.ne.s32.totalorder %s395, %s397
      %p401 = scmp.eq.s32.totalorder %s78, 0
      %p402 = por %p400, %p401
      %p403 = scmp.ne.s32.totalorder %s395, %s397
      %p404 = scmp.eq.s32.totalorder %s83, 1
      %p405 = por %p403, %p404
      %p406 = scmp.ne.s32.totalorder %s397, %s398
      %p407 = scmp.eq.s32.totalorder %s83, 0
      %p408 = por %p406, %p407
      %p409 = scmp.ne.s32.totalorder %s397, %s398
      %p410 = scmp.eq.s32.totalorder %s84, 1
      %p411 = por %p409, %p410
      %p413 = scmp.ne.s32.totalorder %s398, %s412
      %p414 = scmp.eq.s32.totalorder %s84, 0
      %p415 = por %p413, %p414
      %s417 = sadd.s32 %s416, 1
      %p420 = scmp.eq.s32.totalorder %s78, 1
      %p421 = scmp.ne.s32.totalorder %s416, %s418
      %p422 = scmp.eq.s32.totalorder %s78, 0
      %p423 = por %p421, %p422
      %p424 = scmp.ne.s32.totalorder %s416, %s418
      %p425 = scmp.eq.s32.totalorder %s83, 1
      %p426 = por %p424, %p425
      %p427 = scmp.ne.s32.totalorder %s418, %s419
      %p428 = scmp.eq.s32.totalorder %s83, 0
      %p429 = por %p427, %p428
      %p430 = scmp.ne.s32.totalorder %s418, %s419
      %p431 = scmp.eq.s32.totalorder %s84, 1
      %p432 = por %p430, %p431
      %p434 = scmp.ne.s32.totalorder %s419, %s433
      %p435 = scmp.eq.s32.totalorder %s84, 0
      %p436 = por %p434, %p435
      %s438 = sadd.s32 %s437, 1
      %p441 = scmp.eq.s32.totalorder %s78, 1
      %p442 = scmp.ne.s32.totalorder %s437, %s439
      %p443 = scmp.eq.s32.totalorder %s78, 0
      %p444 = por %p442, %p443
      %p445 = scmp.ne.s32.totalorder %s437, %s439
      %p446 = scmp.eq.s32.totalorder %s83, 1
      %p447 = por %p445, %p446
      %p448 = scmp.ne.s32.totalorder %s439, %s440
      %p449 = scmp.eq.s32.totalorder %s83, 0
      %p450 = por %p448, %p449
      %p451 = scmp.ne.s32.totalorder %s439, %s440
      %p452 = scmp.eq.s32.totalorder %s84, 1
      %p453 = por %p451, %p452
      %p455 = scmp.ne.s32.totalorder %s440, %s454
      %p456 = scmp.eq.s32.totalorder %s84, 0
      %p457 = por %p455, %p456
      %s459 = sadd.s32 %s458, 1
      %p462 = scmp.eq.s32.totalorder %s78, 1
      %p463 = scmp.ne.s32.totalorder %s458, %s460
      %p464 = scmp.eq.s32.totalorder %s78, 0
      %p465 = por %p463, %p464
      %p466 = scmp.ne.s32.totalorder %s458, %s460
      %p467 = scmp.eq.s32.totalorder %s83, 1
      %p468 = por %p466, %p467
      %p469 = scmp.ne.s32.totalorder %s460, %s461
      %p470 = scmp.eq.s32.totalorder %s83, 0
      %p471 = por %p469, %p470
      %p472 = scmp.ne.s32.totalorder %s460, %s461
      %p473 = scmp.eq.s32.totalorder %s84, 1
      %p474 = por %p472, %p473
      %p476 = scmp.ne.s32.totalorder %s461, %s475
      %p477 = scmp.eq.s32.totalorder %s84, 0
      %p478 = por %p476, %p477
      %s480 = sadd.s32 %s479, 1
      %p483 = scmp.eq.s32.totalorder %s78, 1
      %p484 = scmp.ne.s32.totalorder %s479, %s481
      %p485 = scmp.eq.s32.totalorder %s78, 0
      %p486 = por %p484, %p485
      %p487 = scmp.ne.s32.totalorder %s479, %s481
      %p488 = scmp.eq.s32.totalorder %s83, 1
      %p489 = por %p487, %p488
      %p490 = scmp.ne.s32.totalorder %s481, %s482
      %p491 = scmp.eq.s32.totalorder %s83, 0
      %p492 = por %p490, %p491
      %p493 = scmp.ne.s32.totalorder %s481, %s482
      %p494 = scmp.eq.s32.totalorder %s84, 1
      %p495 = por %p493, %p494
      %p497 = scmp.ne.s32.totalorder %s482, %s496
      %p498 = scmp.eq.s32.totalorder %s84, 0
      %p499 = por %p497, %p498
      %s501 = sadd.s32 %s500, 1
      %p504 = scmp.eq.s32.totalorder %s78, 1
      %p505 = scmp.ne.s32.totalorder %s500, %s502
      %p506 = scmp.eq.s32.totalorder %s78, 0
      %p507 = por %p505, %p506
      %p508 = scmp.ne.s32.totalorder %s500, %s502
      %p509 = scmp.eq.s32.totalorder %s83, 1
      %p510 = por %p508, %p509
      %p511 = scmp.ne.s32.totalorder %s502, %s503
      %p512 = scmp.eq.s32.totalorder %s83, 0
      %p513 = por %p511, %p512
      %p514 = scmp.ne.s32.totalorder %s502, %s503
      %p515 = scmp.eq.s32.totalorder %s84, 1
      %p516 = por %p514, %p515
      %p518 = scmp.ne.s32.totalorder %s503, %s517
      %p519 = scmp.eq.s32.totalorder %s84, 0
      %p520 = por %p518, %p519
      %s522 = sadd.s32 %s521, 1
      %p525 = scmp.eq.s32.totalorder %s78, 1
      %p526 = scmp.ne.s32.totalorder %s521, %s523
      %p527 = scmp.eq.s32.totalorder %s78, 0
      %p528 = por %p526, %p527
      %p529 = scmp.ne.s32.totalorder %s521, %s523
      %p530 = scmp.eq.s32.totalorder %s83, 1
      %p531 = por %p529, %p530
      %p532 = scmp.ne.s32.totalorder %s523, %s524
      %p533 = scmp.eq.s32.totalorder %s83, 0
      %p534 = por %p532, %p533
      %p535 = scmp.ne.s32.totalorder %s523, %s524
      %p536 = scmp.eq.s32.totalorder %s84, 1
      %p537 = por %p535, %p536
      %p539 = scmp.ne.s32.totalorder %s524, %s538
      %p540 = scmp.eq.s32.totalorder %s84, 0
      %p541 = por %p539, %p540
      %s543 = sadd.s32 %s542, 1
      %p546 = scmp.eq.s32.totalorder %s78, 1
      %p547 = scmp.ne.s32.totalorder %s542, %s544
      %p548 = scmp.eq.s32.totalorder %s78, 0
      %p549 = por %p547, %p548
      %p550 = scmp.ne.s32.totalorder %s542, %s544
      %p551 = scmp.eq.s32.totalorder %s83, 1
      %p552 = por %p550, %p551
      %p553 = scmp.ne.s32.totalorder %s544, %s545
      %p554 = scmp.eq.s32.totalorder %s83, 0
      %p555 = por %p553, %p554
      %p556 = scmp.ne.s32.totalorder %s544, %s545
      %p557 = scmp.eq.s32.totalorder %s84, 1
      %p558 = por %p556, %p557
      %p560 = scmp.ne.s32.totalorder %s545, %s559
      %p561 = scmp.eq.s32.totalorder %s84, 0
      %p562 = por %p560, %p561
      %s564 = sadd.s32 %s563, 1
      %p567 = scmp.eq.s32.totalorder %s78, 1
      %p568 = scmp.ne.s32.totalorder %s563, %s565
      %p569 = scmp.eq.s32.totalorder %s78, 0
      %p570 = por %p568, %p569
      %p571 = scmp.ne.s32.totalorder %s563, %s565
      %p572 = scmp.eq.s32.totalorder %s83, 1
      %p573 = por %p571, %p572
      %p574 = scmp.ne.s32.totalorder %s565, %s566
      %p575 = scmp.eq.s32.totalorder %s83, 0
      %p576 = por %p574, %p575
      %p577 = scmp.ne.s32.totalorder %s565, %s566
      %p578 = scmp.eq.s32.totalorder %s84, 1
      %p579 = por %p577, %p578
      %p581 = scmp.ne.s32.totalorder %s566, %s580
      %p582 = scmp.eq.s32.totalorder %s84, 0
      %p583 = por %p581, %p582
      %s585 = sadd.s32 %s584, 1
      %p588 = scmp.eq.s32.totalorder %s78, 1
      %p589 = scmp.ne.s32.totalorder %s584, %s586
      %p590 = scmp.eq.s32.totalorder %s78, 0
      %p591 = por %p589, %p590
      %p592 = scmp.ne.s32.totalorder %s584, %s586
      %p593 = scmp.eq.s32.totalorder %s83, 1
      %p594 = por %p592, %p593
      %p595 = scmp.ne.s32.totalorder %s586, %s587
      %p596 = scmp.eq.s32.totalorder %s83, 0
      %p597 = por %p595, %p596
      %p598 = scmp.ne.s32.totalorder %s586, %s587
      %p599 = scmp.eq.s32.totalorder %s84, 1
      %p600 = por %p598, %p599
      %p602 = scmp.ne.s32.totalorder %s587, %s601
      %p603 = scmp.eq.s32.totalorder %s84, 0
      %p604 = por %p602, %p603
      %s606 = sadd.s32 %s605, 1
      %p609 = scmp.eq.s32.totalorder %s78, 1
      %p610 = scmp.ne.s32.totalorder %s605, %s607
      %p611 = scmp.eq.s32.totalorder %s78, 0
      %p612 = por %p610, %p611
      %p613 = scmp.ne.s32.totalorder %s605, %s607
      %p614 = scmp.eq.s32.totalorder %s83, 1
      %p615 = por %p613, %p614
      %p616 = scmp.ne.s32.totalorder %s607, %s608
      %p617 = scmp.eq.s32.totalorder %s83, 0
      %p618 = por %p616, %p617
      %p619 = scmp.ne.s32.totalorder %s607, %s608
      %p620 = scmp.eq.s32.totalorder %s84, 1
      %p621 = por %p619, %p620
      %p623 = scmp.ne.s32.totalorder %s608, %s622
      %p624 = scmp.eq.s32.totalorder %s84, 0
      %p625 = por %p623, %p624
      %s627 = sadd.s32 %s626, 1
      %p630 = scmp.eq.s32.totalorder %s78, 1
      %p631 = scmp.ne.s32.totalorder %s626, %s628
      %p632 = scmp.eq.s32.totalorder %s78, 0
      %p633 = por %p631, %p632
      %p634 = scmp.ne.s32.totalorder %s626, %s628
      %p635 = scmp.eq.s32.totalorder %s83, 1
      %p636 = por %p634, %p635
      %p637 = scmp.ne.s32.totalorder %s628, %s629
      %p638 = scmp.eq.s32.totalorder %s83, 0
      %p639 = por %p637, %p638
      %p640 = scmp.ne.s32.totalorder %s628, %s629
      %p641 = scmp.eq.s32.totalorder %s84, 1
      %p642 = por %p640, %p641
      %p644 = scmp.ne.s32.totalorder %s629, %s643
      %p645 = scmp.eq.s32.totalorder %s84, 0
      %p646 = por %p644, %p645
      %s648 = sadd.s32 %s647, 1
      %p651 = scmp.eq.s32.totalorder %s78, 1
      %p652 = scmp.ne.s32.totalorder %s647, %s649
      %p653 = scmp.eq.s32.totalorder %s78, 0
      %p654 = por %p652, %p653
      %p655 = scmp.ne.s32.totalorder %s647, %s649
      %p656 = scmp.eq.s32.totalorder %s83, 1
      %p657 = por %p655, %p656
      %p658 = scmp.ne.s32.totalorder %s649, %s650
      %p659 = scmp.eq.s32.totalorder %s83, 0
      %p660 = por %p658, %p659
      %p661 = scmp.ne.s32.totalorder %s649, %s650
      %p662 = scmp.eq.s32.totalorder %s84, 1
      %p663 = por %p661, %p662
      %p665 = scmp.ne.s32.totalorder %s650, %s664
      %p666 = scmp.eq.s32.totalorder %s84, 0
      %p667 = por %p665, %p666
      %s669 = sadd.s32 %s668, 1
      %p672 = scmp.eq.s32.totalorder %s78, 1
      %p673 = scmp.ne.s32.totalorder %s668, %s670
      %p674 = scmp.eq.s32.totalorder %s78, 0
      %p675 = por %p673, %p674
      %p676 = scmp.ne.s32.totalorder %s668, %s670
      %p677 = scmp.eq.s32.totalorder %s83, 1
      %p678 = por %p676, %p677
      %p679 = scmp.ne.s32.totalorder %s670, %s671
      %p680 = scmp.eq.s32.totalorder %s83, 0
      %p681 = por %p679, %p680
      %p682 = scmp.ne.s32.totalorder %s670, %s671
      %p683 = scmp.eq.s32.totalorder %s84, 1
      %p684 = por %p682, %p683
      %p686 = scmp.ne.s32.totalorder %s671, %s685
      %p687 = scmp.eq.s32.totalorder %s84, 0
      %p688 = por %p686, %p687
      %s690 = sadd.s32 %s689, 1
      %p693 = scmp.eq.s32.totalorder %s78, 1
      %p694 = scmp.ne.s32.totalorder %s689, %s691
      %p695 = scmp.eq.s32.totalorder %s78, 0
      %p696 = por %p694, %p695
      %p697 = scmp.ne.s32.totalorder %s689, %s691
      %p698 = scmp.eq.s32.totalorder %s83, 1
      %p699 = por %p697, %p698
      %p700 = scmp.ne.s32.totalorder %s691, %s692
      %p701 = scmp.eq.s32.totalorder %s83, 0
      %p702 = por %p700, %p701
      %p703 = scmp.ne.s32.totalorder %s691, %s692
      %p704 = scmp.eq.s32.totalorder %s84, 1
      %p705 = por %p703, %p704
      %p707 = scmp.ne.s32.totalorder %s692, %s706
      %p708 = scmp.eq.s32.totalorder %s84, 0
      %p709 = por %p707, %p708
      %s711 = sadd.s32 %s710, 1
      %p714 = scmp.eq.s32.totalorder %s78, 1
      %p715 = scmp.ne.s32.totalorder %s710, %s712
      %p716 = scmp.eq.s32.totalorder %s78, 0
      %p717 = por %p715, %p716
      %p718 = scmp.ne.s32.totalorder %s710, %s712
      %p719 = scmp.eq.s32.totalorder %s83, 1
      %p720 = por %p718, %p719
      %p721 = scmp.ne.s32.totalorder %s712, %s713
      %p722 = scmp.eq.s32.totalorder %s83, 0
      %p723 = por %p721, %p722
      %p724 = scmp.ne.s32.totalorder %s712, %s713
      %p725 = scmp.eq.s32.totalorder %s84, 1
      %p726 = por %p724, %p725
      %p728 = scmp.ne.s32.totalorder %s713, %s727
      %p729 = scmp.eq.s32.totalorder %s84, 0
      %p730 = por %p728, %p729
      %s731 = ssub.s32 %s78, %s85
      %p732 = scmp.eq.s32.totalorder %s731, 0
      %s734 = sadd.s32 %s733, 1
      %s735 = scalar_select %p732, %s733, %s734
      %p738 = pneg %p732
      %p739 = scmp.eq.s32.totalorder %s78, 1
      %p740 = por %p738, %p739
      %p741 = scmp.ne.s32.totalorder %s733, %s736
      %p742 = scmp.eq.s32.totalorder %s78, 0
      %p743 = por %p741, %p742
      %p744 = scmp.ne.s32.totalorder %s733, %s736
      %p745 = scmp.eq.s32.totalorder %s83, 1
      %p746 = por %p744, %p745
      %p747 = scmp.ne.s32.totalorder %s736, %s737
      %p748 = scmp.eq.s32.totalorder %s83, 0
      %p749 = por %p747, %p748
      %p750 = scmp.ne.s32.totalorder %s736, %s737
      %p751 = scmp.eq.s32.totalorder %s84, 1
      %p752 = por %p750, %p751
      %p754 = scmp.ne.s32.totalorder %s737, %s753
      %p755 = scmp.eq.s32.totalorder %s84, 0
      %p756 = por %p754, %p755
      %p757 = scmp.le.s32.totalorder 1, %s78
      %p758 = scmp.lt.s32.totalorder %s78, 3
      %p759 = pnand %p757, %p758
      %p760 = pneg %p759
      // Predicated region
      $region9: #{tpu_custom_call.1} parent=5 // pred_check
        _
      $region10: #{tpu_custom_call.1} parent=5 // pred_check_branch
        %762 = sbr.rel (%p759) target = $region12
      $region11: #{tpu_custom_call.1} parent=5 // pred_region
        %s763 = ssub.s32 %s78, 1
        // Predicated region
        $region13: #{tpu_custom_call.1} parent=11 // pred_check
          %p764 = pneg %p151
        $region14: #{tpu_custom_call.1} parent=11 // pred_check_branch
          %766 = sbr.rel (%p764) target = $region16
        $region15: #{tpu_custom_call.1} parent=11 // pred_region
          _
        $region16: #{tpu_custom_call.1} parent=11 // pred_fallthru
          _
        // Predicated region
        $region17: #{tpu_custom_call.1} parent=11 // pred_check
          %p767 = pneg %p198
        $region18: #{tpu_custom_call.1} parent=11 // pred_check_branch
          %769 = sbr.rel (%p767) target = $region20
        $region19: #{tpu_custom_call.1} parent=11 // pred_region
          _
        $region20: #{tpu_custom_call.1} parent=11 // pred_fallthru
          _
        // Predicated region
        $region21: #{tpu_custom_call.1} parent=11 // pred_check
          %p770 = pneg %p219
        $region22: #{tpu_custom_call.1} parent=11 // pred_check_branch
          %772 = sbr.rel (%p770) target = $region24
        $region23: #{tpu_custom_call.1} parent=11 // pred_region
          _
        $region24: #{tpu_custom_call.1} parent=11 // pred_fallthru
          _
        // Predicated region
        $region25: #{tpu_custom_call.1} parent=11 // pred_check
          %p773 = pneg %p240
        $region26: #{tpu_custom_call.1} parent=11 // pred_check_branch
          %775 = sbr.rel (%p773) target = $region28
        $region27: #{tpu_custom_call.1} parent=11 // pred_region
          %s777 = ssub.s32 4096, 4096
          %778 = vsyncadd [#allocation6], %s777
          %s779 = sshll.u32 [#allocation5], 4
          %s780 = int_to_ptr.vmem [resolvable:$true] %s779
          %785 = dma.hbm_to_vmem [thread:$0]  %s13, 4096, %s780, [#allocation6], 128, 128, 8
        $region28: #{tpu_custom_call.1} parent=11 // pred_fallthru
          _
        // Predicated region
        $region29: #{tpu_custom_call.1} parent=11 // pred_check
          %p786 = pneg %p261
        $region30: #{tpu_custom_call.1} parent=11 // pred_check_branch
          %788 = sbr.rel (%p786) target = $region32
        $region31: #{tpu_custom_call.1} parent=11 // pred_region
          _
        $region32: #{tpu_custom_call.1} parent=11 // pred_fallthru
          _
        // Predicated region
        $region33: #{tpu_custom_call.1} parent=11 // pred_check
          %p789 = pneg %p282
        $region34: #{tpu_custom_call.1} parent=11 // pred_check_branch
          %791 = sbr.rel (%p789) target = $region36
        $region35: #{tpu_custom_call.1} parent=11 // pred_region
          %s793 = ssub.s32 4096, 4096
          %794 = vsyncadd [#allocation6], %s793
          %s795 = sshll.u32 [#allocation7], 4
          %s796 = int_to_ptr.vmem [resolvable:$true] %s795
          %801 = dma.hbm_to_vmem [thread:$0]  %s17, 4096, %s796, [#allocation6], 128, 128, 8
        $region36: #{tpu_custom_call.1} parent=11 // pred_fallthru
          _
        // Predicated region
        $region37: #{tpu_custom_call.1} parent=11 // pred_check
          %p802 = pneg %p303
        $region38: #{tpu_custom_call.1} parent=11 // pred_check_branch
          %804 = sbr.rel (%p802) target = $region40
        $region39: #{tpu_custom_call.1} parent=11 // pred_region
          _
        $region40: #{tpu_custom_call.1} parent=11 // pred_fallthru
          _
        // Predicated region
        $region41: #{tpu_custom_call.1} parent=11 // pred_check
          %p805 = pneg %p324
        $region42: #{tpu_custom_call.1} parent=11 // pred_check_branch
          %807 = sbr.rel (%p805) target = $region44
        $region43: #{tpu_custom_call.1} parent=11 // pred_region
          %s809 = ssub.s32 4096, 4096
          %810 = vsyncadd [#allocation9], %s809
          %s811 = sshll.u32 [#allocation8], 4
          %s812 = int_to_ptr.vmem [resolvable:$true] %s811
          %817 = dma.hbm_to_vmem [thread:$0]  %s21, 4096, %s812, [#allocation9], 128, 128, 8
        $region44: #{tpu_custom_call.1} parent=11 // pred_fallthru
          _
        // Predicated region
        $region45: #{tpu_custom_call.1} parent=11 // pred_check
          %p818 = pneg %p345
        $region46: #{tpu_custom_call.1} parent=11 // pred_check_branch
          %820 = sbr.rel (%p818) target = $region48
        $region47: #{tpu_custom_call.1} parent=11 // pred_region
          _
        $region48: #{tpu_custom_call.1} parent=11 // pred_fallthru
          _
        // Predicated region
        $region49: #{tpu_custom_call.1} parent=11 // pred_check
          %p821 = pneg %p366
        $region50: #{tpu_custom_call.1} parent=11 // pred_check_branch
          %823 = sbr.rel (%p821) target = $region52
        $region51: #{tpu_custom_call.1} parent=11 // pred_region
          %s825 = ssub.s32 4096, 4096
          %826 = vsyncadd [#allocation9], %s825
          %s827 = sshll.u32 [#allocation10], 4
          %s828 = int_to_ptr.vmem [resolvable:$true] %s827
          %833 = dma.hbm_to_vmem [thread:$0]  %s25, 4096, %s828, [#allocation9], 128, 128, 8
        $region52: #{tpu_custom_call.1} parent=11 // pred_fallthru
          _
        // Predicated region
        $region53: #{tpu_custom_call.1} parent=11 // pred_check
          %p834 = pneg %p387
        $region54: #{tpu_custom_call.1} parent=11 // pred_check_branch
          %836 = sbr.rel (%p834) target = $region56
        $region55: #{tpu_custom_call.1} parent=11 // pred_region
          _
        $region56: #{tpu_custom_call.1} parent=11 // pred_fallthru
          _
        // Predicated region
        $region57: #{tpu_custom_call.1} parent=11 // pred_check
          %p837 = pneg %p408
        $region58: #{tpu_custom_call.1} parent=11 // pred_check_branch
          %839 = sbr.rel (%p837) target = $region60
        $region59: #{tpu_custom_call.1} parent=11 // pred_region
          _
        $region60: #{tpu_custom_call.1} parent=11 // pred_fallthru
          _
        // Predicated region
        $region61: #{tpu_custom_call.1} parent=11 // pred_check
          %p840 = pneg %p429
        $region62: #{tpu_custom_call.1} parent=11 // pred_check_branch
          %842 = sbr.rel (%p840) target = $region64
        $region63: #{tpu_custom_call.1} parent=11 // pred_region
          _
        $region64: #{tpu_custom_call.1} parent=11 // pred_fallthru
          _
        // Predicated region
        $region65: #{tpu_custom_call.1} parent=11 // pred_check
          %p843 = pneg %p450
        $region66: #{tpu_custom_call.1} parent=11 // pred_check_branch
          %845 = sbr.rel (%p843) target = $region68
        $region67: #{tpu_custom_call.1} parent=11 // pred_region
          %s847 = ssub.s32 4096, 4096
          %848 = vsyncadd [#allocation12], %s847
          %s849 = sshll.u32 [#allocation11], 4
          %s850 = int_to_ptr.vmem [resolvable:$true] %s849
          %855 = dma.hbm_to_vmem [thread:$0]  %s33, 4096, %s850, [#allocation12], 128, 128, 8
        $region68: #{tpu_custom_call.1} parent=11 // pred_fallthru
          _
        // Predicated region
        $region69: #{tpu_custom_call.1} parent=11 // pred_check
          %p856 = pneg %p471
        $region70: #{tpu_custom_call.1} parent=11 // pred_check_branch
          %858 = sbr.rel (%p856) target = $region72
        $region71: #{tpu_custom_call.1} parent=11 // pred_region
          _
        $region72: #{tpu_custom_call.1} parent=11 // pred_fallthru
          _
        // Predicated region
        $region73: #{tpu_custom_call.1} parent=11 // pred_check
          %p859 = pneg %p492
        $region74: #{tpu_custom_call.1} parent=11 // pred_check_branch
          %861 = sbr.rel (%p859) target = $region76
        $region75: #{tpu_custom_call.1} parent=11 // pred_region
          %s863 = ssub.s32 4096, 4096
          %864 = vsyncadd [#allocation12], %s863
          %s865 = sshll.u32 [#allocation13], 4
          %s866 = int_to_ptr.vmem [resolvable:$true] %s865
          %871 = dma.hbm_to_vmem [thread:$0]  %s37, 4096, %s866, [#allocation12], 128, 128, 8
        $region76: #{tpu_custom_call.1} parent=11 // pred_fallthru
          _
        // Predicated region
        $region77: #{tpu_custom_call.1} parent=11 // pred_check
          %p872 = pneg %p513
        $region78: #{tpu_custom_call.1} parent=11 // pred_check_branch
          %874 = sbr.rel (%p872) target = $region80
        $region79: #{tpu_custom_call.1} parent=11 // pred_region
          _
        $region80: #{tpu_custom_call.1} parent=11 // pred_fallthru
          _
        // Predicated region
        $region81: #{tpu_custom_call.1} parent=11 // pred_check
          %p875 = pneg %p534
        $region82: #{tpu_custom_call.1} parent=11 // pred_check_branch
          %877 = sbr.rel (%p875) target = $region84
        $region83: #{tpu_custom_call.1} parent=11 // pred_region
          %s879 = ssub.s32 4096, 4096
          %880 = vsyncadd [#allocation15], %s879
          %s881 = sshll.u32 [#allocation14], 4
          %s882 = int_to_ptr.vmem [resolvable:$true] %s881
          %887 = dma.hbm_to_vmem [thread:$0]  %s41, 4096, %s882, [#allocation15], 128, 128, 8
        $region84: #{tpu_custom_call.1} parent=11 // pred_fallthru
          _
        // Predicated region
        $region85: #{tpu_custom_call.1} parent=11 // pred_check
          %p888 = pneg %p555
        $region86: #{tpu_custom_call.1} parent=11 // pred_check_branch
          %890 = sbr.rel (%p888) target = $region88
        $region87: #{tpu_custom_call.1} parent=11 // pred_region
          _
        $region88: #{tpu_custom_call.1} parent=11 // pred_fallthru
          _
        // Predicated region
        $region89: #{tpu_custom_call.1} parent=11 // pred_check
          %p891 = pneg %p576
        $region90: #{tpu_custom_call.1} parent=11 // pred_check_branch
          %893 = sbr.rel (%p891) target = $region92
        $region91: #{tpu_custom_call.1} parent=11 // pred_region
          %s895 = ssub.s32 4096, 4096
          %896 = vsyncadd [#allocation15], %s895
          %s897 = sshll.u32 [#allocation16], 4
          %s898 = int_to_ptr.vmem [resolvable:$true] %s897
          %903 = dma.hbm_to_vmem [thread:$0]  %s45, 4096, %s898, [#allocation15], 128, 128, 8
        $region92: #{tpu_custom_call.1} parent=11 // pred_fallthru
          _
        // Predicated region
        $region93: #{tpu_custom_call.1} parent=11 // pred_check
          %p904 = pneg %p597
        $region94: #{tpu_custom_call.1} parent=11 // pred_check_branch
          %906 = sbr.rel (%p904) target = $region96
        $region95: #{tpu_custom_call.1} parent=11 // pred_region
          _
        $region96: #{tpu_custom_call.1} parent=11 // pred_fallthru
          _
        // Predicated region
        $region97: #{tpu_custom_call.1} parent=11 // pred_check
          %p907 = pneg %p618
        $region98: #{tpu_custom_call.1} parent=11 // pred_check_branch
          %909 = sbr.rel (%p907) target = $region100
        $region99: #{tpu_custom_call.1} parent=11 // pred_region
          _
        $region100: #{tpu_custom_call.1} parent=11 // pred_fallthru
          _
        // Predicated region
        $region101: #{tpu_custom_call.1} parent=11 // pred_check
          %p910 = pneg %p639
        $region102: #{tpu_custom_call.1} parent=11 // pred_check_branch
          %912 = sbr.rel (%p910) target = $region104
        $region103: #{tpu_custom_call.1} parent=11 // pred_region
          _
        $region104: #{tpu_custom_call.1} parent=11 // pred_fallthru
          _
        // Predicated region
        $region105: #{tpu_custom_call.1} parent=11 // pred_check
          %p913 = pneg %p660
        $region106: #{tpu_custom_call.1} parent=11 // pred_check_branch
          %915 = sbr.rel (%p913) target = $region108
        $region107: #{tpu_custom_call.1} parent=11 // pred_region
          %s917 = ssub.s32 8192, 8192
          %918 = vsyncadd [#allocation18], %s917
          %s919 = sshll.u32 [#allocation17], 4
          %s920 = int_to_ptr.vmem [resolvable:$true] %s919
          %925 = dma.hbm_to_vmem [thread:$0]  %s53, 8192, %s920, [#allocation18], 256, 256, 16
        $region108: #{tpu_custom_call.1} parent=11 // pred_fallthru
          _
        // Predicated region
        $region109: #{tpu_custom_call.1} parent=11 // pred_check
          %p926 = pneg %p681
        $region110: #{tpu_custom_call.1} parent=11 // pred_check_branch
          %928 = sbr.rel (%p926) target = $region112
        $region111: #{tpu_custom_call.1} parent=11 // pred_region
          _
        $region112: #{tpu_custom_call.1} parent=11 // pred_fallthru
          _
        // Predicated region
        $region113: #{tpu_custom_call.1} parent=11 // pred_check
          %p929 = pneg %p702
        $region114: #{tpu_custom_call.1} parent=11 // pred_check_branch
          %931 = sbr.rel (%p929) target = $region116
        $region115: #{tpu_custom_call.1} parent=11 // pred_region
          %s933 = ssub.s32 8192, 8192
          %934 = vsyncadd [#allocation18], %s933
          %s935 = sshll.u32 [#allocation19], 4
          %s936 = int_to_ptr.vmem [resolvable:$true] %s935
          %941 = dma.hbm_to_vmem [thread:$0]  %s57, 8192, %s936, [#allocation18], 128, 128, 8
        $region116: #{tpu_custom_call.1} parent=11 // pred_fallthru
          _
        // Predicated region
        $region117: #{tpu_custom_call.1} parent=11 // pred_check
          %p942 = pneg %p723
        $region118: #{tpu_custom_call.1} parent=11 // pred_check_branch
          %944 = sbr.rel (%p942) target = $region120
        $region119: #{tpu_custom_call.1} parent=11 // pred_region
          _
        $region120: #{tpu_custom_call.1} parent=11 // pred_fallthru
          _
      $region12: #{tpu_custom_call.1} parent=5 // pred_fallthru
        _
      %p945 = scmp.lt.s32.totalorder %s78, 2
      // Predicated region
      $region121: #{tpu_custom_call.1} parent=5 // pred_check
        %p946 = pneg %p945
      $region122: #{tpu_custom_call.1} parent=5 // pred_check_branch
        %948 = sbr.rel (%p946) target = $region124
      $region123: #{tpu_custom_call.1} parent=5 // pred_region
        // Predicated region
        $region125: #{tpu_custom_call.1} parent=123 // pred_check
          %p949 = pneg %p98
        $region126: #{tpu_custom_call.1} parent=123 // pred_check_branch
          %951 = sbr.rel (%p949) target = $region128
        $region127: #{tpu_custom_call.1} parent=123 // pred_region
          %s952 = sand.u32 %s88, 1
          %s953 = scalar_lea.sflag [#allocation3], %s952
          %s954 = sand.u32 %s88, 1
          %s955 = smul.addr %s954, 16
          %s956 = scalar_lea.vmem [#allocation2], %s955
          %s958 = ssub.s32 256, 256
          %959 = vsyncadd %s953, %s958
          %s960 = smul.addr %s78, 2
          %s961 = smul.addr %s960, 128
          %s962 = scalar_lea.hbm %s1, %s961
          %s964 = sshll.u32 %s956, 4
          %s965 = int_to_ptr.vmem [resolvable:$true] %s964
          %967 = dma.hbm_to_vmem [thread:$0]  %s962, 256, %s965, %s953
        $region128: #{tpu_custom_call.1} parent=123 // pred_fallthru
          _
        // Predicated region
        $region129: #{tpu_custom_call.1} parent=123 // pred_check
          %p968 = pneg %p124
        $region130: #{tpu_custom_call.1} parent=123 // pred_check_branch
          %970 = sbr.rel (%p968) target = $region132
        $region131: #{tpu_custom_call.1} parent=123 // pred_region
          %p971 = scmp.lt.s32.totalorder %s78, 1
          %s972 = scalar_select %p971, %s78, 1
          %s973 = smul.addr %s972, 4
          %s974 = smul.addr %s973, 8
          %s975 = scalar_lea.vmem %s3, %s974
        $region132: #{tpu_custom_call.1} parent=123 // pred_fallthru
          _
        // Predicated region
        $region133: #{tpu_custom_call.1} parent=123 // pred_check
          %p976 = pneg %p171
        $region134: #{tpu_custom_call.1} parent=123 // pred_check_branch
          %978 = sbr.rel (%p976) target = $region136
        $region135: #{tpu_custom_call.1} parent=123 // pred_region
          %p979 = scmp.lt.s32.totalorder %s78, 1
          %s980 = scalar_select %p979, %s78, 1
          %s981 = scalar_lea.vmem %s7, %s980
        $region136: #{tpu_custom_call.1} parent=123 // pred_fallthru
          _
      $region124: #{tpu_custom_call.1} parent=5 // pred_fallthru
        _
      %p982 = scmp.le.s32.totalorder 1, %s78
      %p983 = scmp.lt.s32.totalorder %s78, 3
      %p984 = pnand %p982, %p983
      %p985 = pneg %p984
      // Predicated region
      $region137: #{tpu_custom_call.1} parent=5 // pred_check
        _
      $region138: #{tpu_custom_call.1} parent=5 // pred_check_branch
        %987 = sbr.rel (%p984) target = $region140
      $region139: #{tpu_custom_call.1} parent=5 // pred_region
        %s988 = ssub.s32 %s78, 1
        %s989 = sand.u32 %s91, 1
        %s990 = scalar_lea.sflag [#allocation3], %s989
        %s991 = sand.u32 %s91, 1
        %s992 = smul.addr %s991, 16
        %s993 = scalar_lea.vmem [#allocation2], %s992
        // Predicated region
        $region141: #{tpu_custom_call.1} parent=139 // pred_check
          %p994 = pneg %p104
        $region142: #{tpu_custom_call.1} parent=139 // pred_check_branch
          %996 = sbr.rel (%p994) target = $region144
        $region143: #{tpu_custom_call.1} parent=139 // pred_region
          %997 = dma.done %s990, 256
        $region144: #{tpu_custom_call.1} parent=139 // pred_fallthru
          _
        // Predicated region
        $region145: #{tpu_custom_call.1} parent=139 // pred_check
          %p998 = pneg %p240
        $region146: #{tpu_custom_call.1} parent=139 // pred_check_branch
          %1000 = sbr.rel (%p998) target = $region148
        $region147: #{tpu_custom_call.1} parent=139 // pred_region
          %1001 = dma.done [#allocation6], 4096
        $region148: #{tpu_custom_call.1} parent=139 // pred_fallthru
          _
        // Predicated region
        $region149: #{tpu_custom_call.1} parent=139 // pred_check
          %p1002 = pneg %p282
        $region150: #{tpu_custom_call.1} parent=139 // pred_check_branch
          %1004 = sbr.rel (%p1002) target = $region152
        $region151: #{tpu_custom_call.1} parent=139 // pred_region
          %1005 = dma.done [#allocation6], 4096
        $region152: #{tpu_custom_call.1} parent=139 // pred_fallthru
          _
        // Predicated region
        $region153: #{tpu_custom_call.1} parent=139 // pred_check
          %p1006 = pneg %p324
        $region154: #{tpu_custom_call.1} parent=139 // pred_check_branch
          %1008 = sbr.rel (%p1006) target = $region156
        $region155: #{tpu_custom_call.1} parent=139 // pred_region
          %1009 = dma.done [#allocation9], 4096
        $region156: #{tpu_custom_call.1} parent=139 // pred_fallthru
          _
        // Predicated region
        $region157: #{tpu_custom_call.1} parent=139 // pred_check
          %p1010 = pneg %p366
        $region158: #{tpu_custom_call.1} parent=139 // pred_check_branch
          %1012 = sbr.rel (%p1010) target = $region160
        $region159: #{tpu_custom_call.1} parent=139 // pred_region
          %1013 = dma.done [#allocation9], 4096
        $region160: #{tpu_custom_call.1} parent=139 // pred_fallthru
          _
        // Predicated region
        $region161: #{tpu_custom_call.1} parent=139 // pred_check
          %p1014 = pneg %p450
        $region162: #{tpu_custom_call.1} parent=139 // pred_check_branch
          %1016 = sbr.rel (%p1014) target = $region164
        $region163: #{tpu_custom_call.1} parent=139 // pred_region
          %1017 = dma.done [#allocation12], 4096
        $region164: #{tpu_custom_call.1} parent=139 // pred_fallthru
          _
        // Predicated region
        $region165: #{tpu_custom_call.1} parent=139 // pred_check
          %p1018 = pneg %p492
        $region166: #{tpu_custom_call.1} parent=139 // pred_check_branch
          %1020 = sbr.rel (%p1018) target = $region168
        $region167: #{tpu_custom_call.1} parent=139 // pred_region
          %1021 = dma.done [#allocation12], 4096
        $region168: #{tpu_custom_call.1} parent=139 // pred_fallthru
          _
        // Predicated region
        $region169: #{tpu_custom_call.1} parent=139 // pred_check
          %p1022 = pneg %p534
        $region170: #{tpu_custom_call.1} parent=139 // pred_check_branch
          %1024 = sbr.rel (%p1022) target = $region172
        $region171: #{tpu_custom_call.1} parent=139 // pred_region
          %1025 = dma.done [#allocation15], 4096
        $region172: #{tpu_custom_call.1} parent=139 // pred_fallthru
          _
        // Predicated region
        $region173: #{tpu_custom_call.1} parent=139 // pred_check
          %p1026 = pneg %p576
        $region174: #{tpu_custom_call.1} parent=139 // pred_check_branch
          %1028 = sbr.rel (%p1026) target = $region176
        $region175: #{tpu_custom_call.1} parent=139 // pred_region
          %1029 = dma.done [#allocation15], 4096
        $region176: #{tpu_custom_call.1} parent=139 // pred_fallthru
          _
        // Predicated region
        $region177: #{tpu_custom_call.1} parent=139 // pred_check
          %p1030 = pneg %p660
        $region178: #{tpu_custom_call.1} parent=139 // pred_check_branch
          %1032 = sbr.rel (%p1030) target = $region180
        $region179: #{tpu_custom_call.1} parent=139 // pred_region
          %1033 = dma.done [#allocation18], 8192
        $region180: #{tpu_custom_call.1} parent=139 // pred_fallthru
          _
        // Predicated region
        $region181: #{tpu_custom_call.1} parent=139 // pred_check
          %p1034 = pneg %p702
        $region182: #{tpu_custom_call.1} parent=139 // pred_check_branch
          %1036 = sbr.rel (%p1034) target = $region184
        $region183: #{tpu_custom_call.1} parent=139 // pred_region
          %1037 = dma.done [#allocation18], 8192
        $region184: #{tpu_custom_call.1} parent=139 // pred_fallthru
          _
        %s1038 = sand.u32 %s91, 1
        %s1039 = scalar_lea.sflag [#allocation3], %s1038
        %s1040 = sand.u32 %s91, 1
        %s1041 = smul.addr %s1040, 16
        %s1042 = scalar_lea.vmem [#allocation2], %s1041
        %p1043 = pneg %p104
        %p1044 = pneg %p101
        %p1045 = scmp.lt.s32.totalorder %s83, 1
        %s1046 = scalar_select %p1045, %s83, 1
        %s1047 = smul.addr %s1046, 4
        %s1048 = smul.addr %s1047, 8
        %s1049 = scalar_lea.vmem %s3, %s1048
        %p1050 = pneg %p130
        %p1051 = pneg %p127
        %p1052 = pneg %p151
        %p1053 = pneg %p148
        %p1054 = scmp.lt.s32.totalorder %s83, 1
        %s1055 = scalar_select %p1054, %s83, 1
        %s1056 = scalar_lea.vmem %s7, %s1055
        %p1057 = pneg %p177
        %p1058 = pneg %p174
        %p1059 = pneg %p198
        %p1060 = pneg %p195
        %p1061 = pneg %p219
        %p1062 = pneg %p216
        %p1063 = pneg %p240
        %p1064 = pneg %p237
        %p1065 = pneg %p261
        %p1066 = pneg %p258
        %p1067 = pneg %p282
        %p1068 = pneg %p279
        %p1069 = pneg %p303
        %p1070 = pneg %p300
        %p1071 = pneg %p324
        %p1072 = pneg %p321
        %p1073 = pneg %p345
        %p1074 = pneg %p342
        %p1075 = pneg %p366
        %p1076 = pneg %p363
        %p1077 = pneg %p387
        %p1078 = pneg %p384
        %p1079 = pneg %p408
        %p1080 = pneg %p405
        %p1081 = pneg %p429
        %p1082 = pneg %p426
        %p1083 = pneg %p450
        %p1084 = pneg %p447
        %p1085 = pneg %p471
        %p1086 = pneg %p468
        %p1087 = pneg %p492
        %p1088 = pneg %p489
        %p1089 = pneg %p513
        %p1090 = pneg %p510
        %p1091 = pneg %p534
        %p1092 = pneg %p531
        %p1093 = pneg %p555
        %p1094 = pneg %p552
        %p1095 = pneg %p576
        %p1096 = pneg %p573
        %p1097 = pneg %p597
        %p1098 = pneg %p594
        %p1099 = pneg %p618
        %p1100 = pneg %p615
        %p1101 = pneg %p639
        %p1102 = pneg %p636
        %p1103 = pneg %p660
        %p1104 = pneg %p657
        %p1105 = pneg %p681
        %p1106 = pneg %p678
        %p1107 = pneg %p702
        %p1108 = pneg %p699
        %p1109 = pneg %p723
        %p1110 = pneg %p720
        %p1111 = pneg %p749
        %p1112 = pneg %p746
        %s1113 = sand.u32 %s736, 1
        %s1114 = scalar_lea.sflag [#allocation4], %s1113
        %s1115 = sand.u32 %s736, 1
        %s1116 = smul.addr %s1115, 16
        %s1117 = scalar_lea.vmem [#allocation20], %s1116
        %p1118 = scmp.lt.s32.totalorder %s83, 1
        %s1119 = scalar_select %p1118, %s83, 1
        %s1120 = smul.addr %s1119, 4
        %s1121 = smul.addr %s1120, 8
        %s1122 = scalar_lea.vmem %s3, %s1121
        %p1123 = scmp.lt.s32.totalorder %s83, 1
        %s1124 = scalar_select %p1123, %s83, 1
        %s1125 = scalar_lea.vmem %s7, %s1124
        %v1129 = vld [vmem:[%s993] sm:$0xff]
        %v1130 = vld [vmem:[%s993 + $0x8] sm:$0xff]
        %v1131 = vld [vmem:[%s1122] sm:$0xff]
        %v1132 = vld [vmem:[%s1122 + $0x8] sm:$0xff]
        %v1133 = vld [vmem:[%s1122 + $0x10] sm:$0xff]
        %v1134 = vld [vmem:[%s1122 + $0x18] sm:$0xff]
        %v1135 = vld [vmem:[%s5] sm:$0x3]
        %vm1136 = vnez %v1135
        %v1137 = vld [vmem:[%s1125] sm:$0x1]
        %vm1138 = vnez %v1137
        %v1139 = vld [vmem:[%s9] sm:$0x3]
        %v1140 = vld [vmem:[%s11] sm:$0x3]
        %v1141 = vadd.f32 %v1129, %v1130
        %1142 = vadd.xlane.f32.xlu0 %v1141
        %v1143 = vpop.xlane.xlu0 %1142
        %v1144 = vrcp.pop 256.0
        %v1145 = vmul.f32 %v1143, %v1144
        %v1146 = vsub.f32 %v1129, %v1145
        %v1147 = vsub.f32 %v1130, %v1145
        %v1148 = vmul.f32 %v1146, %v1146
        %v1149 = vmul.f32 %v1147, %v1147
        %v1150 = vadd.f32 %v1148, %v1149
        %1151 = vadd.xlane.f32.xlu0 %v1150
        %v1152 = vpop.xlane.xlu0 %1151
        %v1153 = vmul.f32 %v1152, %v1144
        %v1154 = vadd.f32 %v1153, 1e-05
        %v1155 = vrsqrt.pop %v1154
        %v1156 = vmul.f32 %v1146, %v1155
        %v1157 = vmul.f32 %v1147, %v1155
        %v1159 = vlaneseq
        %v1160 = vshrl.u32 %v1159, 7
        %v1161 = vsub.s32 0, %v1160
        %v1162 = vrot.slane %v1139, %v1161
        %v1163 = vlaneseq
        %v1164 = vshrl.u32 %v1163, 7
        %v1165 = vsub.s32 1, %v1164
        %v1166 = vrot.slane %v1139, %v1165
        %v1169 = vmul.f32 %v1156, %v1162
        %v1170 = vmul.f32 %v1157, %v1166
        %v1172 = vlaneseq
        %v1173 = vshrl.u32 %v1172, 7
        %v1174 = vsub.s32 0, %v1173
        %v1175 = vrot.slane %v1140, %v1174
        %v1176 = vlaneseq
        %v1177 = vshrl.u32 %v1176, 7
        %v1178 = vsub.s32 1, %v1177
        %v1179 = vrot.slane %v1140, %v1178
        %v1182 = vadd.f32 %v1169, %v1175
        %v1183 = vadd.f32 %v1170, %v1179
        %v1184 = vpack.c.bf16 %v1182, %v1182
        %v1185 = vpack.c.bf16 %v1183, %v1183
        %v1186 = vld [vmem:[#allocation5] sm:$0xff]
        %v1187 = vld [vmem:[#allocation5 + $0x8] sm:$0xff]
        %v1188 = vld [vmem:[#allocation5 + $0x10] sm:$0xff]
        %v1189 = vld [vmem:[#allocation5 + $0x18] sm:$0xff]
        %v1190 = vld [vmem:[#allocation5 + $0x20] sm:$0xff]
        %v1191 = vld [vmem:[#allocation5 + $0x28] sm:$0xff]
        %v1192 = vld [vmem:[#allocation5 + $0x30] sm:$0xff]
        %v1193 = vld [vmem:[#allocation5 + $0x38] sm:$0xff]
        %v1194 = vld [vmem:[#allocation5 + $0x40] sm:$0xff]
        %v1195 = vld [vmem:[#allocation5 + $0x48] sm:$0xff]
        %v1196 = vld [vmem:[#allocation5 + $0x50] sm:$0xff]
        %v1197 = vld [vmem:[#allocation5 + $0x58] sm:$0xff]
        %v1198 = vld [vmem:[#allocation5 + $0x60] sm:$0xff]
        %v1199 = vld [vmem:[#allocation5 + $0x68] sm:$0xff]
        %v1200 = vld [vmem:[#allocation5 + $0x70] sm:$0xff]
        %v1201 = vld [vmem:[#allocation5 + $0x78] sm:$0xff]
        %v1202 = vld [vmem:[#allocation5 + $0x80] sm:$0xff]
        %v1203 = vld [vmem:[#allocation5 + $0x88] sm:$0xff]
        %v1204 = vld [vmem:[#allocation5 + $0x90] sm:$0xff]
        %v1205 = vld [vmem:[#allocation5 + $0x98] sm:$0xff]
        %v1206 = vld [vmem:[#allocation5 + $0xa0] sm:$0xff]
        %v1207 = vld [vmem:[#allocation5 + $0xa8] sm:$0xff]
        %v1208 = vld [vmem:[#allocation5 + $0xb0] sm:$0xff]
        %v1209 = vld [vmem:[#allocation5 + $0xb8] sm:$0xff]
        %v1210 = vld [vmem:[#allocation5 + $0xc0] sm:$0xff]
        %v1211 = vld [vmem:[#allocation5 + $0xc8] sm:$0xff]
        %v1212 = vld [vmem:[#allocation5 + $0xd0] sm:$0xff]
        %v1213 = vld [vmem:[#allocation5 + $0xd8] sm:$0xff]
        %v1214 = vld [vmem:[#allocation5 + $0xe0] sm:$0xff]
        %v1215 = vld [vmem:[#allocation5 + $0xe8] sm:$0xff]
        %v1216 = vld [vmem:[#allocation5 + $0xf0] sm:$0xff]
        %v1217 = vld [vmem:[#allocation5 + $0xf8] sm:$0xff]
        %v1218 = vld [vmem:[%s15] sm:$0x3]
        %v1220 = vlaneseq
        %v1221 = vshrl.u32 %v1220, 7
        %v1222 = vsub.s32 0, %v1221
        %v1223 = vrot.slane %v1218, %v1222
        %v1224 = vlaneseq
        %v1225 = vshrl.u32 %v1224, 7
        %v1226 = vsub.s32 1, %v1225
        %v1227 = vrot.slane %v1218, %v1226
        %v1262 = vunpack.c.l.b16 %v1186
        %v1263 = vunpack.c.h.b16 %v1186
        %v1264 = vunpack.c.l.b16 %v1187
        %v1265 = vunpack.c.h.b16 %v1187
        %v1266 = vunpack.c.l.b16 %v1188
        %v1267 = vunpack.c.h.b16 %v1188
        %v1268 = vunpack.c.l.b16 %v1189
        %v1269 = vunpack.c.h.b16 %v1189
        %v1270 = vunpack.c.l.b16 %v1190
        %v1271 = vunpack.c.h.b16 %v1190
        %v1272 = vunpack.c.l.b16 %v1191
        %v1273 = vunpack.c.h.b16 %v1191
        %v1274 = vunpack.c.l.b16 %v1192
        %v1275 = vunpack.c.h.b16 %v1192
        %v1276 = vunpack.c.l.b16 %v1193
        %v1277 = vunpack.c.h.b16 %v1193
        %v1278 = vunpack.c.l.b16 %v1194
        %v1279 = vunpack.c.h.b16 %v1194
        %v1280 = vunpack.c.l.b16 %v1195
        %v1281 = vunpack.c.h.b16 %v1195
        %v1282 = vunpack.c.l.b16 %v1196
        %v1283 = vunpack.c.h.b16 %v1196
        %v1284 = vunpack.c.l.b16 %v1197
        %v1285 = vunpack.c.h.b16 %v1197
        %v1286 = vunpack.c.l.b16 %v1198
        %v1287 = vunpack.c.h.b16 %v1198
        %v1288 = vunpack.c.l.b16 %v1199
        %v1289 = vunpack.c.h.b16 %v1199
        %v1290 = vunpack.c.l.b16 %v1200
        %v1291 = vunpack.c.h.b16 %v1200
        %v1292 = vunpack.c.l.b16 %v1201
        %v1293 = vunpack.c.h.b16 %v1201
        %v1294 = vunpack.c.l.b16 %v1202
        %v1295 = vunpack.c.h.b16 %v1202
        %v1296 = vunpack.c.l.b16 %v1203
        %v1297 = vunpack.c.h.b16 %v1203
        %v1298 = vunpack.c.l.b16 %v1204
        %v1299 = vunpack.c.h.b16 %v1204
        %v1300 = vunpack.c.l.b16 %v1205
        %v1301 = vunpack.c.h.b16 %v1205
        %v1302 = vunpack.c.l.b16 %v1206
        %v1303 = vunpack.c.h.b16 %v1206
        %v1304 = vunpack.c.l.b16 %v1207
        %v1305 = vunpack.c.h.b16 %v1207
        %v1306 = vunpack.c.l.b16 %v1208
        %v1307 = vunpack.c.h.b16 %v1208
        %v1308 = vunpack.c.l.b16 %v1209
        %v1309 = vunpack.c.h.b16 %v1209
        %v1310 = vunpack.c.l.b16 %v1210
        %v1311 = vunpack.c.h.b16 %v1210
        %v1312 = vunpack.c.l.b16 %v1211
        %v1313 = vunpack.c.h.b16 %v1211
        %v1314 = vunpack.c.l.b16 %v1212
        %v1315 = vunpack.c.h.b16 %v1212
        %v1316 = vunpack.c.l.b16 %v1213
        %v1317 = vunpack.c.h.b16 %v1213
        %v1318 = vunpack.c.l.b16 %v1214
        %v1319 = vunpack.c.h.b16 %v1214
        %v1320 = vunpack.c.l.b16 %v1215
        %v1321 = vunpack.c.h.b16 %v1215
        %v1322 = vunpack.c.l.b16 %v1216
        %v1323 = vunpack.c.h.b16 %v1216
        %v1324 = vunpack.c.l.b16 %v1217
        %v1325 = vunpack.c.h.b16 %v1217
        %v1326 = vpack.c.b16 %v1264, %v1262
        %v1327 = vpack.c.b16 %v1265, %v1263
        %v1328 = vpack.c.b16 %v1268, %v1266
        %v1329 = vpack.c.b16 %v1269, %v1267
        %v1330 = vpack.c.b16 %v1272, %v1270
        %v1331 = vpack.c.b16 %v1273, %v1271
        %v1332 = vpack.c.b16 %v1276, %v1274
        %v1333 = vpack.c.b16 %v1277, %v1275
        %v1334 = vpack.c.b16 %v1280, %v1278
        %v1335 = vpack.c.b16 %v1281, %v1279
        %v1336 = vpack.c.b16 %v1284, %v1282
        %v1337 = vpack.c.b16 %v1285, %v1283
        %v1338 = vpack.c.b16 %v1288, %v1286
        %v1339 = vpack.c.b16 %v1289, %v1287
        %v1340 = vpack.c.b16 %v1292, %v1290
        %v1341 = vpack.c.b16 %v1293, %v1291
        %v1342 = vpack.c.b16 %v1296, %v1294
        %v1343 = vpack.c.b16 %v1297, %v1295
        %v1344 = vpack.c.b16 %v1300, %v1298
        %v1345 = vpack.c.b16 %v1301, %v1299
        %v1346 = vpack.c.b16 %v1304, %v1302
        %v1347 = vpack.c.b16 %v1305, %v1303
        %v1348 = vpack.c.b16 %v1308, %v1306
        %v1349 = vpack.c.b16 %v1309, %v1307
        %v1350 = vpack.c.b16 %v1312, %v1310
        %v1351 = vpack.c.b16 %v1313, %v1311
        %v1352 = vpack.c.b16 %v1316, %v1314
        %v1353 = vpack.c.b16 %v1317, %v1315
        %v1354 = vpack.c.b16 %v1320, %v1318
        %v1355 = vpack.c.b16 %v1321, %v1319
        %v1356 = vpack.c.b16 %v1324, %v1322
        %v1357 = vpack.c.b16 %v1325, %v1323
        %1390 = vmatprep.subr.bf16.mxu0 %v1327
        %1391 = vmatpush1.bf16.msra.mxu0 %v1326
        %1392 = vmatprep.subr.bf16.mxu0 %v1329
        %1393 = vmatpush1.bf16.msra.mxu0 %v1328
        %1394 = vmatprep.subr.bf16.mxu0 %v1331
        %1395 = vmatpush1.bf16.msra.mxu0 %v1330
        %1396 = vmatprep.subr.bf16.mxu0 %v1333
        %1397 = vmatpush1.bf16.msra.mxu0 %v1332
        %1398 = vmatprep.subr.bf16.mxu0 %v1335
        %1399 = vmatpush1.bf16.msra.mxu0 %v1334
        %1400 = vmatprep.subr.bf16.mxu0 %v1337
        %1401 = vmatpush1.bf16.msra.mxu0 %v1336
        %1402 = vmatprep.subr.bf16.mxu0 %v1339
        %1403 = vmatpush1.bf16.msra.mxu0 %v1338
        %1404 = vmatprep.subr.bf16.mxu0 %v1341
        %1405 = vmatpush1.bf16.msra.mxu0 %v1340
        %1406 = vmatprep.subr.bf16.mxu0 %v1343
        %1407 = vmatpush1.bf16.msra.mxu0 %v1342
        %1408 = vmatprep.subr.bf16.mxu0 %v1345
        %1409 = vmatpush1.bf16.msra.mxu0 %v1344
        %1410 = vmatprep.subr.bf16.mxu0 %v1347
        %1411 = vmatpush1.bf16.msra.mxu0 %v1346
        %1412 = vmatprep.subr.bf16.mxu0 %v1349
        %1413 = vmatpush1.bf16.msra.mxu0 %v1348
        %1414 = vmatprep.subr.bf16.mxu0 %v1351
        %1415 = vmatpush1.bf16.msra.mxu0 %v1350
        %1416 = vmatprep.subr.bf16.mxu0 %v1353
        %1417 = vmatpush1.bf16.msra.mxu0 %v1352
        %1418 = vmatprep.subr.bf16.mxu0 %v1355
        %1419 = vmatpush1.bf16.msra.mxu0 %v1354
        %1420 = vmatprep.subr.bf16.mxu0 %v1357
        %1421 = vmatpush1.bf16.msra.mxu0 %v1356
        %1422 = vmatprep.mubr.bf16.mxu0 %v1185
        %1423 = vmatmul.mubr.bf16.gmra.mrb[0].mxu0 %v1184
        %v1424 = vpop.f32.mrb[0].mxu0
        %v1425 = vadd.f32 %v1223, %v1424
        %v1426 = vpop.f32.mrb[0].mxu0
        %v1427 = vadd.f32 %v1227, %v1426
        %v1428 = vpop.f32.mrb[0].mxu0
        %v1429 = vpop.f32.mrb[0].mxu0
        %1430 = vdwg.mxu0
        %v1431 = vld [vmem:[#allocation7] sm:$0xff]
        %v1432 = vld [vmem:[#allocation7 + $0x8] sm:$0xff]
        %v1433 = vld [vmem:[#allocation7 + $0x10] sm:$0xff]
        %v1434 = vld [vmem:[#allocation7 + $0x18] sm:$0xff]
        %v1435 = vld [vmem:[#allocation7 + $0x20] sm:$0xff]
        %v1436 = vld [vmem:[#allocation7 + $0x28] sm:$0xff]
        %v1437 = vld [vmem:[#allocation7 + $0x30] sm:$0xff]
        %v1438 = vld [vmem:[#allocation7 + $0x38] sm:$0xff]
        %v1439 = vld [vmem:[#allocation7 + $0x40] sm:$0xff]
        %v1440 = vld [vmem:[#allocation7 + $0x48] sm:$0xff]
        %v1441 = vld [vmem:[#allocation7 + $0x50] sm:$0xff]
        %v1442 = vld [vmem:[#allocation7 + $0x58] sm:$0xff]
        %v1443 = vld [vmem:[#allocation7 + $0x60] sm:$0xff]
        %v1444 = vld [vmem:[#allocation7 + $0x68] sm:$0xff]
        %v1445 = vld [vmem:[#allocation7 + $0x70] sm:$0xff]
        %v1446 = vld [vmem:[#allocation7 + $0x78] sm:$0xff]
        %v1447 = vld [vmem:[#allocation7 + $0x80] sm:$0xff]
        %v1448 = vld [vmem:[#allocation7 + $0x88] sm:$0xff]
        %v1449 = vld [vmem:[#allocation7 + $0x90] sm:$0xff]
        %v1450 = vld [vmem:[#allocation7 + $0x98] sm:$0xff]
        %v1451 = vld [vmem:[#allocation7 + $0xa0] sm:$0xff]
        %v1452 = vld [vmem:[#allocation7 + $0xa8] sm:$0xff]
        %v1453 = vld [vmem:[#allocation7 + $0xb0] sm:$0xff]
        %v1454 = vld [vmem:[#allocation7 + $0xb8] sm:$0xff]
        %v1455 = vld [vmem:[#allocation7 + $0xc0] sm:$0xff]
        %v1456 = vld [vmem:[#allocation7 + $0xc8] sm:$0xff]
        %v1457 = vld [vmem:[#allocation7 + $0xd0] sm:$0xff]
        %v1458 = vld [vmem:[#allocation7 + $0xd8] sm:$0xff]
        %v1459 = vld [vmem:[#allocation7 + $0xe0] sm:$0xff]
        %v1460 = vld [vmem:[#allocation7 + $0xe8] sm:$0xff]
        %v1461 = vld [vmem:[#allocation7 + $0xf0] sm:$0xff]
        %v1462 = vld [vmem:[#allocation7 + $0xf8] sm:$0xff]
        %v1463 = vld [vmem:[%s19] sm:$0x3]
        %v1465 = vlaneseq
        %v1466 = vshrl.u32 %v1465, 7
        %v1467 = vsub.s32 0, %v1466
        %v1468 = vrot.slane %v1463, %v1467
        %v1469 = vlaneseq
        %v1470 = vshrl.u32 %v1469, 7
        %v1471 = vsub.s32 1, %v1470
        %v1472 = vrot.slane %v1463, %v1471
        %v1507 = vunpack.c.l.b16 %v1431
        %v1508 = vunpack.c.h.b16 %v1431
        %v1509 = vunpack.c.l.b16 %v1432
        %v1510 = vunpack.c.h.b16 %v1432
        %v1511 = vunpack.c.l.b16 %v1433
        %v1512 = vunpack.c.h.b16 %v1433
        %v1513 = vunpack.c.l.b16 %v1434
        %v1514 = vunpack.c.h.b16 %v1434
        %v1515 = vunpack.c.l.b16 %v1435
        %v1516 = vunpack.c.h.b16 %v1435
        %v1517 = vunpack.c.l.b16 %v1436
        %v1518 = vunpack.c.h.b16 %v1436
        %v1519 = vunpack.c.l.b16 %v1437
        %v1520 = vunpack.c.h.b16 %v1437
        %v1521 = vunpack.c.l.b16 %v1438
        %v1522 = vunpack.c.h.b16 %v1438
        %v1523 = vunpack.c.l.b16 %v1439
        %v1524 = vunpack.c.h.b16 %v1439
        %v1525 = vunpack.c.l.b16 %v1440
        %v1526 = vunpack.c.h.b16 %v1440
        %v1527 = vunpack.c.l.b16 %v1441
        %v1528 = vunpack.c.h.b16 %v1441
        %v1529 = vunpack.c.l.b16 %v1442
        %v1530 = vunpack.c.h.b16 %v1442
        %v1531 = vunpack.c.l.b16 %v1443
        %v1532 = vunpack.c.h.b16 %v1443
        %v1533 = vunpack.c.l.b16 %v1444
        %v1534 = vunpack.c.h.b16 %v1444
        %v1535 = vunpack.c.l.b16 %v1445
        %v1536 = vunpack.c.h.b16 %v1445
        %v1537 = vunpack.c.l.b16 %v1446
        %v1538 = vunpack.c.h.b16 %v1446
        %v1539 = vunpack.c.l.b16 %v1447
        %v1540 = vunpack.c.h.b16 %v1447
        %v1541 = vunpack.c.l.b16 %v1448
        %v1542 = vunpack.c.h.b16 %v1448
        %v1543 = vunpack.c.l.b16 %v1449
        %v1544 = vunpack.c.h.b16 %v1449
        %v1545 = vunpack.c.l.b16 %v1450
        %v1546 = vunpack.c.h.b16 %v1450
        %v1547 = vunpack.c.l.b16 %v1451
        %v1548 = vunpack.c.h.b16 %v1451
        %v1549 = vunpack.c.l.b16 %v1452
        %v1550 = vunpack.c.h.b16 %v1452
        %v1551 = vunpack.c.l.b16 %v1453
        %v1552 = vunpack.c.h.b16 %v1453
        %v1553 = vunpack.c.l.b16 %v1454
        %v1554 = vunpack.c.h.b16 %v1454
        %v1555 = vunpack.c.l.b16 %v1455
        %v1556 = vunpack.c.h.b16 %v1455
        %v1557 = vunpack.c.l.b16 %v1456
        %v1558 = vunpack.c.h.b16 %v1456
        %v1559 = vunpack.c.l.b16 %v1457
        %v1560 = vunpack.c.h.b16 %v1457
        %v1561 = vunpack.c.l.b16 %v1458
        %v1562 = vunpack.c.h.b16 %v1458
        %v1563 = vunpack.c.l.b16 %v1459
        %v1564 = vunpack.c.h.b16 %v1459
        %v1565 = vunpack.c.l.b16 %v1460
        %v1566 = vunpack.c.h.b16 %v1460
        %v1567 = vunpack.c.l.b16 %v1461
        %v1568 = vunpack.c.h.b16 %v1461
        %v1569 = vunpack.c.l.b16 %v1462
        %v1570 = vunpack.c.h.b16 %v1462
        %v1571 = vpack.c.b16 %v1509, %v1507
        %v1572 = vpack.c.b16 %v1510, %v1508
        %v1573 = vpack.c.b16 %v1513, %v1511
        %v1574 = vpack.c.b16 %v1514, %v1512
        %v1575 = vpack.c.b16 %v1517, %v1515
        %v1576 = vpack.c.b16 %v1518, %v1516
        %v1577 = vpack.c.b16 %v1521, %v1519
        %v1578 = vpack.c.b16 %v1522, %v1520
        %v1579 = vpack.c.b16 %v1525, %v1523
        %v1580 = vpack.c.b16 %v1526, %v1524
        %v1581 = vpack.c.b16 %v1529, %v1527
        %v1582 = vpack.c.b16 %v1530, %v1528
        %v1583 = vpack.c.b16 %v1533, %v1531
        %v1584 = vpack.c.b16 %v1534, %v1532
        %v1585 = vpack.c.b16 %v1537, %v1535
        %v1586 = vpack.c.b16 %v1538, %v1536
        %v1587 = vpack.c.b16 %v1541, %v1539
        %v1588 = vpack.c.b16 %v1542, %v1540
        %v1589 = vpack.c.b16 %v1545, %v1543
        %v1590 = vpack.c.b16 %v1546, %v1544
        %v1591 = vpack.c.b16 %v1549, %v1547
        %v1592 = vpack.c.b16 %v1550, %v1548
        %v1593 = vpack.c.b16 %v1553, %v1551
        %v1594 = vpack.c.b16 %v1554, %v1552
        %v1595 = vpack.c.b16 %v1557, %v1555
        %v1596 = vpack.c.b16 %v1558, %v1556
        %v1597 = vpack.c.b16 %v1561, %v1559
        %v1598 = vpack.c.b16 %v1562, %v1560
        %v1599 = vpack.c.b16 %v1565, %v1563
        %v1600 = vpack.c.b16 %v1566, %v1564
        %v1601 = vpack.c.b16 %v1569, %v1567
        %v1602 = vpack.c.b16 %v1570, %v1568
        %1635 = vmatprep.subr.bf16.mxu0 %v1572
        %1636 = vmatpush1.bf16.msra.mxu0 %v1571
        %1637 = vmatprep.subr.bf16.mxu0 %v1574
        %1638 = vmatpush1.bf16.msra.mxu0 %v1573
        %1639 = vmatprep.subr.bf16.mxu0 %v1576
        %1640 = vmatpush1.bf16.msra.mxu0 %v1575
        %1641 = vmatprep.subr.bf16.mxu0 %v1578
        %1642 = vmatpush1.bf16.msra.mxu0 %v1577
        %1643 = vmatprep.subr.bf16.mxu0 %v1580
        %1644 = vmatpush1.bf16.msra.mxu0 %v1579
        %1645 = vmatprep.subr.bf16.mxu0 %v1582
        %1646 = vmatpush1.bf16.msra.mxu0 %v1581
        %1647 = vmatprep.subr.bf16.mxu0 %v1584
        %1648 = vmatpush1.bf16.msra.mxu0 %v1583
        %1649 = vmatprep.subr.bf16.mxu0 %v1586
        %1650 = vmatpush1.bf16.msra.mxu0 %v1585
        %1651 = vmatprep.subr.bf16.mxu0 %v1588
        %1652 = vmatpush1.bf16.msra.mxu0 %v1587
        %1653 = vmatprep.subr.bf16.mxu0 %v1590
        %1654 = vmatpush1.bf16.msra.mxu0 %v1589
        %1655 = vmatprep.subr.bf16.mxu0 %v1592
        %1656 = vmatpush1.bf16.msra.mxu0 %v1591
        %1657 = vmatprep.subr.bf16.mxu0 %v1594
        %1658 = vmatpush1.bf16.msra.mxu0 %v1593
        %1659 = vmatprep.subr.bf16.mxu0 %v1596
        %1660 = vmatpush1.bf16.msra.mxu0 %v1595
        %1661 = vmatprep.subr.bf16.mxu0 %v1598
        %1662 = vmatpush1.bf16.msra.mxu0 %v1597
        %1663 = vmatprep.subr.bf16.mxu0 %v1600
        %1664 = vmatpush1.bf16.msra.mxu0 %v1599
        %1665 = vmatprep.subr.bf16.mxu0 %v1602
        %1666 = vmatpush1.bf16.msra.mxu0 %v1601
        %1667 = vmatprep.mubr.bf16.mxu0 %v1185
        %1668 = vmatmul.mubr.bf16.gmra.mrb[0].mxu0 %v1184
        %v1669 = vpop.f32.mrb[0].mxu0
        %v1670 = vadd.f32 %v1468, %v1669
        %v1671 = vpop.f32.mrb[0].mxu0
        %v1672 = vadd.f32 %v1472, %v1671
        %v1673 = vpop.f32.mrb[0].mxu0
        %v1674 = vpop.f32.mrb[0].mxu0
        %1675 = vdwg.mxu0
        %v1676 = vld [vmem:[#allocation8] sm:$0xff]
        %v1677 = vld [vmem:[#allocation8 + $0x8] sm:$0xff]
        %v1678 = vld [vmem:[#allocation8 + $0x10] sm:$0xff]
        %v1679 = vld [vmem:[#allocation8 + $0x18] sm:$0xff]
        %v1680 = vld [vmem:[#allocation8 + $0x20] sm:$0xff]
        %v1681 = vld [vmem:[#allocation8 + $0x28] sm:$0xff]
        %v1682 = vld [vmem:[#allocation8 + $0x30] sm:$0xff]
        %v1683 = vld [vmem:[#allocation8 + $0x38] sm:$0xff]
        %v1684 = vld [vmem:[#allocation8 + $0x40] sm:$0xff]
        %v1685 = vld [vmem:[#allocation8 + $0x48] sm:$0xff]
        %v1686 = vld [vmem:[#allocation8 + $0x50] sm:$0xff]
        %v1687 = vld [vmem:[#allocation8 + $0x58] sm:$0xff]
        %v1688 = vld [vmem:[#allocation8 + $0x60] sm:$0xff]
        %v1689 = vld [vmem:[#allocation8 + $0x68] sm:$0xff]
        %v1690 = vld [vmem:[#allocation8 + $0x70] sm:$0xff]
        %v1691 = vld [vmem:[#allocation8 + $0x78] sm:$0xff]
        %v1692 = vld [vmem:[#allocation8 + $0x80] sm:$0xff]
        %v1693 = vld [vmem:[#allocation8 + $0x88] sm:$0xff]
        %v1694 = vld [vmem:[#allocation8 + $0x90] sm:$0xff]
        %v1695 = vld [vmem:[#allocation8 + $0x98] sm:$0xff]
        %v1696 = vld [vmem:[#allocation8 + $0xa0] sm:$0xff]
        %v1697 = vld [vmem:[#allocation8 + $0xa8] sm:$0xff]
        %v1698 = vld [vmem:[#allocation8 + $0xb0] sm:$0xff]
        %v1699 = vld [vmem:[#allocation8 + $0xb8] sm:$0xff]
        %v1700 = vld [vmem:[#allocation8 + $0xc0] sm:$0xff]
        %v1701 = vld [vmem:[#allocation8 + $0xc8] sm:$0xff]
        %v1702 = vld [vmem:[#allocation8 + $0xd0] sm:$0xff]
        %v1703 = vld [vmem:[#allocation8 + $0xd8] sm:$0xff]
        %v1704 = vld [vmem:[#allocation8 + $0xe0] sm:$0xff]
        %v1705 = vld [vmem:[#allocation8 + $0xe8] sm:$0xff]
        %v1706 = vld [vmem:[#allocation8 + $0xf0] sm:$0xff]
        %v1707 = vld [vmem:[#allocation8 + $0xf8] sm:$0xff]
        %v1708 = vld [vmem:[%s23] sm:$0x3]
        %v1710 = vlaneseq
        %v1711 = vshrl.u32 %v1710, 7
        %v1712 = vsub.s32 0, %v1711
        %v1713 = vrot.slane %v1708, %v1712
        %v1714 = vlaneseq
        %v1715 = vshrl.u32 %v1714, 7
        %v1716 = vsub.s32 1, %v1715
        %v1717 = vrot.slane %v1708, %v1716
        %v1752 = vunpack.c.l.b16 %v1676
        %v1753 = vunpack.c.h.b16 %v1676
        %v1754 = vunpack.c.l.b16 %v1677
        %v1755 = vunpack.c.h.b16 %v1677
        %v1756 = vunpack.c.l.b16 %v1678
        %v1757 = vunpack.c.h.b16 %v1678
        %v1758 = vunpack.c.l.b16 %v1679
        %v1759 = vunpack.c.h.b16 %v1679
        %v1760 = vunpack.c.l.b16 %v1680
        %v1761 = vunpack.c.h.b16 %v1680
        %v1762 = vunpack.c.l.b16 %v1681
        %v1763 = vunpack.c.h.b16 %v1681
        %v1764 = vunpack.c.l.b16 %v1682
        %v1765 = vunpack.c.h.b16 %v1682
        %v1766 = vunpack.c.l.b16 %v1683
        %v1767 = vunpack.c.h.b16 %v1683
        %v1768 = vunpack.c.l.b16 %v1684
        %v1769 = vunpack.c.h.b16 %v1684
        %v1770 = vunpack.c.l.b16 %v1685
        %v1771 = vunpack.c.h.b16 %v1685
        %v1772 = vunpack.c.l.b16 %v1686
        %v1773 = vunpack.c.h.b16 %v1686
        %v1774 = vunpack.c.l.b16 %v1687
        %v1775 = vunpack.c.h.b16 %v1687
        %v1776 = vunpack.c.l.b16 %v1688
        %v1777 = vunpack.c.h.b16 %v1688
        %v1778 = vunpack.c.l.b16 %v1689
        %v1779 = vunpack.c.h.b16 %v1689
        %v1780 = vunpack.c.l.b16 %v1690
        %v1781 = vunpack.c.h.b16 %v1690
        %v1782 = vunpack.c.l.b16 %v1691
        %v1783 = vunpack.c.h.b16 %v1691
        %v1784 = vunpack.c.l.b16 %v1692
        %v1785 = vunpack.c.h.b16 %v1692
        %v1786 = vunpack.c.l.b16 %v1693
        %v1787 = vunpack.c.h.b16 %v1693
        %v1788 = vunpack.c.l.b16 %v1694
        %v1789 = vunpack.c.h.b16 %v1694
        %v1790 = vunpack.c.l.b16 %v1695
        %v1791 = vunpack.c.h.b16 %v1695
        %v1792 = vunpack.c.l.b16 %v1696
        %v1793 = vunpack.c.h.b16 %v1696
        %v1794 = vunpack.c.l.b16 %v1697
        %v1795 = vunpack.c.h.b16 %v1697
        %v1796 = vunpack.c.l.b16 %v1698
        %v1797 = vunpack.c.h.b16 %v1698
        %v1798 = vunpack.c.l.b16 %v1699
        %v1799 = vunpack.c.h.b16 %v1699
        %v1800 = vunpack.c.l.b16 %v1700
        %v1801 = vunpack.c.h.b16 %v1700
        %v1802 = vunpack.c.l.b16 %v1701
        %v1803 = vunpack.c.h.b16 %v1701
        %v1804 = vunpack.c.l.b16 %v1702
        %v1805 = vunpack.c.h.b16 %v1702
        %v1806 = vunpack.c.l.b16 %v1703
        %v1807 = vunpack.c.h.b16 %v1703
        %v1808 = vunpack.c.l.b16 %v1704
        %v1809 = vunpack.c.h.b16 %v1704
        %v1810 = vunpack.c.l.b16 %v1705
        %v1811 = vunpack.c.h.b16 %v1705
        %v1812 = vunpack.c.l.b16 %v1706
        %v1813 = vunpack.c.h.b16 %v1706
        %v1814 = vunpack.c.l.b16 %v1707
        %v1815 = vunpack.c.h.b16 %v1707
        %v1816 = vpack.c.b16 %v1754, %v1752
        %v1817 = vpack.c.b16 %v1755, %v1753
        %v1818 = vpack.c.b16 %v1758, %v1756
        %v1819 = vpack.c.b16 %v1759, %v1757
        %v1820 = vpack.c.b16 %v1762, %v1760
        %v1821 = vpack.c.b16 %v1763, %v1761
        %v1822 = vpack.c.b16 %v1766, %v1764
        %v1823 = vpack.c.b16 %v1767, %v1765
        %v1824 = vpack.c.b16 %v1770, %v1768
        %v1825 = vpack.c.b16 %v1771, %v1769
        %v1826 = vpack.c.b16 %v1774, %v1772
        %v1827 = vpack.c.b16 %v1775, %v1773
        %v1828 = vpack.c.b16 %v1778, %v1776
        %v1829 = vpack.c.b16 %v1779, %v1777
        %v1830 = vpack.c.b16 %v1782, %v1780
        %v1831 = vpack.c.b16 %v1783, %v1781
        %v1832 = vpack.c.b16 %v1786, %v1784
        %v1833 = vpack.c.b16 %v1787, %v1785
        %v1834 = vpack.c.b16 %v1790, %v1788
        %v1835 = vpack.c.b16 %v1791, %v1789
        %v1836 = vpack.c.b16 %v1794, %v1792
        %v1837 = vpack.c.b16 %v1795, %v1793
        %v1838 = vpack.c.b16 %v1798, %v1796
        %v1839 = vpack.c.b16 %v1799, %v1797
        %v1840 = vpack.c.b16 %v1802, %v1800
        %v1841 = vpack.c.b16 %v1803, %v1801
        %v1842 = vpack.c.b16 %v1806, %v1804
        %v1843 = vpack.c.b16 %v1807, %v1805
        %v1844 = vpack.c.b16 %v1810, %v1808
        %v1845 = vpack.c.b16 %v1811, %v1809
        %v1846 = vpack.c.b16 %v1814, %v1812
        %v1847 = vpack.c.b16 %v1815, %v1813
        %1880 = vmatprep.subr.bf16.mxu0 %v1817
        %1881 = vmatpush1.bf16.msra.mxu0 %v1816
        %1882 = vmatprep.subr.bf16.mxu0 %v1819
        %1883 = vmatpush1.bf16.msra.mxu0 %v1818
        %1884 = vmatprep.subr.bf16.mxu0 %v1821
        %1885 = vmatpush1.bf16.msra.mxu0 %v1820
        %1886 = vmatprep.subr.bf16.mxu0 %v1823
        %1887 = vmatpush1.bf16.msra.mxu0 %v1822
        %1888 = vmatprep.subr.bf16.mxu0 %v1825
        %1889 = vmatpush1.bf16.msra.mxu0 %v1824
        %1890 = vmatprep.subr.bf16.mxu0 %v1827
        %1891 = vmatpush1.bf16.msra.mxu0 %v1826
        %1892 = vmatprep.subr.bf16.mxu0 %v1829
        %1893 = vmatpush1.bf16.msra.mxu0 %v1828
        %1894 = vmatprep.subr.bf16.mxu0 %v1831
        %1895 = vmatpush1.bf16.msra.mxu0 %v1830
        %1896 = vmatprep.subr.bf16.mxu0 %v1833
        %1897 = vmatpush1.bf16.msra.mxu0 %v1832
        %1898 = vmatprep.subr.bf16.mxu0 %v1835
        %1899 = vmatpush1.bf16.msra.mxu0 %v1834
        %1900 = vmatprep.subr.bf16.mxu0 %v1837
        %1901 = vmatpush1.bf16.msra.mxu0 %v1836
        %1902 = vmatprep.subr.bf16.mxu0 %v1839
        %1903 = vmatpush1.bf16.msra.mxu0 %v1838
        %1904 = vmatprep.subr.bf16.mxu0 %v1841
        %1905 = vmatpush1.bf16.msra.mxu0 %v1840
        %1906 = vmatprep.subr.bf16.mxu0 %v1843
        %1907 = vmatpush1.bf16.msra.mxu0 %v1842
        %1908 = vmatprep.subr.bf16.mxu0 %v1845
        %1909 = vmatpush1.bf16.msra.mxu0 %v1844
        %1910 = vmatprep.subr.bf16.mxu0 %v1847
        %1911 = vmatpush1.bf16.msra.mxu0 %v1846
        %1912 = vmatprep.mubr.bf16.mxu0 %v1185
        %1913 = vmatmul.mubr.bf16.gmra.mrb[0].mxu0 %v1184
        %v1914 = vpop.f32.mrb[0].mxu0
        %v1915 = vadd.f32 %v1713, %v1914
        %v1916 = vpop.f32.mrb[0].mxu0
        %v1917 = vadd.f32 %v1717, %v1916
        %v1918 = vpop.f32.mrb[0].mxu0
        %v1919 = vpop.f32.mrb[0].mxu0
        %1920 = vdwg.mxu0
        %v1921 = vpack.c.bf16 %v1425, %v1425
        %v1922 = vpack.c.bf16 %v1670, %v1670
        %v1923 = vpack.c.bf16 %v1915, %v1915
        %1924 = vmatprep.subr.bf16.mxu0 0
        %1925 = vmatpush1.bf16.xpose.msra.mxu0 %v1922
        %1926 = vmatprep.subr.bf16.mxu0 0
        %1927 = vmatpush1.bf16.xpose.msra.mxu0 0
        %1928 = vmatprep.subr.bf16.mxu0 0
        %1929 = vmatpush1.bf16.xpose.msra.mxu0 0
        %1930 = vmatprep.subr.bf16.mxu0 0
        %1931 = vmatpush1.bf16.xpose.msra.mxu0 0
        %1932 = vmatprep.subr.bf16.mxu0 0
        %1933 = vmatpush1.bf16.xpose.msra.mxu0 0
        %1934 = vmatprep.subr.bf16.mxu0 0
        %1935 = vmatpush1.bf16.xpose.msra.mxu0 0
        %1936 = vmatprep.subr.bf16.mxu0 0
        %1937 = vmatpush1.bf16.xpose.msra.mxu0 0
        %1938 = vmatprep.subr.bf16.mxu0 0
        %1939 = vmatpush1.bf16.xpose.msra.mxu0 0
        %1940 = vmatprep.subr.bf16.mxu0 0
        %1941 = vmatpush1.bf16.xpose.msra.mxu0 0
        %1942 = vmatprep.subr.bf16.mxu0 0
        %1943 = vmatpush1.bf16.xpose.msra.mxu0 0
        %1944 = vmatprep.subr.bf16.mxu0 0
        %1945 = vmatpush1.bf16.xpose.msra.mxu0 0
        %1946 = vmatprep.subr.bf16.mxu0 0
        %1947 = vmatpush1.bf16.xpose.msra.mxu0 0
        %1948 = vmatprep.subr.bf16.mxu0 0
        %1949 = vmatpush1.bf16.xpose.msra.mxu0 0
        %1950 = vmatprep.subr.bf16.mxu0 0
        %1951 = vmatpush1.bf16.xpose.msra.mxu0 0
        %1952 = vmatprep.subr.bf16.mxu0 0
        %1953 = vmatpush1.bf16.xpose.msra.mxu0 0
        %1954 = vmatprep.subr.bf16.mxu0 0
        %1955 = vmatpush1.bf16.xpose.msra.mxu0 0
        %1956 = vmatprep.mubr.bf16.mxu0 0
        %1957 = vmatmul.mubr.bf16.gmra.mrb[0].mxu0 %v1921
        %v1958 = vpop.f32.mrb[0].mxu0
        %v1959 = vadd.f32 0.0, %v1958
        %v1960 = vpop.f32.mrb[0].mxu0
        %v1961 = vpop.f32.mrb[0].mxu0
        %v1962 = vpop.f32.mrb[0].mxu0
        %1963 = vdwg.mxu0
        %v1964 = vsel %vm1136, 16843009, 0
        %v1965 = vunpack.c.0.s8 %v1964
        %vm1966 = vcmp.ne.s32.totalorder %v1965, 0
        %v1967 = vsel %vm1966, %v1959, -1e+09
        %vm1968 = vcmask 64512
        %v1969 = vsel %vm1968, %v1967, -inf
        %1970 = vmax.xlane.f32.xlu0 %v1969
        %v1971 = vpop.xlane.xlu0 %1970
        %v1972 = vsub.f32 %v1967, %v1971
        %v1973 = vmul.f32 %v1972, 1.442695
        %v1974 = vpow.pop %v1973
        %v1975 = vsel %vm1968, %v1974, 0.0
        %1976 = vadd.xlane.f32.xlu0 %v1975
        %v1977 = vpop.xlane.xlu0 %1976
        %v1978 = vrcp.pop %v1977
        %v1979 = vmul.f32 %v1974, %v1978
        %v1980 = vpack.c.bf16 %v1979, %v1979
        %v1982 = vsel %vm1968, %v1980, 0
        %vm1984 = vcmask 1043456
        %v1986 = vsel %vm1984, %v1923, 0
        %1988 = vmatprep.subr.bf16.mxu0 0
        %1989 = vmatpush1.bf16.msra.mxu0 %v1986
        %1990 = vmatprep.subr.bf16.mxu0 0
        %1991 = vmatpush1.bf16.msra.mxu0 0
        %1992 = vmatprep.subr.bf16.mxu0 0
        %1993 = vmatpush1.bf16.msra.mxu0 0
        %1994 = vmatprep.subr.bf16.mxu0 0
        %1995 = vmatpush1.bf16.msra.mxu0 0
        %1996 = vmatprep.subr.bf16.mxu0 0
        %1997 = vmatpush1.bf16.msra.mxu0 0
        %1998 = vmatprep.subr.bf16.mxu0 0
        %1999 = vmatpush1.bf16.msra.mxu0 0
        %2000 = vmatprep.subr.bf16.mxu0 0
        %2001 = vmatpush1.bf16.msra.mxu0 0
        %2002 = vmatprep.subr.bf16.mxu0 0
        %2003 = vmatpush1.bf16.msra.mxu0 0
        %2004 = vmatprep.subr.bf16.mxu0 0
        %2005 = vmatpush1.bf16.msra.mxu0 0
        %2006 = vmatprep.subr.bf16.mxu0 0
        %2007 = vmatpush1.bf16.msra.mxu0 0
        %2008 = vmatprep.subr.bf16.mxu0 0
        %2009 = vmatpush1.bf16.msra.mxu0 0
        %2010 = vmatprep.subr.bf16.mxu0 0
        %2011 = vmatpush1.bf16.msra.mxu0 0
        %2012 = vmatprep.subr.bf16.mxu0 0
        %2013 = vmatpush1.bf16.msra.mxu0 0
        %2014 = vmatprep.subr.bf16.mxu0 0
        %2015 = vmatpush1.bf16.msra.mxu0 0
        %2016 = vmatprep.subr.bf16.mxu0 0
        %2017 = vmatpush1.bf16.msra.mxu0 0
        %2018 = vmatprep.subr.bf16.mxu0 0
        %2019 = vmatpush1.bf16.msra.mxu0 0
        %2020 = vmatprep.mubr.bf16.mxu0 0
        %2021 = vmatmul.mubr.bf16.gmra.mrb[0].mxu0 %v1982
        %v2022 = vpop.f32.mrb[0].mxu0
        %v2023 = vadd.f32 0.0, %v2022
        %v2024 = vpop.f32.mrb[0].mxu0
        %v2025 = vpop.f32.mrb[0].mxu0
        %v2026 = vpop.f32.mrb[0].mxu0
        %2027 = vdwg.mxu0
        %v2028 = vpack.c.bf16 %v2023, %v2023
        %v2029 = vld [vmem:[#allocation10] sm:$0xff]
        %v2030 = vld [vmem:[#allocation10 + $0x8] sm:$0xff]
        %v2031 = vld [vmem:[#allocation10 + $0x10] sm:$0xff]
        %v2032 = vld [vmem:[#allocation10 + $0x18] sm:$0xff]
        %v2033 = vld [vmem:[#allocation10 + $0x20] sm:$0xff]
        %v2034 = vld [vmem:[#allocation10 + $0x28] sm:$0xff]
        %v2035 = vld [vmem:[#allocation10 + $0x30] sm:$0xff]
        %v2036 = vld [vmem:[#allocation10 + $0x38] sm:$0xff]
        %v2037 = vld [vmem:[#allocation10 + $0x40] sm:$0xff]
        %v2038 = vld [vmem:[#allocation10 + $0x48] sm:$0xff]
        %v2039 = vld [vmem:[#allocation10 + $0x50] sm:$0xff]
        %v2040 = vld [vmem:[#allocation10 + $0x58] sm:$0xff]
        %v2041 = vld [vmem:[#allocation10 + $0x60] sm:$0xff]
        %v2042 = vld [vmem:[#allocation10 + $0x68] sm:$0xff]
        %v2043 = vld [vmem:[#allocation10 + $0x70] sm:$0xff]
        %v2044 = vld [vmem:[#allocation10 + $0x78] sm:$0xff]
        %v2045 = vpack.c.bf16 %v1427, %v1427
        %v2046 = vpack.c.bf16 %v1672, %v1672
        %v2047 = vpack.c.bf16 %v1917, %v1917
        %2048 = vmatprep.subr.bf16.mxu0 0
        %2049 = vmatpush1.bf16.xpose.msra.mxu0 %v2046
        %2050 = vmatprep.subr.bf16.mxu0 0
        %2051 = vmatpush1.bf16.xpose.msra.mxu0 0
        %2052 = vmatprep.subr.bf16.mxu0 0
        %2053 = vmatpush1.bf16.xpose.msra.mxu0 0
        %2054 = vmatprep.subr.bf16.mxu0 0
        %2055 = vmatpush1.bf16.xpose.msra.mxu0 0
        %2056 = vmatprep.subr.bf16.mxu0 0
        %2057 = vmatpush1.bf16.xpose.msra.mxu0 0
        %2058 = vmatprep.subr.bf16.mxu0 0
        %2059 = vmatpush1.bf16.xpose.msra.mxu0 0
        %2060 = vmatprep.subr.bf16.mxu0 0
        %2061 = vmatpush1.bf16.xpose.msra.mxu0 0
        %2062 = vmatprep.subr.bf16.mxu0 0
        %2063 = vmatpush1.bf16.xpose.msra.mxu0 0
        %2064 = vmatprep.subr.bf16.mxu0 0
        %2065 = vmatpush1.bf16.xpose.msra.mxu0 0
        %2066 = vmatprep.subr.bf16.mxu0 0
        %2067 = vmatpush1.bf16.xpose.msra.mxu0 0
        %2068 = vmatprep.subr.bf16.mxu0 0
        %2069 = vmatpush1.bf16.xpose.msra.mxu0 0
        %2070 = vmatprep.subr.bf16.mxu0 0
        %2071 = vmatpush1.bf16.xpose.msra.mxu0 0
        %2072 = vmatprep.subr.bf16.mxu0 0
        %2073 = vmatpush1.bf16.xpose.msra.mxu0 0
        %2074 = vmatprep.subr.bf16.mxu0 0
        %2075 = vmatpush1.bf16.xpose.msra.mxu0 0
        %2076 = vmatprep.subr.bf16.mxu0 0
        %2077 = vmatpush1.bf16.xpose.msra.mxu0 0
        %2078 = vmatprep.subr.bf16.mxu0 0
        %2079 = vmatpush1.bf16.xpose.msra.mxu0 0
        %2080 = vmatprep.mubr.bf16.mxu0 0
        %2081 = vmatmul.mubr.bf16.gmra.mrb[0].mxu0 %v2045
        %v2082 = vpop.f32.mrb[0].mxu0
        %v2083 = vadd.f32 0.0, %v2082
        %v2084 = vpop.f32.mrb[0].mxu0
        %v2085 = vpop.f32.mrb[0].mxu0
        %v2086 = vpop.f32.mrb[0].mxu0
        %2087 = vdwg.mxu0
        %v2088 = vsel %vm1966, %v2083, -1e+09
        %v2089 = vsel %vm1968, %v2088, -inf
        %2090 = vmax.xlane.f32.xlu0 %v2089
        %v2091 = vpop.xlane.xlu0 %2090
        %v2092 = vsub.f32 %v2088, %v2091
        %v2093 = vmul.f32 %v2092, 1.442695
        %v2094 = vpow.pop %v2093
        %v2095 = vsel %vm1968, %v2094, 0.0
        %2096 = vadd.xlane.f32.xlu0 %v2095
        %v2097 = vpop.xlane.xlu0 %2096
        %v2098 = vrcp.pop %v2097
        %v2099 = vmul.f32 %v2094, %v2098
        %v2100 = vpack.c.bf16 %v2099, %v2099
        %v2102 = vsel %vm1968, %v2100, 0
        %v2105 = vsel %vm1984, %v2047, 0
        %2107 = vmatprep.subr.bf16.mxu0 0
        %2108 = vmatpush1.bf16.msra.mxu0 %v2105
        %2109 = vmatprep.subr.bf16.mxu0 0
        %2110 = vmatpush1.bf16.msra.mxu0 0
        %2111 = vmatprep.subr.bf16.mxu0 0
        %2112 = vmatpush1.bf16.msra.mxu0 0
        %2113 = vmatprep.subr.bf16.mxu0 0
        %2114 = vmatpush1.bf16.msra.mxu0 0
        %2115 = vmatprep.subr.bf16.mxu0 0
        %2116 = vmatpush1.bf16.msra.mxu0 0
        %2117 = vmatprep.subr.bf16.mxu0 0
        %2118 = vmatpush1.bf16.msra.mxu0 0
        %2119 = vmatprep.subr.bf16.mxu0 0
        %2120 = vmatpush1.bf16.msra.mxu0 0
        %2121 = vmatprep.subr.bf16.mxu0 0
        %2122 = vmatpush1.bf16.msra.mxu0 0
        %2123 = vmatprep.subr.bf16.mxu0 0
        %2124 = vmatpush1.bf16.msra.mxu0 0
        %2125 = vmatprep.subr.bf16.mxu0 0
        %2126 = vmatpush1.bf16.msra.mxu0 0
        %2127 = vmatprep.subr.bf16.mxu0 0
        %2128 = vmatpush1.bf16.msra.mxu0 0
        %2129 = vmatprep.subr.bf16.mxu0 0
        %2130 = vmatpush1.bf16.msra.mxu0 0
        %2131 = vmatprep.subr.bf16.mxu0 0
        %2132 = vmatpush1.bf16.msra.mxu0 0
        %2133 = vmatprep.subr.bf16.mxu0 0
        %2134 = vmatpush1.bf16.msra.mxu0 0
        %2135 = vmatprep.subr.bf16.mxu0 0
        %2136 = vmatpush1.bf16.msra.mxu0 0
        %2137 = vmatprep.subr.bf16.mxu0 0
        %2138 = vmatpush1.bf16.msra.mxu0 0
        %2139 = vmatprep.mubr.bf16.mxu0 0
        %2140 = vmatmul.mubr.bf16.gmra.mrb[0].mxu0 %v2102
        %v2141 = vpop.f32.mrb[0].mxu0
        %v2142 = vadd.f32 0.0, %v2141
        %v2143 = vpop.f32.mrb[0].mxu0
        %v2144 = vpop.f32.mrb[0].mxu0
        %v2145 = vpop.f32.mrb[0].mxu0
        %2146 = vdwg.mxu0
        %v2147 = vpack.c.bf16 %v2142, %v2142
        %v2148 = vld [vmem:[#allocation10 + $0x80] sm:$0xff]
        %v2149 = vld [vmem:[#allocation10 + $0x88] sm:$0xff]
        %v2150 = vld [vmem:[#allocation10 + $0x90] sm:$0xff]
        %v2151 = vld [vmem:[#allocation10 + $0x98] sm:$0xff]
        %v2152 = vld [vmem:[#allocation10 + $0xa0] sm:$0xff]
        %v2153 = vld [vmem:[#allocation10 + $0xa8] sm:$0xff]
        %v2154 = vld [vmem:[#allocation10 + $0xb0] sm:$0xff]
        %v2155 = vld [vmem:[#allocation10 + $0xb8] sm:$0xff]
        %v2156 = vld [vmem:[#allocation10 + $0xc0] sm:$0xff]
        %v2157 = vld [vmem:[#allocation10 + $0xc8] sm:$0xff]
        %v2158 = vld [vmem:[#allocation10 + $0xd0] sm:$0xff]
        %v2159 = vld [vmem:[#allocation10 + $0xd8] sm:$0xff]
        %v2160 = vld [vmem:[#allocation10 + $0xe0] sm:$0xff]
        %v2161 = vld [vmem:[#allocation10 + $0xe8] sm:$0xff]
        %v2162 = vld [vmem:[#allocation10 + $0xf0] sm:$0xff]
        %v2163 = vld [vmem:[#allocation10 + $0xf8] sm:$0xff]
        %v2180 = vunpack.c.l.b16 %v2148
        %v2181 = vunpack.c.h.b16 %v2148
        %v2182 = vunpack.c.l.b16 %v2149
        %v2183 = vunpack.c.h.b16 %v2149
        %v2184 = vunpack.c.l.b16 %v2150
        %v2185 = vunpack.c.h.b16 %v2150
        %v2186 = vunpack.c.l.b16 %v2151
        %v2187 = vunpack.c.h.b16 %v2151
        %v2188 = vunpack.c.l.b16 %v2152
        %v2189 = vunpack.c.h.b16 %v2152
        %v2190 = vunpack.c.l.b16 %v2153
        %v2191 = vunpack.c.h.b16 %v2153
        %v2192 = vunpack.c.l.b16 %v2154
        %v2193 = vunpack.c.h.b16 %v2154
        %v2194 = vunpack.c.l.b16 %v2155
        %v2195 = vunpack.c.h.b16 %v2155
        %v2196 = vunpack.c.l.b16 %v2156
        %v2197 = vunpack.c.h.b16 %v2156
        %v2198 = vunpack.c.l.b16 %v2157
        %v2199 = vunpack.c.h.b16 %v2157
        %v2200 = vunpack.c.l.b16 %v2158
        %v2201 = vunpack.c.h.b16 %v2158
        %v2202 = vunpack.c.l.b16 %v2159
        %v2203 = vunpack.c.h.b16 %v2159
        %v2204 = vunpack.c.l.b16 %v2160
        %v2205 = vunpack.c.h.b16 %v2160
        %v2206 = vunpack.c.l.b16 %v2161
        %v2207 = vunpack.c.h.b16 %v2161
        %v2208 = vunpack.c.l.b16 %v2162
        %v2209 = vunpack.c.h.b16 %v2162
        %v2210 = vunpack.c.l.b16 %v2163
        %v2211 = vunpack.c.h.b16 %v2163
        %v2212 = vpack.c.b16 %v2182, %v2180
        %v2213 = vpack.c.b16 %v2183, %v2181
        %v2214 = vpack.c.b16 %v2186, %v2184
        %v2215 = vpack.c.b16 %v2187, %v2185
        %v2216 = vpack.c.b16 %v2190, %v2188
        %v2217 = vpack.c.b16 %v2191, %v2189
        %v2218 = vpack.c.b16 %v2194, %v2192
        %v2219 = vpack.c.b16 %v2195, %v2193
        %v2220 = vpack.c.b16 %v2198, %v2196
        %v2221 = vpack.c.b16 %v2199, %v2197
        %v2222 = vpack.c.b16 %v2202, %v2200
        %v2223 = vpack.c.b16 %v2203, %v2201
        %v2224 = vpack.c.b16 %v2206, %v2204
        %v2225 = vpack.c.b16 %v2207, %v2205
        %v2226 = vpack.c.b16 %v2210, %v2208
        %v2227 = vpack.c.b16 %v2211, %v2209
        %2244 = vmatprep.subr.bf16.mxu0 %v2213
        %2245 = vmatpush1.bf16.msra.mxu0 %v2212
        %2246 = vmatprep.subr.bf16.mxu0 %v2215
        %2247 = vmatpush1.bf16.msra.mxu0 %v2214
        %2248 = vmatprep.subr.bf16.mxu0 %v2217
        %2249 = vmatpush1.bf16.msra.mxu0 %v2216
        %2250 = vmatprep.subr.bf16.mxu0 %v2219
        %2251 = vmatpush1.bf16.msra.mxu0 %v2218
        %2252 = vmatprep.subr.bf16.mxu0 %v2221
        %2253 = vmatpush1.bf16.msra.mxu0 %v2220
        %2254 = vmatprep.subr.bf16.mxu0 %v2223
        %2255 = vmatpush1.bf16.msra.mxu0 %v2222
        %2256 = vmatprep.subr.bf16.mxu0 %v2225
        %2257 = vmatpush1.bf16.msra.mxu0 %v2224
        %2258 = vmatprep.subr.bf16.mxu0 %v2227
        %2259 = vmatpush1.bf16.msra.mxu0 %v2226
        %2260 = vmatprep.subr.bf16.mxu0 0
        %2261 = vmatpush1.bf16.msra.mxu0 0
        %2262 = vmatprep.subr.bf16.mxu0 0
        %2263 = vmatpush1.bf16.msra.mxu0 0
        %2264 = vmatprep.subr.bf16.mxu0 0
        %2265 = vmatpush1.bf16.msra.mxu0 0
        %2266 = vmatprep.subr.bf16.mxu0 0
        %2267 = vmatpush1.bf16.msra.mxu0 0
        %2268 = vmatprep.subr.bf16.mxu0 0
        %2269 = vmatpush1.bf16.msra.mxu0 0
        %2270 = vmatprep.subr.bf16.mxu0 0
        %2271 = vmatpush1.bf16.msra.mxu0 0
        %2272 = vmatprep.subr.bf16.mxu0 0
        %2273 = vmatpush1.bf16.msra.mxu0 0
        %2274 = vmatprep.subr.bf16.mxu0 0
        %2275 = vmatpush1.bf16.msra.mxu0 0
        %2276 = vmatprep.mubr.bf16.mxu0 0
        %2277 = vmatmul.mubr.bf16.gmra.mrb[0].mxu0 %v2147
        %v2278 = vpop.f32.mrb[0].mxu0
        %v2279 = vadd.f32 0.0, %v2278
        %v2280 = vpop.f32.mrb[0].mxu0
        %v2281 = vadd.f32 0.0, %v2280
        %v2282 = vpop.f32.mrb[0].mxu0
        %v2283 = vpop.f32.mrb[0].mxu0
        %2284 = vdwg.mxu0
        %v2301 = vunpack.c.l.b16 %v2029
        %v2302 = vunpack.c.h.b16 %v2029
        %v2303 = vunpack.c.l.b16 %v2030
        %v2304 = vunpack.c.h.b16 %v2030
        %v2305 = vunpack.c.l.b16 %v2031
        %v2306 = vunpack.c.h.b16 %v2031
        %v2307 = vunpack.c.l.b16 %v2032
        %v2308 = vunpack.c.h.b16 %v2032
        %v2309 = vunpack.c.l.b16 %v2033
        %v2310 = vunpack.c.h.b16 %v2033
        %v2311 = vunpack.c.l.b16 %v2034
        %v2312 = vunpack.c.h.b16 %v2034
        %v2313 = vunpack.c.l.b16 %v2035
        %v2314 = vunpack.c.h.b16 %v2035
        %v2315 = vunpack.c.l.b16 %v2036
        %v2316 = vunpack.c.h.b16 %v2036
        %v2317 = vunpack.c.l.b16 %v2037
        %v2318 = vunpack.c.h.b16 %v2037
        %v2319 = vunpack.c.l.b16 %v2038
        %v2320 = vunpack.c.h.b16 %v2038
        %v2321 = vunpack.c.l.b16 %v2039
        %v2322 = vunpack.c.h.b16 %v2039
        %v2323 = vunpack.c.l.b16 %v2040
        %v2324 = vunpack.c.h.b16 %v2040
        %v2325 = vunpack.c.l.b16 %v2041
        %v2326 = vunpack.c.h.b16 %v2041
        %v2327 = vunpack.c.l.b16 %v2042
        %v2328 = vunpack.c.h.b16 %v2042
        %v2329 = vunpack.c.l.b16 %v2043
        %v2330 = vunpack.c.h.b16 %v2043
        %v2331 = vunpack.c.l.b16 %v2044
        %v2332 = vunpack.c.h.b16 %v2044
        %v2333 = vpack.c.b16 %v2303, %v2301
        %v2334 = vpack.c.b16 %v2304, %v2302
        %v2335 = vpack.c.b16 %v2307, %v2305
        %v2336 = vpack.c.b16 %v2308, %v2306
        %v2337 = vpack.c.b16 %v2311, %v2309
        %v2338 = vpack.c.b16 %v2312, %v2310
        %v2339 = vpack.c.b16 %v2315, %v2313
        %v2340 = vpack.c.b16 %v2316, %v2314
        %v2341 = vpack.c.b16 %v2319, %v2317
        %v2342 = vpack.c.b16 %v2320, %v2318
        %v2343 = vpack.c.b16 %v2323, %v2321
        %v2344 = vpack.c.b16 %v2324, %v2322
        %v2345 = vpack.c.b16 %v2327, %v2325
        %v2346 = vpack.c.b16 %v2328, %v2326
        %v2347 = vpack.c.b16 %v2331, %v2329
        %v2348 = vpack.c.b16 %v2332, %v2330
        %2365 = vmatprep.subr.bf16.mxu0 %v2334
        %2366 = vmatpush1.bf16.msra.mxu0 %v2333
        %2367 = vmatprep.subr.bf16.mxu0 %v2336
        %2368 = vmatpush1.bf16.msra.mxu0 %v2335
        %2369 = vmatprep.subr.bf16.mxu0 %v2338
        %2370 = vmatpush1.bf16.msra.mxu0 %v2337
        %2371 = vmatprep.subr.bf16.mxu0 %v2340
        %2372 = vmatpush1.bf16.msra.mxu0 %v2339
        %2373 = vmatprep.subr.bf16.mxu0 %v2342
        %2374 = vmatpush1.bf16.msra.mxu0 %v2341
        %2375 = vmatprep.subr.bf16.mxu0 %v2344
        %2376 = vmatpush1.bf16.msra.mxu0 %v2343
        %2377 = vmatprep.subr.bf16.mxu0 %v2346
        %2378 = vmatpush1.bf16.msra.mxu0 %v2345
        %2379 = vmatprep.subr.bf16.mxu0 %v2348
        %2380 = vmatpush1.bf16.msra.mxu0 %v2347
        %2381 = vmatprep.subr.bf16.mxu0 0
        %2382 = vmatpush1.bf16.msra.mxu0 0
        %2383 = vmatprep.subr.bf16.mxu0 0
        %2384 = vmatpush1.bf16.msra.mxu0 0
        %2385 = vmatprep.subr.bf16.mxu0 0
        %2386 = vmatpush1.bf16.msra.mxu0 0
        %2387 = vmatprep.subr.bf16.mxu0 0
        %2388 = vmatpush1.bf16.msra.mxu0 0
        %2389 = vmatprep.subr.bf16.mxu0 0
        %2390 = vmatpush1.bf16.msra.mxu0 0
        %2391 = vmatprep.subr.bf16.mxu0 0
        %2392 = vmatpush1.bf16.msra.mxu0 0
        %2393 = vmatprep.subr.bf16.mxu0 0
        %2394 = vmatpush1.bf16.msra.mxu0 0
        %2395 = vmatprep.subr.bf16.mxu0 0
        %2396 = vmatpush1.bf16.msra.mxu0 0
        %2397 = vmatprep.mubr.bf16.mxu0 0
        %2398 = vmatmul.mubr.bf16.gmra.mrb[0].mxu0 %v2028
        %v2399 = vpop.f32.mrb[0].mxu0
        %v2400 = vadd.f32 %v2279, %v2399
        %v2401 = vpop.f32.mrb[0].mxu0
        %v2402 = vadd.f32 %v2281, %v2401
        %v2403 = vpop.f32.mrb[0].mxu0
        %v2404 = vpop.f32.mrb[0].mxu0
        %2405 = vdwg.mxu0
        %v2406 = vld [vmem:[%s27] sm:$0x3]
        %v2408 = vlaneseq
        %v2409 = vshrl.u32 %v2408, 7
        %v2410 = vsub.s32 0, %v2409
        %v2411 = vrot.slane %v2406, %v2410
        %v2412 = vlaneseq
        %v2413 = vshrl.u32 %v2412, 7
        %v2414 = vsub.s32 1, %v2413
        %v2415 = vrot.slane %v2406, %v2414
        %v2418 = vadd.f32 %v2400, %v2411
        %v2419 = vadd.f32 %v2402, %v2415
        %v2420 = vadd.f32 %v1129, %v2418
        %v2421 = vadd.f32 %v1130, %v2419
        %v2422 = vld [vmem:[%s29] sm:$0x3]
        %v2423 = vld [vmem:[%s31] sm:$0x3]
        %v2424 = vadd.f32 %v2420, %v2421
        %2425 = vadd.xlane.f32.xlu0 %v2424
        %v2426 = vpop.xlane.xlu0 %2425
        %v2427 = vmul.f32 %v2426, %v1144
        %v2428 = vsub.f32 %v2420, %v2427
        %v2429 = vsub.f32 %v2421, %v2427
        %v2430 = vmul.f32 %v2428, %v2428
        %v2431 = vmul.f32 %v2429, %v2429
        %v2432 = vadd.f32 %v2430, %v2431
        %2433 = vadd.xlane.f32.xlu0 %v2432
        %v2434 = vpop.xlane.xlu0 %2433
        %v2435 = vmul.f32 %v2434, %v1144
        %v2436 = vadd.f32 %v2435, 1e-05
        %v2437 = vrsqrt.pop %v2436
        %v2438 = vmul.f32 %v2428, %v2437
        %v2439 = vmul.f32 %v2429, %v2437
        %v2441 = vlaneseq
        %v2442 = vshrl.u32 %v2441, 7
        %v2443 = vsub.s32 0, %v2442
        %v2444 = vrot.slane %v2422, %v2443
        %v2445 = vlaneseq
        %v2446 = vshrl.u32 %v2445, 7
        %v2447 = vsub.s32 1, %v2446
        %v2448 = vrot.slane %v2422, %v2447
        %v2451 = vmul.f32 %v2438, %v2444
        %v2452 = vmul.f32 %v2439, %v2448
        %v2454 = vlaneseq
        %v2455 = vshrl.u32 %v2454, 7
        %v2456 = vsub.s32 0, %v2455
        %v2457 = vrot.slane %v2423, %v2456
        %v2458 = vlaneseq
        %v2459 = vshrl.u32 %v2458, 7
        %v2460 = vsub.s32 1, %v2459
        %v2461 = vrot.slane %v2423, %v2460
        %v2464 = vadd.f32 %v2451, %v2457
        %v2465 = vadd.f32 %v2452, %v2461
        %v2466 = vpack.c.bf16 %v2464, %v2464
        %v2467 = vpack.c.bf16 %v2465, %v2465
        %v2468 = vpack.c.bf16 %v1133, %v1131
        %v2469 = vpack.c.bf16 %v1134, %v1132
        %v2470 = vld [vmem:[#allocation11] sm:$0xff]
        %v2471 = vld [vmem:[#allocation11 + $0x8] sm:$0xff]
        %v2472 = vld [vmem:[#allocation11 + $0x10] sm:$0xff]
        %v2473 = vld [vmem:[#allocation11 + $0x18] sm:$0xff]
        %v2474 = vld [vmem:[#allocation11 + $0x20] sm:$0xff]
        %v2475 = vld [vmem:[#allocation11 + $0x28] sm:$0xff]
        %v2476 = vld [vmem:[#allocation11 + $0x30] sm:$0xff]
        %v2477 = vld [vmem:[#allocation11 + $0x38] sm:$0xff]
        %v2478 = vld [vmem:[#allocation11 + $0x40] sm:$0xff]
        %v2479 = vld [vmem:[#allocation11 + $0x48] sm:$0xff]
        %v2480 = vld [vmem:[#allocation11 + $0x50] sm:$0xff]
        %v2481 = vld [vmem:[#allocation11 + $0x58] sm:$0xff]
        %v2482 = vld [vmem:[#allocation11 + $0x60] sm:$0xff]
        %v2483 = vld [vmem:[#allocation11 + $0x68] sm:$0xff]
        %v2484 = vld [vmem:[#allocation11 + $0x70] sm:$0xff]
        %v2485 = vld [vmem:[#allocation11 + $0x78] sm:$0xff]
        %v2486 = vld [vmem:[#allocation11 + $0x80] sm:$0xff]
        %v2487 = vld [vmem:[#allocation11 + $0x88] sm:$0xff]
        %v2488 = vld [vmem:[#allocation11 + $0x90] sm:$0xff]
        %v2489 = vld [vmem:[#allocation11 + $0x98] sm:$0xff]
        %v2490 = vld [vmem:[#allocation11 + $0xa0] sm:$0xff]
        %v2491 = vld [vmem:[#allocation11 + $0xa8] sm:$0xff]
        %v2492 = vld [vmem:[#allocation11 + $0xb0] sm:$0xff]
        %v2493 = vld [vmem:[#allocation11 + $0xb8] sm:$0xff]
        %v2494 = vld [vmem:[#allocation11 + $0xc0] sm:$0xff]
        %v2495 = vld [vmem:[#allocation11 + $0xc8] sm:$0xff]
        %v2496 = vld [vmem:[#allocation11 + $0xd0] sm:$0xff]
        %v2497 = vld [vmem:[#allocation11 + $0xd8] sm:$0xff]
        %v2498 = vld [vmem:[#allocation11 + $0xe0] sm:$0xff]
        %v2499 = vld [vmem:[#allocation11 + $0xe8] sm:$0xff]
        %v2500 = vld [vmem:[#allocation11 + $0xf0] sm:$0xff]
        %v2501 = vld [vmem:[#allocation11 + $0xf8] sm:$0xff]
        %v2502 = vld [vmem:[%s35] sm:$0x3]
        %v2504 = vlaneseq
        %v2505 = vshrl.u32 %v2504, 7
        %v2506 = vsub.s32 0, %v2505
        %v2507 = vrot.slane %v2502, %v2506
        %v2508 = vlaneseq
        %v2509 = vshrl.u32 %v2508, 7
        %v2510 = vsub.s32 1, %v2509
        %v2511 = vrot.slane %v2502, %v2510
        %v2546 = vunpack.c.l.b16 %v2470
        %v2547 = vunpack.c.h.b16 %v2470
        %v2548 = vunpack.c.l.b16 %v2471
        %v2549 = vunpack.c.h.b16 %v2471
        %v2550 = vunpack.c.l.b16 %v2472
        %v2551 = vunpack.c.h.b16 %v2472
        %v2552 = vunpack.c.l.b16 %v2473
        %v2553 = vunpack.c.h.b16 %v2473
        %v2554 = vunpack.c.l.b16 %v2474
        %v2555 = vunpack.c.h.b16 %v2474
        %v2556 = vunpack.c.l.b16 %v2475
        %v2557 = vunpack.c.h.b16 %v2475
        %v2558 = vunpack.c.l.b16 %v2476
        %v2559 = vunpack.c.h.b16 %v2476
        %v2560 = vunpack.c.l.b16 %v2477
        %v2561 = vunpack.c.h.b16 %v2477
        %v2562 = vunpack.c.l.b16 %v2478
        %v2563 = vunpack.c.h.b16 %v2478
        %v2564 = vunpack.c.l.b16 %v2479
        %v2565 = vunpack.c.h.b16 %v2479
        %v2566 = vunpack.c.l.b16 %v2480
        %v2567 = vunpack.c.h.b16 %v2480
        %v2568 = vunpack.c.l.b16 %v2481
        %v2569 = vunpack.c.h.b16 %v2481
        %v2570 = vunpack.c.l.b16 %v2482
        %v2571 = vunpack.c.h.b16 %v2482
        %v2572 = vunpack.c.l.b16 %v2483
        %v2573 = vunpack.c.h.b16 %v2483
        %v2574 = vunpack.c.l.b16 %v2484
        %v2575 = vunpack.c.h.b16 %v2484
        %v2576 = vunpack.c.l.b16 %v2485
        %v2577 = vunpack.c.h.b16 %v2485
        %v2578 = vunpack.c.l.b16 %v2486
        %v2579 = vunpack.c.h.b16 %v2486
        %v2580 = vunpack.c.l.b16 %v2487
        %v2581 = vunpack.c.h.b16 %v2487
        %v2582 = vunpack.c.l.b16 %v2488
        %v2583 = vunpack.c.h.b16 %v2488
        %v2584 = vunpack.c.l.b16 %v2489
        %v2585 = vunpack.c.h.b16 %v2489
        %v2586 = vunpack.c.l.b16 %v2490
        %v2587 = vunpack.c.h.b16 %v2490
        %v2588 = vunpack.c.l.b16 %v2491
        %v2589 = vunpack.c.h.b16 %v2491
        %v2590 = vunpack.c.l.b16 %v2492
        %v2591 = vunpack.c.h.b16 %v2492
        %v2592 = vunpack.c.l.b16 %v2493
        %v2593 = vunpack.c.h.b16 %v2493
        %v2594 = vunpack.c.l.b16 %v2494
        %v2595 = vunpack.c.h.b16 %v2494
        %v2596 = vunpack.c.l.b16 %v2495
        %v2597 = vunpack.c.h.b16 %v2495
        %v2598 = vunpack.c.l.b16 %v2496
        %v2599 = vunpack.c.h.b16 %v2496
        %v2600 = vunpack.c.l.b16 %v2497
        %v2601 = vunpack.c.h.b16 %v2497
        %v2602 = vunpack.c.l.b16 %v2498
        %v2603 = vunpack.c.h.b16 %v2498
        %v2604 = vunpack.c.l.b16 %v2499
        %v2605 = vunpack.c.h.b16 %v2499
        %v2606 = vunpack.c.l.b16 %v2500
        %v2607 = vunpack.c.h.b16 %v2500
        %v2608 = vunpack.c.l.b16 %v2501
        %v2609 = vunpack.c.h.b16 %v2501
        %v2610 = vpack.c.b16 %v2548, %v2546
        %v2611 = vpack.c.b16 %v2549, %v2547
        %v2612 = vpack.c.b16 %v2552, %v2550
        %v2613 = vpack.c.b16 %v2553, %v2551
        %v2614 = vpack.c.b16 %v2556, %v2554
        %v2615 = vpack.c.b16 %v2557, %v2555
        %v2616 = vpack.c.b16 %v2560, %v2558
        %v2617 = vpack.c.b16 %v2561, %v2559
        %v2618 = vpack.c.b16 %v2564, %v2562
        %v2619 = vpack.c.b16 %v2565, %v2563
        %v2620 = vpack.c.b16 %v2568, %v2566
        %v2621 = vpack.c.b16 %v2569, %v2567
        %v2622 = vpack.c.b16 %v2572, %v2570
        %v2623 = vpack.c.b16 %v2573, %v2571
        %v2624 = vpack.c.b16 %v2576, %v2574
        %v2625 = vpack.c.b16 %v2577, %v2575
        %v2626 = vpack.c.b16 %v2580, %v2578
        %v2627 = vpack.c.b16 %v2581, %v2579
        %v2628 = vpack.c.b16 %v2584, %v2582
        %v2629 = vpack.c.b16 %v2585, %v2583
        %v2630 = vpack.c.b16 %v2588, %v2586
        %v2631 = vpack.c.b16 %v2589, %v2587
        %v2632 = vpack.c.b16 %v2592, %v2590
        %v2633 = vpack.c.b16 %v2593, %v2591
        %v2634 = vpack.c.b16 %v2596, %v2594
        %v2635 = vpack.c.b16 %v2597, %v2595
        %v2636 = vpack.c.b16 %v2600, %v2598
        %v2637 = vpack.c.b16 %v2601, %v2599
        %v2638 = vpack.c.b16 %v2604, %v2602
        %v2639 = vpack.c.b16 %v2605, %v2603
        %v2640 = vpack.c.b16 %v2608, %v2606
        %v2641 = vpack.c.b16 %v2609, %v2607
        %2674 = vmatprep.subr.bf16.mxu0 %v2611
        %2675 = vmatpush1.bf16.msra.mxu0 %v2610
        %2676 = vmatprep.subr.bf16.mxu0 %v2613
        %2677 = vmatpush1.bf16.msra.mxu0 %v2612
        %2678 = vmatprep.subr.bf16.mxu0 %v2615
        %2679 = vmatpush1.bf16.msra.mxu0 %v2614
        %2680 = vmatprep.subr.bf16.mxu0 %v2617
        %2681 = vmatpush1.bf16.msra.mxu0 %v2616
        %2682 = vmatprep.subr.bf16.mxu0 %v2619
        %2683 = vmatpush1.bf16.msra.mxu0 %v2618
        %2684 = vmatprep.subr.bf16.mxu0 %v2621
        %2685 = vmatpush1.bf16.msra.mxu0 %v2620
        %2686 = vmatprep.subr.bf16.mxu0 %v2623
        %2687 = vmatpush1.bf16.msra.mxu0 %v2622
        %2688 = vmatprep.subr.bf16.mxu0 %v2625
        %2689 = vmatpush1.bf16.msra.mxu0 %v2624
        %2690 = vmatprep.subr.bf16.mxu0 %v2627
        %2691 = vmatpush1.bf16.msra.mxu0 %v2626
        %2692 = vmatprep.subr.bf16.mxu0 %v2629
        %2693 = vmatpush1.bf16.msra.mxu0 %v2628
        %2694 = vmatprep.subr.bf16.mxu0 %v2631
        %2695 = vmatpush1.bf16.msra.mxu0 %v2630
        %2696 = vmatprep.subr.bf16.mxu0 %v2633
        %2697 = vmatpush1.bf16.msra.mxu0 %v2632
        %2698 = vmatprep.subr.bf16.mxu0 %v2635
        %2699 = vmatpush1.bf16.msra.mxu0 %v2634
        %2700 = vmatprep.subr.bf16.mxu0 %v2637
        %2701 = vmatpush1.bf16.msra.mxu0 %v2636
        %2702 = vmatprep.subr.bf16.mxu0 %v2639
        %2703 = vmatpush1.bf16.msra.mxu0 %v2638
        %2704 = vmatprep.subr.bf16.mxu0 %v2641
        %2705 = vmatpush1.bf16.msra.mxu0 %v2640
        %2706 = vmatprep.mubr.bf16.mxu0 %v2467
        %2707 = vmatmul.mubr.bf16.gmra.mrb[0].mxu0 %v2466
        %v2708 = vpop.f32.mrb[0].mxu0
        %v2709 = vadd.f32 %v2507, %v2708
        %v2710 = vpop.f32.mrb[0].mxu0
        %v2711 = vadd.f32 %v2511, %v2710
        %v2712 = vpop.f32.mrb[0].mxu0
        %v2713 = vpop.f32.mrb[0].mxu0
        %2714 = vdwg.mxu0
        %v2715 = vld [vmem:[#allocation13] sm:$0xff]
        %v2716 = vld [vmem:[#allocation13 + $0x8] sm:$0xff]
        %v2717 = vld [vmem:[#allocation13 + $0x10] sm:$0xff]
        %v2718 = vld [vmem:[#allocation13 + $0x18] sm:$0xff]
        %v2719 = vld [vmem:[#allocation13 + $0x20] sm:$0xff]
        %v2720 = vld [vmem:[#allocation13 + $0x28] sm:$0xff]
        %v2721 = vld [vmem:[#allocation13 + $0x30] sm:$0xff]
        %v2722 = vld [vmem:[#allocation13 + $0x38] sm:$0xff]
        %v2723 = vld [vmem:[#allocation13 + $0x40] sm:$0xff]
        %v2724 = vld [vmem:[#allocation13 + $0x48] sm:$0xff]
        %v2725 = vld [vmem:[#allocation13 + $0x50] sm:$0xff]
        %v2726 = vld [vmem:[#allocation13 + $0x58] sm:$0xff]
        %v2727 = vld [vmem:[#allocation13 + $0x60] sm:$0xff]
        %v2728 = vld [vmem:[#allocation13 + $0x68] sm:$0xff]
        %v2729 = vld [vmem:[#allocation13 + $0x70] sm:$0xff]
        %v2730 = vld [vmem:[#allocation13 + $0x78] sm:$0xff]
        %v2731 = vld [vmem:[#allocation13 + $0x80] sm:$0xff]
        %v2732 = vld [vmem:[#allocation13 + $0x88] sm:$0xff]
        %v2733 = vld [vmem:[#allocation13 + $0x90] sm:$0xff]
        %v2734 = vld [vmem:[#allocation13 + $0x98] sm:$0xff]
        %v2735 = vld [vmem:[#allocation13 + $0xa0] sm:$0xff]
        %v2736 = vld [vmem:[#allocation13 + $0xa8] sm:$0xff]
        %v2737 = vld [vmem:[#allocation13 + $0xb0] sm:$0xff]
        %v2738 = vld [vmem:[#allocation13 + $0xb8] sm:$0xff]
        %v2739 = vld [vmem:[#allocation13 + $0xc0] sm:$0xff]
        %v2740 = vld [vmem:[#allocation13 + $0xc8] sm:$0xff]
        %v2741 = vld [vmem:[#allocation13 + $0xd0] sm:$0xff]
        %v2742 = vld [vmem:[#allocation13 + $0xd8] sm:$0xff]
        %v2743 = vld [vmem:[#allocation13 + $0xe0] sm:$0xff]
        %v2744 = vld [vmem:[#allocation13 + $0xe8] sm:$0xff]
        %v2745 = vld [vmem:[#allocation13 + $0xf0] sm:$0xff]
        %v2746 = vld [vmem:[#allocation13 + $0xf8] sm:$0xff]
        %v2747 = vld [vmem:[%s39] sm:$0x3]
        %v2749 = vlaneseq
        %v2750 = vshrl.u32 %v2749, 7
        %v2751 = vsub.s32 0, %v2750
        %v2752 = vrot.slane %v2747, %v2751
        %v2753 = vlaneseq
        %v2754 = vshrl.u32 %v2753, 7
        %v2755 = vsub.s32 1, %v2754
        %v2756 = vrot.slane %v2747, %v2755
        %v2791 = vunpack.c.l.b16 %v2715
        %v2792 = vunpack.c.h.b16 %v2715
        %v2793 = vunpack.c.l.b16 %v2716
        %v2794 = vunpack.c.h.b16 %v2716
        %v2795 = vunpack.c.l.b16 %v2717
        %v2796 = vunpack.c.h.b16 %v2717
        %v2797 = vunpack.c.l.b16 %v2718
        %v2798 = vunpack.c.h.b16 %v2718
        %v2799 = vunpack.c.l.b16 %v2719
        %v2800 = vunpack.c.h.b16 %v2719
        %v2801 = vunpack.c.l.b16 %v2720
        %v2802 = vunpack.c.h.b16 %v2720
        %v2803 = vunpack.c.l.b16 %v2721
        %v2804 = vunpack.c.h.b16 %v2721
        %v2805 = vunpack.c.l.b16 %v2722
        %v2806 = vunpack.c.h.b16 %v2722
        %v2807 = vunpack.c.l.b16 %v2723
        %v2808 = vunpack.c.h.b16 %v2723
        %v2809 = vunpack.c.l.b16 %v2724
        %v2810 = vunpack.c.h.b16 %v2724
        %v2811 = vunpack.c.l.b16 %v2725
        %v2812 = vunpack.c.h.b16 %v2725
        %v2813 = vunpack.c.l.b16 %v2726
        %v2814 = vunpack.c.h.b16 %v2726
        %v2815 = vunpack.c.l.b16 %v2727
        %v2816 = vunpack.c.h.b16 %v2727
        %v2817 = vunpack.c.l.b16 %v2728
        %v2818 = vunpack.c.h.b16 %v2728
        %v2819 = vunpack.c.l.b16 %v2729
        %v2820 = vunpack.c.h.b16 %v2729
        %v2821 = vunpack.c.l.b16 %v2730
        %v2822 = vunpack.c.h.b16 %v2730
        %v2823 = vunpack.c.l.b16 %v2731
        %v2824 = vunpack.c.h.b16 %v2731
        %v2825 = vunpack.c.l.b16 %v2732
        %v2826 = vunpack.c.h.b16 %v2732
        %v2827 = vunpack.c.l.b16 %v2733
        %v2828 = vunpack.c.h.b16 %v2733
        %v2829 = vunpack.c.l.b16 %v2734
        %v2830 = vunpack.c.h.b16 %v2734
        %v2831 = vunpack.c.l.b16 %v2735
        %v2832 = vunpack.c.h.b16 %v2735
        %v2833 = vunpack.c.l.b16 %v2736
        %v2834 = vunpack.c.h.b16 %v2736
        %v2835 = vunpack.c.l.b16 %v2737
        %v2836 = vunpack.c.h.b16 %v2737
        %v2837 = vunpack.c.l.b16 %v2738
        %v2838 = vunpack.c.h.b16 %v2738
        %v2839 = vunpack.c.l.b16 %v2739
        %v2840 = vunpack.c.h.b16 %v2739
        %v2841 = vunpack.c.l.b16 %v2740
        %v2842 = vunpack.c.h.b16 %v2740
        %v2843 = vunpack.c.l.b16 %v2741
        %v2844 = vunpack.c.h.b16 %v2741
        %v2845 = vunpack.c.l.b16 %v2742
        %v2846 = vunpack.c.h.b16 %v2742
        %v2847 = vunpack.c.l.b16 %v2743
        %v2848 = vunpack.c.h.b16 %v2743
        %v2849 = vunpack.c.l.b16 %v2744
        %v2850 = vunpack.c.h.b16 %v2744
        %v2851 = vunpack.c.l.b16 %v2745
        %v2852 = vunpack.c.h.b16 %v2745
        %v2853 = vunpack.c.l.b16 %v2746
        %v2854 = vunpack.c.h.b16 %v2746
        %v2855 = vpack.c.b16 %v2793, %v2791
        %v2856 = vpack.c.b16 %v2794, %v2792
        %v2857 = vpack.c.b16 %v2797, %v2795
        %v2858 = vpack.c.b16 %v2798, %v2796
        %v2859 = vpack.c.b16 %v2801, %v2799
        %v2860 = vpack.c.b16 %v2802, %v2800
        %v2861 = vpack.c.b16 %v2805, %v2803
        %v2862 = vpack.c.b16 %v2806, %v2804
        %v2863 = vpack.c.b16 %v2809, %v2807
        %v2864 = vpack.c.b16 %v2810, %v2808
        %v2865 = vpack.c.b16 %v2813, %v2811
        %v2866 = vpack.c.b16 %v2814, %v2812
        %v2867 = vpack.c.b16 %v2817, %v2815
        %v2868 = vpack.c.b16 %v2818, %v2816
        %v2869 = vpack.c.b16 %v2821, %v2819
        %v2870 = vpack.c.b16 %v2822, %v2820
        %v2871 = vpack.c.b16 %v2825, %v2823
        %v2872 = vpack.c.b16 %v2826, %v2824
        %v2873 = vpack.c.b16 %v2829, %v2827
        %v2874 = vpack.c.b16 %v2830, %v2828
        %v2875 = vpack.c.b16 %v2833, %v2831
        %v2876 = vpack.c.b16 %v2834, %v2832
        %v2877 = vpack.c.b16 %v2837, %v2835
        %v2878 = vpack.c.b16 %v2838, %v2836
        %v2879 = vpack.c.b16 %v2841, %v2839
        %v2880 = vpack.c.b16 %v2842, %v2840
        %v2881 = vpack.c.b16 %v2845, %v2843
        %v2882 = vpack.c.b16 %v2846, %v2844
        %v2883 = vpack.c.b16 %v2849, %v2847
        %v2884 = vpack.c.b16 %v2850, %v2848
        %v2885 = vpack.c.b16 %v2853, %v2851
        %v2886 = vpack.c.b16 %v2854, %v2852
        %2919 = vmatprep.subr.bf16.mxu0 %v2856
        %2920 = vmatpush1.bf16.msra.mxu0 %v2855
        %2921 = vmatprep.subr.bf16.mxu0 %v2858
        %2922 = vmatpush1.bf16.msra.mxu0 %v2857
        %2923 = vmatprep.subr.bf16.mxu0 %v2860
        %2924 = vmatpush1.bf16.msra.mxu0 %v2859
        %2925 = vmatprep.subr.bf16.mxu0 %v2862
        %2926 = vmatpush1.bf16.msra.mxu0 %v2861
        %2927 = vmatprep.subr.bf16.mxu0 %v2864
        %2928 = vmatpush1.bf16.msra.mxu0 %v2863
        %2929 = vmatprep.subr.bf16.mxu0 %v2866
        %2930 = vmatpush1.bf16.msra.mxu0 %v2865
        %2931 = vmatprep.subr.bf16.mxu0 %v2868
        %2932 = vmatpush1.bf16.msra.mxu0 %v2867
        %2933 = vmatprep.subr.bf16.mxu0 %v2870
        %2934 = vmatpush1.bf16.msra.mxu0 %v2869
        %2935 = vmatprep.subr.bf16.mxu0 %v2872
        %2936 = vmatpush1.bf16.msra.mxu0 %v2871
        %2937 = vmatprep.subr.bf16.mxu0 %v2874
        %2938 = vmatpush1.bf16.msra.mxu0 %v2873
        %2939 = vmatprep.subr.bf16.mxu0 %v2876
        %2940 = vmatpush1.bf16.msra.mxu0 %v2875
        %2941 = vmatprep.subr.bf16.mxu0 %v2878
        %2942 = vmatpush1.bf16.msra.mxu0 %v2877
        %2943 = vmatprep.subr.bf16.mxu0 %v2880
        %2944 = vmatpush1.bf16.msra.mxu0 %v2879
        %2945 = vmatprep.subr.bf16.mxu0 %v2882
        %2946 = vmatpush1.bf16.msra.mxu0 %v2881
        %2947 = vmatprep.subr.bf16.mxu0 %v2884
        %2948 = vmatpush1.bf16.msra.mxu0 %v2883
        %2949 = vmatprep.subr.bf16.mxu0 %v2886
        %2950 = vmatpush1.bf16.msra.mxu0 %v2885
        %2951 = vmatprep.mubr.bf16.mxu0 %v2469
        %2952 = vmatmul.mubr.bf16.gmra.mrb[0].mxu0 %v2468
        %v2953 = vpop.f32.mrb[0].mxu0
        %v2954 = vadd.f32 %v2752, %v2953
        %v2955 = vpop.f32.mrb[0].mxu0
        %v2956 = vadd.f32 %v2756, %v2955
        %v2957 = vpop.f32.mrb[0].mxu0
        %v2958 = vadd.f32 %v2752, %v2957
        %v2959 = vpop.f32.mrb[0].mxu0
        %v2960 = vadd.f32 %v2756, %v2959
        %2961 = vdwg.mxu0
        %v2962 = vld [vmem:[#allocation14] sm:$0xff]
        %v2963 = vld [vmem:[#allocation14 + $0x8] sm:$0xff]
        %v2964 = vld [vmem:[#allocation14 + $0x10] sm:$0xff]
        %v2965 = vld [vmem:[#allocation14 + $0x18] sm:$0xff]
        %v2966 = vld [vmem:[#allocation14 + $0x20] sm:$0xff]
        %v2967 = vld [vmem:[#allocation14 + $0x28] sm:$0xff]
        %v2968 = vld [vmem:[#allocation14 + $0x30] sm:$0xff]
        %v2969 = vld [vmem:[#allocation14 + $0x38] sm:$0xff]
        %v2970 = vld [vmem:[#allocation14 + $0x40] sm:$0xff]
        %v2971 = vld [vmem:[#allocation14 + $0x48] sm:$0xff]
        %v2972 = vld [vmem:[#allocation14 + $0x50] sm:$0xff]
        %v2973 = vld [vmem:[#allocation14 + $0x58] sm:$0xff]
        %v2974 = vld [vmem:[#allocation14 + $0x60] sm:$0xff]
        %v2975 = vld [vmem:[#allocation14 + $0x68] sm:$0xff]
        %v2976 = vld [vmem:[#allocation14 + $0x70] sm:$0xff]
        %v2977 = vld [vmem:[#allocation14 + $0x78] sm:$0xff]
        %v2978 = vld [vmem:[#allocation14 + $0x80] sm:$0xff]
        %v2979 = vld [vmem:[#allocation14 + $0x88] sm:$0xff]
        %v2980 = vld [vmem:[#allocation14 + $0x90] sm:$0xff]
        %v2981 = vld [vmem:[#allocation14 + $0x98] sm:$0xff]
        %v2982 = vld [vmem:[#allocation14 + $0xa0] sm:$0xff]
        %v2983 = vld [vmem:[#allocation14 + $0xa8] sm:$0xff]
        %v2984 = vld [vmem:[#allocation14 + $0xb0] sm:$0xff]
        %v2985 = vld [vmem:[#allocation14 + $0xb8] sm:$0xff]
        %v2986 = vld [vmem:[#allocation14 + $0xc0] sm:$0xff]
        %v2987 = vld [vmem:[#allocation14 + $0xc8] sm:$0xff]
        %v2988 = vld [vmem:[#allocation14 + $0xd0] sm:$0xff]
        %v2989 = vld [vmem:[#allocation14 + $0xd8] sm:$0xff]
        %v2990 = vld [vmem:[#allocation14 + $0xe0] sm:$0xff]
        %v2991 = vld [vmem:[#allocation14 + $0xe8] sm:$0xff]
        %v2992 = vld [vmem:[#allocation14 + $0xf0] sm:$0xff]
        %v2993 = vld [vmem:[#allocation14 + $0xf8] sm:$0xff]
        %v2994 = vld [vmem:[%s43] sm:$0x3]
        %v2996 = vlaneseq
        %v2997 = vshrl.u32 %v2996, 7
        %v2998 = vsub.s32 0, %v2997
        %v2999 = vrot.slane %v2994, %v2998
        %v3000 = vlaneseq
        %v3001 = vshrl.u32 %v3000, 7
        %v3002 = vsub.s32 1, %v3001
        %v3003 = vrot.slane %v2994, %v3002
        %v3038 = vunpack.c.l.b16 %v2962
        %v3039 = vunpack.c.h.b16 %v2962
        %v3040 = vunpack.c.l.b16 %v2963
        %v3041 = vunpack.c.h.b16 %v2963
        %v3042 = vunpack.c.l.b16 %v2964
        %v3043 = vunpack.c.h.b16 %v2964
        %v3044 = vunpack.c.l.b16 %v2965
        %v3045 = vunpack.c.h.b16 %v2965
        %v3046 = vunpack.c.l.b16 %v2966
        %v3047 = vunpack.c.h.b16 %v2966
        %v3048 = vunpack.c.l.b16 %v2967
        %v3049 = vunpack.c.h.b16 %v2967
        %v3050 = vunpack.c.l.b16 %v2968
        %v3051 = vunpack.c.h.b16 %v2968
        %v3052 = vunpack.c.l.b16 %v2969
        %v3053 = vunpack.c.h.b16 %v2969
        %v3054 = vunpack.c.l.b16 %v2970
        %v3055 = vunpack.c.h.b16 %v2970
        %v3056 = vunpack.c.l.b16 %v2971
        %v3057 = vunpack.c.h.b16 %v2971
        %v3058 = vunpack.c.l.b16 %v2972
        %v3059 = vunpack.c.h.b16 %v2972
        %v3060 = vunpack.c.l.b16 %v2973
        %v3061 = vunpack.c.h.b16 %v2973
        %v3062 = vunpack.c.l.b16 %v2974
        %v3063 = vunpack.c.h.b16 %v2974
        %v3064 = vunpack.c.l.b16 %v2975
        %v3065 = vunpack.c.h.b16 %v2975
        %v3066 = vunpack.c.l.b16 %v2976
        %v3067 = vunpack.c.h.b16 %v2976
        %v3068 = vunpack.c.l.b16 %v2977
        %v3069 = vunpack.c.h.b16 %v2977
        %v3070 = vunpack.c.l.b16 %v2978
        %v3071 = vunpack.c.h.b16 %v2978
        %v3072 = vunpack.c.l.b16 %v2979
        %v3073 = vunpack.c.h.b16 %v2979
        %v3074 = vunpack.c.l.b16 %v2980
        %v3075 = vunpack.c.h.b16 %v2980
        %v3076 = vunpack.c.l.b16 %v2981
        %v3077 = vunpack.c.h.b16 %v2981
        %v3078 = vunpack.c.l.b16 %v2982
        %v3079 = vunpack.c.h.b16 %v2982
        %v3080 = vunpack.c.l.b16 %v2983
        %v3081 = vunpack.c.h.b16 %v2983
        %v3082 = vunpack.c.l.b16 %v2984
        %v3083 = vunpack.c.h.b16 %v2984
        %v3084 = vunpack.c.l.b16 %v2985
        %v3085 = vunpack.c.h.b16 %v2985
        %v3086 = vunpack.c.l.b16 %v2986
        %v3087 = vunpack.c.h.b16 %v2986
        %v3088 = vunpack.c.l.b16 %v2987
        %v3089 = vunpack.c.h.b16 %v2987
        %v3090 = vunpack.c.l.b16 %v2988
        %v3091 = vunpack.c.h.b16 %v2988
        %v3092 = vunpack.c.l.b16 %v2989
        %v3093 = vunpack.c.h.b16 %v2989
        %v3094 = vunpack.c.l.b16 %v2990
        %v3095 = vunpack.c.h.b16 %v2990
        %v3096 = vunpack.c.l.b16 %v2991
        %v3097 = vunpack.c.h.b16 %v2991
        %v3098 = vunpack.c.l.b16 %v2992
        %v3099 = vunpack.c.h.b16 %v2992
        %v3100 = vunpack.c.l.b16 %v2993
        %v3101 = vunpack.c.h.b16 %v2993
        %v3102 = vpack.c.b16 %v3040, %v3038
        %v3103 = vpack.c.b16 %v3041, %v3039
        %v3104 = vpack.c.b16 %v3044, %v3042
        %v3105 = vpack.c.b16 %v3045, %v3043
        %v3106 = vpack.c.b16 %v3048, %v3046
        %v3107 = vpack.c.b16 %v3049, %v3047
        %v3108 = vpack.c.b16 %v3052, %v3050
        %v3109 = vpack.c.b16 %v3053, %v3051
        %v3110 = vpack.c.b16 %v3056, %v3054
        %v3111 = vpack.c.b16 %v3057, %v3055
        %v3112 = vpack.c.b16 %v3060, %v3058
        %v3113 = vpack.c.b16 %v3061, %v3059
        %v3114 = vpack.c.b16 %v3064, %v3062
        %v3115 = vpack.c.b16 %v3065, %v3063
        %v3116 = vpack.c.b16 %v3068, %v3066
        %v3117 = vpack.c.b16 %v3069, %v3067
        %v3118 = vpack.c.b16 %v3072, %v3070
        %v3119 = vpack.c.b16 %v3073, %v3071
        %v3120 = vpack.c.b16 %v3076, %v3074
        %v3121 = vpack.c.b16 %v3077, %v3075
        %v3122 = vpack.c.b16 %v3080, %v3078
        %v3123 = vpack.c.b16 %v3081, %v3079
        %v3124 = vpack.c.b16 %v3084, %v3082
        %v3125 = vpack.c.b16 %v3085, %v3083
        %v3126 = vpack.c.b16 %v3088, %v3086
        %v3127 = vpack.c.b16 %v3089, %v3087
        %v3128 = vpack.c.b16 %v3092, %v3090
        %v3129 = vpack.c.b16 %v3093, %v3091
        %v3130 = vpack.c.b16 %v3096, %v3094
        %v3131 = vpack.c.b16 %v3097, %v3095
        %v3132 = vpack.c.b16 %v3100, %v3098
        %v3133 = vpack.c.b16 %v3101, %v3099
        %3166 = vmatprep.subr.bf16.mxu0 %v3103
        %3167 = vmatpush1.bf16.msra.mxu0 %v3102
        %3168 = vmatprep.subr.bf16.mxu0 %v3105
        %3169 = vmatpush1.bf16.msra.mxu0 %v3104
        %3170 = vmatprep.subr.bf16.mxu0 %v3107
        %3171 = vmatpush1.bf16.msra.mxu0 %v3106
        %3172 = vmatprep.subr.bf16.mxu0 %v3109
        %3173 = vmatpush1.bf16.msra.mxu0 %v3108
        %3174 = vmatprep.subr.bf16.mxu0 %v3111
        %3175 = vmatpush1.bf16.msra.mxu0 %v3110
        %3176 = vmatprep.subr.bf16.mxu0 %v3113
        %3177 = vmatpush1.bf16.msra.mxu0 %v3112
        %3178 = vmatprep.subr.bf16.mxu0 %v3115
        %3179 = vmatpush1.bf16.msra.mxu0 %v3114
        %3180 = vmatprep.subr.bf16.mxu0 %v3117
        %3181 = vmatpush1.bf16.msra.mxu0 %v3116
        %3182 = vmatprep.subr.bf16.mxu0 %v3119
        %3183 = vmatpush1.bf16.msra.mxu0 %v3118
        %3184 = vmatprep.subr.bf16.mxu0 %v3121
        %3185 = vmatpush1.bf16.msra.mxu0 %v3120
        %3186 = vmatprep.subr.bf16.mxu0 %v3123
        %3187 = vmatpush1.bf16.msra.mxu0 %v3122
        %3188 = vmatprep.subr.bf16.mxu0 %v3125
        %3189 = vmatpush1.bf16.msra.mxu0 %v3124
        %3190 = vmatprep.subr.bf16.mxu0 %v3127
        %3191 = vmatpush1.bf16.msra.mxu0 %v3126
        %3192 = vmatprep.subr.bf16.mxu0 %v3129
        %3193 = vmatpush1.bf16.msra.mxu0 %v3128
        %3194 = vmatprep.subr.bf16.mxu0 %v3131
        %3195 = vmatpush1.bf16.msra.mxu0 %v3130
        %3196 = vmatprep.subr.bf16.mxu0 %v3133
        %3197 = vmatpush1.bf16.msra.mxu0 %v3132
        %3198 = vmatprep.mubr.bf16.mxu0 %v2469
        %3199 = vmatmul.mubr.bf16.gmra.mrb[0].mxu0 %v2468
        %v3200 = vpop.f32.mrb[0].mxu0
        %v3201 = vadd.f32 %v2999, %v3200
        %v3202 = vpop.f32.mrb[0].mxu0
        %v3203 = vadd.f32 %v3003, %v3202
        %v3204 = vpop.f32.mrb[0].mxu0
        %v3205 = vadd.f32 %v2999, %v3204
        %v3206 = vpop.f32.mrb[0].mxu0
        %v3207 = vadd.f32 %v3003, %v3206
        %3208 = vdwg.mxu0
        %v3209 = vpack.c.bf16 %v2709, %v2709
        %v3210 = vpack.c.bf16 %v2958, %v2954
        %v3211 = vpack.c.bf16 %v3205, %v3201
        %3212 = vmatprep.subr.bf16.mxu0 0
        %3213 = vmatpush1.bf16.xpose.msra.mxu0 %v3210
        %3214 = vmatprep.subr.bf16.mxu0 0
        %3215 = vmatpush1.bf16.xpose.msra.mxu0 0
        %3216 = vmatprep.subr.bf16.mxu0 0
        %3217 = vmatpush1.bf16.xpose.msra.mxu0 0
        %3218 = vmatprep.subr.bf16.mxu0 0
        %3219 = vmatpush1.bf16.xpose.msra.mxu0 0
        %3220 = vmatprep.subr.bf16.mxu0 0
        %3221 = vmatpush1.bf16.xpose.msra.mxu0 0
        %3222 = vmatprep.subr.bf16.mxu0 0
        %3223 = vmatpush1.bf16.xpose.msra.mxu0 0
        %3224 = vmatprep.subr.bf16.mxu0 0
        %3225 = vmatpush1.bf16.xpose.msra.mxu0 0
        %3226 = vmatprep.subr.bf16.mxu0 0
        %3227 = vmatpush1.bf16.xpose.msra.mxu0 0
        %3228 = vmatprep.subr.bf16.mxu0 0
        %3229 = vmatpush1.bf16.xpose.msra.mxu0 0
        %3230 = vmatprep.subr.bf16.mxu0 0
        %3231 = vmatpush1.bf16.xpose.msra.mxu0 0
        %3232 = vmatprep.subr.bf16.mxu0 0
        %3233 = vmatpush1.bf16.xpose.msra.mxu0 0
        %3234 = vmatprep.subr.bf16.mxu0 0
        %3235 = vmatpush1.bf16.xpose.msra.mxu0 0
        %3236 = vmatprep.subr.bf16.mxu0 0
        %3237 = vmatpush1.bf16.xpose.msra.mxu0 0
        %3238 = vmatprep.subr.bf16.mxu0 0
        %3239 = vmatpush1.bf16.xpose.msra.mxu0 0
        %3240 = vmatprep.subr.bf16.mxu0 0
        %3241 = vmatpush1.bf16.xpose.msra.mxu0 0
        %3242 = vmatprep.subr.bf16.mxu0 0
        %3243 = vmatpush1.bf16.xpose.msra.mxu0 0
        %3244 = vmatprep.mubr.bf16.mxu0 0
        %3245 = vmatmul.mubr.bf16.gmra.mrb[0].mxu0 %v3209
        %v3246 = vpop.f32.mrb[0].mxu0
        %v3247 = vadd.f32 0.0, %v3246
        %v3248 = vpop.f32.mrb[0].mxu0
        %v3249 = vpop.f32.mrb[0].mxu0
        %v3250 = vpop.f32.mrb[0].mxu0
        %3251 = vdwg.mxu0
        %v3252 = vsel %vm1138, 16843009, 0
        %v3253 = vunpack.c.0.s8 %v3252
        %vm3254 = vcmp.ne.s32.totalorder %v3253, 0
        %v3255 = vsel %vm3254, 1, 0
        %v3256 = vlaneseq
        %v3257 = vshrl.u32 %v3256, 7
        %v3258 = vsub.s32 0, %v3257
        %v3259 = vrot.slane %v3255, %v3258
        %vm3260 = vcmp.eq.s32.totalorder %v3259, 1
        %v3261 = vsel %vm3260, %v3247, -1e+09
        %vm3262 = vcmask 130048
        %v3263 = vsel %vm3262, %v3261, -inf
        %3264 = vmax.xlane.f32.xlu0 %v3263
        %v3265 = vpop.xlane.xlu0 %3264
        %v3266 = vsub.f32 %v3261, %v3265
        %v3267 = vmul.f32 %v3266, 1.442695
        %v3268 = vpow.pop %v3267
        %v3269 = vsel %vm3262, %v3268, 0.0
        %3270 = vadd.xlane.f32.xlu0 %v3269
        %v3271 = vpop.xlane.xlu0 %3270
        %v3272 = vrcp.pop %v3271
        %v3273 = vmul.f32 %v3268, %v3272
        %v3274 = vpack.c.bf16 %v3273, %v3273
        %v3276 = vsel %vm3262, %v3274, 0
        %3278 = vmatprep.subr.bf16.mxu0 0
        %3279 = vmatpush1.bf16.msra.mxu0 %v3211
        %3280 = vmatprep.subr.bf16.mxu0 0
        %3281 = vmatpush1.bf16.msra.mxu0 0
        %3282 = vmatprep.subr.bf16.mxu0 0
        %3283 = vmatpush1.bf16.msra.mxu0 0
        %3284 = vmatprep.subr.bf16.mxu0 0
        %3285 = vmatpush1.bf16.msra.mxu0 0
        %3286 = vmatprep.subr.bf16.mxu0 0
        %3287 = vmatpush1.bf16.msra.mxu0 0
        %3288 = vmatprep.subr.bf16.mxu0 0
        %3289 = vmatpush1.bf16.msra.mxu0 0
        %3290 = vmatprep.subr.bf16.mxu0 0
        %3291 = vmatpush1.bf16.msra.mxu0 0
        %3292 = vmatprep.subr.bf16.mxu0 0
        %3293 = vmatpush1.bf16.msra.mxu0 0
        %3294 = vmatprep.subr.bf16.mxu0 0
        %3295 = vmatpush1.bf16.msra.mxu0 0
        %3296 = vmatprep.subr.bf16.mxu0 0
        %3297 = vmatpush1.bf16.msra.mxu0 0
        %3298 = vmatprep.subr.bf16.mxu0 0
        %3299 = vmatpush1.bf16.msra.mxu0 0
        %3300 = vmatprep.subr.bf16.mxu0 0
        %3301 = vmatpush1.bf16.msra.mxu0 0
        %3302 = vmatprep.subr.bf16.mxu0 0
        %3303 = vmatpush1.bf16.msra.mxu0 0
        %3304 = vmatprep.subr.bf16.mxu0 0
        %3305 = vmatpush1.bf16.msra.mxu0 0
        %3306 = vmatprep.subr.bf16.mxu0 0
        %3307 = vmatpush1.bf16.msra.mxu0 0
        %3308 = vmatprep.subr.bf16.mxu0 0
        %3309 = vmatpush1.bf16.msra.mxu0 0
        %3310 = vmatprep.mubr.bf16.mxu0 0
        %3311 = vmatmul.mubr.bf16.gmra.mrb[0].mxu0 %v3276
        %v3312 = vpop.f32.mrb[0].mxu0
        %v3313 = vadd.f32 0.0, %v3312
        %v3314 = vpop.f32.mrb[0].mxu0
        %v3315 = vpop.f32.mrb[0].mxu0
        %v3316 = vpop.f32.mrb[0].mxu0
        %3317 = vdwg.mxu0
        %v3318 = vpack.c.bf16 %v3313, %v3313
        %v3319 = vld [vmem:[#allocation16] sm:$0xff]
        %v3320 = vld [vmem:[#allocation16 + $0x8] sm:$0xff]
        %v3321 = vld [vmem:[#allocation16 + $0x10] sm:$0xff]
        %v3322 = vld [vmem:[#allocation16 + $0x18] sm:$0xff]
        %v3323 = vld [vmem:[#allocation16 + $0x20] sm:$0xff]
        %v3324 = vld [vmem:[#allocation16 + $0x28] sm:$0xff]
        %v3325 = vld [vmem:[#allocation16 + $0x30] sm:$0xff]
        %v3326 = vld [vmem:[#allocation16 + $0x38] sm:$0xff]
        %v3327 = vld [vmem:[#allocation16 + $0x40] sm:$0xff]
        %v3328 = vld [vmem:[#allocation16 + $0x48] sm:$0xff]
        %v3329 = vld [vmem:[#allocation16 + $0x50] sm:$0xff]
        %v3330 = vld [vmem:[#allocation16 + $0x58] sm:$0xff]
        %v3331 = vld [vmem:[#allocation16 + $0x60] sm:$0xff]
        %v3332 = vld [vmem:[#allocation16 + $0x68] sm:$0xff]
        %v3333 = vld [vmem:[#allocation16 + $0x70] sm:$0xff]
        %v3334 = vld [vmem:[#allocation16 + $0x78] sm:$0xff]
        %v3335 = vpack.c.bf16 %v2711, %v2711
        %v3336 = vpack.c.bf16 %v2960, %v2956
        %v3337 = vpack.c.bf16 %v3207, %v3203
        %3338 = vmatprep.subr.bf16.mxu0 0
        %3339 = vmatpush1.bf16.xpose.msra.mxu0 %v3336
        %3340 = vmatprep.subr.bf16.mxu0 0
        %3341 = vmatpush1.bf16.xpose.msra.mxu0 0
        %3342 = vmatprep.subr.bf16.mxu0 0
        %3343 = vmatpush1.bf16.xpose.msra.mxu0 0
        %3344 = vmatprep.subr.bf16.mxu0 0
        %3345 = vmatpush1.bf16.xpose.msra.mxu0 0
        %3346 = vmatprep.subr.bf16.mxu0 0
        %3347 = vmatpush1.bf16.xpose.msra.mxu0 0
        %3348 = vmatprep.subr.bf16.mxu0 0
        %3349 = vmatpush1.bf16.xpose.msra.mxu0 0
        %3350 = vmatprep.subr.bf16.mxu0 0
        %3351 = vmatpush1.bf16.xpose.msra.mxu0 0
        %3352 = vmatprep.subr.bf16.mxu0 0
        %3353 = vmatpush1.bf16.xpose.msra.mxu0 0
        %3354 = vmatprep.subr.bf16.mxu0 0
        %3355 = vmatpush1.bf16.xpose.msra.mxu0 0
        %3356 = vmatprep.subr.bf16.mxu0 0
        %3357 = vmatpush1.bf16.xpose.msra.mxu0 0
        %3358 = vmatprep.subr.bf16.mxu0 0
        %3359 = vmatpush1.bf16.xpose.msra.mxu0 0
        %3360 = vmatprep.subr.bf16.mxu0 0
        %3361 = vmatpush1.bf16.xpose.msra.mxu0 0
        %3362 = vmatprep.subr.bf16.mxu0 0
        %3363 = vmatpush1.bf16.xpose.msra.mxu0 0
        %3364 = vmatprep.subr.bf16.mxu0 0
        %3365 = vmatpush1.bf16.xpose.msra.mxu0 0
        %3366 = vmatprep.subr.bf16.mxu0 0
        %3367 = vmatpush1.bf16.xpose.msra.mxu0 0
        %3368 = vmatprep.subr.bf16.mxu0 0
        %3369 = vmatpush1.bf16.xpose.msra.mxu0 0
        %3370 = vmatprep.mubr.bf16.mxu0 0
        %3371 = vmatmul.mubr.bf16.gmra.mrb[0].mxu0 %v3335
        %v3372 = vpop.f32.mrb[0].mxu0
        %v3373 = vadd.f32 0.0, %v3372
        %v3374 = vpop.f32.mrb[0].mxu0
        %v3375 = vpop.f32.mrb[0].mxu0
        %v3376 = vpop.f32.mrb[0].mxu0
        %3377 = vdwg.mxu0
        %v3378 = vsel %vm3260, %v3373, -1e+09
        %v3379 = vsel %vm3262, %v3378, -inf
        %3380 = vmax.xlane.f32.xlu0 %v3379
        %v3381 = vpop.xlane.xlu0 %3380
        %v3382 = vsub.f32 %v3378, %v3381
        %v3383 = vmul.f32 %v3382, 1.442695
        %v3384 = vpow.pop %v3383
        %v3385 = vsel %vm3262, %v3384, 0.0
        %3386 = vadd.xlane.f32.xlu0 %v3385
        %v3387 = vpop.xlane.xlu0 %3386
        %v3388 = vrcp.pop %v3387
        %v3389 = vmul.f32 %v3384, %v3388
        %v3390 = vpack.c.bf16 %v3389, %v3389
        %v3392 = vsel %vm3262, %v3390, 0
        %3394 = vmatprep.subr.bf16.mxu0 0
        %3395 = vmatpush1.bf16.msra.mxu0 %v3337
        %3396 = vmatprep.subr.bf16.mxu0 0
        %3397 = vmatpush1.bf16.msra.mxu0 0
        %3398 = vmatprep.subr.bf16.mxu0 0
        %3399 = vmatpush1.bf16.msra.mxu0 0
        %3400 = vmatprep.subr.bf16.mxu0 0
        %3401 = vmatpush1.bf16.msra.mxu0 0
        %3402 = vmatprep.subr.bf16.mxu0 0
        %3403 = vmatpush1.bf16.msra.mxu0 0
        %3404 = vmatprep.subr.bf16.mxu0 0
        %3405 = vmatpush1.bf16.msra.mxu0 0
        %3406 = vmatprep.subr.bf16.mxu0 0
        %3407 = vmatpush1.bf16.msra.mxu0 0
        %3408 = vmatprep.subr.bf16.mxu0 0
        %3409 = vmatpush1.bf16.msra.mxu0 0
        %3410 = vmatprep.subr.bf16.mxu0 0
        %3411 = vmatpush1.bf16.msra.mxu0 0
        %3412 = vmatprep.subr.bf16.mxu0 0
        %3413 = vmatpush1.bf16.msra.mxu0 0
        %3414 = vmatprep.subr.bf16.mxu0 0
        %3415 = vmatpush1.bf16.msra.mxu0 0
        %3416 = vmatprep.subr.bf16.mxu0 0
        %3417 = vmatpush1.bf16.msra.mxu0 0
        %3418 = vmatprep.subr.bf16.mxu0 0
        %3419 = vmatpush1.bf16.msra.mxu0 0
        %3420 = vmatprep.subr.bf16.mxu0 0
        %3421 = vmatpush1.bf16.msra.mxu0 0
        %3422 = vmatprep.subr.bf16.mxu0 0
        %3423 = vmatpush1.bf16.msra.mxu0 0
        %3424 = vmatprep.subr.bf16.mxu0 0
        %3425 = vmatpush1.bf16.msra.mxu0 0
        %3426 = vmatprep.mubr.bf16.mxu0 0
        %3427 = vmatmul.mubr.bf16.gmra.mrb[0].mxu0 %v3392
        %v3428 = vpop.f32.mrb[0].mxu0
        %v3429 = vadd.f32 0.0, %v3428
        %v3430 = vpop.f32.mrb[0].mxu0
        %v3431 = vpop.f32.mrb[0].mxu0
        %v3432 = vpop.f32.mrb[0].mxu0
        %3433 = vdwg.mxu0
        %v3434 = vpack.c.bf16 %v3429, %v3429
        %v3435 = vld [vmem:[#allocation16 + $0x80] sm:$0xff]
        %v3436 = vld [vmem:[#allocation16 + $0x88] sm:$0xff]
        %v3437 = vld [vmem:[#allocation16 + $0x90] sm:$0xff]
        %v3438 = vld [vmem:[#allocation16 + $0x98] sm:$0xff]
        %v3439 = vld [vmem:[#allocation16 + $0xa0] sm:$0xff]
        %v3440 = vld [vmem:[#allocation16 + $0xa8] sm:$0xff]
        %v3441 = vld [vmem:[#allocation16 + $0xb0] sm:$0xff]
        %v3442 = vld [vmem:[#allocation16 + $0xb8] sm:$0xff]
        %v3443 = vld [vmem:[#allocation16 + $0xc0] sm:$0xff]
        %v3444 = vld [vmem:[#allocation16 + $0xc8] sm:$0xff]
        %v3445 = vld [vmem:[#allocation16 + $0xd0] sm:$0xff]
        %v3446 = vld [vmem:[#allocation16 + $0xd8] sm:$0xff]
        %v3447 = vld [vmem:[#allocation16 + $0xe0] sm:$0xff]
        %v3448 = vld [vmem:[#allocation16 + $0xe8] sm:$0xff]
        %v3449 = vld [vmem:[#allocation16 + $0xf0] sm:$0xff]
        %v3450 = vld [vmem:[#allocation16 + $0xf8] sm:$0xff]
        %v3467 = vunpack.c.l.b16 %v3435
        %v3468 = vunpack.c.h.b16 %v3435
        %v3469 = vunpack.c.l.b16 %v3436
        %v3470 = vunpack.c.h.b16 %v3436
        %v3471 = vunpack.c.l.b16 %v3437
        %v3472 = vunpack.c.h.b16 %v3437
        %v3473 = vunpack.c.l.b16 %v3438
        %v3474 = vunpack.c.h.b16 %v3438
        %v3475 = vunpack.c.l.b16 %v3439
        %v3476 = vunpack.c.h.b16 %v3439
        %v3477 = vunpack.c.l.b16 %v3440
        %v3478 = vunpack.c.h.b16 %v3440
        %v3479 = vunpack.c.l.b16 %v3441
        %v3480 = vunpack.c.h.b16 %v3441
        %v3481 = vunpack.c.l.b16 %v3442
        %v3482 = vunpack.c.h.b16 %v3442
        %v3483 = vunpack.c.l.b16 %v3443
        %v3484 = vunpack.c.h.b16 %v3443
        %v3485 = vunpack.c.l.b16 %v3444
        %v3486 = vunpack.c.h.b16 %v3444
        %v3487 = vunpack.c.l.b16 %v3445
        %v3488 = vunpack.c.h.b16 %v3445
        %v3489 = vunpack.c.l.b16 %v3446
        %v3490 = vunpack.c.h.b16 %v3446
        %v3491 = vunpack.c.l.b16 %v3447
        %v3492 = vunpack.c.h.b16 %v3447
        %v3493 = vunpack.c.l.b16 %v3448
        %v3494 = vunpack.c.h.b16 %v3448
        %v3495 = vunpack.c.l.b16 %v3449
        %v3496 = vunpack.c.h.b16 %v3449
        %v3497 = vunpack.c.l.b16 %v3450
        %v3498 = vunpack.c.h.b16 %v3450
        %v3499 = vpack.c.b16 %v3469, %v3467
        %v3500 = vpack.c.b16 %v3470, %v3468
        %v3501 = vpack.c.b16 %v3473, %v3471
        %v3502 = vpack.c.b16 %v3474, %v3472
        %v3503 = vpack.c.b16 %v3477, %v3475
        %v3504 = vpack.c.b16 %v3478, %v3476
        %v3505 = vpack.c.b16 %v3481, %v3479
        %v3506 = vpack.c.b16 %v3482, %v3480
        %v3507 = vpack.c.b16 %v3485, %v3483
        %v3508 = vpack.c.b16 %v3486, %v3484
        %v3509 = vpack.c.b16 %v3489, %v3487
        %v3510 = vpack.c.b16 %v3490, %v3488
        %v3511 = vpack.c.b16 %v3493, %v3491
        %v3512 = vpack.c.b16 %v3494, %v3492
        %v3513 = vpack.c.b16 %v3497, %v3495
        %v3514 = vpack.c.b16 %v3498, %v3496
        %3531 = vmatprep.subr.bf16.mxu0 %v3500
        %3532 = vmatpush1.bf16.msra.mxu0 %v3499
        %3533 = vmatprep.subr.bf16.mxu0 %v3502
        %3534 = vmatpush1.bf16.msra.mxu0 %v3501
        %3535 = vmatprep.subr.bf16.mxu0 %v3504
        %3536 = vmatpush1.bf16.msra.mxu0 %v3503
        %3537 = vmatprep.subr.bf16.mxu0 %v3506
        %3538 = vmatpush1.bf16.msra.mxu0 %v3505
        %3539 = vmatprep.subr.bf16.mxu0 %v3508
        %3540 = vmatpush1.bf16.msra.mxu0 %v3507
        %3541 = vmatprep.subr.bf16.mxu0 %v3510
        %3542 = vmatpush1.bf16.msra.mxu0 %v3509
        %3543 = vmatprep.subr.bf16.mxu0 %v3512
        %3544 = vmatpush1.bf16.msra.mxu0 %v3511
        %3545 = vmatprep.subr.bf16.mxu0 %v3514
        %3546 = vmatpush1.bf16.msra.mxu0 %v3513
        %3547 = vmatprep.subr.bf16.mxu0 0
        %3548 = vmatpush1.bf16.msra.mxu0 0
        %3549 = vmatprep.subr.bf16.mxu0 0
        %3550 = vmatpush1.bf16.msra.mxu0 0
        %3551 = vmatprep.subr.bf16.mxu0 0
        %3552 = vmatpush1.bf16.msra.mxu0 0
        %3553 = vmatprep.subr.bf16.mxu0 0
        %3554 = vmatpush1.bf16.msra.mxu0 0
        %3555 = vmatprep.subr.bf16.mxu0 0
        %3556 = vmatpush1.bf16.msra.mxu0 0
        %3557 = vmatprep.subr.bf16.mxu0 0
        %3558 = vmatpush1.bf16.msra.mxu0 0
        %3559 = vmatprep.subr.bf16.mxu0 0
        %3560 = vmatpush1.bf16.msra.mxu0 0
        %3561 = vmatprep.subr.bf16.mxu0 0
        %3562 = vmatpush1.bf16.msra.mxu0 0
        %3563 = vmatprep.mubr.bf16.mxu0 0
        %3564 = vmatmul.mubr.bf16.gmra.mrb[0].mxu0 %v3434
        %v3565 = vpop.f32.mrb[0].mxu0
        %v3566 = vadd.f32 0.0, %v3565
        %v3567 = vpop.f32.mrb[0].mxu0
        %v3568 = vadd.f32 0.0, %v3567
        %v3569 = vpop.f32.mrb[0].mxu0
        %v3570 = vpop.f32.mrb[0].mxu0
        %3571 = vdwg.mxu0
        %v3588 = vunpack.c.l.b16 %v3319
        %v3589 = vunpack.c.h.b16 %v3319
        %v3590 = vunpack.c.l.b16 %v3320
        %v3591 = vunpack.c.h.b16 %v3320
        %v3592 = vunpack.c.l.b16 %v3321
        %v3593 = vunpack.c.h.b16 %v3321
        %v3594 = vunpack.c.l.b16 %v3322
        %v3595 = vunpack.c.h.b16 %v3322
        %v3596 = vunpack.c.l.b16 %v3323
        %v3597 = vunpack.c.h.b16 %v3323
        %v3598 = vunpack.c.l.b16 %v3324
        %v3599 = vunpack.c.h.b16 %v3324
        %v3600 = vunpack.c.l.b16 %v3325
        %v3601 = vunpack.c.h.b16 %v3325
        %v3602 = vunpack.c.l.b16 %v3326
        %v3603 = vunpack.c.h.b16 %v3326
        %v3604 = vunpack.c.l.b16 %v3327
        %v3605 = vunpack.c.h.b16 %v3327
        %v3606 = vunpack.c.l.b16 %v3328
        %v3607 = vunpack.c.h.b16 %v3328
        %v3608 = vunpack.c.l.b16 %v3329
        %v3609 = vunpack.c.h.b16 %v3329
        %v3610 = vunpack.c.l.b16 %v3330
        %v3611 = vunpack.c.h.b16 %v3330
        %v3612 = vunpack.c.l.b16 %v3331
        %v3613 = vunpack.c.h.b16 %v3331
        %v3614 = vunpack.c.l.b16 %v3332
        %v3615 = vunpack.c.h.b16 %v3332
        %v3616 = vunpack.c.l.b16 %v3333
        %v3617 = vunpack.c.h.b16 %v3333
        %v3618 = vunpack.c.l.b16 %v3334
        %v3619 = vunpack.c.h.b16 %v3334
        %v3620 = vpack.c.b16 %v3590, %v3588
        %v3621 = vpack.c.b16 %v3591, %v3589
        %v3622 = vpack.c.b16 %v3594, %v3592
        %v3623 = vpack.c.b16 %v3595, %v3593
        %v3624 = vpack.c.b16 %v3598, %v3596
        %v3625 = vpack.c.b16 %v3599, %v3597
        %v3626 = vpack.c.b16 %v3602, %v3600
        %v3627 = vpack.c.b16 %v3603, %v3601
        %v3628 = vpack.c.b16 %v3606, %v3604
        %v3629 = vpack.c.b16 %v3607, %v3605
        %v3630 = vpack.c.b16 %v3610, %v3608
        %v3631 = vpack.c.b16 %v3611, %v3609
        %v3632 = vpack.c.b16 %v3614, %v3612
        %v3633 = vpack.c.b16 %v3615, %v3613
        %v3634 = vpack.c.b16 %v3618, %v3616
        %v3635 = vpack.c.b16 %v3619, %v3617
        %3652 = vmatprep.subr.bf16.mxu0 %v3621
        %3653 = vmatpush1.bf16.msra.mxu0 %v3620
        %3654 = vmatprep.subr.bf16.mxu0 %v3623
        %3655 = vmatpush1.bf16.msra.mxu0 %v3622
        %3656 = vmatprep.subr.bf16.mxu0 %v3625
        %3657 = vmatpush1.bf16.msra.mxu0 %v3624
        %3658 = vmatprep.subr.bf16.mxu0 %v3627
        %3659 = vmatpush1.bf16.msra.mxu0 %v3626
        %3660 = vmatprep.subr.bf16.mxu0 %v3629
        %3661 = vmatpush1.bf16.msra.mxu0 %v3628
        %3662 = vmatprep.subr.bf16.mxu0 %v3631
        %3663 = vmatpush1.bf16.msra.mxu0 %v3630
        %3664 = vmatprep.subr.bf16.mxu0 %v3633
        %3665 = vmatpush1.bf16.msra.mxu0 %v3632
        %3666 = vmatprep.subr.bf16.mxu0 %v3635
        %3667 = vmatpush1.bf16.msra.mxu0 %v3634
        %3668 = vmatprep.subr.bf16.mxu0 0
        %3669 = vmatpush1.bf16.msra.mxu0 0
        %3670 = vmatprep.subr.bf16.mxu0 0
        %3671 = vmatpush1.bf16.msra.mxu0 0
        %3672 = vmatprep.subr.bf16.mxu0 0
        %3673 = vmatpush1.bf16.msra.mxu0 0
        %3674 = vmatprep.subr.bf16.mxu0 0
        %3675 = vmatpush1.bf16.msra.mxu0 0
        %3676 = vmatprep.subr.bf16.mxu0 0
        %3677 = vmatpush1.bf16.msra.mxu0 0
        %3678 = vmatprep.subr.bf16.mxu0 0
        %3679 = vmatpush1.bf16.msra.mxu0 0
        %3680 = vmatprep.subr.bf16.mxu0 0
        %3681 = vmatpush1.bf16.msra.mxu0 0
        %3682 = vmatprep.subr.bf16.mxu0 0
        %3683 = vmatpush1.bf16.msra.mxu0 0
        %3684 = vmatprep.mubr.bf16.mxu0 0
        %3685 = vmatmul.mubr.bf16.gmra.mrb[0].mxu0 %v3318
        %v3686 = vpop.f32.mrb[0].mxu0
        %v3687 = vadd.f32 %v3566, %v3686
        %v3688 = vpop.f32.mrb[0].mxu0
        %v3689 = vadd.f32 %v3568, %v3688
        %v3690 = vpop.f32.mrb[0].mxu0
        %v3691 = vpop.f32.mrb[0].mxu0
        %3692 = vdwg.mxu0
        %v3693 = vld [vmem:[%s47] sm:$0x3]
        %v3695 = vlaneseq
        %v3696 = vshrl.u32 %v3695, 7
        %v3697 = vsub.s32 0, %v3696
        %v3698 = vrot.slane %v3693, %v3697
        %v3699 = vlaneseq
        %v3700 = vshrl.u32 %v3699, 7
        %v3701 = vsub.s32 1, %v3700
        %v3702 = vrot.slane %v3693, %v3701
        %v3705 = vadd.f32 %v3687, %v3698
        %v3706 = vadd.f32 %v3689, %v3702
        %v3707 = vadd.f32 %v2420, %v3705
        %v3708 = vadd.f32 %v2421, %v3706
        %v3709 = vld [vmem:[%s49] sm:$0x3]
        %v3710 = vld [vmem:[%s51] sm:$0x3]
        %v3711 = vadd.f32 %v3707, %v3708
        %3712 = vadd.xlane.f32.xlu0 %v3711
        %v3713 = vpop.xlane.xlu0 %3712
        %v3714 = vmul.f32 %v3713, %v1144
        %v3715 = vsub.f32 %v3707, %v3714
        %v3716 = vsub.f32 %v3708, %v3714
        %v3717 = vmul.f32 %v3715, %v3715
        %v3718 = vmul.f32 %v3716, %v3716
        %v3719 = vadd.f32 %v3717, %v3718
        %3720 = vadd.xlane.f32.xlu0 %v3719
        %v3721 = vpop.xlane.xlu0 %3720
        %v3722 = vmul.f32 %v3721, %v1144
        %v3723 = vadd.f32 %v3722, 1e-05
        %v3724 = vrsqrt.pop %v3723
        %v3725 = vmul.f32 %v3715, %v3724
        %v3726 = vmul.f32 %v3716, %v3724
        %v3728 = vlaneseq
        %v3729 = vshrl.u32 %v3728, 7
        %v3730 = vsub.s32 0, %v3729
        %v3731 = vrot.slane %v3709, %v3730
        %v3732 = vlaneseq
        %v3733 = vshrl.u32 %v3732, 7
        %v3734 = vsub.s32 1, %v3733
        %v3735 = vrot.slane %v3709, %v3734
        %v3738 = vmul.f32 %v3725, %v3731
        %v3739 = vmul.f32 %v3726, %v3735
        %v3741 = vlaneseq
        %v3742 = vshrl.u32 %v3741, 7
        %v3743 = vsub.s32 0, %v3742
        %v3744 = vrot.slane %v3710, %v3743
        %v3745 = vlaneseq
        %v3746 = vshrl.u32 %v3745, 7
        %v3747 = vsub.s32 1, %v3746
        %v3748 = vrot.slane %v3710, %v3747
        %v3751 = vadd.f32 %v3738, %v3744
        %v3752 = vadd.f32 %v3739, %v3748
        %v3753 = vpack.c.bf16 %v3751, %v3751
        %v3754 = vpack.c.bf16 %v3752, %v3752
        %v3755 = vld [vmem:[#allocation17] sm:$0xff]
        %v3756 = vld [vmem:[#allocation17 + $0x10] sm:$0xff]
        %v3757 = vld [vmem:[#allocation17 + $0x20] sm:$0xff]
        %v3758 = vld [vmem:[#allocation17 + $0x30] sm:$0xff]
        %v3759 = vld [vmem:[#allocation17 + $0x40] sm:$0xff]
        %v3760 = vld [vmem:[#allocation17 + $0x50] sm:$0xff]
        %v3761 = vld [vmem:[#allocation17 + $0x60] sm:$0xff]
        %v3762 = vld [vmem:[#allocation17 + $0x70] sm:$0xff]
        %v3763 = vld [vmem:[#allocation17 + $0x80] sm:$0xff]
        %v3764 = vld [vmem:[#allocation17 + $0x90] sm:$0xff]
        %v3765 = vld [vmem:[#allocation17 + $0xa0] sm:$0xff]
        %v3766 = vld [vmem:[#allocation17 + $0xb0] sm:$0xff]
        %v3767 = vld [vmem:[#allocation17 + $0xc0] sm:$0xff]
        %v3768 = vld [vmem:[#allocation17 + $0xd0] sm:$0xff]
        %v3769 = vld [vmem:[#allocation17 + $0xe0] sm:$0xff]
        %v3770 = vld [vmem:[#allocation17 + $0xf0] sm:$0xff]
        %v3771 = vld [vmem:[#allocation17 + $0x100] sm:$0xff]
        %v3772 = vld [vmem:[#allocation17 + $0x110] sm:$0xff]
        %v3773 = vld [vmem:[#allocation17 + $0x120] sm:$0xff]
        %v3774 = vld [vmem:[#allocation17 + $0x130] sm:$0xff]
        %v3775 = vld [vmem:[#allocation17 + $0x140] sm:$0xff]
        %v3776 = vld [vmem:[#allocation17 + $0x150] sm:$0xff]
        %v3777 = vld [vmem:[#allocation17 + $0x160] sm:$0xff]
        %v3778 = vld [vmem:[#allocation17 + $0x170] sm:$0xff]
        %v3779 = vld [vmem:[#allocation17 + $0x180] sm:$0xff]
        %v3780 = vld [vmem:[#allocation17 + $0x190] sm:$0xff]
        %v3781 = vld [vmem:[#allocation17 + $0x1a0] sm:$0xff]
        %v3782 = vld [vmem:[#allocation17 + $0x1b0] sm:$0xff]
        %v3783 = vld [vmem:[#allocation17 + $0x1c0] sm:$0xff]
        %v3784 = vld [vmem:[#allocation17 + $0x1d0] sm:$0xff]
        %v3785 = vld [vmem:[#allocation17 + $0x1e0] sm:$0xff]
        %v3786 = vld [vmem:[#allocation17 + $0x1f0] sm:$0xff]
        %v3787 = vld [vmem:[%s55] sm:$0x3]
        %v3789 = vlaneseq
        %v3790 = vshrl.u32 %v3789, 7
        %v3791 = vsub.s32 0, %v3790
        %v3792 = vrot.slane %v3787, %v3791
        %v3793 = vlaneseq
        %v3794 = vshrl.u32 %v3793, 7
        %v3795 = vsub.s32 1, %v3794
        %v3796 = vrot.slane %v3787, %v3795
        %v3831 = vunpack.c.l.b16 %v3755
        %v3832 = vunpack.c.h.b16 %v3755
        %v3833 = vunpack.c.l.b16 %v3756
        %v3834 = vunpack.c.h.b16 %v3756
        %v3835 = vunpack.c.l.b16 %v3757
        %v3836 = vunpack.c.h.b16 %v3757
        %v3837 = vunpack.c.l.b16 %v3758
        %v3838 = vunpack.c.h.b16 %v3758
        %v3839 = vunpack.c.l.b16 %v3759
        %v3840 = vunpack.c.h.b16 %v3759
        %v3841 = vunpack.c.l.b16 %v3760
        %v3842 = vunpack.c.h.b16 %v3760
        %v3843 = vunpack.c.l.b16 %v3761
        %v3844 = vunpack.c.h.b16 %v3761
        %v3845 = vunpack.c.l.b16 %v3762
        %v3846 = vunpack.c.h.b16 %v3762
        %v3847 = vunpack.c.l.b16 %v3763
        %v3848 = vunpack.c.h.b16 %v3763
        %v3849 = vunpack.c.l.b16 %v3764
        %v3850 = vunpack.c.h.b16 %v3764
        %v3851 = vunpack.c.l.b16 %v3765
        %v3852 = vunpack.c.h.b16 %v3765
        %v3853 = vunpack.c.l.b16 %v3766
        %v3854 = vunpack.c.h.b16 %v3766
        %v3855 = vunpack.c.l.b16 %v3767
        %v3856 = vunpack.c.h.b16 %v3767
        %v3857 = vunpack.c.l.b16 %v3768
        %v3858 = vunpack.c.h.b16 %v3768
        %v3859 = vunpack.c.l.b16 %v3769
        %v3860 = vunpack.c.h.b16 %v3769
        %v3861 = vunpack.c.l.b16 %v3770
        %v3862 = vunpack.c.h.b16 %v3770
        %v3863 = vunpack.c.l.b16 %v3771
        %v3864 = vunpack.c.h.b16 %v3771
        %v3865 = vunpack.c.l.b16 %v3772
        %v3866 = vunpack.c.h.b16 %v3772
        %v3867 = vunpack.c.l.b16 %v3773
        %v3868 = vunpack.c.h.b16 %v3773
        %v3869 = vunpack.c.l.b16 %v3774
        %v3870 = vunpack.c.h.b16 %v3774
        %v3871 = vunpack.c.l.b16 %v3775
        %v3872 = vunpack.c.h.b16 %v3775
        %v3873 = vunpack.c.l.b16 %v3776
        %v3874 = vunpack.c.h.b16 %v3776
        %v3875 = vunpack.c.l.b16 %v3777
        %v3876 = vunpack.c.h.b16 %v3777
        %v3877 = vunpack.c.l.b16 %v3778
        %v3878 = vunpack.c.h.b16 %v3778
        %v3879 = vunpack.c.l.b16 %v3779
        %v3880 = vunpack.c.h.b16 %v3779
        %v3881 = vunpack.c.l.b16 %v3780
        %v3882 = vunpack.c.h.b16 %v3780
        %v3883 = vunpack.c.l.b16 %v3781
        %v3884 = vunpack.c.h.b16 %v3781
        %v3885 = vunpack.c.l.b16 %v3782
        %v3886 = vunpack.c.h.b16 %v3782
        %v3887 = vunpack.c.l.b16 %v3783
        %v3888 = vunpack.c.h.b16 %v3783
        %v3889 = vunpack.c.l.b16 %v3784
        %v3890 = vunpack.c.h.b16 %v3784
        %v3891 = vunpack.c.l.b16 %v3785
        %v3892 = vunpack.c.h.b16 %v3785
        %v3893 = vunpack.c.l.b16 %v3786
        %v3894 = vunpack.c.h.b16 %v3786
        %v3895 = vpack.c.b16 %v3833, %v3831
        %v3896 = vpack.c.b16 %v3834, %v3832
        %v3897 = vpack.c.b16 %v3837, %v3835
        %v3898 = vpack.c.b16 %v3838, %v3836
        %v3899 = vpack.c.b16 %v3841, %v3839
        %v3900 = vpack.c.b16 %v3842, %v3840
        %v3901 = vpack.c.b16 %v3845, %v3843
        %v3902 = vpack.c.b16 %v3846, %v3844
        %v3903 = vpack.c.b16 %v3849, %v3847
        %v3904 = vpack.c.b16 %v3850, %v3848
        %v3905 = vpack.c.b16 %v3853, %v3851
        %v3906 = vpack.c.b16 %v3854, %v3852
        %v3907 = vpack.c.b16 %v3857, %v3855
        %v3908 = vpack.c.b16 %v3858, %v3856
        %v3909 = vpack.c.b16 %v3861, %v3859
        %v3910 = vpack.c.b16 %v3862, %v3860
        %v3911 = vpack.c.b16 %v3865, %v3863
        %v3912 = vpack.c.b16 %v3866, %v3864
        %v3913 = vpack.c.b16 %v3869, %v3867
        %v3914 = vpack.c.b16 %v3870, %v3868
        %v3915 = vpack.c.b16 %v3873, %v3871
        %v3916 = vpack.c.b16 %v3874, %v3872
        %v3917 = vpack.c.b16 %v3877, %v3875
        %v3918 = vpack.c.b16 %v3878, %v3876
        %v3919 = vpack.c.b16 %v3881, %v3879
        %v3920 = vpack.c.b16 %v3882, %v3880
        %v3921 = vpack.c.b16 %v3885, %v3883
        %v3922 = vpack.c.b16 %v3886, %v3884
        %v3923 = vpack.c.b16 %v3889, %v3887
        %v3924 = vpack.c.b16 %v3890, %v3888
        %v3925 = vpack.c.b16 %v3893, %v3891
        %v3926 = vpack.c.b16 %v3894, %v3892
        %3959 = vmatprep.subr.bf16.mxu0 %v3896
        %3960 = vmatpush1.bf16.msra.mxu0 %v3895
        %3961 = vmatprep.subr.bf16.mxu0 %v3898
        %3962 = vmatpush1.bf16.msra.mxu0 %v3897
        %3963 = vmatprep.subr.bf16.mxu0 %v3900
        %3964 = vmatpush1.bf16.msra.mxu0 %v3899
        %3965 = vmatprep.subr.bf16.mxu0 %v3902
        %3966 = vmatpush1.bf16.msra.mxu0 %v3901
        %3967 = vmatprep.subr.bf16.mxu0 %v3904
        %3968 = vmatpush1.bf16.msra.mxu0 %v3903
        %3969 = vmatprep.subr.bf16.mxu0 %v3906
        %3970 = vmatpush1.bf16.msra.mxu0 %v3905
        %3971 = vmatprep.subr.bf16.mxu0 %v3908
        %3972 = vmatpush1.bf16.msra.mxu0 %v3907
        %3973 = vmatprep.subr.bf16.mxu0 %v3910
        %3974 = vmatpush1.bf16.msra.mxu0 %v3909
        %3975 = vmatprep.subr.bf16.mxu0 %v3912
        %3976 = vmatpush1.bf16.msra.mxu0 %v3911
        %3977 = vmatprep.subr.bf16.mxu0 %v3914
        %3978 = vmatpush1.bf16.msra.mxu0 %v3913
        %3979 = vmatprep.subr.bf16.mxu0 %v3916
        %3980 = vmatpush1.bf16.msra.mxu0 %v3915
        %3981 = vmatprep.subr.bf16.mxu0 %v3918
        %3982 = vmatpush1.bf16.msra.mxu0 %v3917
        %3983 = vmatprep.subr.bf16.mxu0 %v3920
        %3984 = vmatpush1.bf16.msra.mxu0 %v3919
        %3985 = vmatprep.subr.bf16.mxu0 %v3922
        %3986 = vmatpush1.bf16.msra.mxu0 %v3921
        %3987 = vmatprep.subr.bf16.mxu0 %v3924
        %3988 = vmatpush1.bf16.msra.mxu0 %v3923
        %3989 = vmatprep.subr.bf16.mxu0 %v3926
        %3990 = vmatpush1.bf16.msra.mxu0 %v3925
        %3991 = vmatprep.mubr.bf16.mxu0 %v3754
        %3992 = vmatmul.mubr.bf16.gmra.mrb[0].mxu0 %v3753
        %v3993 = vpop.f32.mrb[0].mxu0
        %v3994 = vadd.f32 %v3792, %v3993
        %v3995 = vpop.f32.mrb[0].mxu0
        %v3996 = vadd.f32 %v3796, %v3995
        %v3997 = vpop.f32.mrb[0].mxu0
        %v3998 = vpop.f32.mrb[0].mxu0
        %3999 = vdwg.mxu0
        %v4000 = vmax.f32 %v3994, 0.0
        %v4001 = vmax.f32 %v3996, 0.0
        %v4002 = vpack.c.bf16 %v4000, %v4000
        %v4003 = vpack.c.bf16 %v4001, %v4001
        %v4004 = vld [vmem:[#allocation19] sm:$0xff]
        %v4005 = vld [vmem:[#allocation19 + $0x8] sm:$0xff]
        %v4006 = vld [vmem:[#allocation19 + $0x10] sm:$0xff]
        %v4007 = vld [vmem:[#allocation19 + $0x18] sm:$0xff]
        %v4008 = vld [vmem:[#allocation19 + $0x20] sm:$0xff]
        %v4009 = vld [vmem:[#allocation19 + $0x28] sm:$0xff]
        %v4010 = vld [vmem:[#allocation19 + $0x30] sm:$0xff]
        %v4011 = vld [vmem:[#allocation19 + $0x38] sm:$0xff]
        %v4012 = vld [vmem:[#allocation19 + $0x40] sm:$0xff]
        %v4013 = vld [vmem:[#allocation19 + $0x48] sm:$0xff]
        %v4014 = vld [vmem:[#allocation19 + $0x50] sm:$0xff]
        %v4015 = vld [vmem:[#allocation19 + $0x58] sm:$0xff]
        %v4016 = vld [vmem:[#allocation19 + $0x60] sm:$0xff]
        %v4017 = vld [vmem:[#allocation19 + $0x68] sm:$0xff]
        %v4018 = vld [vmem:[#allocation19 + $0x70] sm:$0xff]
        %v4019 = vld [vmem:[#allocation19 + $0x78] sm:$0xff]
        %v4020 = vld [vmem:[#allocation19 + $0x80] sm:$0xff]
        %v4021 = vld [vmem:[#allocation19 + $0x88] sm:$0xff]
        %v4022 = vld [vmem:[#allocation19 + $0x90] sm:$0xff]
        %v4023 = vld [vmem:[#allocation19 + $0x98] sm:$0xff]
        %v4024 = vld [vmem:[#allocation19 + $0xa0] sm:$0xff]
        %v4025 = vld [vmem:[#allocation19 + $0xa8] sm:$0xff]
        %v4026 = vld [vmem:[#allocation19 + $0xb0] sm:$0xff]
        %v4027 = vld [vmem:[#allocation19 + $0xb8] sm:$0xff]
        %v4028 = vld [vmem:[#allocation19 + $0xc0] sm:$0xff]
        %v4029 = vld [vmem:[#allocation19 + $0xc8] sm:$0xff]
        %v4030 = vld [vmem:[#allocation19 + $0xd0] sm:$0xff]
        %v4031 = vld [vmem:[#allocation19 + $0xd8] sm:$0xff]
        %v4032 = vld [vmem:[#allocation19 + $0xe0] sm:$0xff]
        %v4033 = vld [vmem:[#allocation19 + $0xe8] sm:$0xff]
        %v4034 = vld [vmem:[#allocation19 + $0xf0] sm:$0xff]
        %v4035 = vld [vmem:[#allocation19 + $0xf8] sm:$0xff]
        %v4036 = vld [vmem:[#allocation17 + $0x8] sm:$0xff]
        %v4037 = vld [vmem:[#allocation17 + $0x18] sm:$0xff]
        %v4038 = vld [vmem:[#allocation17 + $0x28] sm:$0xff]
        %v4039 = vld [vmem:[#allocation17 + $0x38] sm:$0xff]
        %v4040 = vld [vmem:[#allocation17 + $0x48] sm:$0xff]
        %v4041 = vld [vmem:[#allocation17 + $0x58] sm:$0xff]
        %v4042 = vld [vmem:[#allocation17 + $0x68] sm:$0xff]
        %v4043 = vld [vmem:[#allocation17 + $0x78] sm:$0xff]
        %v4044 = vld [vmem:[#allocation17 + $0x88] sm:$0xff]
        %v4045 = vld [vmem:[#allocation17 + $0x98] sm:$0xff]
        %v4046 = vld [vmem:[#allocation17 + $0xa8] sm:$0xff]
        %v4047 = vld [vmem:[#allocation17 + $0xb8] sm:$0xff]
        %v4048 = vld [vmem:[#allocation17 + $0xc8] sm:$0xff]
        %v4049 = vld [vmem:[#allocation17 + $0xd8] sm:$0xff]
        %v4050 = vld [vmem:[#allocation17 + $0xe8] sm:$0xff]
        %v4051 = vld [vmem:[#allocation17 + $0xf8] sm:$0xff]
        %v4052 = vld [vmem:[#allocation17 + $0x108] sm:$0xff]
        %v4053 = vld [vmem:[#allocation17 + $0x118] sm:$0xff]
        %v4054 = vld [vmem:[#allocation17 + $0x128] sm:$0xff]
        %v4055 = vld [vmem:[#allocation17 + $0x138] sm:$0xff]
        %v4056 = vld [vmem:[#allocation17 + $0x148] sm:$0xff]
        %v4057 = vld [vmem:[#allocation17 + $0x158] sm:$0xff]
        %v4058 = vld [vmem:[#allocation17 + $0x168] sm:$0xff]
        %v4059 = vld [vmem:[#allocation17 + $0x178] sm:$0xff]
        %v4060 = vld [vmem:[#allocation17 + $0x188] sm:$0xff]
        %v4061 = vld [vmem:[#allocation17 + $0x198] sm:$0xff]
        %v4062 = vld [vmem:[#allocation17 + $0x1a8] sm:$0xff]
        %v4063 = vld [vmem:[#allocation17 + $0x1b8] sm:$0xff]
        %v4064 = vld [vmem:[#allocation17 + $0x1c8] sm:$0xff]
        %v4065 = vld [vmem:[#allocation17 + $0x1d8] sm:$0xff]
        %v4066 = vld [vmem:[#allocation17 + $0x1e8] sm:$0xff]
        %v4067 = vld [vmem:[#allocation17 + $0x1f8] sm:$0xff]
        %v4068 = vld [vmem:[%s55 + $0x2] sm:$0x3]
        %v4070 = vlaneseq
        %v4071 = vshrl.u32 %v4070, 7
        %v4072 = vsub.s32 0, %v4071
        %v4073 = vrot.slane %v4068, %v4072
        %v4074 = vlaneseq
        %v4075 = vshrl.u32 %v4074, 7
        %v4076 = vsub.s32 1, %v4075
        %v4077 = vrot.slane %v4068, %v4076
        %v4112 = vunpack.c.l.b16 %v4036
        %v4113 = vunpack.c.h.b16 %v4036
        %v4114 = vunpack.c.l.b16 %v4037
        %v4115 = vunpack.c.h.b16 %v4037
        %v4116 = vunpack.c.l.b16 %v4038
        %v4117 = vunpack.c.h.b16 %v4038
        %v4118 = vunpack.c.l.b16 %v4039
        %v4119 = vunpack.c.h.b16 %v4039
        %v4120 = vunpack.c.l.b16 %v4040
        %v4121 = vunpack.c.h.b16 %v4040
        %v4122 = vunpack.c.l.b16 %v4041
        %v4123 = vunpack.c.h.b16 %v4041
        %v4124 = vunpack.c.l.b16 %v4042
        %v4125 = vunpack.c.h.b16 %v4042
        %v4126 = vunpack.c.l.b16 %v4043
        %v4127 = vunpack.c.h.b16 %v4043
        %v4128 = vunpack.c.l.b16 %v4044
        %v4129 = vunpack.c.h.b16 %v4044
        %v4130 = vunpack.c.l.b16 %v4045
        %v4131 = vunpack.c.h.b16 %v4045
        %v4132 = vunpack.c.l.b16 %v4046
        %v4133 = vunpack.c.h.b16 %v4046
        %v4134 = vunpack.c.l.b16 %v4047
        %v4135 = vunpack.c.h.b16 %v4047
        %v4136 = vunpack.c.l.b16 %v4048
        %v4137 = vunpack.c.h.b16 %v4048
        %v4138 = vunpack.c.l.b16 %v4049
        %v4139 = vunpack.c.h.b16 %v4049
        %v4140 = vunpack.c.l.b16 %v4050
        %v4141 = vunpack.c.h.b16 %v4050
        %v4142 = vunpack.c.l.b16 %v4051
        %v4143 = vunpack.c.h.b16 %v4051
        %v4144 = vunpack.c.l.b16 %v4052
        %v4145 = vunpack.c.h.b16 %v4052
        %v4146 = vunpack.c.l.b16 %v4053
        %v4147 = vunpack.c.h.b16 %v4053
        %v4148 = vunpack.c.l.b16 %v4054
        %v4149 = vunpack.c.h.b16 %v4054
        %v4150 = vunpack.c.l.b16 %v4055
        %v4151 = vunpack.c.h.b16 %v4055
        %v4152 = vunpack.c.l.b16 %v4056
        %v4153 = vunpack.c.h.b16 %v4056
        %v4154 = vunpack.c.l.b16 %v4057
        %v4155 = vunpack.c.h.b16 %v4057
        %v4156 = vunpack.c.l.b16 %v4058
        %v4157 = vunpack.c.h.b16 %v4058
        %v4158 = vunpack.c.l.b16 %v4059
        %v4159 = vunpack.c.h.b16 %v4059
        %v4160 = vunpack.c.l.b16 %v4060
        %v4161 = vunpack.c.h.b16 %v4060
        %v4162 = vunpack.c.l.b16 %v4061
        %v4163 = vunpack.c.h.b16 %v4061
        %v4164 = vunpack.c.l.b16 %v4062
        %v4165 = vunpack.c.h.b16 %v4062
        %v4166 = vunpack.c.l.b16 %v4063
        %v4167 = vunpack.c.h.b16 %v4063
        %v4168 = vunpack.c.l.b16 %v4064
        %v4169 = vunpack.c.h.b16 %v4064
        %v4170 = vunpack.c.l.b16 %v4065
        %v4171 = vunpack.c.h.b16 %v4065
        %v4172 = vunpack.c.l.b16 %v4066
        %v4173 = vunpack.c.h.b16 %v4066
        %v4174 = vunpack.c.l.b16 %v4067
        %v4175 = vunpack.c.h.b16 %v4067
        %v4176 = vpack.c.b16 %v4114, %v4112
        %v4177 = vpack.c.b16 %v4115, %v4113
        %v4178 = vpack.c.b16 %v4118, %v4116
        %v4179 = vpack.c.b16 %v4119, %v4117
        %v4180 = vpack.c.b16 %v4122, %v4120
        %v4181 = vpack.c.b16 %v4123, %v4121
        %v4182 = vpack.c.b16 %v4126, %v4124
        %v4183 = vpack.c.b16 %v4127, %v4125
        %v4184 = vpack.c.b16 %v4130, %v4128
        %v4185 = vpack.c.b16 %v4131, %v4129
        %v4186 = vpack.c.b16 %v4134, %v4132
        %v4187 = vpack.c.b16 %v4135, %v4133
        %v4188 = vpack.c.b16 %v4138, %v4136
        %v4189 = vpack.c.b16 %v4139, %v4137
        %v4190 = vpack.c.b16 %v4142, %v4140
        %v4191 = vpack.c.b16 %v4143, %v4141
        %v4192 = vpack.c.b16 %v4146, %v4144
        %v4193 = vpack.c.b16 %v4147, %v4145
        %v4194 = vpack.c.b16 %v4150, %v4148
        %v4195 = vpack.c.b16 %v4151, %v4149
        %v4196 = vpack.c.b16 %v4154, %v4152
        %v4197 = vpack.c.b16 %v4155, %v4153
        %v4198 = vpack.c.b16 %v4158, %v4156
        %v4199 = vpack.c.b16 %v4159, %v4157
        %v4200 = vpack.c.b16 %v4162, %v4160
        %v4201 = vpack.c.b16 %v4163, %v4161
        %v4202 = vpack.c.b16 %v4166, %v4164
        %v4203 = vpack.c.b16 %v4167, %v4165
        %v4204 = vpack.c.b16 %v4170, %v4168
        %v4205 = vpack.c.b16 %v4171, %v4169
        %v4206 = vpack.c.b16 %v4174, %v4172
        %v4207 = vpack.c.b16 %v4175, %v4173
        %4240 = vmatprep.subr.bf16.mxu0 %v4177
        %4241 = vmatpush1.bf16.msra.mxu0 %v4176
        %4242 = vmatprep.subr.bf16.mxu0 %v4179
        %4243 = vmatpush1.bf16.msra.mxu0 %v4178
        %4244 = vmatprep.subr.bf16.mxu0 %v4181
        %4245 = vmatpush1.bf16.msra.mxu0 %v4180
        %4246 = vmatprep.subr.bf16.mxu0 %v4183
        %4247 = vmatpush1.bf16.msra.mxu0 %v4182
        %4248 = vmatprep.subr.bf16.mxu0 %v4185
        %4249 = vmatpush1.bf16.msra.mxu0 %v4184
        %4250 = vmatprep.subr.bf16.mxu0 %v4187
        %4251 = vmatpush1.bf16.msra.mxu0 %v4186
        %4252 = vmatprep.subr.bf16.mxu0 %v4189
        %4253 = vmatpush1.bf16.msra.mxu0 %v4188
        %4254 = vmatprep.subr.bf16.mxu0 %v4191
        %4255 = vmatpush1.bf16.msra.mxu0 %v4190
        %4256 = vmatprep.subr.bf16.mxu0 %v4193
        %4257 = vmatpush1.bf16.msra.mxu0 %v4192
        %4258 = vmatprep.subr.bf16.mxu0 %v4195
        %4259 = vmatpush1.bf16.msra.mxu0 %v4194
        %4260 = vmatprep.subr.bf16.mxu0 %v4197
        %4261 = vmatpush1.bf16.msra.mxu0 %v4196
        %4262 = vmatprep.subr.bf16.mxu0 %v4199
        %4263 = vmatpush1.bf16.msra.mxu0 %v4198
        %4264 = vmatprep.subr.bf16.mxu0 %v4201
        %4265 = vmatpush1.bf16.msra.mxu0 %v4200
        %4266 = vmatprep.subr.bf16.mxu0 %v4203
        %4267 = vmatpush1.bf16.msra.mxu0 %v4202
        %4268 = vmatprep.subr.bf16.mxu0 %v4205
        %4269 = vmatpush1.bf16.msra.mxu0 %v4204
        %4270 = vmatprep.subr.bf16.mxu0 %v4207
        %4271 = vmatpush1.bf16.msra.mxu0 %v4206
        %4272 = vmatprep.mubr.bf16.mxu0 %v3754
        %4273 = vmatmul.mubr.bf16.gmra.mrb[0].mxu0 %v3753
        %v4274 = vpop.f32.mrb[0].mxu0
        %v4275 = vadd.f32 %v4073, %v4274
        %v4276 = vpop.f32.mrb[0].mxu0
        %v4277 = vadd.f32 %v4077, %v4276
        %v4278 = vpop.f32.mrb[0].mxu0
        %v4279 = vpop.f32.mrb[0].mxu0
        %4280 = vdwg.mxu0
        %v4281 = vmax.f32 %v4275, 0.0
        %v4282 = vmax.f32 %v4277, 0.0
        %v4283 = vpack.c.bf16 %v4281, %v4281
        %v4284 = vpack.c.bf16 %v4282, %v4282
        %v4285 = vld [vmem:[#allocation19 + $0x100] sm:$0xff]
        %v4286 = vld [vmem:[#allocation19 + $0x108] sm:$0xff]
        %v4287 = vld [vmem:[#allocation19 + $0x110] sm:$0xff]
        %v4288 = vld [vmem:[#allocation19 + $0x118] sm:$0xff]
        %v4289 = vld [vmem:[#allocation19 + $0x120] sm:$0xff]
        %v4290 = vld [vmem:[#allocation19 + $0x128] sm:$0xff]
        %v4291 = vld [vmem:[#allocation19 + $0x130] sm:$0xff]
        %v4292 = vld [vmem:[#allocation19 + $0x138] sm:$0xff]
        %v4293 = vld [vmem:[#allocation19 + $0x140] sm:$0xff]
        %v4294 = vld [vmem:[#allocation19 + $0x148] sm:$0xff]
        %v4295 = vld [vmem:[#allocation19 + $0x150] sm:$0xff]
        %v4296 = vld [vmem:[#allocation19 + $0x158] sm:$0xff]
        %v4297 = vld [vmem:[#allocation19 + $0x160] sm:$0xff]
        %v4298 = vld [vmem:[#allocation19 + $0x168] sm:$0xff]
        %v4299 = vld [vmem:[#allocation19 + $0x170] sm:$0xff]
        %v4300 = vld [vmem:[#allocation19 + $0x178] sm:$0xff]
        %v4301 = vld [vmem:[#allocation19 + $0x180] sm:$0xff]
        %v4302 = vld [vmem:[#allocation19 + $0x188] sm:$0xff]
        %v4303 = vld [vmem:[#allocation19 + $0x190] sm:$0xff]
        %v4304 = vld [vmem:[#allocation19 + $0x198] sm:$0xff]
        %v4305 = vld [vmem:[#allocation19 + $0x1a0] sm:$0xff]
        %v4306 = vld [vmem:[#allocation19 + $0x1a8] sm:$0xff]
        %v4307 = vld [vmem:[#allocation19 + $0x1b0] sm:$0xff]
        %v4308 = vld [vmem:[#allocation19 + $0x1b8] sm:$0xff]
        %v4309 = vld [vmem:[#allocation19 + $0x1c0] sm:$0xff]
        %v4310 = vld [vmem:[#allocation19 + $0x1c8] sm:$0xff]
        %v4311 = vld [vmem:[#allocation19 + $0x1d0] sm:$0xff]
        %v4312 = vld [vmem:[#allocation19 + $0x1d8] sm:$0xff]
        %v4313 = vld [vmem:[#allocation19 + $0x1e0] sm:$0xff]
        %v4314 = vld [vmem:[#allocation19 + $0x1e8] sm:$0xff]
        %v4315 = vld [vmem:[#allocation19 + $0x1f0] sm:$0xff]
        %v4316 = vld [vmem:[#allocation19 + $0x1f8] sm:$0xff]
        %v4349 = vunpack.c.l.b16 %v4285
        %v4350 = vunpack.c.h.b16 %v4285
        %v4351 = vunpack.c.l.b16 %v4286
        %v4352 = vunpack.c.h.b16 %v4286
        %v4353 = vunpack.c.l.b16 %v4287
        %v4354 = vunpack.c.h.b16 %v4287
        %v4355 = vunpack.c.l.b16 %v4288
        %v4356 = vunpack.c.h.b16 %v4288
        %v4357 = vunpack.c.l.b16 %v4289
        %v4358 = vunpack.c.h.b16 %v4289
        %v4359 = vunpack.c.l.b16 %v4290
        %v4360 = vunpack.c.h.b16 %v4290
        %v4361 = vunpack.c.l.b16 %v4291
        %v4362 = vunpack.c.h.b16 %v4291
        %v4363 = vunpack.c.l.b16 %v4292
        %v4364 = vunpack.c.h.b16 %v4292
        %v4365 = vunpack.c.l.b16 %v4293
        %v4366 = vunpack.c.h.b16 %v4293
        %v4367 = vunpack.c.l.b16 %v4294
        %v4368 = vunpack.c.h.b16 %v4294
        %v4369 = vunpack.c.l.b16 %v4295
        %v4370 = vunpack.c.h.b16 %v4295
        %v4371 = vunpack.c.l.b16 %v4296
        %v4372 = vunpack.c.h.b16 %v4296
        %v4373 = vunpack.c.l.b16 %v4297
        %v4374 = vunpack.c.h.b16 %v4297
        %v4375 = vunpack.c.l.b16 %v4298
        %v4376 = vunpack.c.h.b16 %v4298
        %v4377 = vunpack.c.l.b16 %v4299
        %v4378 = vunpack.c.h.b16 %v4299
        %v4379 = vunpack.c.l.b16 %v4300
        %v4380 = vunpack.c.h.b16 %v4300
        %v4381 = vunpack.c.l.b16 %v4301
        %v4382 = vunpack.c.h.b16 %v4301
        %v4383 = vunpack.c.l.b16 %v4302
        %v4384 = vunpack.c.h.b16 %v4302
        %v4385 = vunpack.c.l.b16 %v4303
        %v4386 = vunpack.c.h.b16 %v4303
        %v4387 = vunpack.c.l.b16 %v4304
        %v4388 = vunpack.c.h.b16 %v4304
        %v4389 = vunpack.c.l.b16 %v4305
        %v4390 = vunpack.c.h.b16 %v4305
        %v4391 = vunpack.c.l.b16 %v4306
        %v4392 = vunpack.c.h.b16 %v4306
        %v4393 = vunpack.c.l.b16 %v4307
        %v4394 = vunpack.c.h.b16 %v4307
        %v4395 = vunpack.c.l.b16 %v4308
        %v4396 = vunpack.c.h.b16 %v4308
        %v4397 = vunpack.c.l.b16 %v4309
        %v4398 = vunpack.c.h.b16 %v4309
        %v4399 = vunpack.c.l.b16 %v4310
        %v4400 = vunpack.c.h.b16 %v4310
        %v4401 = vunpack.c.l.b16 %v4311
        %v4402 = vunpack.c.h.b16 %v4311
        %v4403 = vunpack.c.l.b16 %v4312
        %v4404 = vunpack.c.h.b16 %v4312
        %v4405 = vunpack.c.l.b16 %v4313
        %v4406 = vunpack.c.h.b16 %v4313
        %v4407 = vunpack.c.l.b16 %v4314
        %v4408 = vunpack.c.h.b16 %v4314
        %v4409 = vunpack.c.l.b16 %v4315
        %v4410 = vunpack.c.h.b16 %v4315
        %v4411 = vunpack.c.l.b16 %v4316
        %v4412 = vunpack.c.h.b16 %v4316
        %v4413 = vpack.c.b16 %v4351, %v4349
        %v4414 = vpack.c.b16 %v4352, %v4350
        %v4415 = vpack.c.b16 %v4355, %v4353
        %v4416 = vpack.c.b16 %v4356, %v4354
        %v4417 = vpack.c.b16 %v4359, %v4357
        %v4418 = vpack.c.b16 %v4360, %v4358
        %v4419 = vpack.c.b16 %v4363, %v4361
        %v4420 = vpack.c.b16 %v4364, %v4362
        %v4421 = vpack.c.b16 %v4367, %v4365
        %v4422 = vpack.c.b16 %v4368, %v4366
        %v4423 = vpack.c.b16 %v4371, %v4369
        %v4424 = vpack.c.b16 %v4372, %v4370
        %v4425 = vpack.c.b16 %v4375, %v4373
        %v4426 = vpack.c.b16 %v4376, %v4374
        %v4427 = vpack.c.b16 %v4379, %v4377
        %v4428 = vpack.c.b16 %v4380, %v4378
        %v4429 = vpack.c.b16 %v4383, %v4381
        %v4430 = vpack.c.b16 %v4384, %v4382
        %v4431 = vpack.c.b16 %v4387, %v4385
        %v4432 = vpack.c.b16 %v4388, %v4386
        %v4433 = vpack.c.b16 %v4391, %v4389
        %v4434 = vpack.c.b16 %v4392, %v4390
        %v4435 = vpack.c.b16 %v4395, %v4393
        %v4436 = vpack.c.b16 %v4396, %v4394
        %v4437 = vpack.c.b16 %v4399, %v4397
        %v4438 = vpack.c.b16 %v4400, %v4398
        %v4439 = vpack.c.b16 %v4403, %v4401
        %v4440 = vpack.c.b16 %v4404, %v4402
        %v4441 = vpack.c.b16 %v4407, %v4405
        %v4442 = vpack.c.b16 %v4408, %v4406
        %v4443 = vpack.c.b16 %v4411, %v4409
        %v4444 = vpack.c.b16 %v4412, %v4410
        %4477 = vmatprep.subr.bf16.mxu0 %v4414
        %4478 = vmatpush1.bf16.msra.mxu0 %v4413
        %4479 = vmatprep.subr.bf16.mxu0 %v4416
        %4480 = vmatpush1.bf16.msra.mxu0 %v4415
        %4481 = vmatprep.subr.bf16.mxu0 %v4418
        %4482 = vmatpush1.bf16.msra.mxu0 %v4417
        %4483 = vmatprep.subr.bf16.mxu0 %v4420
        %4484 = vmatpush1.bf16.msra.mxu0 %v4419
        %4485 = vmatprep.subr.bf16.mxu0 %v4422
        %4486 = vmatpush1.bf16.msra.mxu0 %v4421
        %4487 = vmatprep.subr.bf16.mxu0 %v4424
        %4488 = vmatpush1.bf16.msra.mxu0 %v4423
        %4489 = vmatprep.subr.bf16.mxu0 %v4426
        %4490 = vmatpush1.bf16.msra.mxu0 %v4425
        %4491 = vmatprep.subr.bf16.mxu0 %v4428
        %4492 = vmatpush1.bf16.msra.mxu0 %v4427
        %4493 = vmatprep.subr.bf16.mxu0 %v4430
        %4494 = vmatpush1.bf16.msra.mxu0 %v4429
        %4495 = vmatprep.subr.bf16.mxu0 %v4432
        %4496 = vmatpush1.bf16.msra.mxu0 %v4431
        %4497 = vmatprep.subr.bf16.mxu0 %v4434
        %4498 = vmatpush1.bf16.msra.mxu0 %v4433
        %4499 = vmatprep.subr.bf16.mxu0 %v4436
        %4500 = vmatpush1.bf16.msra.mxu0 %v4435
        %4501 = vmatprep.subr.bf16.mxu0 %v4438
        %4502 = vmatpush1.bf16.msra.mxu0 %v4437
        %4503 = vmatprep.subr.bf16.mxu0 %v4440
        %4504 = vmatpush1.bf16.msra.mxu0 %v4439
        %4505 = vmatprep.subr.bf16.mxu0 %v4442
        %4506 = vmatpush1.bf16.msra.mxu0 %v4441
        %4507 = vmatprep.subr.bf16.mxu0 %v4444
        %4508 = vmatpush1.bf16.msra.mxu0 %v4443
        %4509 = vmatprep.mubr.bf16.mxu0 %v4284
        %4510 = vmatmul.mubr.bf16.gmra.mrb[0].mxu0 %v4283
        %v4511 = vpop.f32.mrb[0].mxu0
        %v4512 = vadd.f32 0.0, %v4511
        %v4513 = vpop.f32.mrb[0].mxu0
        %v4514 = vadd.f32 0.0, %v4513
        %v4515 = vpop.f32.mrb[0].mxu0
        %v4516 = vpop.f32.mrb[0].mxu0
        %4517 = vdwg.mxu0
        %v4550 = vunpack.c.l.b16 %v4004
        %v4551 = vunpack.c.h.b16 %v4004
        %v4552 = vunpack.c.l.b16 %v4005
        %v4553 = vunpack.c.h.b16 %v4005
        %v4554 = vunpack.c.l.b16 %v4006
        %v4555 = vunpack.c.h.b16 %v4006
        %v4556 = vunpack.c.l.b16 %v4007
        %v4557 = vunpack.c.h.b16 %v4007
        %v4558 = vunpack.c.l.b16 %v4008
        %v4559 = vunpack.c.h.b16 %v4008
        %v4560 = vunpack.c.l.b16 %v4009
        %v4561 = vunpack.c.h.b16 %v4009
        %v4562 = vunpack.c.l.b16 %v4010
        %v4563 = vunpack.c.h.b16 %v4010
        %v4564 = vunpack.c.l.b16 %v4011
        %v4565 = vunpack.c.h.b16 %v4011
        %v4566 = vunpack.c.l.b16 %v4012
        %v4567 = vunpack.c.h.b16 %v4012
        %v4568 = vunpack.c.l.b16 %v4013
        %v4569 = vunpack.c.h.b16 %v4013
        %v4570 = vunpack.c.l.b16 %v4014
        %v4571 = vunpack.c.h.b16 %v4014
        %v4572 = vunpack.c.l.b16 %v4015
        %v4573 = vunpack.c.h.b16 %v4015
        %v4574 = vunpack.c.l.b16 %v4016
        %v4575 = vunpack.c.h.b16 %v4016
        %v4576 = vunpack.c.l.b16 %v4017
        %v4577 = vunpack.c.h.b16 %v4017
        %v4578 = vunpack.c.l.b16 %v4018
        %v4579 = vunpack.c.h.b16 %v4018
        %v4580 = vunpack.c.l.b16 %v4019
        %v4581 = vunpack.c.h.b16 %v4019
        %v4582 = vunpack.c.l.b16 %v4020
        %v4583 = vunpack.c.h.b16 %v4020
        %v4584 = vunpack.c.l.b16 %v4021
        %v4585 = vunpack.c.h.b16 %v4021
        %v4586 = vunpack.c.l.b16 %v4022
        %v4587 = vunpack.c.h.b16 %v4022
        %v4588 = vunpack.c.l.b16 %v4023
        %v4589 = vunpack.c.h.b16 %v4023
        %v4590 = vunpack.c.l.b16 %v4024
        %v4591 = vunpack.c.h.b16 %v4024
        %v4592 = vunpack.c.l.b16 %v4025
        %v4593 = vunpack.c.h.b16 %v4025
        %v4594 = vunpack.c.l.b16 %v4026
        %v4595 = vunpack.c.h.b16 %v4026
        %v4596 = vunpack.c.l.b16 %v4027
        %v4597 = vunpack.c.h.b16 %v4027
        %v4598 = vunpack.c.l.b16 %v4028
        %v4599 = vunpack.c.h.b16 %v4028
        %v4600 = vunpack.c.l.b16 %v4029
        %v4601 = vunpack.c.h.b16 %v4029
        %v4602 = vunpack.c.l.b16 %v4030
        %v4603 = vunpack.c.h.b16 %v4030
        %v4604 = vunpack.c.l.b16 %v4031
        %v4605 = vunpack.c.h.b16 %v4031
        %v4606 = vunpack.c.l.b16 %v4032
        %v4607 = vunpack.c.h.b16 %v4032
        %v4608 = vunpack.c.l.b16 %v4033
        %v4609 = vunpack.c.h.b16 %v4033
        %v4610 = vunpack.c.l.b16 %v4034
        %v4611 = vunpack.c.h.b16 %v4034
        %v4612 = vunpack.c.l.b16 %v4035
        %v4613 = vunpack.c.h.b16 %v4035
        %v4614 = vpack.c.b16 %v4552, %v4550
        %v4615 = vpack.c.b16 %v4553, %v4551
        %v4616 = vpack.c.b16 %v4556, %v4554
        %v4617 = vpack.c.b16 %v4557, %v4555
        %v4618 = vpack.c.b16 %v4560, %v4558
        %v4619 = vpack.c.b16 %v4561, %v4559
        %v4620 = vpack.c.b16 %v4564, %v4562
        %v4621 = vpack.c.b16 %v4565, %v4563
        %v4622 = vpack.c.b16 %v4568, %v4566
        %v4623 = vpack.c.b16 %v4569, %v4567
        %v4624 = vpack.c.b16 %v4572, %v4570
        %v4625 = vpack.c.b16 %v4573, %v4571
        %v4626 = vpack.c.b16 %v4576, %v4574
        %v4627 = vpack.c.b16 %v4577, %v4575
        %v4628 = vpack.c.b16 %v4580, %v4578
        %v4629 = vpack.c.b16 %v4581, %v4579
        %v4630 = vpack.c.b16 %v4584, %v4582
        %v4631 = vpack.c.b16 %v4585, %v4583
        %v4632 = vpack.c.b16 %v4588, %v4586
        %v4633 = vpack.c.b16 %v4589, %v4587
        %v4634 = vpack.c.b16 %v4592, %v4590
        %v4635 = vpack.c.b16 %v4593, %v4591
        %v4636 = vpack.c.b16 %v4596, %v4594
        %v4637 = vpack.c.b16 %v4597, %v4595
        %v4638 = vpack.c.b16 %v4600, %v4598
        %v4639 = vpack.c.b16 %v4601, %v4599
        %v4640 = vpack.c.b16 %v4604, %v4602
        %v4641 = vpack.c.b16 %v4605, %v4603
        %v4642 = vpack.c.b16 %v4608, %v4606
        %v4643 = vpack.c.b16 %v4609, %v4607
        %v4644 = vpack.c.b16 %v4612, %v4610
        %v4645 = vpack.c.b16 %v4613, %v4611
        %4678 = vmatprep.subr.bf16.mxu0 %v4615
        %4679 = vmatpush1.bf16.msra.mxu0 %v4614
        %4680 = vmatprep.subr.bf16.mxu0 %v4617
        %4681 = vmatpush1.bf16.msra.mxu0 %v4616
        %4682 = vmatprep.subr.bf16.mxu0 %v4619
        %4683 = vmatpush1.bf16.msra.mxu0 %v4618
        %4684 = vmatprep.subr.bf16.mxu0 %v4621
        %4685 = vmatpush1.bf16.msra.mxu0 %v4620
        %4686 = vmatprep.subr.bf16.mxu0 %v4623
        %4687 = vmatpush1.bf16.msra.mxu0 %v4622
        %4688 = vmatprep.subr.bf16.mxu0 %v4625
        %4689 = vmatpush1.bf16.msra.mxu0 %v4624
        %4690 = vmatprep.subr.bf16.mxu0 %v4627
        %4691 = vmatpush1.bf16.msra.mxu0 %v4626
        %4692 = vmatprep.subr.bf16.mxu0 %v4629
        %4693 = vmatpush1.bf16.msra.mxu0 %v4628
        %4694 = vmatprep.subr.bf16.mxu0 %v4631
        %4695 = vmatpush1.bf16.msra.mxu0 %v4630
        %4696 = vmatprep.subr.bf16.mxu0 %v4633
        %4697 = vmatpush1.bf16.msra.mxu0 %v4632
        %4698 = vmatprep.subr.bf16.mxu0 %v4635
        %4699 = vmatpush1.bf16.msra.mxu0 %v4634
        %4700 = vmatprep.subr.bf16.mxu0 %v4637
        %4701 = vmatpush1.bf16.msra.mxu0 %v4636
        %4702 = vmatprep.subr.bf16.mxu0 %v4639
        %4703 = vmatpush1.bf16.msra.mxu0 %v4638
        %4704 = vmatprep.subr.bf16.mxu0 %v4641
        %4705 = vmatpush1.bf16.msra.mxu0 %v4640
        %4706 = vmatprep.subr.bf16.mxu0 %v4643
        %4707 = vmatpush1.bf16.msra.mxu0 %v4642
        %4708 = vmatprep.subr.bf16.mxu0 %v4645
        %4709 = vmatpush1.bf16.msra.mxu0 %v4644
        %4710 = vmatprep.mubr.bf16.mxu0 %v4003
        %4711 = vmatmul.mubr.bf16.gmra.mrb[0].mxu0 %v4002
        %v4712 = vpop.f32.mrb[0].mxu0
        %v4713 = vadd.f32 %v4512, %v4712
        %v4714 = vpop.f32.mrb[0].mxu0
        %v4715 = vadd.f32 %v4514, %v4714
        %v4716 = vpop.f32.mrb[0].mxu0
        %v4717 = vpop.f32.mrb[0].mxu0
        %4718 = vdwg.mxu0
        %v4719 = vld [vmem:[%s59] sm:$0x3]
        %v4721 = vlaneseq
        %v4722 = vshrl.u32 %v4721, 7
        %v4723 = vsub.s32 0, %v4722
        %v4724 = vrot.slane %v4719, %v4723
        %v4725 = vlaneseq
        %v4726 = vshrl.u32 %v4725, 7
        %v4727 = vsub.s32 1, %v4726
        %v4728 = vrot.slane %v4719, %v4727
        %v4731 = vadd.f32 %v4713, %v4724
        %v4732 = vadd.f32 %v4715, %v4728
        %v4733 = vadd.f32 %v3707, %v4731
        %v4734 = vadd.f32 %v3708, %v4732
        %4735 = vst [vmem:[%s1117] sm:$0xff] %v4733
        %4736 = vst [vmem:[%s1117 + $0x8] sm:$0xff] %v4734
        %s4737 = sand.u32 %s736, 1
        %s4738 = scalar_lea.sflag [#allocation4], %s4737
        %s4739 = sand.u32 %s736, 1
        %s4740 = smul.addr %s4739, 16
        %s4741 = scalar_lea.vmem [#allocation20], %s4740
        // Predicated region
        $region185: #{tpu_custom_call.1} parent=139 // pred_check
          %p4742 = pneg %p746
        $region186: #{tpu_custom_call.1} parent=139 // pred_check_branch
          %4744 = sbr.rel (%p4742) target = $region188
        $region187: #{tpu_custom_call.1} parent=139 // pred_region
          %s4746 = ssub.s32 256, 256
          %4747 = vsyncadd %s4738, %s4746
          %s4748 = smul.addr %s83, 2
          %s4749 = smul.addr %s4748, 128
          %s4750 = scalar_lea.hbm %s61, %s4749
          %s4752 = sshll.u32 %s4741, 4
          %s4753 = int_to_ptr.vmem [resolvable:$true] %s4752
          %4755 = dma.vmem_to_hbm [thread:$0]  %s4753, 256, %s4750, %s4738
        $region188: #{tpu_custom_call.1} parent=139 // pred_fallthru
          _
      $region140: #{tpu_custom_call.1} parent=5 // pred_fallthru
        _
      %p4756 = scmp.le.s32.totalorder 2, %s78
      // Predicated region
      $region189: #{tpu_custom_call.1} parent=5 // pred_check
        %p4757 = pneg %p4756
      $region190: #{tpu_custom_call.1} parent=5 // pred_check_branch
        %4759 = sbr.rel (%p4757) target = $region192
      $region191: #{tpu_custom_call.1} parent=5 // pred_region
        %s4760 = ssub.s32 %s78, 2
        // Predicated region
        $region193: #{tpu_custom_call.1} parent=191 // pred_check
          %p4761 = pneg %p752
        $region194: #{tpu_custom_call.1} parent=191 // pred_check_branch
          %4763 = sbr.rel (%p4761) target = $region196
        $region195: #{tpu_custom_call.1} parent=191 // pred_region
          %s4764 = sand.u32 %s737, 1
          %s4765 = scalar_lea.sflag [#allocation4], %s4764
          %s4766 = sand.u32 %s737, 1
          %s4767 = smul.addr %s4766, 16
          %s4768 = scalar_lea.vmem [#allocation20], %s4767
          %4769 = dma.done %s4765, 256
        $region196: #{tpu_custom_call.1} parent=191 // pred_fallthru
          _
      $region192: #{tpu_custom_call.1} parent=5 // pred_fallthru
        _
    $region6: #{tpu_custom_call.1} parent=1 // loop_footer
      %s82 = sadd.s32 1, %s78
    $region7: #{tpu_custom_call.1} parent=1 // loop_footer_branch
      %77 = sbr.rel target = $region3
    $region8: #{tpu_custom_call.1} parent=1 // loop_exit
      _
    %4770 = vsyncpa [#allocation3], 1
    %s4771 = scalar_lea.sflag [#allocation3], 1
    %4772 = vsyncpa %s4771, 1
    %4773 = vsyncpa [#allocation6], 1
    %4774 = vsyncpa [#allocation9], 1
    %4775 = vsyncpa [#allocation12], 1
    %4776 = vsyncpa [#allocation15], 1
    %4777 = vsyncpa [#allocation18], 1
    %4778 = vsyncpa [#allocation4], 1
    %s4779 = scalar_lea.sflag [#allocation4], 1
    %4780 = vsyncpa %s4779, 1

// kernel: tpu_custom_call.1
$region0: #{tpu_custom_call.1}
  #allocation0 [shape = 'u32[]', space=smem, size = 0x4, offset = 0x4, fixed_abs, tag = 'smem constant byte address 0x4 - core index']
  #allocation1 [shape = 'u32[144,128]{1,0:T(1,128)}', space=vmem, size = 0x12000, scoped, tag = 'internal scratch']
  %s0 = inlined_call_operand.smem [shape: u32[31], index: -1, kind: input, shape index: {}]
  %s1 = sld [smem:[%s0]]
  %s2 = scalar_lea.smem %s0, 1
  %s3 = sld [smem:[%s2]]
  %s4 = scalar_lea.smem %s0, 2
  %s5 = sld [smem:[%s4]]
  %s6 = scalar_lea.smem %s0, 3
  %s7 = sld [smem:[%s6]]
  %s8 = scalar_lea.smem %s0, 4
  %s9 = sld [smem:[%s8]]
  %s10 = scalar_lea.smem %s0, 5
  %s11 = sld [smem:[%s10]]
  %s12 = scalar_lea.smem %s0, 6
  %s13 = sld [smem:[%s12]]
  %s14 = scalar_lea.smem %s0, 7
  %s15 = sld [smem:[%s14]]
  %s16 = scalar_lea.smem %s0, 8
  %s17 = sld [smem:[%s16]]
  %s18 = scalar_lea.smem %s0, 9
  %s19 = sld [smem:[%s18]]
  %s20 = scalar_lea.smem %s0, 10
  %s21 = sld [smem:[%s20]]
  %s22 = scalar_lea.smem %s0, 11
  %s23 = sld [smem:[%s22]]
  %s24 = scalar_lea.smem %s0, 12
  %s25 = sld [smem:[%s24]]
  %s26 = scalar_lea.smem %s0, 13
  %s27 = sld [smem:[%s26]]
  %s28 = scalar_lea.smem %s0, 14
  %s29 = sld [smem:[%s28]]
  %s30 = scalar_lea.smem %s0, 15
  %s31 = sld [smem:[%s30]]
  %s32 = scalar_lea.smem %s0, 16
  %s33 = sld [smem:[%s32]]
  %s34 = scalar_lea.smem %s0, 17
  %s35 = sld [smem:[%s34]]
  %s36 = scalar_lea.smem %s0, 18
  %s37 = sld [smem:[%s36]]
  %s38 = scalar_lea.smem %s0, 19
  %s39 = sld [smem:[%s38]]
  %s40 = scalar_lea.smem %s0, 20
  %s41 = sld [smem:[%s40]]
  %s42 = scalar_lea.smem %s0, 21
  %s43 = sld [smem:[%s42]]
  %s44 = scalar_lea.smem %s0, 22
  %s45 = sld [smem:[%s44]]
  %s46 = scalar_lea.smem %s0, 23
  %s47 = sld [smem:[%s46]]
  %s48 = scalar_lea.smem %s0, 24
  %s49 = sld [smem:[%s48]]
  %s50 = scalar_lea.smem %s0, 25
  %s51 = sld [smem:[%s50]]
  %s52 = scalar_lea.smem %s0, 26
  %s53 = sld [smem:[%s52]]
  %s54 = scalar_lea.smem %s0, 27
  %s55 = sld [smem:[%s54]]
  %s56 = scalar_lea.smem %s0, 28
  %s57 = sld [smem:[%s56]]
  %s58 = scalar_lea.smem %s0, 29
  %s59 = sld [smem:[%s58]]
  %s60 = scalar_lea.smem %s0, 30
  %s61 = sld [smem:[%s60]]
  %s62 = sld [smem:[#allocation0]]
  $region197: #{tpu_custom_call.1} parent=0
    _
  %s64 = ssub.s32 1, %s62
  %s65 = scalar_select 0, %s64, %s62
  $region1: #{tpu_custom_call.1} parent=0
    #allocation2 [shape = 'u8[16384]{0}', space=vmem, size = 0x4000, scoped, tag = 'input window, operand 0']
    #allocation3 [shape = 's32[2]{0}', space=sflag, size = 0x8, scoped, tag = 'scoped memory for tpu_custom_call.1']
    #allocation4 [shape = 's32[2]{0}', space=sflag, size = 0x8, scoped, tag = 'scoped memory for tpu_custom_call.1']
    #allocation5 [shape = 'u8[131072]{0}', space=vmem, size = 0x20000, scoped, tag = 'input window, operand 6, single buffered']
    #allocation6 [shape = 's32[1]{0}', space=sflag, size = 0x4, scoped, tag = 'scoped memory for tpu_custom_call.1']
    #allocation7 [shape = 'u8[131072]{0}', space=vmem, size = 0x20000, scoped, tag = 'input window, operand 8, single buffered']
    #allocation8 [shape = 'u8[131072]{0}', space=vmem, size = 0x20000, scoped, tag = 'input window, operand 10, single buffered']
    #allocation9 [shape = 's32[1]{0}', space=sflag, size = 0x4, scoped, tag = 'scoped memory for tpu_custom_call.1']
    #allocation10 [shape = 'u8[131072]{0}', space=vmem, size = 0x20000, scoped, tag = 'input window, operand 12, single buffered']
    #allocation11 [shape = 'u8[131072]{0}', space=vmem, size = 0x20000, scoped, tag = 'input window, operand 16, single buffered']
    #allocation12 [shape = 's32[1]{0}', space=sflag, size = 0x4, scoped, tag = 'scoped memory for tpu_custom_call.1']
    #allocation13 [shape = 'u8[131072]{0}', space=vmem, size = 0x20000, scoped, tag = 'input window, operand 18, single buffered']
    #allocation14 [shape = 'u8[131072]{0}', space=vmem, size = 0x20000, scoped, tag = 'input window, operand 20, single buffered']
    #allocation15 [shape = 's32[1]{0}', space=sflag, size = 0x4, scoped, tag = 'scoped memory for tpu_custom_call.1']
    #allocation16 [shape = 'u8[131072]{0}', space=vmem, size = 0x20000, scoped, tag = 'input window, operand 22, single buffered']
    #allocation17 [shape = 'u8[262144]{0}', space=vmem, size = 0x40000, scoped, tag = 'input window, operand 26, single buffered']
    #allocation18 [shape = 's32[1]{0}', space=sflag, size = 0x4, scoped, tag = 'scoped memory for tpu_custom_call.1']
    #allocation19 [shape = 'u8[262144]{0}', space=vmem, size = 0x40000, scoped, tag = 'input window, operand 28, single buffered']
    #allocation20 [shape = 'u8[16384]{0}', space=vmem, size = 0x4000, scoped, tag = 'output window, operand 0']
    %66 = vsyncpa [#allocation3], 0
    %s67 = scalar_lea.sflag [#allocation3], 1
    %68 = vsyncpa %s67, 0
    %69 = vsyncpa [#allocation6], 0
    %70 = vsyncpa [#allocation9], 0
    %71 = vsyncpa [#allocation12], 0
    %72 = vsyncpa [#allocation15], 0
    %73 = vsyncpa [#allocation18], 0
    %74 = vsyncpa [#allocation4], 0
    %s75 = scalar_lea.sflag [#allocation4], 1
    %76 = vsyncpa %s75, 0
    loop: start=0, step=1, limit=4
    $region2: #{tpu_custom_call.1} parent=1 // loop_pre_header
      _
    $region3: #{tpu_custom_call.1} parent=1 // loop_header
      %s78 = sphi 0, %s82
      %p79 = scmp.ge.s32.totalorder %s78, 4
      %s88 = sphi 0, %s90
      %s91 = sphi 0, %s88
      %s92 = sphi 0, %s91
      %s108 = sphi 0, %s92
      %s114 = sphi 0, %s116
      %s117 = sphi 0, %s114
      %s118 = sphi 0, %s117
      %s134 = sphi 0, %s118
      %s138 = sphi 0, %s138
      %s140 = sphi 0, %s138
      %s141 = sphi 0, %s140
      %s155 = sphi 0, %s141
      %s161 = sphi 0, %s163
      %s164 = sphi 0, %s161
      %s165 = sphi 0, %s164
      %s181 = sphi 0, %s165
      %s185 = sphi 0, %s185
      %s187 = sphi 0, %s185
      %s188 = sphi 0, %s187
      %s202 = sphi 0, %s188
      %s206 = sphi 0, %s206
      %s208 = sphi 0, %s206
      %s209 = sphi 0, %s208
      %s223 = sphi 0, %s209
      %s227 = sphi 0, %s227
      %s229 = sphi 0, %s227
      %s230 = sphi 0, %s229
      %s244 = sphi 0, %s230
      %s248 = sphi 0, %s248
      %s250 = sphi 0, %s248
      %s251 = sphi 0, %s250
      %s265 = sphi 0, %s251
      %s269 = sphi 0, %s269
      %s271 = sphi 0, %s269
      %s272 = sphi 0, %s271
      %s286 = sphi 0, %s272
      %s290 = sphi 0, %s290
      %s292 = sphi 0, %s290
      %s293 = sphi 0, %s292
      %s307 = sphi 0, %s293
      %s311 = sphi 0, %s311
      %s313 = sphi 0, %s311
      %s314 = sphi 0, %s313
      %s328 = sphi 0, %s314
      %s332 = sphi 0, %s332
      %s334 = sphi 0, %s332
      %s335 = sphi 0, %s334
      %s349 = sphi 0, %s335
      %s353 = sphi 0, %s353
      %s355 = sphi 0, %s353
      %s356 = sphi 0, %s355
      %s370 = sphi 0, %s356
      %s374 = sphi 0, %s374
      %s376 = sphi 0, %s374
      %s377 = sphi 0, %s376
      %s391 = sphi 0, %s377
      %s395 = sphi 0, %s395
      %s397 = sphi 0, %s395
      %s398 = sphi 0, %s397
      %s412 = sphi 0, %s398
      %s416 = sphi 0, %s416
      %s418 = sphi 0, %s416
      %s419 = sphi 0, %s418
      %s433 = sphi 0, %s419
      %s437 = sphi 0, %s437
      %s439 = sphi 0, %s437
      %s440 = sphi 0, %s439
      %s454 = sphi 0, %s440
      %s458 = sphi 0, %s458
      %s460 = sphi 0, %s458
      %s461 = sphi 0, %s460
      %s475 = sphi 0, %s461
      %s479 = sphi 0, %s479
      %s481 = sphi 0, %s479
      %s482 = sphi 0, %s481
      %s496 = sphi 0, %s482
      %s500 = sphi 0, %s500
      %s502 = sphi 0, %s500
      %s503 = sphi 0, %s502
      %s517 = sphi 0, %s503
      %s521 = sphi 0, %s521
      %s523 = sphi 0, %s521
      %s524 = sphi 0, %s523
      %s538 = sphi 0, %s524
      %s542 = sphi 0, %s542
      %s544 = sphi 0, %s542
      %s545 = sphi 0, %s544
      %s559 = sphi 0, %s545
      %s563 = sphi 0, %s563
      %s565 = sphi 0, %s563
      %s566 = sphi 0, %s565
      %s580 = sphi 0, %s566
      %s584 = sphi 0, %s584
      %s586 = sphi 0, %s584
      %s587 = sphi 0, %s586
      %s601 = sphi 0, %s587
      %s605 = sphi 0, %s605
      %s607 = sphi 0, %s605
      %s608 = sphi 0, %s607
      %s622 = sphi 0, %s608
      %s626 = sphi 0, %s626
      %s628 = sphi 0, %s626
      %s629 = sphi 0, %s628
      %s643 = sphi 0, %s629
      %s647 = sphi 0, %s647
      %s649 = sphi 0, %s647
      %s650 = sphi 0, %s649
      %s664 = sphi 0, %s650
      %s668 = sphi 0, %s668
      %s670 = sphi 0, %s668
      %s671 = sphi 0, %s670
      %s685 = sphi 0, %s671
      %s689 = sphi 0, %s689
      %s691 = sphi 0, %s689
      %s692 = sphi 0, %s691
      %s706 = sphi 0, %s692
      %s710 = sphi 0, %s710
      %s712 = sphi 0, %s710
      %s713 = sphi 0, %s712
      %s727 = sphi 0, %s713
      %s733 = sphi 0, %s735
      %s736 = sphi 0, %s733
      %s737 = sphi 0, %s736
      %s753 = sphi 0, %s737
    $region4: #{tpu_custom_call.1} parent=1 // loop_header_branch
      %81 = sbr.rel (%p79) target = $region8
    $region5: #{tpu_custom_call.1} parent=1 // loop_body
      %s83 = ssub.s32 %s78, 1
      %s84 = ssub.s32 %s78, 2
      %s85 = sadd.s32 %s78, 1
      %s86 = ssub.s32 %s78, %s85
      %p87 = scmp.eq.s32.totalorder %s86, 0
      %s89 = sadd.s32 %s88, 1
      %s90 = scalar_select %p87, %s88, %s89
      %p93 = pneg %p87
      %p94 = scmp.eq.s32.totalorder %s78, 1
      %p95 = por %p93, %p94
      %p96 = scmp.ne.s32.totalorder %s88, %s91
      %p97 = scmp.eq.s32.totalorder %s78, 0
      %p98 = por %p96, %p97
      %p99 = scmp.ne.s32.totalorder %s88, %s91
      %p100 = scmp.eq.s32.totalorder %s83, 1
      %p101 = por %p99, %p100
      %p102 = scmp.ne.s32.totalorder %s91, %s92
      %p103 = scmp.eq.s32.totalorder %s83, 0
      %p104 = por %p102, %p103
      %p105 = scmp.ne.s32.totalorder %s91, %s92
      %p106 = scmp.eq.s32.totalorder %s84, 1
      %p107 = por %p105, %p106
      %p109 = scmp.ne.s32.totalorder %s92, %s108
      %p110 = scmp.eq.s32.totalorder %s84, 0
      %p111 = por %p109, %p110
      %s112 = ssub.s32 %s78, %s85
      %p113 = scmp.eq.s32.totalorder %s112, 0
      %s115 = sadd.s32 %s114, 1
      %s116 = scalar_select %p113, %s114, %s115
      %p119 = pneg %p113
      %p120 = scmp.eq.s32.totalorder %s78, 1
      %p121 = por %p119, %p120
      %p122 = scmp.ne.s32.totalorder %s114, %s117
      %p123 = scmp.eq.s32.totalorder %s78, 0
      %p124 = por %p122, %p123
      %p125 = scmp.ne.s32.totalorder %s114, %s117
      %p126 = scmp.eq.s32.totalorder %s83, 1
      %p127 = por %p125, %p126
      %p128 = scmp.ne.s32.totalorder %s117, %s118
      %p129 = scmp.eq.s32.totalorder %s83, 0
      %p130 = por %p128, %p129
      %p131 = scmp.ne.s32.totalorder %s117, %s118
      %p132 = scmp.eq.s32.totalorder %s84, 1
      %p133 = por %p131, %p132
      %p135 = scmp.ne.s32.totalorder %s118, %s134
      %p136 = scmp.eq.s32.totalorder %s84, 0
      %p137 = por %p135, %p136
      %s139 = sadd.s32 %s138, 1
      %p142 = scmp.eq.s32.totalorder %s78, 1
      %p143 = scmp.ne.s32.totalorder %s138, %s140
      %p144 = scmp.eq.s32.totalorder %s78, 0
      %p145 = por %p143, %p144
      %p146 = scmp.ne.s32.totalorder %s138, %s140
      %p147 = scmp.eq.s32.totalorder %s83, 1
      %p148 = por %p146, %p147
      %p149 = scmp.ne.s32.totalorder %s140, %s141
      %p150 = scmp.eq.s32.totalorder %s83, 0
      %p151 = por %p149, %p150
      %p152 = scmp.ne.s32.totalorder %s140, %s141
      %p153 = scmp.eq.s32.totalorder %s84, 1
      %p154 = por %p152, %p153
      %p156 = scmp.ne.s32.totalorder %s141, %s155
      %p157 = scmp.eq.s32.totalorder %s84, 0
      %p158 = por %p156, %p157
      %s159 = ssub.s32 %s78, %s85
      %p160 = scmp.eq.s32.totalorder %s159, 0
      %s162 = sadd.s32 %s161, 1
      %s163 = scalar_select %p160, %s161, %s162
      %p166 = pneg %p160
      %p167 = scmp.eq.s32.totalorder %s78, 1
      %p168 = por %p166, %p167
      %p169 = scmp.ne.s32.totalorder %s161, %s164
      %p170 = scmp.eq.s32.totalorder %s78, 0
      %p171 = por %p169, %p170
      %p172 = scmp.ne.s32.totalorder %s161, %s164
      %p173 = scmp.eq.s32.totalorder %s83, 1
      %p174 = por %p172, %p173
      %p175 = scmp.ne.s32.totalorder %s164, %s165
      %p176 = scmp.eq.s32.totalorder %s83, 0
      %p177 = por %p175, %p176
      %p178 = scmp.ne.s32.totalorder %s164, %s165
      %p179 = scmp.eq.s32.totalorder %s84, 1
      %p180 = por %p178, %p179
      %p182 = scmp.ne.s32.totalorder %s165, %s181
      %p183 = scmp.eq.s32.totalorder %s84, 0
      %p184 = por %p182, %p183
      %s186 = sadd.s32 %s185, 1
      %p189 = scmp.eq.s32.totalorder %s78, 1
      %p190 = scmp.ne.s32.totalorder %s185, %s187
      %p191 = scmp.eq.s32.totalorder %s78, 0
      %p192 = por %p190, %p191
      %p193 = scmp.ne.s32.totalorder %s185, %s187
      %p194 = scmp.eq.s32.totalorder %s83, 1
      %p195 = por %p193, %p194
      %p196 = scmp.ne.s32.totalorder %s187, %s188
      %p197 = scmp.eq.s32.totalorder %s83, 0
      %p198 = por %p196, %p197
      %p199 = scmp.ne.s32.totalorder %s187, %s188
      %p200 = scmp.eq.s32.totalorder %s84, 1
      %p201 = por %p199, %p200
      %p203 = scmp.ne.s32.totalorder %s188, %s202
      %p204 = scmp.eq.s32.totalorder %s84, 0
      %p205 = por %p203, %p204
      %s207 = sadd.s32 %s206, 1
      %p210 = scmp.eq.s32.totalorder %s78, 1
      %p211 = scmp.ne.s32.totalorder %s206, %s208
      %p212 = scmp.eq.s32.totalorder %s78, 0
      %p213 = por %p211, %p212
      %p214 = scmp.ne.s32.totalorder %s206, %s208
      %p215 = scmp.eq.s32.totalorder %s83, 1
      %p216 = por %p214, %p215
      %p217 = scmp.ne.s32.totalorder %s208, %s209
      %p218 = scmp.eq.s32.totalorder %s83, 0
      %p219 = por %p217, %p218
      %p220 = scmp.ne.s32.totalorder %s208, %s209
      %p221 = scmp.eq.s32.totalorder %s84, 1
      %p222 = por %p220, %p221
      %p224 = scmp.ne.s32.totalorder %s209, %s223
      %p225 = scmp.eq.s32.totalorder %s84, 0
      %p226 = por %p224, %p225
      %s228 = sadd.s32 %s227, 1
      %p231 = scmp.eq.s32.totalorder %s78, 1
      %p232 = scmp.ne.s32.totalorder %s227, %s229
      %p233 = scmp.eq.s32.totalorder %s78, 0
      %p234 = por %p232, %p233
      %p235 = scmp.ne.s32.totalorder %s227, %s229
      %p236 = scmp.eq.s32.totalorder %s83, 1
      %p237 = por %p235, %p236
      %p238 = scmp.ne.s32.totalorder %s229, %s230
      %p239 = scmp.eq.s32.totalorder %s83, 0
      %p240 = por %p238, %p239
      %p241 = scmp.ne.s32.totalorder %s229, %s230
      %p242 = scmp.eq.s32.totalorder %s84, 1
      %p243 = por %p241, %p242
      %p245 = scmp.ne.s32.totalorder %s230, %s244
      %p246 = scmp.eq.s32.totalorder %s84, 0
      %p247 = por %p245, %p246
      %s249 = sadd.s32 %s248, 1
      %p252 = scmp.eq.s32.totalorder %s78, 1
      %p253 = scmp.ne.s32.totalorder %s248, %s250
      %p254 = scmp.eq.s32.totalorder %s78, 0
      %p255 = por %p253, %p254
      %p256 = scmp.ne.s32.totalorder %s248, %s250
      %p257 = scmp.eq.s32.totalorder %s83, 1
      %p258 = por %p256, %p257
      %p259 = scmp.ne.s32.totalorder %s250, %s251
      %p260 = scmp.eq.s32.totalorder %s83, 0
      %p261 = por %p259, %p260
      %p262 = scmp.ne.s32.totalorder %s250, %s251
      %p263 = scmp.eq.s32.totalorder %s84, 1
      %p264 = por %p262, %p263
      %p266 = scmp.ne.s32.totalorder %s251, %s265
      %p267 = scmp.eq.s32.totalorder %s84, 0
      %p268 = por %p266, %p267
      %s270 = sadd.s32 %s269, 1
      %p273 = scmp.eq.s32.totalorder %s78, 1
      %p274 = scmp.ne.s32.totalorder %s269, %s271
      %p275 = scmp.eq.s32.totalorder %s78, 0
      %p276 = por %p274, %p275
      %p277 = scmp.ne.s32.totalorder %s269, %s271
      %p278 = scmp.eq.s32.totalorder %s83, 1
      %p279 = por %p277, %p278
      %p280 = scmp.ne.s32.totalorder %s271, %s272
      %p281 = scmp.eq.s32.totalorder %s83, 0
      %p282 = por %p280, %p281
      %p283 = scmp.ne.s32.totalorder %s271, %s272
      %p284 = scmp.eq.s32.totalorder %s84, 1
      %p285 = por %p283, %p284
      %p287 = scmp.ne.s32.totalorder %s272, %s286
      %p288 = scmp.eq.s32.totalorder %s84, 0
      %p289 = por %p287, %p288
      %s291 = sadd.s32 %s290, 1
      %p294 = scmp.eq.s32.totalorder %s78, 1
      %p295 = scmp.ne.s32.totalorder %s290, %s292
      %p296 = scmp.eq.s32.totalorder %s78, 0
      %p297 = por %p295, %p296
      %p298 = scmp.ne.s32.totalorder %s290, %s292
      %p299 = scmp.eq.s32.totalorder %s83, 1
      %p300 = por %p298, %p299
      %p301 = scmp.ne.s32.totalorder %s292, %s293
      %p302 = scmp.eq.s32.totalorder %s83, 0
      %p303 = por %p301, %p302
      %p304 = scmp.ne.s32.totalorder %s292, %s293
      %p305 = scmp.eq.s32.totalorder %s84, 1
      %p306 = por %p304, %p305
      %p308 = scmp.ne.s32.totalorder %s293, %s307
      %p309 = scmp.eq.s32.totalorder %s84, 0
      %p310 = por %p308, %p309
      %s312 = sadd.s32 %s311, 1
      %p315 = scmp.eq.s32.totalorder %s78, 1
      %p316 = scmp.ne.s32.totalorder %s311, %s313
      %p317 = scmp.eq.s32.totalorder %s78, 0
      %p318 = por %p316, %p317
      %p319 = scmp.ne.s32.totalorder %s311, %s313
      %p320 = scmp.eq.s32.totalorder %s83, 1
      %p321 = por %p319, %p320
      %p322 = scmp.ne.s32.totalorder %s313, %s314
      %p323 = scmp.eq.s32.totalorder %s83, 0
      %p324 = por %p322, %p323
      %p325 = scmp.ne.s32.totalorder %s313, %s314
      %p326 = scmp.eq.s32.totalorder %s84, 1
      %p327 = por %p325, %p326
      %p329 = scmp.ne.s32.totalorder %s314, %s328
      %p330 = scmp.eq.s32.totalorder %s84, 0
      %p331 = por %p329, %p330
      %s333 = sadd.s32 %s332, 1
      %p336 = scmp.eq.s32.totalorder %s78, 1
      %p337 = scmp.ne.s32.totalorder %s332, %s334
      %p338 = scmp.eq.s32.totalorder %s78, 0
      %p339 = por %p337, %p338
      %p340 = scmp.ne.s32.totalorder %s332, %s334
      %p341 = scmp.eq.s32.totalorder %s83, 1
      %p342 = por %p340, %p341
      %p343 = scmp.ne.s32.totalorder %s334, %s335
      %p344 = scmp.eq.s32.totalorder %s83, 0
      %p345 = por %p343, %p344
      %p346 = scmp.ne.s32.totalorder %s334, %s335
      %p347 = scmp.eq.s32.totalorder %s84, 1
      %p348 = por %p346, %p347
      %p350 = scmp.ne.s32.totalorder %s335, %s349
      %p351 = scmp.eq.s32.totalorder %s84, 0
      %p352 = por %p350, %p351
      %s354 = sadd.s32 %s353, 1
      %p357 = scmp.eq.s32.totalorder %s78, 1
      %p358 = scmp.ne.s32.totalorder %s353, %s355
      %p359 = scmp.eq.s32.totalorder %s78, 0
      %p360 = por %p358, %p359
      %p361 = scmp.ne.s32.totalorder %s353, %s355
      %p362 = scmp.eq.s32.totalorder %s83, 1
      %p363 = por %p361, %p362
      %p364 = scmp.ne.s32.totalorder %s355, %s356
      %p365 = scmp.eq.s32.totalorder %s83, 0
      %p366 = por %p364, %p365
      %p367 = scmp.ne.s32.totalorder %s355, %s356
      %p368 = scmp.eq.s32.totalorder %s84, 1
      %p369 = por %p367, %p368
      %p371 = scmp.ne.s32.totalorder %s356, %s370
      %p372 = scmp.eq.s32.totalorder %s84, 0
      %p373 = por %p371, %p372
      %s375 = sadd.s32 %s374, 1
      %p378 = scmp.eq.s32.totalorder %s78, 1
      %p379 = scmp.ne.s32.totalorder %s374, %s376
      %p380 = scmp.eq.s32.totalorder %s78, 0
      %p381 = por %p379, %p380
      %p382 = scmp.ne.s32.totalorder %s374, %s376
      %p383 = scmp.eq.s32.totalorder %s83, 1
      %p384 = por %p382, %p383
      %p385 = scmp.ne.s32.totalorder %s376, %s377
      %p386 = scmp.eq.s32.totalorder %s83, 0
      %p387 = por %p385, %p386
      %p388 = scmp.ne.s32.totalorder %s376, %s377
      %p389 = scmp.eq.s32.totalorder %s84, 1
      %p390 = por %p388, %p389
      %p392 = scmp.ne.s32.totalorder %s377, %s391
      %p393 = scmp.eq.s32.totalorder %s84, 0
      %p394 = por %p392, %p393
      %s396 = sadd.s32 %s395, 1
      %p399 = scmp.eq.s32.totalorder %s78, 1
      %p400 = scmp.ne.s32.totalorder %s395, %s397
      %p401 = scmp.eq.s32.totalorder %s78, 0
      %p402 = por %p400, %p401
      %p403 = scmp.ne.s32.totalorder %s395, %s397
      %p404 = scmp.eq.s32.totalorder %s83, 1
      %p405 = por %p403, %p404
      %p406 = scmp.ne.s32.totalorder %s397, %s398
      %p407 = scmp.eq.s32.totalorder %s83, 0
      %p408 = por %p406, %p407
      %p409 = scmp.ne.s32.totalorder %s397, %s398
      %p410 = scmp.eq.s32.totalorder %s84, 1
      %p411 = por %p409, %p410
      %p413 = scmp.ne.s32.totalorder %s398, %s412
      %p414 = scmp.eq.s32.totalorder %s84, 0
      %p415 = por %p413, %p414
      %s417 = sadd.s32 %s416, 1
      %p420 = scmp.eq.s32.totalorder %s78, 1
      %p421 = scmp.ne.s32.totalorder %s416, %s418
      %p422 = scmp.eq.s32.totalorder %s78, 0
      %p423 = por %p421, %p422
      %p424 = scmp.ne.s32.totalorder %s416, %s418
      %p425 = scmp.eq.s32.totalorder %s83, 1
      %p426 = por %p424, %p425
      %p427 = scmp.ne.s32.totalorder %s418, %s419
      %p428 = scmp.eq.s32.totalorder %s83, 0
      %p429 = por %p427, %p428
      %p430 = scmp.ne.s32.totalorder %s418, %s419
      %p431 = scmp.eq.s32.totalorder %s84, 1
      %p432 = por %p430, %p431
      %p434 = scmp.ne.s32.totalorder %s419, %s433
      %p435 = scmp.eq.s32.totalorder %s84, 0
      %p436 = por %p434, %p435
      %s438 = sadd.s32 %s437, 1
      %p441 = scmp.eq.s32.totalorder %s78, 1
      %p442 = scmp.ne.s32.totalorder %s437, %s439
      %p443 = scmp.eq.s32.totalorder %s78, 0
      %p444 = por %p442, %p443
      %p445 = scmp.ne.s32.totalorder %s437, %s439
      %p446 = scmp.eq.s32.totalorder %s83, 1
      %p447 = por %p445, %p446
      %p448 = scmp.ne.s32.totalorder %s439, %s440
      %p449 = scmp.eq.s32.totalorder %s83, 0
      %p450 = por %p448, %p449
      %p451 = scmp.ne.s32.totalorder %s439, %s440
      %p452 = scmp.eq.s32.totalorder %s84, 1
      %p453 = por %p451, %p452
      %p455 = scmp.ne.s32.totalorder %s440, %s454
      %p456 = scmp.eq.s32.totalorder %s84, 0
      %p457 = por %p455, %p456
      %s459 = sadd.s32 %s458, 1
      %p462 = scmp.eq.s32.totalorder %s78, 1
      %p463 = scmp.ne.s32.totalorder %s458, %s460
      %p464 = scmp.eq.s32.totalorder %s78, 0
      %p465 = por %p463, %p464
      %p466 = scmp.ne.s32.totalorder %s458, %s460
      %p467 = scmp.eq.s32.totalorder %s83, 1
      %p468 = por %p466, %p467
      %p469 = scmp.ne.s32.totalorder %s460, %s461
      %p470 = scmp.eq.s32.totalorder %s83, 0
      %p471 = por %p469, %p470
      %p472 = scmp.ne.s32.totalorder %s460, %s461
      %p473 = scmp.eq.s32.totalorder %s84, 1
      %p474 = por %p472, %p473
      %p476 = scmp.ne.s32.totalorder %s461, %s475
      %p477 = scmp.eq.s32.totalorder %s84, 0
      %p478 = por %p476, %p477
      %s480 = sadd.s32 %s479, 1
      %p483 = scmp.eq.s32.totalorder %s78, 1
      %p484 = scmp.ne.s32.totalorder %s479, %s481
      %p485 = scmp.eq.s32.totalorder %s78, 0
      %p486 = por %p484, %p485
      %p487 = scmp.ne.s32.totalorder %s479, %s481
      %p488 = scmp.eq.s32.totalorder %s83, 1
      %p489 = por %p487, %p488
      %p490 = scmp.ne.s32.totalorder %s481, %s482
      %p491 = scmp.eq.s32.totalorder %s83, 0
      %p492 = por %p490, %p491
      %p493 = scmp.ne.s32.totalorder %s481, %s482
      %p494 = scmp.eq.s32.totalorder %s84, 1
      %p495 = por %p493, %p494
      %p497 = scmp.ne.s32.totalorder %s482, %s496
      %p498 = scmp.eq.s32.totalorder %s84, 0
      %p499 = por %p497, %p498
      %s501 = sadd.s32 %s500, 1
      %p504 = scmp.eq.s32.totalorder %s78, 1
      %p505 = scmp.ne.s32.totalorder %s500, %s502
      %p506 = scmp.eq.s32.totalorder %s78, 0
      %p507 = por %p505, %p506
      %p508 = scmp.ne.s32.totalorder %s500, %s502
      %p509 = scmp.eq.s32.totalorder %s83, 1
      %p510 = por %p508, %p509
      %p511 = scmp.ne.s32.totalorder %s502, %s503
      %p512 = scmp.eq.s32.totalorder %s83, 0
      %p513 = por %p511, %p512
      %p514 = scmp.ne.s32.totalorder %s502, %s503
      %p515 = scmp.eq.s32.totalorder %s84, 1
      %p516 = por %p514, %p515
      %p518 = scmp.ne.s32.totalorder %s503, %s517
      %p519 = scmp.eq.s32.totalorder %s84, 0
      %p520 = por %p518, %p519
      %s522 = sadd.s32 %s521, 1
      %p525 = scmp.eq.s32.totalorder %s78, 1
      %p526 = scmp.ne.s32.totalorder %s521, %s523
      %p527 = scmp.eq.s32.totalorder %s78, 0
      %p528 = por %p526, %p527
      %p529 = scmp.ne.s32.totalorder %s521, %s523
      %p530 = scmp.eq.s32.totalorder %s83, 1
      %p531 = por %p529, %p530
      %p532 = scmp.ne.s32.totalorder %s523, %s524
      %p533 = scmp.eq.s32.totalorder %s83, 0
      %p534 = por %p532, %p533
      %p535 = scmp.ne.s32.totalorder %s523, %s524
      %p536 = scmp.eq.s32.totalorder %s84, 1
      %p537 = por %p535, %p536
      %p539 = scmp.ne.s32.totalorder %s524, %s538
      %p540 = scmp.eq.s32.totalorder %s84, 0
      %p541 = por %p539, %p540
      %s543 = sadd.s32 %s542, 1
      %p546 = scmp.eq.s32.totalorder %s78, 1
      %p547 = scmp.ne.s32.totalorder %s542, %s544
      %p548 = scmp.eq.s32.totalorder %s78, 0
      %p549 = por %p547, %p548
      %p550 = scmp.ne.s32.totalorder %s542, %s544
      %p551 = scmp.eq.s32.totalorder %s83, 1
      %p552 = por %p550, %p551
      %p553 = scmp.ne.s32.totalorder %s544, %s545
      %p554 = scmp.eq.s32.totalorder %s83, 0
      %p555 = por %p553, %p554
      %p556 = scmp.ne.s32.totalorder %s544, %s545
      %p557 = scmp.eq.s32.totalorder %s84, 1
      %p558 = por %p556, %p557
      %p560 = scmp.ne.s32.totalorder %s545, %s559
      %p561 = scmp.eq.s32.totalorder %s84, 0
      %p562 = por %p560, %p561
      %s564 = sadd.s32 %s563, 1
      %p567 = scmp.eq.s32.totalorder %s78, 1
      %p568 = scmp.ne.s32.totalorder %s563, %s565
      %p569 = scmp.eq.s32.totalorder %s78, 0
      %p570 = por %p568, %p569
      %p571 = scmp.ne.s32.totalorder %s563, %s565
      %p572 = scmp.eq.s32.totalorder %s83, 1
      %p573 = por %p571, %p572
      %p574 = scmp.ne.s32.totalorder %s565, %s566
      %p575 = scmp.eq.s32.totalorder %s83, 0
      %p576 = por %p574, %p575
      %p577 = scmp.ne.s32.totalorder %s565, %s566
      %p578 = scmp.eq.s32.totalorder %s84, 1
      %p579 = por %p577, %p578
      %p581 = scmp.ne.s32.totalorder %s566, %s580
      %p582 = scmp.eq.s32.totalorder %s84, 0
      %p583 = por %p581, %p582
      %s585 = sadd.s32 %s584, 1
      %p588 = scmp.eq.s32.totalorder %s78, 1
      %p589 = scmp.ne.s32.totalorder %s584, %s586
      %p590 = scmp.eq.s32.totalorder %s78, 0
      %p591 = por %p589, %p590
      %p592 = scmp.ne.s32.totalorder %s584, %s586
      %p593 = scmp.eq.s32.totalorder %s83, 1
      %p594 = por %p592, %p593
      %p595 = scmp.ne.s32.totalorder %s586, %s587
      %p596 = scmp.eq.s32.totalorder %s83, 0
      %p597 = por %p595, %p596
      %p598 = scmp.ne.s32.totalorder %s586, %s587
      %p599 = scmp.eq.s32.totalorder %s84, 1
      %p600 = por %p598, %p599
      %p602 = scmp.ne.s32.totalorder %s587, %s601
      %p603 = scmp.eq.s32.totalorder %s84, 0
      %p604 = por %p602, %p603
      %s606 = sadd.s32 %s605, 1
      %p609 = scmp.eq.s32.totalorder %s78, 1
      %p610 = scmp.ne.s32.totalorder %s605, %s607
      %p611 = scmp.eq.s32.totalorder %s78, 0
      %p612 = por %p610, %p611
      %p613 = scmp.ne.s32.totalorder %s605, %s607
      %p614 = scmp.eq.s32.totalorder %s83, 1
      %p615 = por %p613, %p614
      %p616 = scmp.ne.s32.totalorder %s607, %s608
      %p617 = scmp.eq.s32.totalorder %s83, 0
      %p618 = por %p616, %p617
      %p619 = scmp.ne.s32.totalorder %s607, %s608
      %p620 = scmp.eq.s32.totalorder %s84, 1
      %p621 = por %p619, %p620
      %p623 = scmp.ne.s32.totalorder %s608, %s622
      %p624 = scmp.eq.s32.totalorder %s84, 0
      %p625 = por %p623, %p624
      %s627 = sadd.s32 %s626, 1
      %p630 = scmp.eq.s32.totalorder %s78, 1
      %p631 = scmp.ne.s32.totalorder %s626, %s628
      %p632 = scmp.eq.s32.totalorder %s78, 0
      %p633 = por %p631, %p632
      %p634 = scmp.ne.s32.totalorder %s626, %s628
      %p635 = scmp.eq.s32.totalorder %s83, 1
      %p636 = por %p634, %p635
      %p637 = scmp.ne.s32.totalorder %s628, %s629
      %p638 = scmp.eq.s32.totalorder %s83, 0
      %p639 = por %p637, %p638
      %p640 = scmp.ne.s32.totalorder %s628, %s629
      %p641 = scmp.eq.s32.totalorder %s84, 1
      %p642 = por %p640, %p641
      %p644 = scmp.ne.s32.totalorder %s629, %s643
      %p645 = scmp.eq.s32.totalorder %s84, 0
      %p646 = por %p644, %p645
      %s648 = sadd.s32 %s647, 1
      %p651 = scmp.eq.s32.totalorder %s78, 1
      %p652 = scmp.ne.s32.totalorder %s647, %s649
      %p653 = scmp.eq.s32.totalorder %s78, 0
      %p654 = por %p652, %p653
      %p655 = scmp.ne.s32.totalorder %s647, %s649
      %p656 = scmp.eq.s32.totalorder %s83, 1
      %p657 = por %p655, %p656
      %p658 = scmp.ne.s32.totalorder %s649, %s650
      %p659 = scmp.eq.s32.totalorder %s83, 0
      %p660 = por %p658, %p659
      %p661 = scmp.ne.s32.totalorder %s649, %s650
      %p662 = scmp.eq.s32.totalorder %s84, 1
      %p663 = por %p661, %p662
      %p665 = scmp.ne.s32.totalorder %s650, %s664
      %p666 = scmp.eq.s32.totalorder %s84, 0
      %p667 = por %p665, %p666
      %s669 = sadd.s32 %s668, 1
      %p672 = scmp.eq.s32.totalorder %s78, 1
      %p673 = scmp.ne.s32.totalorder %s668, %s670
      %p674 = scmp.eq.s32.totalorder %s78, 0
      %p675 = por %p673, %p674
      %p676 = scmp.ne.s32.totalorder %s668, %s670
      %p677 = scmp.eq.s32.totalorder %s83, 1
      %p678 = por %p676, %p677
      %p679 = scmp.ne.s32.totalorder %s670, %s671
      %p680 = scmp.eq.s32.totalorder %s83, 0
      %p681 = por %p679, %p680
      %p682 = scmp.ne.s32.totalorder %s670, %s671
      %p683 = scmp.eq.s32.totalorder %s84, 1
      %p684 = por %p682, %p683
      %p686 = scmp.ne.s32.totalorder %s671, %s685
      %p687 = scmp.eq.s32.totalorder %s84, 0
      %p688 = por %p686, %p687
      %s690 = sadd.s32 %s689, 1
      %p693 = scmp.eq.s32.totalorder %s78, 1
      %p694 = scmp.ne.s32.totalorder %s689, %s691
      %p695 = scmp.eq.s32.totalorder %s78, 0
      %p696 = por %p694, %p695
      %p697 = scmp.ne.s32.totalorder %s689, %s691
      %p698 = scmp.eq.s32.totalorder %s83, 1
      %p699 = por %p697, %p698
      %p700 = scmp.ne.s32.totalorder %s691, %s692
      %p701 = scmp.eq.s32.totalorder %s83, 0
      %p702 = por %p700, %p701
      %p703 = scmp.ne.s32.totalorder %s691, %s692
      %p704 = scmp.eq.s32.totalorder %s84, 1
      %p705 = por %p703, %p704
      %p707 = scmp.ne.s32.totalorder %s692, %s706
      %p708 = scmp.eq.s32.totalorder %s84, 0
      %p709 = por %p707, %p708
      %s711 = sadd.s32 %s710, 1
      %p714 = scmp.eq.s32.totalorder %s78, 1
      %p715 = scmp.ne.s32.totalorder %s710, %s712
      %p716 = scmp.eq.s32.totalorder %s78, 0
      %p717 = por %p715, %p716
      %p718 = scmp.ne.s32.totalorder %s710, %s712
      %p719 = scmp.eq.s32.totalorder %s83, 1
      %p720 = por %p718, %p719
      %p721 = scmp.ne.s32.totalorder %s712, %s713
      %p722 = scmp.eq.s32.totalorder %s83, 0
      %p723 = por %p721, %p722
      %p724 = scmp.ne.s32.totalorder %s712, %s713
      %p725 = scmp.eq.s32.totalorder %s84, 1
      %p726 = por %p724, %p725
      %p728 = scmp.ne.s32.totalorder %s713, %s727
      %p729 = scmp.eq.s32.totalorder %s84, 0
      %p730 = por %p728, %p729
      %s731 = ssub.s32 %s78, %s85
      %p732 = scmp.eq.s32.totalorder %s731, 0
      %s734 = sadd.s32 %s733, 1
      %s735 = scalar_select %p732, %s733, %s734
      %p738 = pneg %p732
      %p739 = scmp.eq.s32.totalorder %s78, 1
      %p740 = por %p738, %p739
      %p741 = scmp.ne.s32.totalorder %s733, %s736
      %p742 = scmp.eq.s32.totalorder %s78, 0
      %p743 = por %p741, %p742
      %p744 = scmp.ne.s32.totalorder %s733, %s736
      %p745 = scmp.eq.s32.totalorder %s83, 1
      %p746 = por %p744, %p745
      %p747 = scmp.ne.s32.totalorder %s736, %s737
      %p748 = scmp.eq.s32.totalorder %s83, 0
      %p749 = por %p747, %p748
      %p750 = scmp.ne.s32.totalorder %s736, %s737
      %p751 = scmp.eq.s32.totalorder %s84, 1
      %p752 = por %p750, %p751
      %p754 = scmp.ne.s32.totalorder %s737, %s753
      %p755 = scmp.eq.s32.totalorder %s84, 0
      %p756 = por %p754, %p755
      %p757 = scmp.le.s32.totalorder 1, %s78
      %p758 = scmp.lt.s32.totalorder %s78, 3
      %p759 = pnand %p757, %p758
      %p760 = pneg %p759
      // Predicated region
      $region9: #{tpu_custom_call.1} parent=5 // pred_check
        _
      $region10: #{tpu_custom_call.1} parent=5 // pred_check_branch
        %762 = sbr.rel (%p759) target = $region12
      $region11: #{tpu_custom_call.1} parent=5 // pred_region
        %s763 = ssub.s32 %s78, 1
        // Predicated region
        $region13: #{tpu_custom_call.1} parent=11 // pred_check
          %p764 = pneg %p151
        $region14: #{tpu_custom_call.1} parent=11 // pred_check_branch
          %766 = sbr.rel (%p764) target = $region16
        $region15: #{tpu_custom_call.1} parent=11 // pred_region
          _
        $region16: #{tpu_custom_call.1} parent=11 // pred_fallthru
          _
        // Predicated region
        $region17: #{tpu_custom_call.1} parent=11 // pred_check
          %p767 = pneg %p198
        $region18: #{tpu_custom_call.1} parent=11 // pred_check_branch
          %769 = sbr.rel (%p767) target = $region20
        $region19: #{tpu_custom_call.1} parent=11 // pred_region
          _
        $region20: #{tpu_custom_call.1} parent=11 // pred_fallthru
          _
        // Predicated region
        $region21: #{tpu_custom_call.1} parent=11 // pred_check
          %p770 = pneg %p219
        $region22: #{tpu_custom_call.1} parent=11 // pred_check_branch
          %772 = sbr.rel (%p770) target = $region24
        $region23: #{tpu_custom_call.1} parent=11 // pred_region
          _
        $region24: #{tpu_custom_call.1} parent=11 // pred_fallthru
          _
        // Predicated region
        $region25: #{tpu_custom_call.1} parent=11 // pred_check
          %p773 = pneg %p240
        $region26: #{tpu_custom_call.1} parent=11 // pred_check_branch
          %775 = sbr.rel (%p773) target = $region28
        $region27: #{tpu_custom_call.1} parent=11 // pred_region
          %s777 = ssub.s32 4096, 4096
          %778 = vsyncadd [#allocation6], %s777
          %s779 = sshll.u32 [#allocation5], 4
          %s780 = int_to_ptr.vmem [resolvable:$true] %s779
          %785 = dma.hbm_to_vmem [thread:$0]  %s13, 4096, %s780, [#allocation6], 128, 128, 8
        $region28: #{tpu_custom_call.1} parent=11 // pred_fallthru
          _
        // Predicated region
        $region29: #{tpu_custom_call.1} parent=11 // pred_check
          %p786 = pneg %p261
        $region30: #{tpu_custom_call.1} parent=11 // pred_check_branch
          %788 = sbr.rel (%p786) target = $region32
        $region31: #{tpu_custom_call.1} parent=11 // pred_region
          _
        $region32: #{tpu_custom_call.1} parent=11 // pred_fallthru
          _
        // Predicated region
        $region33: #{tpu_custom_call.1} parent=11 // pred_check
          %p789 = pneg %p282
        $region34: #{tpu_custom_call.1} parent=11 // pred_check_branch
          %791 = sbr.rel (%p789) target = $region36
        $region35: #{tpu_custom_call.1} parent=11 // pred_region
          %s793 = ssub.s32 4096, 4096
          %794 = vsyncadd [#allocation6], %s793
          %s795 = sshll.u32 [#allocation7], 4
          %s796 = int_to_ptr.vmem [resolvable:$true] %s795
          %801 = dma.hbm_to_vmem [thread:$0]  %s17, 4096, %s796, [#allocation6], 128, 128, 8
        $region36: #{tpu_custom_call.1} parent=11 // pred_fallthru
          _
        // Predicated region
        $region37: #{tpu_custom_call.1} parent=11 // pred_check
          %p802 = pneg %p303
        $region38: #{tpu_custom_call.1} parent=11 // pred_check_branch
          %804 = sbr.rel (%p802) target = $region40
        $region39: #{tpu_custom_call.1} parent=11 // pred_region
          _
        $region40: #{tpu_custom_call.1} parent=11 // pred_fallthru
          _
        // Predicated region
        $region41: #{tpu_custom_call.1} parent=11 // pred_check
          %p805 = pneg %p324
        $region42: #{tpu_custom_call.1} parent=11 // pred_check_branch
          %807 = sbr.rel (%p805) target = $region44
        $region43: #{tpu_custom_call.1} parent=11 // pred_region
          %s809 = ssub.s32 4096, 4096
          %810 = vsyncadd [#allocation9], %s809
          %s811 = sshll.u32 [#allocation8], 4
          %s812 = int_to_ptr.vmem [resolvable:$true] %s811
          %817 = dma.hbm_to_vmem [thread:$0]  %s21, 4096, %s812, [#allocation9], 128, 128, 8
        $region44: #{tpu_custom_call.1} parent=11 // pred_fallthru
          _
        // Predicated region
        $region45: #{tpu_custom_call.1} parent=11 // pred_check
          %p818 = pneg %p345
        $region46: #{tpu_custom_call.1} parent=11 // pred_check_branch
          %820 = sbr.rel (%p818) target = $region48
        $region47: #{tpu_custom_call.1} parent=11 // pred_region
          _
        $region48: #{tpu_custom_call.1} parent=11 // pred_fallthru
          _
        // Predicated region
        $region49: #{tpu_custom_call.1} parent=11 // pred_check
          %p821 = pneg %p366
        $region50: #{tpu_custom_call.1} parent=11 // pred_check_branch
          %823 = sbr.rel (%p821) target = $region52
        $region51: #{tpu_custom_call.1} parent=11 // pred_region
          %s825 = ssub.s32 4096, 4096
          %826 = vsyncadd [#allocation9], %s825
          %s827 = sshll.u32 [#allocation10], 4
          %s828 = int_to_ptr.vmem [resolvable:$true] %s827
          %833 = dma.hbm_to_vmem [thread:$0]  %s25, 4096, %s828, [#allocation9], 128, 128, 8
        $region52: #{tpu_custom_call.1} parent=11 // pred_fallthru
          _
        // Predicated region
        $region53: #{tpu_custom_call.1} parent=11 // pred_check
          %p834 = pneg %p387
        $region54: #{tpu_custom_call.1} parent=11 // pred_check_branch
          %836 = sbr.rel (%p834) target = $region56
        $region55: #{tpu_custom_call.1} parent=11 // pred_region
          _
        $region56: #{tpu_custom_call.1} parent=11 // pred_fallthru
          _
        // Predicated region
        $region57: #{tpu_custom_call.1} parent=11 // pred_check
          %p837 = pneg %p408
        $region58: #{tpu_custom_call.1} parent=11 // pred_check_branch
          %839 = sbr.rel (%p837) target = $region60
        $region59: #{tpu_custom_call.1} parent=11 // pred_region
          _
        $region60: #{tpu_custom_call.1} parent=11 // pred_fallthru
          _
        // Predicated region
        $region61: #{tpu_custom_call.1} parent=11 // pred_check
          %p840 = pneg %p429
        $region62: #{tpu_custom_call.1} parent=11 // pred_check_branch
          %842 = sbr.rel (%p840) target = $region64
        $region63: #{tpu_custom_call.1} parent=11 // pred_region
          _
        $region64: #{tpu_custom_call.1} parent=11 // pred_fallthru
          _
        // Predicated region
        $region65: #{tpu_custom_call.1} parent=11 // pred_check
          %p843 = pneg %p450
        $region66: #{tpu_custom_call.1} parent=11 // pred_check_branch
          %845 = sbr.rel (%p843) target = $region68
        $region67: #{tpu_custom_call.1} parent=11 // pred_region
          %s847 = ssub.s32 4096, 4096
          %848 = vsyncadd [#allocation12], %s847
          %s849 = sshll.u32 [#allocation11], 4
          %s850 = int_to_ptr.vmem [resolvable:$true] %s849
          %855 = dma.hbm_to_vmem [thread:$0]  %s33, 4096, %s850, [#allocation12], 128, 128, 8
        $region68: #{tpu_custom_call.1} parent=11 // pred_fallthru
          _
        // Predicated region
        $region69: #{tpu_custom_call.1} parent=11 // pred_check
          %p856 = pneg %p471
        $region70: #{tpu_custom_call.1} parent=11 // pred_check_branch
          %858 = sbr.rel (%p856) target = $region72
        $region71: #{tpu_custom_call.1} parent=11 // pred_region
          _
        $region72: #{tpu_custom_call.1} parent=11 // pred_fallthru
          _
        // Predicated region
        $region73: #{tpu_custom_call.1} parent=11 // pred_check
          %p859 = pneg %p492
        $region74: #{tpu_custom_call.1} parent=11 // pred_check_branch
          %861 = sbr.rel (%p859) target = $region76
        $region75: #{tpu_custom_call.1} parent=11 // pred_region
          %s863 = ssub.s32 4096, 4096
          %864 = vsyncadd [#allocation12], %s863
          %s865 = sshll.u32 [#allocation13], 4
          %s866 = int_to_ptr.vmem [resolvable:$true] %s865
          %871 = dma.hbm_to_vmem [thread:$0]  %s37, 4096, %s866, [#allocation12], 128, 128, 8
        $region76: #{tpu_custom_call.1} parent=11 // pred_fallthru
          _
        // Predicated region
        $region77: #{tpu_custom_call.1} parent=11 // pred_check
          %p872 = pneg %p513
        $region78: #{tpu_custom_call.1} parent=11 // pred_check_branch
          %874 = sbr.rel (%p872) target = $region80
        $region79: #{tpu_custom_call.1} parent=11 // pred_region
          _
        $region80: #{tpu_custom_call.1} parent=11 // pred_fallthru
          _
        // Predicated region
        $region81: #{tpu_custom_call.1} parent=11 // pred_check
          %p875 = pneg %p534
        $region82: #{tpu_custom_call.1} parent=11 // pred_check_branch
          %877 = sbr.rel (%p875) target = $region84
        $region83: #{tpu_custom_call.1} parent=11 // pred_region
          %s879 = ssub.s32 4096, 4096
          %880 = vsyncadd [#allocation15], %s879
          %s881 = sshll.u32 [#allocation14], 4
          %s882 = int_to_ptr.vmem [resolvable:$true] %s881
          %887 = dma.hbm_to_vmem [thread:$0]  %s41, 4096, %s882, [#allocation15], 128, 128, 8
        $region84: #{tpu_custom_call.1} parent=11 // pred_fallthru
          _
        // Predicated region
        $region85: #{tpu_custom_call.1} parent=11 // pred_check
          %p888 = pneg %p555
        $region86: #{tpu_custom_call.1} parent=11 // pred_check_branch
          %890 = sbr.rel (%p888) target = $region88
        $region87: #{tpu_custom_call.1} parent=11 // pred_region
          _
        $region88: #{tpu_custom_call.1} parent=11 // pred_fallthru
          _
        // Predicated region
        $region89: #{tpu_custom_call.1} parent=11 // pred_check
          %p891 = pneg %p576
        $region90: #{tpu_custom_call.1} parent=11 // pred_check_branch
          %893 = sbr.rel (%p891) target = $region92
        $region91: #{tpu_custom_call.1} parent=11 // pred_region
          %s895 = ssub.s32 4096, 4096
          %896 = vsyncadd [#allocation15], %s895
          %s897 = sshll.u32 [#allocation16], 4
          %s898 = int_to_ptr.vmem [resolvable:$true] %s897
          %903 = dma.hbm_to_vmem [thread:$0]  %s45, 4096, %s898, [#allocation15], 128, 128, 8
        $region92: #{tpu_custom_call.1} parent=11 // pred_fallthru
          _
        // Predicated region
        $region93: #{tpu_custom_call.1} parent=11 // pred_check
          %p904 = pneg %p597
        $region94: #{tpu_custom_call.1} parent=11 // pred_check_branch
          %906 = sbr.rel (%p904) target = $region96
        $region95: #{tpu_custom_call.1} parent=11 // pred_region
          _
        $region96: #{tpu_custom_call.1} parent=11 // pred_fallthru
          _
        // Predicated region
        $region97: #{tpu_custom_call.1} parent=11 // pred_check
          %p907 = pneg %p618
        $region98: #{tpu_custom_call.1} parent=11 // pred_check_branch
          %909 = sbr.rel (%p907) target = $region100
        $region99: #{tpu_custom_call.1} parent=11 // pred_region
          _
        $region100: #{tpu_custom_call.1} parent=11 // pred_fallthru
          _
        // Predicated region
        $region101: #{tpu_custom_call.1} parent=11 // pred_check
          %p910 = pneg %p639
        $region102: #{tpu_custom_call.1} parent=11 // pred_check_branch
          %912 = sbr.rel (%p910) target = $region104
        $region103: #{tpu_custom_call.1} parent=11 // pred_region
          _
        $region104: #{tpu_custom_call.1} parent=11 // pred_fallthru
          _
        // Predicated region
        $region105: #{tpu_custom_call.1} parent=11 // pred_check
          %p913 = pneg %p660
        $region106: #{tpu_custom_call.1} parent=11 // pred_check_branch
          %915 = sbr.rel (%p913) target = $region108
        $region107: #{tpu_custom_call.1} parent=11 // pred_region
          %s917 = ssub.s32 8192, 8192
          %918 = vsyncadd [#allocation18], %s917
          %s919 = sshll.u32 [#allocation17], 4
          %s920 = int_to_ptr.vmem [resolvable:$true] %s919
          %925 = dma.hbm_to_vmem [thread:$0]  %s53, 8192, %s920, [#allocation18], 256, 256, 16
        $region108: #{tpu_custom_call.1} parent=11 // pred_fallthru
          _
        // Predicated region
        $region109: #{tpu_custom_call.1} parent=11 // pred_check
          %p926 = pneg %p681
        $region110: #{tpu_custom_call.1} parent=11 // pred_check_branch
          %928 = sbr.rel (%p926) target = $region112
        $region111: #{tpu_custom_call.1} parent=11 // pred_region
          _
        $region112: #{tpu_custom_call.1} parent=11 // pred_fallthru
          _
        // Predicated region
        $region113: #{tpu_custom_call.1} parent=11 // pred_check
          %p929 = pneg %p702
        $region114: #{tpu_custom_call.1} parent=11 // pred_check_branch
          %931 = sbr.rel (%p929) target = $region116
        $region115: #{tpu_custom_call.1} parent=11 // pred_region
          %s933 = ssub.s32 8192, 8192
          %934 = vsyncadd [#allocation18], %s933
          %s935 = sshll.u32 [#allocation19], 4
          %s936 = int_to_ptr.vmem [resolvable:$true] %s935
          %941 = dma.hbm_to_vmem [thread:$0]  %s57, 8192, %s936, [#allocation18], 128, 128, 8
        $region116: #{tpu_custom_call.1} parent=11 // pred_fallthru
          _
        // Predicated region
        $region117: #{tpu_custom_call.1} parent=11 // pred_check
          %p942 = pneg %p723
        $region118: #{tpu_custom_call.1} parent=11 // pred_check_branch
          %944 = sbr.rel (%p942) target = $region120
        $region119: #{tpu_custom_call.1} parent=11 // pred_region
          _
        $region120: #{tpu_custom_call.1} parent=11 // pred_fallthru
          _
      $region12: #{tpu_custom_call.1} parent=5 // pred_fallthru
        _
      %p945 = scmp.lt.s32.totalorder %s78, 2
      // Predicated region
      $region121: #{tpu_custom_call.1} parent=5 // pred_check
        %p946 = pneg %p945
      $region122: #{tpu_custom_call.1} parent=5 // pred_check_branch
        %948 = sbr.rel (%p946) target = $region124
      $region123: #{tpu_custom_call.1} parent=5 // pred_region
        // Predicated region
        $region125: #{tpu_custom_call.1} parent=123 // pred_check
          %p949 = pneg %p98
        $region126: #{tpu_custom_call.1} parent=123 // pred_check_branch
          %951 = sbr.rel (%p949) target = $region128
        $region127: #{tpu_custom_call.1} parent=123 // pred_region
          %s952 = sand.u32 %s88, 1
          %s953 = scalar_lea.sflag [#allocation3], %s952
          %s954 = sand.u32 %s88, 1
          %s955 = smul.addr %s954, 16
          %s956 = scalar_lea.vmem [#allocation2], %s955
          %s958 = ssub.s32 256, 256
          %959 = vsyncadd %s953, %s958
          %s960 = smul.addr %s78, 2
          %s961 = smul.addr %s960, 128
          %s962 = scalar_lea.hbm %s1, %s961
          %s964 = sshll.u32 %s956, 4
          %s965 = int_to_ptr.vmem [resolvable:$true] %s964
          %967 = dma.hbm_to_vmem [thread:$0]  %s962, 256, %s965, %s953
        $region128: #{tpu_custom_call.1} parent=123 // pred_fallthru
          _
        // Predicated region
        $region129: #{tpu_custom_call.1} parent=123 // pred_check
          %p968 = pneg %p124
        $region130: #{tpu_custom_call.1} parent=123 // pred_check_branch
          %970 = sbr.rel (%p968) target = $region132
        $region131: #{tpu_custom_call.1} parent=123 // pred_region
          %p971 = scmp.lt.s32.totalorder %s78, 1
          %s972 = scalar_select %p971, %s78, 1
          %s973 = smul.addr %s972, 4
          %s974 = smul.addr %s973, 8
          %s975 = scalar_lea.vmem %s3, %s974
        $region132: #{tpu_custom_call.1} parent=123 // pred_fallthru
          _
        // Predicated region
        $region133: #{tpu_custom_call.1} parent=123 // pred_check
          %p976 = pneg %p171
        $region134: #{tpu_custom_call.1} parent=123 // pred_check_branch
          %978 = sbr.rel (%p976) target = $region136
        $region135: #{tpu_custom_call.1} parent=123 // pred_region
          %p979 = scmp.lt.s32.totalorder %s78, 1
          %s980 = scalar_select %p979, %s78, 1
          %s981 = scalar_lea.vmem %s7, %s980
        $region136: #{tpu_custom_call.1} parent=123 // pred_fallthru
          _
      $region124: #{tpu_custom_call.1} parent=5 // pred_fallthru
        _
      %p982 = scmp.le.s32.totalorder 1, %s78
      %p983 = scmp.lt.s32.totalorder %s78, 3
      %p984 = pnand %p982, %p983
      %p985 = pneg %p984
      // Predicated region
      $region137: #{tpu_custom_call.1} parent=5 // pred_check
        _
      $region138: #{tpu_custom_call.1} parent=5 // pred_check_branch
        %987 = sbr.rel (%p984) target = $region140
      $region139: #{tpu_custom_call.1} parent=5 // pred_region
        %s988 = ssub.s32 %s78, 1
        %s989 = sand.u32 %s91, 1
        %s990 = scalar_lea.sflag [#allocation3], %s989
        %s991 = sand.u32 %s91, 1
        %s992 = smul.addr %s991, 16
        %s993 = scalar_lea.vmem [#allocation2], %s992
        // Predicated region
        $region141: #{tpu_custom_call.1} parent=139 // pred_check
          %p994 = pneg %p104
        $region142: #{tpu_custom_call.1} parent=139 // pred_check_branch
          %996 = sbr.rel (%p994) target = $region144
        $region143: #{tpu_custom_call.1} parent=139 // pred_region
          %997 = dma.done %s990, 256
        $region144: #{tpu_custom_call.1} parent=139 // pred_fallthru
          _
        // Predicated region
        $region145: #{tpu_custom_call.1} parent=139 // pred_check
          %p998 = pneg %p240
        $region146: #{tpu_custom_call.1} parent=139 // pred_check_branch
          %1000 = sbr.rel (%p998) target = $region148
        $region147: #{tpu_custom_call.1} parent=139 // pred_region
          %1001 = dma.done [#allocation6], 4096
        $region148: #{tpu_custom_call.1} parent=139 // pred_fallthru
          _
        // Predicated region
        $region149: #{tpu_custom_call.1} parent=139 // pred_check
          %p1002 = pneg %p282
        $region150: #{tpu_custom_call.1} parent=139 // pred_check_branch
          %1004 = sbr.rel (%p1002) target = $region152
        $region151: #{tpu_custom_call.1} parent=139 // pred_region
          %1005 = dma.done [#allocation6], 4096
        $region152: #{tpu_custom_call.1} parent=139 // pred_fallthru
          _
        // Predicated region
        $region153: #{tpu_custom_call.1} parent=139 // pred_check
          %p1006 = pneg %p324
        $region154: #{tpu_custom_call.1} parent=139 // pred_check_branch
          %1008 = sbr.rel (%p1006) target = $region156
        $region155: #{tpu_custom_call.1} parent=139 // pred_region
          %1009 = dma.done [#allocation9], 4096
        $region156: #{tpu_custom_call.1} parent=139 // pred_fallthru
          _
        // Predicated region
        $region157: #{tpu_custom_call.1} parent=139 // pred_check
          %p1010 = pneg %p366
        $region158: #{tpu_custom_call.1} parent=139 // pred_check_branch
          %1012 = sbr.rel (%p1010) target = $region160
        $region159: #{tpu_custom_call.1} parent=139 // pred_region
          %1013 = dma.done [#allocation9], 4096
        $region160: #{tpu_custom_call.1} parent=139 // pred_fallthru
          _
        // Predicated region
        $region161: #{tpu_custom_call.1} parent=139 // pred_check
          %p1014 = pneg %p450
        $region162: #{tpu_custom_call.1} parent=139 // pred_check_branch
          %1016 = sbr.rel (%p1014) target = $region164
        $region163: #{tpu_custom_call.1} parent=139 // pred_region
          %1017 = dma.done [#allocation12], 4096
        $region164: #{tpu_custom_call.1} parent=139 // pred_fallthru
          _
        // Predicated region
        $region165: #{tpu_custom_call.1} parent=139 // pred_check
          %p1018 = pneg %p492
        $region166: #{tpu_custom_call.1} parent=139 // pred_check_branch
          %1020 = sbr.rel (%p1018) target = $region168
        $region167: #{tpu_custom_call.1} parent=139 // pred_region
          %1021 = dma.done [#allocation12], 4096
        $region168: #{tpu_custom_call.1} parent=139 // pred_fallthru
          _
        // Predicated region
        $region169: #{tpu_custom_call.1} parent=139 // pred_check
          %p1022 = pneg %p534
        $region170: #{tpu_custom_call.1} parent=139 // pred_check_branch
          %1024 = sbr.rel (%p1022) target = $region172
        $region171: #{tpu_custom_call.1} parent=139 // pred_region
          %1025 = dma.done [#allocation15], 4096
        $region172: #{tpu_custom_call.1} parent=139 // pred_fallthru
          _
        // Predicated region
        $region173: #{tpu_custom_call.1} parent=139 // pred_check
          %p1026 = pneg %p576
        $region174: #{tpu_custom_call.1} parent=139 // pred_check_branch
          %1028 = sbr.rel (%p1026) target = $region176
        $region175: #{tpu_custom_call.1} parent=139 // pred_region
          %1029 = dma.done [#allocation15], 4096
        $region176: #{tpu_custom_call.1} parent=139 // pred_fallthru
          _
        // Predicated region
        $region177: #{tpu_custom_call.1} parent=139 // pred_check
          %p1030 = pneg %p660
        $region178: #{tpu_custom_call.1} parent=139 // pred_check_branch
          %1032 = sbr.rel (%p1030) target = $region180
        $region179: #{tpu_custom_call.1} parent=139 // pred_region
          %1033 = dma.done [#allocation18], 8192
        $region180: #{tpu_custom_call.1} parent=139 // pred_fallthru
          _
        // Predicated region
        $region181: #{tpu_custom_call.1} parent=139 // pred_check
          %p1034 = pneg %p702
        $region182: #{tpu_custom_call.1} parent=139 // pred_check_branch
          %1036 = sbr.rel (%p1034) target = $region184
        $region183: #{tpu_custom_call.1} parent=139 // pred_region
          %1037 = dma.done [#allocation18], 8192
        $region184: #{tpu_custom_call.1} parent=139 // pred_fallthru
          _
        %s1038 = sand.u32 %s91, 1
        %s1039 = scalar_lea.sflag [#allocation3], %s1038
        %s1040 = sand.u32 %s91, 1
        %s1041 = smul.addr %s1040, 16
        %s1042 = scalar_lea.vmem [#allocation2], %s1041
        %p1043 = pneg %p104
        %p1044 = pneg %p101
        %p1045 = scmp.lt.s32.totalorder %s83, 1
        %s1046 = scalar_select %p1045, %s83, 1
        %s1047 = smul.addr %s1046, 4
        %s1048 = smul.addr %s1047, 8
        %s1049 = scalar_lea.vmem %s3, %s1048
        %p1050 = pneg %p130
        %p1051 = pneg %p127
        %p1052 = pneg %p151
        %p1053 = pneg %p148
        %p1054 = scmp.lt.s32.totalorder %s83, 1
        %s1055 = scalar_select %p1054, %s83, 1
        %s1056 = scalar_lea.vmem %s7, %s1055
        %p1057 = pneg %p177
        %p1058 = pneg %p174
        %p1059 = pneg %p198
        %p1060 = pneg %p195
        %p1061 = pneg %p219
        %p1062 = pneg %p216
        %p1063 = pneg %p240
        %p1064 = pneg %p237
        %p1065 = pneg %p261
        %p1066 = pneg %p258
        %p1067 = pneg %p282
        %p1068 = pneg %p279
        %p1069 = pneg %p303
        %p1070 = pneg %p300
        %p1071 = pneg %p324
        %p1072 = pneg %p321
        %p1073 = pneg %p345
        %p1074 = pneg %p342
        %p1075 = pneg %p366
        %p1076 = pneg %p363
        %p1077 = pneg %p387
        %p1078 = pneg %p384
        %p1079 = pneg %p408
        %p1080 = pneg %p405
        %p1081 = pneg %p429
        %p1082 = pneg %p426
        %p1083 = pneg %p450
        %p1084 = pneg %p447
        %p1085 = pneg %p471
        %p1086 = pneg %p468
        %p1087 = pneg %p492
        %p1088 = pneg %p489
        %p1089 = pneg %p513
        %p1090 = pneg %p510
        %p1091 = pneg %p534
        %p1092 = pneg %p531
        %p1093 = pneg %p555
        %p1094 = pneg %p552
        %p1095 = pneg %p576
        %p1096 = pneg %p573
        %p1097 = pneg %p597
        %p1098 = pneg %p594
        %p1099 = pneg %p618
        %p1100 = pneg %p615
        %p1101 = pneg %p639
        %p1102 = pneg %p636
        %p1103 = pneg %p660
        %p1104 = pneg %p657
        %p1105 = pneg %p681
        %p1106 = pneg %p678
        %p1107 = pneg %p702
        %p1108 = pneg %p699
        %p1109 = pneg %p723
        %p1110 = pneg %p720
        %p1111 = pneg %p749
        %p1112 = pneg %p746
        %s1113 = sand.u32 %s736, 1
        %s1114 = scalar_lea.sflag [#allocation4], %s1113
        %s1115 = sand.u32 %s736, 1
        %s1116 = smul.addr %s1115, 16
        %s1117 = scalar_lea.vmem [#allocation20], %s1116
        %p1118 = scmp.lt.s32.totalorder %s83, 1
        %s1119 = scalar_select %p1118, %s83, 1
        %s1120 = smul.addr %s1119, 4
        %s1121 = smul.addr %s1120, 8
        %s1122 = scalar_lea.vmem %s3, %s1121
        %p1123 = scmp.lt.s32.totalorder %s83, 1
        %s1124 = scalar_select %p1123, %s83, 1
        %s1125 = scalar_lea.vmem %s7, %s1124
        %v1129 = vld [vmem:[%s993] sm:$0xff]
        %v1130 = vld [vmem:[%s993 + $0x8] sm:$0xff]
        %v1131 = vld [vmem:[%s1122] sm:$0xff]
        %v1132 = vld [vmem:[%s1122 + $0x8] sm:$0xff]
        %v1133 = vld [vmem:[%s1122 + $0x10] sm:$0xff]
        %v1134 = vld [vmem:[%s1122 + $0x18] sm:$0xff]
        %v1135 = vld [vmem:[%s5] sm:$0x3]
        %vm1136 = vnez %v1135
        %v1137 = vld [vmem:[%s1125] sm:$0x1]
        %vm1138 = vnez %v1137
        %v1139 = vld [vmem:[%s9] sm:$0x3]
        %v1140 = vld [vmem:[%s11] sm:$0x3]
        %v1141 = vadd.f32 %v1129, %v1130
        %1142 = vadd.xlane.f32.xlu0 %v1141
        %v1143 = vpop.xlane.xlu0 %1142
        %v1144 = vrcp.pop 256.0
        %v1145 = vmul.f32 %v1143, %v1144
        %v1146 = vsub.f32 %v1129, %v1145
        %v1147 = vsub.f32 %v1130, %v1145
        %v1148 = vmul.f32 %v1146, %v1146
        %v1149 = vmul.f32 %v1147, %v1147
        %v1150 = vadd.f32 %v1148, %v1149
        %1151 = vadd.xlane.f32.xlu0 %v1150
        %v1152 = vpop.xlane.xlu0 %1151
        %v1153 = vmul.f32 %v1152, %v1144
        %v1154 = vadd.f32 %v1153, 1e-05
        %v1155 = vrsqrt.pop %v1154
        %v1156 = vmul.f32 %v1146, %v1155
        %v1157 = vmul.f32 %v1147, %v1155
        %v1159 = vlaneseq
        %v1160 = vshrl.u32 %v1159, 7
        %v1161 = vsub.s32 0, %v1160
        %v1162 = vrot.slane %v1139, %v1161
        %v1163 = vlaneseq
        %v1164 = vshrl.u32 %v1163, 7
        %v1165 = vsub.s32 1, %v1164
        %v1166 = vrot.slane %v1139, %v1165
        %v1169 = vmul.f32 %v1156, %v1162
        %v1170 = vmul.f32 %v1157, %v1166
        %v1172 = vlaneseq
        %v1173 = vshrl.u32 %v1172, 7
        %v1174 = vsub.s32 0, %v1173
        %v1175 = vrot.slane %v1140, %v1174
        %v1176 = vlaneseq
        %v1177 = vshrl.u32 %v1176, 7
        %v1178 = vsub.s32 1, %v1177
        %v1179 = vrot.slane %v1140, %v1178
        %v1182 = vadd.f32 %v1169, %v1175
        %v1183 = vadd.f32 %v1170, %v1179
        %v1184 = vpack.c.bf16 %v1182, %v1182
        %v1185 = vpack.c.bf16 %v1183, %v1183
        %v1186 = vld [vmem:[#allocation5] sm:$0xff]
        %v1187 = vld [vmem:[#allocation5 + $0x8] sm:$0xff]
        %v1188 = vld [vmem:[#allocation5 + $0x10] sm:$0xff]
        %v1189 = vld [vmem:[#allocation5 + $0x18] sm:$0xff]
        %v1190 = vld [vmem:[#allocation5 + $0x20] sm:$0xff]
        %v1191 = vld [vmem:[#allocation5 + $0x28] sm:$0xff]
        %v1192 = vld [vmem:[#allocation5 + $0x30] sm:$0xff]
        %v1193 = vld [vmem:[#allocation5 + $0x38] sm:$0xff]
        %v1194 = vld [vmem:[#allocation5 + $0x40] sm:$0xff]
        %v1195 = vld [vmem:[#allocation5 + $0x48] sm:$0xff]
        %v1196 = vld [vmem:[#allocation5 + $0x50] sm:$0xff]
        %v1197 = vld [vmem:[#allocation5 + $0x58] sm:$0xff]
        %v1198 = vld [vmem:[#allocation5 + $0x60] sm:$0xff]
        %v1199 = vld [vmem:[#allocation5 + $0x68] sm:$0xff]
        %v1200 = vld [vmem:[#allocation5 + $0x70] sm:$0xff]
        %v1201 = vld [vmem:[#allocation5 + $0x78] sm:$0xff]
        %v1202 = vld [vmem:[#allocation5 + $0x80] sm:$0xff]
        %v1203 = vld [vmem:[#allocation5 + $0x88] sm:$0xff]
        %v1204 = vld [vmem:[#allocation5 + $0x90] sm:$0xff]
        %v1205 = vld [vmem:[#allocation5 + $0x98] sm:$0xff]
        %v1206 = vld [vmem:[#allocation5 + $0xa0] sm:$0xff]
        %v1207 = vld [vmem:[#allocation5 + $0xa8] sm:$0xff]
        %v1208 = vld [vmem:[#allocation5 + $0xb0] sm:$0xff]
        %v1209 = vld [vmem:[#allocation5 + $0xb8] sm:$0xff]
        %v1210 = vld [vmem:[#allocation5 + $0xc0] sm:$0xff]
        %v1211 = vld [vmem:[#allocation5 + $0xc8] sm:$0xff]
        %v1212 = vld [vmem:[#allocation5 + $0xd0] sm:$0xff]
        %v1213 = vld [vmem:[#allocation5 + $0xd8] sm:$0xff]
        %v1214 = vld [vmem:[#allocation5 + $0xe0] sm:$0xff]
        %v1215 = vld [vmem:[#allocation5 + $0xe8] sm:$0xff]
        %v1216 = vld [vmem:[#allocation5 + $0xf0] sm:$0xff]
        %v1217 = vld [vmem:[#allocation5 + $0xf8] sm:$0xff]
        %v1218 = vld [vmem:[%s15] sm:$0x3]
        %v1220 = vlaneseq
        %v1221 = vshrl.u32 %v1220, 7
        %v1222 = vsub.s32 0, %v1221
        %v1223 = vrot.slane %v1218, %v1222
        %v1224 = vlaneseq
        %v1225 = vshrl.u32 %v1224, 7
        %v1226 = vsub.s32 1, %v1225
        %v1227 = vrot.slane %v1218, %v1226
        %v1262 = vunpack.c.l.b16 %v1186
        %v1263 = vunpack.c.h.b16 %v1186
        %v1264 = vunpack.c.l.b16 %v1187
        %v1265 = vunpack.c.h.b16 %v1187
        %v1266 = vunpack.c.l.b16 %v1188
        %v1267 = vunpack.c.h.b16 %v1188
        %v1268 = vunpack.c.l.b16 %v1189
        %v1269 = vunpack.c.h.b16 %v1189
        %v1270 = vunpack.c.l.b16 %v1190
        %v1271 = vunpack.c.h.b16 %v1190
        %v1272 = vunpack.c.l.b16 %v1191
        %v1273 = vunpack.c.h.b16 %v1191
        %v1274 = vunpack.c.l.b16 %v1192
        %v1275 = vunpack.c.h.b16 %v1192
        %v1276 = vunpack.c.l.b16 %v1193
        %v1277 = vunpack.c.h.b16 %v1193
        %v1278 = vunpack.c.l.b16 %v1194
        %v1279 = vunpack.c.h.b16 %v1194
        %v1280 = vunpack.c.l.b16 %v1195
        %v1281 = vunpack.c.h.b16 %v1195
        %v1282 = vunpack.c.l.b16 %v1196
        %v1283 = vunpack.c.h.b16 %v1196
        %v1284 = vunpack.c.l.b16 %v1197
        %v1285 = vunpack.c.h.b16 %v1197
        %v1286 = vunpack.c.l.b16 %v1198
        %v1287 = vunpack.c.h.b16 %v1198
        %v1288 = vunpack.c.l.b16 %v1199
        %v1289 = vunpack.c.h.b16 %v1199
        %v1290 = vunpack.c.l.b16 %v1200
        %v1291 = vunpack.c.h.b16 %v1200
        %v1292 = vunpack.c.l.b16 %v1201
        %v1293 = vunpack.c.h.b16 %v1201
        %v1294 = vunpack.c.l.b16 %v1202
        %v1295 = vunpack.c.h.b16 %v1202
        %v1296 = vunpack.c.l.b16 %v1203
        %v1297 = vunpack.c.h.b16 %v1203
        %v1298 = vunpack.c.l.b16 %v1204
        %v1299 = vunpack.c.h.b16 %v1204
        %v1300 = vunpack.c.l.b16 %v1205
        %v1301 = vunpack.c.h.b16 %v1205
        %v1302 = vunpack.c.l.b16 %v1206
        %v1303 = vunpack.c.h.b16 %v1206
        %v1304 = vunpack.c.l.b16 %v1207
        %v1305 = vunpack.c.h.b16 %v1207
        %v1306 = vunpack.c.l.b16 %v1208
        %v1307 = vunpack.c.h.b16 %v1208
        %v1308 = vunpack.c.l.b16 %v1209
        %v1309 = vunpack.c.h.b16 %v1209
        %v1310 = vunpack.c.l.b16 %v1210
        %v1311 = vunpack.c.h.b16 %v1210
        %v1312 = vunpack.c.l.b16 %v1211
        %v1313 = vunpack.c.h.b16 %v1211
        %v1314 = vunpack.c.l.b16 %v1212
        %v1315 = vunpack.c.h.b16 %v1212
        %v1316 = vunpack.c.l.b16 %v1213
        %v1317 = vunpack.c.h.b16 %v1213
        %v1318 = vunpack.c.l.b16 %v1214
        %v1319 = vunpack.c.h.b16 %v1214
        %v1320 = vunpack.c.l.b16 %v1215
        %v1321 = vunpack.c.h.b16 %v1215
        %v1322 = vunpack.c.l.b16 %v1216
        %v1323 = vunpack.c.h.b16 %v1216
        %v1324 = vunpack.c.l.b16 %v1217
        %v1325 = vunpack.c.h.b16 %v1217
        %v1326 = vpack.c.b16 %v1264, %v1262
        %v1327 = vpack.c.b16 %v1265, %v1263
        %v1328 = vpack.c.b16 %v1268, %v1266
        %v1329 = vpack.c.b16 %v1269, %v1267
        %v1330 = vpack.c.b16 %v1272, %v1270
        %v1331 = vpack.c.b16 %v1273, %v1271
        %v1332 = vpack.c.b16 %v1276, %v1274
        %v1333 = vpack.c.b16 %v1277, %v1275
        %v1334 = vpack.c.b16 %v1280, %v1278
        %v1335 = vpack.c.b16 %v1281, %v1279
        %v1336 = vpack.c.b16 %v1284, %v1282
        %v1337 = vpack.c.b16 %v1285, %v1283
        %v1338 = vpack.c.b16 %v1288, %v1286
        %v1339 = vpack.c.b16 %v1289, %v1287
        %v1340 = vpack.c.b16 %v1292, %v1290
        %v1341 = vpack.c.b16 %v1293, %v1291
        %v1342 = vpack.c.b16 %v1296, %v1294
        %v1343 = vpack.c.b16 %v1297, %v1295
        %v1344 = vpack.c.b16 %v1300, %v1298
        %v1345 = vpack.c.b16 %v1301, %v1299
        %v1346 = vpack.c.b16 %v1304, %v1302
        %v1347 = vpack.c.b16 %v1305, %v1303
        %v1348 = vpack.c.b16 %v1308, %v1306
        %v1349 = vpack.c.b16 %v1309, %v1307
        %v1350 = vpack.c.b16 %v1312, %v1310
        %v1351 = vpack.c.b16 %v1313, %v1311
        %v1352 = vpack.c.b16 %v1316, %v1314
        %v1353 = vpack.c.b16 %v1317, %v1315
        %v1354 = vpack.c.b16 %v1320, %v1318
        %v1355 = vpack.c.b16 %v1321, %v1319
        %v1356 = vpack.c.b16 %v1324, %v1322
        %v1357 = vpack.c.b16 %v1325, %v1323
        %1390 = vmatprep.subr.bf16.mxu0 %v1327
        %1391 = vmatpush1.bf16.msra.mxu0 %v1326
        %1392 = vmatprep.subr.bf16.mxu0 %v1329
        %1393 = vmatpush1.bf16.msra.mxu0 %v1328
        %1394 = vmatprep.subr.bf16.mxu0 %v1331
        %1395 = vmatpush1.bf16.msra.mxu0 %v1330
        %1396 = vmatprep.subr.bf16.mxu0 %v1333
        %1397 = vmatpush1.bf16.msra.mxu0 %v1332
        %1398 = vmatprep.subr.bf16.mxu0 %v1335
        %1399 = vmatpush1.bf16.msra.mxu0 %v1334
        %1400 = vmatprep.subr.bf16.mxu0 %v1337
        %1401 = vmatpush1.bf16.msra.mxu0 %v1336
        %1402 = vmatprep.subr.bf16.mxu0 %v1339
        %1403 = vmatpush1.bf16.msra.mxu0 %v1338
        %1404 = vmatprep.subr.bf16.mxu0 %v1341
        %1405 = vmatpush1.bf16.msra.mxu0 %v1340
        %1406 = vmatprep.subr.bf16.mxu0 %v1343
        %1407 = vmatpush1.bf16.msra.mxu0 %v1342
        %1408 = vmatprep.subr.bf16.mxu0 %v1345
        %1409 = vmatpush1.bf16.msra.mxu0 %v1344
        %1410 = vmatprep.subr.bf16.mxu0 %v1347
        %1411 = vmatpush1.bf16.msra.mxu0 %v1346
        %1412 = vmatprep.subr.bf16.mxu0 %v1349
        %1413 = vmatpush1.bf16.msra.mxu0 %v1348
        %1414 = vmatprep.subr.bf16.mxu0 %v1351
        %1415 = vmatpush1.bf16.msra.mxu0 %v1350
        %1416 = vmatprep.subr.bf16.mxu0 %v1353
        %1417 = vmatpush1.bf16.msra.mxu0 %v1352
        %1418 = vmatprep.subr.bf16.mxu0 %v1355
        %1419 = vmatpush1.bf16.msra.mxu0 %v1354
        %1420 = vmatprep.subr.bf16.mxu0 %v1357
        %1421 = vmatpush1.bf16.msra.mxu0 %v1356
        %1422 = vmatprep.mubr.bf16.mxu0 %v1185
        %1423 = vmatmul.mubr.bf16.gmra.mrb[0].mxu0 %v1184
        %v1424 = vpop.f32.mrb[0].mxu0
        %v1425 = vadd.f32 %v1223, %v1424
        %v1426 = vpop.f32.mrb[0].mxu0
        %v1427 = vadd.f32 %v1227, %v1426
        %v1428 = vpop.f32.mrb[0].mxu0
        %v1429 = vpop.f32.mrb[0].mxu0
        %1430 = vdwg.mxu0
        %v1431 = vld [vmem:[#allocation7] sm:$0xff]
        %v1432 = vld [vmem:[#allocation7 + $0x8] sm:$0xff]
        %v1433 = vld [vmem:[#allocation7 + $0x10] sm:$0xff]
        %v1434 = vld [vmem:[#allocation7 + $0x18] sm:$0xff]
        %v1435 = vld [vmem:[#allocation7 + $0x20] sm:$0xff]
        %v1436 = vld [vmem:[#allocation7 + $0x28] sm:$0xff]
        %v1437 = vld [vmem:[#allocation7 + $0x30] sm:$0xff]
        %v1438 = vld [vmem:[#allocation7 + $0x38] sm:$0xff]
        %v1439 = vld [vmem:[#allocation7 + $0x40] sm:$0xff]
        %v1440 = vld [vmem:[#allocation7 + $0x48] sm:$0xff]
        %v1441 = vld [vmem:[#allocation7 + $0x50] sm:$0xff]
        %v1442 = vld [vmem:[#allocation7 + $0x58] sm:$0xff]
        %v1443 = vld [vmem:[#allocation7 + $0x60] sm:$0xff]
        %v1444 = vld [vmem:[#allocation7 + $0x68] sm:$0xff]
        %v1445 = vld [vmem:[#allocation7 + $0x70] sm:$0xff]
        %v1446 = vld [vmem:[#allocation7 + $0x78] sm:$0xff]
        %v1447 = vld [vmem:[#allocation7 + $0x80] sm:$0xff]
        %v1448 = vld [vmem:[#allocation7 + $0x88] sm:$0xff]
        %v1449 = vld [vmem:[#allocation7 + $0x90] sm:$0xff]
        %v1450 = vld [vmem:[#allocation7 + $0x98] sm:$0xff]
        %v1451 = vld [vmem:[#allocation7 + $0xa0] sm:$0xff]
        %v1452 = vld [vmem:[#allocation7 + $0xa8] sm:$0xff]
        %v1453 = vld [vmem:[#allocation7 + $0xb0] sm:$0xff]
        %v1454 = vld [vmem:[#allocation7 + $0xb8] sm:$0xff]
        %v1455 = vld [vmem:[#allocation7 + $0xc0] sm:$0xff]
        %v1456 = vld [vmem:[#allocation7 + $0xc8] sm:$0xff]
        %v1457 = vld [vmem:[#allocation7 + $0xd0] sm:$0xff]
        %v1458 = vld [vmem:[#allocation7 + $0xd8] sm:$0xff]
        %v1459 = vld [vmem:[#allocation7 + $0xe0] sm:$0xff]
        %v1460 = vld [vmem:[#allocation7 + $0xe8] sm:$0xff]
        %v1461 = vld [vmem:[#allocation7 + $0xf0] sm:$0xff]
        %v1462 = vld [vmem:[#allocation7 + $0xf8] sm:$0xff]
        %v1463 = vld [vmem:[%s19] sm:$0x3]
        %v1465 = vlaneseq
        %v1466 = vshrl.u32 %v1465, 7
        %v1467 = vsub.s32 0, %v1466
        %v1468 = vrot.slane %v1463, %v1467
        %v1469 = vlaneseq
        %v1470 = vshrl.u32 %v1469, 7
        %v1471 = vsub.s32 1, %v1470
        %v1472 = vrot.slane %v1463, %v1471
        %v1507 = vunpack.c.l.b16 %v1431
        %v1508 = vunpack.c.h.b16 %v1431
        %v1509 = vunpack.c.l.b16 %v1432
        %v1510 = vunpack.c.h.b16 %v1432
        %v1511 = vunpack.c.l.b16 %v1433
        %v1512 = vunpack.c.h.b16 %v1433
        %v1513 = vunpack.c.l.b16 %v1434
        %v1514 = vunpack.c.h.b16 %v1434
        %v1515 = vunpack.c.l.b16 %v1435
        %v1516 = vunpack.c.h.b16 %v1435
        %v1517 = vunpack.c.l.b16 %v1436
        %v1518 = vunpack.c.h.b16 %v1436
        %v1519 = vunpack.c.l.b16 %v1437
        %v1520 = vunpack.c.h.b16 %v1437
        %v1521 = vunpack.c.l.b16 %v1438
        %v1522 = vunpack.c.h.b16 %v1438
        %v1523 = vunpack.c.l.b16 %v1439
        %v1524 = vunpack.c.h.b16 %v1439
        %v1525 = vunpack.c.l.b16 %v1440
        %v1526 = vunpack.c.h.b16 %v1440
        %v1527 = vunpack.c.l.b16 %v1441
        %v1528 = vunpack.c.h.b16 %v1441
        %v1529 = vunpack.c.l.b16 %v1442
        %v1530 = vunpack.c.h.b16 %v1442
        %v1531 = vunpack.c.l.b16 %v1443
        %v1532 = vunpack.c.h.b16 %v1443
        %v1533 = vunpack.c.l.b16 %v1444
        %v1534 = vunpack.c.h.b16 %v1444
        %v1535 = vunpack.c.l.b16 %v1445
        %v1536 = vunpack.c.h.b16 %v1445
        %v1537 = vunpack.c.l.b16 %v1446
        %v1538 = vunpack.c.h.b16 %v1446
        %v1539 = vunpack.c.l.b16 %v1447
        %v1540 = vunpack.c.h.b16 %v1447
        %v1541 = vunpack.c.l.b16 %v1448
        %v1542 = vunpack.c.h.b16 %v1448
        %v1543 = vunpack.c.l.b16 %v1449
        %v1544 = vunpack.c.h.b16 %v1449
        %v1545 = vunpack.c.l.b16 %v1450
        %v1546 = vunpack.c.h.b16 %v1450
        %v1547 = vunpack.c.l.b16 %v1451
        %v1548 = vunpack.c.h.b16 %v1451
        %v1549 = vunpack.c.l.b16 %v1452
        %v1550 = vunpack.c.h.b16 %v1452
        %v1551 = vunpack.c.l.b16 %v1453
        %v1552 = vunpack.c.h.b16 %v1453
        %v1553 = vunpack.c.l.b16 %v1454
        %v1554 = vunpack.c.h.b16 %v1454
        %v1555 = vunpack.c.l.b16 %v1455
        %v1556 = vunpack.c.h.b16 %v1455
        %v1557 = vunpack.c.l.b16 %v1456
        %v1558 = vunpack.c.h.b16 %v1456
        %v1559 = vunpack.c.l.b16 %v1457
        %v1560 = vunpack.c.h.b16 %v1457
        %v1561 = vunpack.c.l.b16 %v1458
        %v1562 = vunpack.c.h.b16 %v1458
        %v1563 = vunpack.c.l.b16 %v1459
        %v1564 = vunpack.c.h.b16 %v1459
        %v1565 = vunpack.c.l.b16 %v1460
        %v1566 = vunpack.c.h.b16 %v1460
        %v1567 = vunpack.c.l.b16 %v1461
        %v1568 = vunpack.c.h.b16 %v1461
        %v1569 = vunpack.c.l.b16 %v1462
        %v1570 = vunpack.c.h.b16 %v1462
        %v1571 = vpack.c.b16 %v1509, %v1507
        %v1572 = vpack.c.b16 %v1510, %v1508
        %v1573 = vpack.c.b16 %v1513, %v1511
        %v1574 = vpack.c.b16 %v1514, %v1512
        %v1575 = vpack.c.b16 %v1517, %v1515
        %v1576 = vpack.c.b16 %v1518, %v1516
        %v1577 = vpack.c.b16 %v1521, %v1519
        %v1578 = vpack.c.b16 %v1522, %v1520
        %v1579 = vpack.c.b16 %v1525, %v1523
        %v1580 = vpack.c.b16 %v1526, %v1524
        %v1581 = vpack.c.b16 %v1529, %v1527
        %v1582 = vpack.c.b16 %v1530, %v1528
        %v1583 = vpack.c.b16 %v1533, %v1531
        %v1584 = vpack.c.b16 %v1534, %v1532
        %v1585 = vpack.c.b16 %v1537, %v1535
        %v1586 = vpack.c.b16 %v1538, %v1536
        %v1587 = vpack.c.b16 %v1541, %v1539
        %v1588 = vpack.c.b16 %v1542, %v1540
        %v1589 = vpack.c.b16 %v1545, %v1543
        %v1590 = vpack.c.b16 %v1546, %v1544
        %v1591 = vpack.c.b16 %v1549, %v1547
        %v1592 = vpack.c.b16 %v1550, %v1548
        %v1593 = vpack.c.b16 %v1553, %v1551
        %v1594 = vpack.c.b16 %v1554, %v1552
        %v1595 = vpack.c.b16 %v1557, %v1555
        %v1596 = vpack.c.b16 %v1558, %v1556
        %v1597 = vpack.c.b16 %v1561, %v1559
        %v1598 = vpack.c.b16 %v1562, %v1560
        %v1599 = vpack.c.b16 %v1565, %v1563
        %v1600 = vpack.c.b16 %v1566, %v1564
        %v1601 = vpack.c.b16 %v1569, %v1567
        %v1602 = vpack.c.b16 %v1570, %v1568
        %1635 = vmatprep.subr.bf16.mxu0 %v1572
        %1636 = vmatpush1.bf16.msra.mxu0 %v1571
        %1637 = vmatprep.subr.bf16.mxu0 %v1574
        %1638 = vmatpush1.bf16.msra.mxu0 %v1573
        %1639 = vmatprep.subr.bf16.mxu0 %v1576
        %1640 = vmatpush1.bf16.msra.mxu0 %v1575
        %1641 = vmatprep.subr.bf16.mxu0 %v1578
        %1642 = vmatpush1.bf16.msra.mxu0 %v1577
        %1643 = vmatprep.subr.bf16.mxu0 %v1580
        %1644 = vmatpush1.bf16.msra.mxu0 %v1579
        %1645 = vmatprep.subr.bf16.mxu0 %v1582
        %1646 = vmatpush1.bf16.msra.mxu0 %v1581
        %1647 = vmatprep.subr.bf16.mxu0 %v1584
        %1648 = vmatpush1.bf16.msra.mxu0 %v1583
        %1649 = vmatprep.subr.bf16.mxu0 %v1586
        %1650 = vmatpush1.bf16.msra.mxu0 %v1585
        %1651 = vmatprep.subr.bf16.mxu0 %v1588
        %1652 = vmatpush1.bf16.msra.mxu0 %v1587
        %1653 = vmatprep.subr.bf16.mxu0 %v1590
        %1654 = vmatpush1.bf16.msra.mxu0 %v1589
        %1655 = vmatprep.subr.bf16.mxu0 %v1592
        %1656 = vmatpush1.bf16.msra.mxu0 %v1591
        %1657 = vmatprep.subr.bf16.mxu0 %v1594
        %1658 = vmatpush1.bf16.msra.mxu0 %v1593
        %1659 = vmatprep.subr.bf16.mxu0 %v1596
        %1660 = vmatpush1.bf16.msra.mxu0 %v1595
        %1661 = vmatprep.subr.bf16.mxu0 %v1598
        %1662 = vmatpush1.bf16.msra.mxu0 %v1597
        %1663 = vmatprep.subr.bf16.mxu0 %v1600
        %1664 = vmatpush1.bf16.msra.mxu0 %v1599
        %1665 = vmatprep.subr.bf16.mxu0 %v1602
        %1666 = vmatpush1.bf16.msra.mxu0 %v1601
        %1667 = vmatprep.mubr.bf16.mxu0 %v1185
        %1668 = vmatmul.mubr.bf16.gmra.mrb[0].mxu0 %v1184
        %v1669 = vpop.f32.mrb[0].mxu0
        %v1670 = vadd.f32 %v1468, %v1669
        %v1671 = vpop.f32.mrb[0].mxu0
        %v1672 = vadd.f32 %v1472, %v1671
        %v1673 = vpop.f32.mrb[0].mxu0
        %v1674 = vpop.f32.mrb[0].mxu0
        %1675 = vdwg.mxu0
        %v1676 = vld [vmem:[#allocation8] sm:$0xff]
        %v1677 = vld [vmem:[#allocation8 + $0x8] sm:$0xff]
        %v1678 = vld [vmem:[#allocation8 + $0x10] sm:$0xff]
        %v1679 = vld [vmem:[#allocation8 + $0x18] sm:$0xff]
        %v1680 = vld [vmem:[#allocation8 + $0x20] sm:$0xff]
        %v1681 = vld [vmem:[#allocation8 + $0x28] sm:$0xff]
        %v1682 = vld [vmem:[#allocation8 + $0x30] sm:$0xff]
        %v1683 = vld [vmem:[#allocation8 + $0x38] sm:$0xff]
        %v1684 = vld [vmem:[#allocation8 + $0x40] sm:$0xff]
        %v1685 = vld [vmem:[#allocation8 + $0x48] sm:$0xff]
        %v1686 = vld [vmem:[#allocation8 + $0x50] sm:$0xff]
        %v1687 = vld [vmem:[#allocation8 + $0x58] sm:$0xff]
        %v1688 = vld [vmem:[#allocation8 + $0x60] sm:$0xff]
        %v1689 = vld [vmem:[#allocation8 + $0x68] sm:$0xff]
        %v1690 = vld [vmem:[#allocation8 + $0x70] sm:$0xff]
        %v1691 = vld [vmem:[#allocation8 + $0x78] sm:$0xff]
        %v1692 = vld [vmem:[#allocation8 + $0x80] sm:$0xff]
        %v1693 = vld [vmem:[#allocation8 + $0x88] sm:$0xff]
        %v1694 = vld [vmem:[#allocation8 + $0x90] sm:$0xff]
        %v1695 = vld [vmem:[#allocation8 + $0x98] sm:$0xff]
        %v1696 = vld [vmem:[#allocation8 + $0xa0] sm:$0xff]
        %v1697 = vld [vmem:[#allocation8 + $0xa8] sm:$0xff]
        %v1698 = vld [vmem:[#allocation8 + $0xb0] sm:$0xff]
        %v1699 = vld [vmem:[#allocation8 + $0xb8] sm:$0xff]
        %v1700 = vld [vmem:[#allocation8 + $0xc0] sm:$0xff]
        %v1701 = vld [vmem:[#allocation8 + $0xc8] sm:$0xff]
        %v1702 = vld [vmem:[#allocation8 + $0xd0] sm:$0xff]
        %v1703 = vld [vmem:[#allocation8 + $0xd8] sm:$0xff]
        %v1704 = vld [vmem:[#allocation8 + $0xe0] sm:$0xff]
        %v1705 = vld [vmem:[#allocation8 + $0xe8] sm:$0xff]
        %v1706 = vld [vmem:[#allocation8 + $0xf0] sm:$0xff]
        %v1707 = vld [vmem:[#allocation8 + $0xf8] sm:$0xff]
        %v1708 = vld [vmem:[%s23] sm:$0x3]
        %v1710 = vlaneseq
        %v1711 = vshrl.u32 %v1710, 7
        %v1712 = vsub.s32 0, %v1711
        %v1713 = vrot.slane %v1708, %v1712
        %v1714 = vlaneseq
        %v1715 = vshrl.u32 %v1714, 7
        %v1716 = vsub.s32 1, %v1715
        %v1717 = vrot.slane %v1708, %v1716
        %v1752 = vunpack.c.l.b16 %v1676
        %v1753 = vunpack.c.h.b16 %v1676
        %v1754 = vunpack.c.l.b16 %v1677
        %v1755 = vunpack.c.h.b16 %v1677
        %v1756 = vunpack.c.l.b16 %v1678
        %v1757 = vunpack.c.h.b16 %v1678
        %v1758 = vunpack.c.l.b16 %v1679
        %v1759 = vunpack.c.h.b16 %v1679
        %v1760 = vunpack.c.l.b16 %v1680
        %v1761 = vunpack.c.h.b16 %v1680
        %v1762 = vunpack.c.l.b16 %v1681
        %v1763 = vunpack.c.h.b16 %v1681
        %v1764 = vunpack.c.l.b16 %v1682
        %v1765 = vunpack.c.h.b16 %v1682
        %v1766 = vunpack.c.l.b16 %v1683
        %v1767 = vunpack.c.h.b16 %v1683
        %v1768 = vunpack.c.l.b16 %v1684
        %v1769 = vunpack.c.h.b16 %v1684
        %v1770 = vunpack.c.l.b16 %v1685
        %v1771 = vunpack.c.h.b16 %v1685
        %v1772 = vunpack.c.l.b16 %v1686
        %v1773 = vunpack.c.h.b16 %v1686
        %v1774 = vunpack.c.l.b16 %v1687
        %v1775 = vunpack.c.h.b16 %v1687
        %v1776 = vunpack.c.l.b16 %v1688
        %v1777 = vunpack.c.h.b16 %v1688
        %v1778 = vunpack.c.l.b16 %v1689
        %v1779 = vunpack.c.h.b16 %v1689
        %v1780 = vunpack.c.l.b16 %v1690
        %v1781 = vunpack.c.h.b16 %v1690
        %v1782 = vunpack.c.l.b16 %v1691
        %v1783 = vunpack.c.h.b16 %v1691
        %v1784 = vunpack.c.l.b16 %v1692
        %v1785 = vunpack.c.h.b16 %v1692
        %v1786 = vunpack.c.l.b16 %v1693
        %v1787 = vunpack.c.h.b16 %v1693
        %v1788 = vunpack.c.l.b16 %v1694
        %v1789 = vunpack.c.h.b16 %v1694
        %v1790 = vunpack.c.l.b16 %v1695
        %v1791 = vunpack.c.h.b16 %v1695
        %v1792 = vunpack.c.l.b16 %v1696
        %v1793 = vunpack.c.h.b16 %v1696
        %v1794 = vunpack.c.l.b16 %v1697
        %v1795 = vunpack.c.h.b16 %v1697
        %v1796 = vunpack.c.l.b16 %v1698
        %v1797 = vunpack.c.h.b16 %v1698
        %v1798 = vunpack.c.l.b16 %v1699
        %v1799 = vunpack.c.h.b16 %v1699
        %v1800 = vunpack.c.l.b16 %v1700
        %v1801 = vunpack.c.h.b16 %v1700
        %v1802 = vunpack.c.l.b16 %v1701
        %v1803 = vunpack.c.h.b16 %v1701
        %v1804 = vunpack.c.l.b16 %v1702
        %v1805 = vunpack.c.h.b16 %v1702
        %v1806 = vunpack.c.l.b16 %v1703
        %v1807 = vunpack.c.h.b16 %v1703
        %v1808 = vunpack.c.l.b16 %v1704
        %v1809 = vunpack.c.h.b16 %v1704
        %v1810 = vunpack.c.l.b16 %v1705
        %v1811 = vunpack.c.h.b16 %v1705
        %v1812 = vunpack.c.l.b16 %v1706
        %v1813 = vunpack.c.h.b16 %v1706
        %v1814 = vunpack.c.l.b16 %v1707
        %v1815 = vunpack.c.h.b16 %v1707
        %v1816 = vpack.c.b16 %v1754, %v1752
        %v1817 = vpack.c.b16 %v1755, %v1753
        %v1818 = vpack.c.b16 %v1758, %v1756
        %v1819 = vpack.c.b16 %v1759, %v1757
        %v1820 = vpack.c.b16 %v1762, %v1760
        %v1821 = vpack.c.b16 %v1763, %v1761
        %v1822 = vpack.c.b16 %v1766, %v1764
        %v1823 = vpack.c.b16 %v1767, %v1765
        %v1824 = vpack.c.b16 %v1770, %v1768
        %v1825 = vpack.c.b16 %v1771, %v1769
        %v1826 = vpack.c.b16 %v1774, %v1772
        %v1827 = vpack.c.b16 %v1775, %v1773
        %v1828 = vpack.c.b16 %v1778, %v1776
        %v1829 = vpack.c.b16 %v1779, %v1777
        %v1830 = vpack.c.b16 %v1782, %v1780
        %v1831 = vpack.c.b16 %v1783, %v1781
        %v1832 = vpack.c.b16 %v1786, %v1784
        %v1833 = vpack.c.b16 %v1787, %v1785
        %v1834 = vpack.c.b16 %v1790, %v1788
        %v1835 = vpack.c.b16 %v1791, %v1789
        %v1836 = vpack.c.b16 %v1794, %v1792
        %v1837 = vpack.c.b16 %v1795, %v1793
        %v1838 = vpack.c.b16 %v1798, %v1796
        %v1839 = vpack.c.b16 %v1799, %v1797
        %v1840 = vpack.c.b16 %v1802, %v1800
        %v1841 = vpack.c.b16 %v1803, %v1801
        %v1842 = vpack.c.b16 %v1806, %v1804
        %v1843 = vpack.c.b16 %v1807, %v1805
        %v1844 = vpack.c.b16 %v1810, %v1808
        %v1845 = vpack.c.b16 %v1811, %v1809
        %v1846 = vpack.c.b16 %v1814, %v1812
        %v1847 = vpack.c.b16 %v1815, %v1813
        %1880 = vmatprep.subr.bf16.mxu0 %v1817
        %1881 = vmatpush1.bf16.msra.mxu0 %v1816
        %1882 = vmatprep.subr.bf16.mxu0 %v1819
        %1883 = vmatpush1.bf16.msra.mxu0 %v1818
        %1884 = vmatprep.subr.bf16.mxu0 %v1821
        %1885 = vmatpush1.bf16.msra.mxu0 %v1820
        %1886 = vmatprep.subr.bf16.mxu0 %v1823
        %1887 = vmatpush1.bf16.msra.mxu0 %v1822
        %1888 = vmatprep.subr.bf16.mxu0 %v1825
        %1889 = vmatpush1.bf16.msra.mxu0 %v1824
        %1890 = vmatprep.subr.bf16.mxu0 %v1827
        %1891 = vmatpush1.bf16.msra.mxu0 %v1826
        %1892 = vmatprep.subr.bf16.mxu0 %v1829
        %1893 = vmatpush1.bf16.msra.mxu0 %v1828
        %1894 = vmatprep.subr.bf16.mxu0 %v1831
        %1895 = vmatpush1.bf16.msra.mxu0 %v1830
        %1896 = vmatprep.subr.bf16.mxu0 %v1833
        %1897 = vmatpush1.bf16.msra.mxu0 %v1832
        %1898 = vmatprep.subr.bf16.mxu0 %v1835
        %1899 = vmatpush1.bf16.msra.mxu0 %v1834
        %1900 = vmatprep.subr.bf16.mxu0 %v1837
        %1901 = vmatpush1.bf16.msra.mxu0 %v1836
        %1902 = vmatprep.subr.bf16.mxu0 %v1839
        %1903 = vmatpush1.bf16.msra.mxu0 %v1838
        %1904 = vmatprep.subr.bf16.mxu0 %v1841
        %1905 = vmatpush1.bf16.msra.mxu0 %v1840
        %1906 = vmatprep.subr.bf16.mxu0 %v1843
        %1907 = vmatpush1.bf16.msra.mxu0 %v1842
        %1908 = vmatprep.subr.bf16.mxu0 %v1845
        %1909 = vmatpush1.bf16.msra.mxu0 %v1844
        %1910 = vmatprep.subr.bf16.mxu0 %v1847
        %1911 = vmatpush1.bf16.msra.mxu0 %v1846
        %1912 = vmatprep.mubr.bf16.mxu0 %v1185
        %1913 = vmatmul.mubr.bf16.gmra.mrb[0].mxu0 %v1184
        %v1914 = vpop.f32.mrb[0].mxu0
        %v1915 = vadd.f32 %v1713, %v1914
        %v1916 = vpop.f32.mrb[0].mxu0
        %v1917 = vadd.f32 %v1717, %v1916
        %v1918 = vpop.f32.mrb[0].mxu0
        %v1919 = vpop.f32.mrb[0].mxu0
        %1920 = vdwg.mxu0
        %v1921 = vpack.c.bf16 %v1425, %v1425
        %v1922 = vpack.c.bf16 %v1670, %v1670
        %v1923 = vpack.c.bf16 %v1915, %v1915
        %1924 = vmatprep.subr.bf16.mxu0 0
        %1925 = vmatpush1.bf16.xpose.msra.mxu0 %v1922
        %1926 = vmatprep.subr.bf16.mxu0 0
        %1927 = vmatpush1.bf16.xpose.msra.mxu0 0
        %1928 = vmatprep.subr.bf16.mxu0 0
        %1929 = vmatpush1.bf16.xpose.msra.mxu0 0
        %1930 = vmatprep.subr.bf16.mxu0 0
        %1931 = vmatpush1.bf16.xpose.msra.mxu0 0
        %1932 = vmatprep.subr.bf16.mxu0 0
        %1933 = vmatpush1.bf16.xpose.msra.mxu0 0
        %1934 = vmatprep.subr.bf16.mxu0 0
        %1935 = vmatpush1.bf16.xpose.msra.mxu0 0
        %1936 = vmatprep.subr.bf16.mxu0 0
        %1937 = vmatpush1.bf16.xpose.msra.mxu0 0
        %1938 = vmatprep.subr.bf16.mxu0 0
        %1939 = vmatpush1.bf16.xpose.msra.mxu0 0
        %1940 = vmatprep.subr.bf16.mxu0 0
        %1941 = vmatpush1.bf16.xpose.msra.mxu0 0
        %1942 = vmatprep.subr.bf16.mxu0 0
        %1943 = vmatpush1.bf16.xpose.msra.mxu0 0
        %1944 = vmatprep.subr.bf16.mxu0 0
        %1945 = vmatpush1.bf16.xpose.msra.mxu0 0
        %1946 = vmatprep.subr.bf16.mxu0 0
        %1947 = vmatpush1.bf16.xpose.msra.mxu0 0
        %1948 = vmatprep.subr.bf16.mxu0 0
        %1949 = vmatpush1.bf16.xpose.msra.mxu0 0
        %1950 = vmatprep.subr.bf16.mxu0 0
        %1951 = vmatpush1.bf16.xpose.msra.mxu0 0
        %1952 = vmatprep.subr.bf16.mxu0 0
        %1953 = vmatpush1.bf16.xpose.msra.mxu0 0
        %1954 = vmatprep.subr.bf16.mxu0 0
        %1955 = vmatpush1.bf16.xpose.msra.mxu0 0
        %1956 = vmatprep.mubr.bf16.mxu0 0
        %1957 = vmatmul.mubr.bf16.gmra.mrb[0].mxu0 %v1921
        %v1958 = vpop.f32.mrb[0].mxu0
        %v1959 = vadd.f32 0.0, %v1958
        %v1960 = vpop.f32.mrb[0].mxu0
        %v1961 = vpop.f32.mrb[0].mxu0
        %v1962 = vpop.f32.mrb[0].mxu0
        %1963 = vdwg.mxu0
        %v1964 = vsel %vm1136, 16843009, 0
        %v1965 = vunpack.c.0.s8 %v1964
        %vm1966 = vcmp.ne.s32.totalorder %v1965, 0
        %v1967 = vsel %vm1966, %v1959, -1e+09
        %vm1968 = vcmask 64512
        %v1969 = vsel %vm1968, %v1967, -inf
        %1970 = vmax.xlane.f32.xlu0 %v1969
        %v1971 = vpop.xlane.xlu0 %1970
        %v1972 = vsub.f32 %v1967, %v1971
        %v1973 = vmul.f32 %v1972, 1.442695
        %v1974 = vpow.pop %v1973
        %v1975 = vsel %vm1968, %v1974, 0.0
        %1976 = vadd.xlane.f32.xlu0 %v1975
        %v1977 = vpop.xlane.xlu0 %1976
        %v1978 = vrcp.pop %v1977
        %v1979 = vmul.f32 %v1974, %v1978
        %v1980 = vpack.c.bf16 %v1979, %v1979
        %v1982 = vsel %vm1968, %v1980, 0
        %vm1984 = vcmask 1043456
        %v1986 = vsel %vm1984, %v1923, 0
        %1988 = vmatprep.subr.bf16.mxu0 0
        %1989 = vmatpush1.bf16.msra.mxu0 %v1986
        %1990 = vmatprep.subr.bf16.mxu0 0
        %1991 = vmatpush1.bf16.msra.mxu0 0
        %1992 = vmatprep.subr.bf16.mxu0 0
        %1993 = vmatpush1.bf16.msra.mxu0 0
        %1994 = vmatprep.subr.bf16.mxu0 0
        %1995 = vmatpush1.bf16.msra.mxu0 0
        %1996 = vmatprep.subr.bf16.mxu0 0
        %1997 = vmatpush1.bf16.msra.mxu0 0
        %1998 = vmatprep.subr.bf16.mxu0 0
        %1999 = vmatpush1.bf16.msra.mxu0 0
        %2000 = vmatprep.subr.bf16.mxu0 0
        %2001 = vmatpush1.bf16.msra.mxu0 0
        %2002 = vmatprep.subr.bf16.mxu0 0
        %2003 = vmatpush1.bf16.msra.mxu0 0
        %2004 = vmatprep.subr.bf16.mxu0 0
        %2005 = vmatpush1.bf16.msra.mxu0 0
        %2006 = vmatprep.subr.bf16.mxu0 0
        %2007 = vmatpush1.bf16.msra.mxu0 0
        %2008 = vmatprep.subr.bf16.mxu0 0
        %2009 = vmatpush1.bf16.msra.mxu0 0
        %2010 = vmatprep.subr.bf16.mxu0 0
        %2011 = vmatpush1.bf16.msra.mxu0 0
        %2012 = vmatprep.subr.bf16.mxu0 0
        %2013 = vmatpush1.bf16.msra.mxu0 0
        %2014 = vmatprep.subr.bf16.mxu0 0
        %2015 = vmatpush1.bf16.msra.mxu0 0
        %2016 = vmatprep.subr.bf16.mxu0 0
        %2017 = vmatpush1.bf16.msra.mxu0 0
        %2018 = vmatprep.subr.bf16.mxu0 0
        %2019 = vmatpush1.bf16.msra.mxu0 0
        %2020 = vmatprep.mubr.bf16.mxu0 0
        %2021 = vmatmul.mubr.bf16.gmra.mrb[0].mxu0 %v1982
        %v2022 = vpop.f32.mrb[0].mxu0
        %v2023 = vadd.f32 0.0, %v2022
        %v2024 = vpop.f32.mrb[0].mxu0
        %v2025 = vpop.f32.mrb[0].mxu0
        %v2026 = vpop.f32.mrb[0].mxu0
        %2027 = vdwg.mxu0
        %v2028 = vpack.c.bf16 %v2023, %v2023
        %v2029 = vld [vmem:[#allocation10] sm:$0xff]
        %v2030 = vld [vmem:[#allocation10 + $0x8] sm:$0xff]
        %v2031 = vld [vmem:[#allocation10 + $0x10] sm:$0xff]
        %v2032 = vld [vmem:[#allocation10 + $0x18] sm:$0xff]
        %v2033 = vld [vmem:[#allocation10 + $0x20] sm:$0xff]
        %v2034 = vld [vmem:[#allocation10 + $0x28] sm:$0xff]
        %v2035 = vld [vmem:[#allocation10 + $0x30] sm:$0xff]
        %v2036 = vld [vmem:[#allocation10 + $0x38] sm:$0xff]
        %v2037 = vld [vmem:[#allocation10 + $0x40] sm:$0xff]
        %v2038 = vld [vmem:[#allocation10 + $0x48] sm:$0xff]
        %v2039 = vld [vmem:[#allocation10 + $0x50] sm:$0xff]
        %v2040 = vld [vmem:[#allocation10 + $0x58] sm:$0xff]
        %v2041 = vld [vmem:[#allocation10 + $0x60] sm:$0xff]
        %v2042 = vld [vmem:[#allocation10 + $0x68] sm:$0xff]
        %v2043 = vld [vmem:[#allocation10 + $0x70] sm:$0xff]
        %v2044 = vld [vmem:[#allocation10 + $0x78] sm:$0xff]
        %v2045 = vpack.c.bf16 %v1427, %v1427
        %v2046 = vpack.c.bf16 %v1672, %v1672
        %v2047 = vpack.c.bf16 %v1917, %v1917
        %2048 = vmatprep.subr.bf16.mxu0 0
        %2049 = vmatpush1.bf16.xpose.msra.mxu0 %v2046
        %2050 = vmatprep.subr.bf16.mxu0 0
        %2051 = vmatpush1.bf16.xpose.msra.mxu0 0
        %2052 = vmatprep.subr.bf16.mxu0 0
        %2053 = vmatpush1.bf16.xpose.msra.mxu0 0
        %2054 = vmatprep.subr.bf16.mxu0 0
        %2055 = vmatpush1.bf16.xpose.msra.mxu0 0
        %2056 = vmatprep.subr.bf16.mxu0 0
        %2057 = vmatpush1.bf16.xpose.msra.mxu0 0
        %2058 = vmatprep.subr.bf16.mxu0 0
        %2059 = vmatpush1.bf16.xpose.msra.mxu0 0
        %2060 = vmatprep.subr.bf16.mxu0 0
        %2061 = vmatpush1.bf16.xpose.msra.mxu0 0
        %2062 = vmatprep.subr.bf16.mxu0 0
        %2063 = vmatpush1.bf16.xpose.msra.mxu0 0
        %2064 = vmatprep.subr.bf16.mxu0 0
        %2065 = vmatpush1.bf16.xpose.msra.mxu0 0
        %2066 = vmatprep.subr.bf16.mxu0 0
        %2067 = vmatpush1.bf16.xpose.msra.mxu0 0
        %2068 = vmatprep.subr.bf16.mxu0 0
        %2069 = vmatpush1.bf16.xpose.msra.mxu0 0
        %2070 = vmatprep.subr.bf16.mxu0 0
        %2071 = vmatpush1.bf16.xpose.msra.mxu0 0
        %2072 = vmatprep.subr.bf16.mxu0 0
        %2073 = vmatpush1.bf16.xpose.msra.mxu0 0
        %2074 = vmatprep.subr.bf16.mxu0 0
        %2075 = vmatpush1.bf16.xpose.msra.mxu0 0
        %2076 = vmatprep.subr.bf16.mxu0 0
        %2077 = vmatpush1.bf16.xpose.msra.mxu0 0
        %2078 = vmatprep.subr.bf16.mxu0 0
        %2079 = vmatpush1.bf16.xpose.msra.mxu0 0
        %2080 = vmatprep.mubr.bf16.mxu0 0
        %2081 = vmatmul.mubr.bf16.gmra.mrb[0].mxu0 %v2045
        %v2082 = vpop.f32.mrb[0].mxu0
        %v2083 = vadd.f32 0.0, %v2082
        %v2084 = vpop.f32.mrb[0].mxu0
        %v2085 = vpop.f32.mrb[0].mxu0
        %v2086 = vpop.f32.mrb[0].mxu0
        %2087 = vdwg.mxu0
        %v2088 = vsel %vm1966, %v2083, -1e+09
        %v2089 = vsel %vm1968, %v2088, -inf
        %2090 = vmax.xlane.f32.xlu0 %v2089
        %v2091 = vpop.xlane.xlu0 %2090
        %v2092 = vsub.f32 %v2088, %v2091
        %v2093 = vmul.f32 %v2092, 1.442695
        %v2094 = vpow.pop %v2093
        %v2095 = vsel %vm1968, %v2094, 0.0
        %2096 = vadd.xlane.f32.xlu0 %v2095
        %v2097 = vpop.xlane.xlu0 %2096
        %v2098 = vrcp.pop %v2097
        %v2099 = vmul.f32 %v2094, %v2098
        %v2100 = vpack.c.bf16 %v2099, %v2099
        %v2102 = vsel %vm1968, %v2100, 0
        %v2105 = vsel %vm1984, %v2047, 0
        %2107 = vmatprep.subr.bf16.mxu0 0
        %2108 = vmatpush1.bf16.msra.mxu0 %v2105
        %2109 = vmatprep.subr.bf16.mxu0 0
        %2110 = vmatpush1.bf16.msra.mxu0 0
        %2111 = vmatprep.subr.bf16.mxu0 0
        %2112 = vmatpush1.bf16.msra.mxu0 0
        %2113 = vmatprep.subr.bf16.mxu0 0
        %2114 = vmatpush1.bf16.msra.mxu0 0
        %2115 = vmatprep.subr.bf16.mxu0 0
        %2116 = vmatpush1.bf16.msra.mxu0 0
        %2117 = vmatprep.subr.bf16.mxu0 0
        %2118 = vmatpush1.bf16.msra.mxu0 0
        %2119 = vmatprep.subr.bf16.mxu0 0
        %2120 = vmatpush1.bf16.msra.mxu0 0
        %2121 = vmatprep.subr.bf16.mxu0 0
        %2122 = vmatpush1.bf16.msra.mxu0 0
        %2123 = vmatprep.subr.bf16.mxu0 0
        %2124 = vmatpush1.bf16.msra.mxu0 0
        %2125 = vmatprep.subr.bf16.mxu0 0
        %2126 = vmatpush1.bf16.msra.mxu0 0
        %2127 = vmatprep.subr.bf16.mxu0 0
        %2128 = vmatpush1.bf16.msra.mxu0 0
        %2129 = vmatprep.subr.bf16.mxu0 0
        %2130 = vmatpush1.bf16.msra.mxu0 0
        %2131 = vmatprep.subr.bf16.mxu0 0
        %2132 = vmatpush1.bf16.msra.mxu0 0
        %2133 = vmatprep.subr.bf16.mxu0 0
        %2134 = vmatpush1.bf16.msra.mxu0 0
        %2135 = vmatprep.subr.bf16.mxu0 0
        %2136 = vmatpush1.bf16.msra.mxu0 0
        %2137 = vmatprep.subr.bf16.mxu0 0
        %2138 = vmatpush1.bf16.msra.mxu0 0
        %2139 = vmatprep.mubr.bf16.mxu0 0
        %2140 = vmatmul.mubr.bf16.gmra.mrb[0].mxu0 %v2102
        %v2141 = vpop.f32.mrb[0].mxu0
        %v2142 = vadd.f32 0.0, %v2141
        %v2143 = vpop.f32.mrb[0].mxu0
        %v2144 = vpop.f32.mrb[0].mxu0
        %v2145 = vpop.f32.mrb[0].mxu0
        %2146 = vdwg.mxu0
        %v2147 = vpack.c.bf16 %v2142, %v2142
        %v2148 = vld [vmem:[#allocation10 + $0x80] sm:$0xff]
        %v2149 = vld [vmem:[#allocation10 + $0x88] sm:$0xff]
        %v2150 = vld [vmem:[#allocation10 + $0x90] sm:$0xff]
        %v2151 = vld [vmem:[#allocation10 + $0x98] sm:$0xff]
        %v2152 = vld [vmem:[#allocation10 + $0xa0] sm:$0xff]
        %v2153 = vld [vmem:[#allocation10 + $0xa8] sm:$0xff]
        %v2154 = vld [vmem:[#allocation10 + $0xb0] sm:$0xff]
        %v2155 = vld [vmem:[#allocation10 + $0xb8] sm:$0xff]
        %v2156 = vld [vmem:[#allocation10 + $0xc0] sm:$0xff]
        %v2157 = vld [vmem:[#allocation10 + $0xc8] sm:$0xff]
        %v2158 = vld [vmem:[#allocation10 + $0xd0] sm:$0xff]
        %v2159 = vld [vmem:[#allocation10 + $0xd8] sm:$0xff]
        %v2160 = vld [vmem:[#allocation10 + $0xe0] sm:$0xff]
        %v2161 = vld [vmem:[#allocation10 + $0xe8] sm:$0xff]
        %v2162 = vld [vmem:[#allocation10 + $0xf0] sm:$0xff]
        %v2163 = vld [vmem:[#allocation10 + $0xf8] sm:$0xff]
        %v2180 = vunpack.c.l.b16 %v2148
        %v2181 = vunpack.c.h.b16 %v2148
        %v2182 = vunpack.c.l.b16 %v2149
        %v2183 = vunpack.c.h.b16 %v2149
        %v2184 = vunpack.c.l.b16 %v2150
        %v2185 = vunpack.c.h.b16 %v2150
        %v2186 = vunpack.c.l.b16 %v2151
        %v2187 = vunpack.c.h.b16 %v2151
        %v2188 = vunpack.c.l.b16 %v2152
        %v2189 = vunpack.c.h.b16 %v2152
        %v2190 = vunpack.c.l.b16 %v2153
        %v2191 = vunpack.c.h.b16 %v2153
        %v2192 = vunpack.c.l.b16 %v2154
        %v2193 = vunpack.c.h.b16 %v2154
        %v2194 = vunpack.c.l.b16 %v2155
        %v2195 = vunpack.c.h.b16 %v2155
        %v2196 = vunpack.c.l.b16 %v2156
        %v2197 = vunpack.c.h.b16 %v2156
        %v2198 = vunpack.c.l.b16 %v2157
        %v2199 = vunpack.c.h.b16 %v2157
        %v2200 = vunpack.c.l.b16 %v2158
        %v2201 = vunpack.c.h.b16 %v2158
        %v2202 = vunpack.c.l.b16 %v2159
        %v2203 = vunpack.c.h.b16 %v2159
        %v2204 = vunpack.c.l.b16 %v2160
        %v2205 = vunpack.c.h.b16 %v2160
        %v2206 = vunpack.c.l.b16 %v2161
        %v2207 = vunpack.c.h.b16 %v2161
        %v2208 = vunpack.c.l.b16 %v2162
        %v2209 = vunpack.c.h.b16 %v2162
        %v2210 = vunpack.c.l.b16 %v2163
        %v2211 = vunpack.c.h.b16 %v2163
        %v2212 = vpack.c.b16 %v2182, %v2180
        %v2213 = vpack.c.b16 %v2183, %v2181
        %v2214 = vpack.c.b16 %v2186, %v2184
        %v2215 = vpack.c.b16 %v2187, %v2185
        %v2216 = vpack.c.b16 %v2190, %v2188
        %v2217 = vpack.c.b16 %v2191, %v2189
        %v2218 = vpack.c.b16 %v2194, %v2192
        %v2219 = vpack.c.b16 %v2195, %v2193
        %v2220 = vpack.c.b16 %v2198, %v2196
        %v2221 = vpack.c.b16 %v2199, %v2197
        %v2222 = vpack.c.b16 %v2202, %v2200
        %v2223 = vpack.c.b16 %v2203, %v2201
        %v2224 = vpack.c.b16 %v2206, %v2204
        %v2225 = vpack.c.b16 %v2207, %v2205
        %v2226 = vpack.c.b16 %v2210, %v2208
        %v2227 = vpack.c.b16 %v2211, %v2209
        %2244 = vmatprep.subr.bf16.mxu0 %v2213
        %2245 = vmatpush1.bf16.msra.mxu0 %v2212
        %2246 = vmatprep.subr.bf16.mxu0 %v2215
        %2247 = vmatpush1.bf16.msra.mxu0 %v2214
        %2248 = vmatprep.subr.bf16.mxu0 %v2217
        %2249 = vmatpush1.bf16.msra.mxu0 %v2216
        %2250 = vmatprep.subr.bf16.mxu0 %v2219
        %2251 = vmatpush1.bf16.msra.mxu0 %v2218
        %2252 = vmatprep.subr.bf16.mxu0 %v2221
        %2253 = vmatpush1.bf16.msra.mxu0 %v2220
        %2254 = vmatprep.subr.bf16.mxu0 %v2223
        %2255 = vmatpush1.bf16.msra.mxu0 %v2222
        %2256 = vmatprep.subr.bf16.mxu0 %v2225
        %2257 = vmatpush1.bf16.msra.mxu0 %v2224
        %2258 = vmatprep.subr.bf16.mxu0 %v2227
        %2259 = vmatpush1.bf16.msra.mxu0 %v2226
        %2260 = vmatprep.subr.bf16.mxu0 0
        %2261 = vmatpush1.bf16.msra.mxu0 0
        %2262 = vmatprep.subr.bf16.mxu0 0
        %2263 = vmatpush1.bf16.msra.mxu0 0
        %2264 = vmatprep.subr.bf16.mxu0 0
        %2265 = vmatpush1.bf16.msra.mxu0 0
        %2266 = vmatprep.subr.bf16.mxu0 0
        %2267 = vmatpush1.bf16.msra.mxu0 0
        %2268 = vmatprep.subr.bf16.mxu0 0
        %2269 = vmatpush1.bf16.msra.mxu0 0
        %2270 = vmatprep.subr.bf16.mxu0 0
        %2271 = vmatpush1.bf16.msra.mxu0 0
        %2272 = vmatprep.subr.bf16.mxu0 0
        %2273 = vmatpush1.bf16.msra.mxu0 0
        %2274 = vmatprep.subr.bf16.mxu0 0
        %2275 = vmatpush1.bf16.msra.mxu0 0
        %2276 = vmatprep.mubr.bf16.mxu0 0
        %2277 = vmatmul.mubr.bf16.gmra.mrb[0].mxu0 %v2147
        %v2278 = vpop.f32.mrb[0].mxu0
        %v2279 = vadd.f32 0.0, %v2278
        %v2280 = vpop.f32.mrb[0].mxu0
        %v2281 = vadd.f32 0.0, %v2280
        %v2282 = vpop.f32.mrb[0].mxu0
        %v2283 = vpop.f32.mrb[0].mxu0
        %2284 = vdwg.mxu0
        %v2301 = vunpack.c.l.b16 %v2029
        %v2302 = vunpack.c.h.b16 %v2029
        %v2303 = vunpack.c.l.b16 %v2030
        %v2304 = vunpack.c.h.b16 %v2030
        %v2305 = vunpack.c.l.b16 %v2031
        %v2306 = vunpack.c.h.b16 %v2031
        %v2307 = vunpack.c.l.b16 %v2032
        %v2308 = vunpack.c.h.b16 %v2032
        %v2309 = vunpack.c.l.b16 %v2033
        %v2310 = vunpack.c.h.b16 %v2033
        %v2311 = vunpack.c.l.b16 %v2034
        %v2312 = vunpack.c.h.b16 %v2034
        %v2313 = vunpack.c.l.b16 %v2035
        %v2314 = vunpack.c.h.b16 %v2035
        %v2315 = vunpack.c.l.b16 %v2036
        %v2316 = vunpack.c.h.b16 %v2036
        %v2317 = vunpack.c.l.b16 %v2037
        %v2318 = vunpack.c.h.b16 %v2037
        %v2319 = vunpack.c.l.b16 %v2038
        %v2320 = vunpack.c.h.b16 %v2038
        %v2321 = vunpack.c.l.b16 %v2039
        %v2322 = vunpack.c.h.b16 %v2039
        %v2323 = vunpack.c.l.b16 %v2040
        %v2324 = vunpack.c.h.b16 %v2040
        %v2325 = vunpack.c.l.b16 %v2041
        %v2326 = vunpack.c.h.b16 %v2041
        %v2327 = vunpack.c.l.b16 %v2042
        %v2328 = vunpack.c.h.b16 %v2042
        %v2329 = vunpack.c.l.b16 %v2043
        %v2330 = vunpack.c.h.b16 %v2043
        %v2331 = vunpack.c.l.b16 %v2044
        %v2332 = vunpack.c.h.b16 %v2044
        %v2333 = vpack.c.b16 %v2303, %v2301
        %v2334 = vpack.c.b16 %v2304, %v2302
        %v2335 = vpack.c.b16 %v2307, %v2305
        %v2336 = vpack.c.b16 %v2308, %v2306
        %v2337 = vpack.c.b16 %v2311, %v2309
        %v2338 = vpack.c.b16 %v2312, %v2310
        %v2339 = vpack.c.b16 %v2315, %v2313
        %v2340 = vpack.c.b16 %v2316, %v2314
        %v2341 = vpack.c.b16 %v2319, %v2317
        %v2342 = vpack.c.b16 %v2320, %v2318
        %v2343 = vpack.c.b16 %v2323, %v2321
        %v2344 = vpack.c.b16 %v2324, %v2322
        %v2345 = vpack.c.b16 %v2327, %v2325
        %v2346 = vpack.c.b16 %v2328, %v2326
        %v2347 = vpack.c.b16 %v2331, %v2329
        %v2348 = vpack.c.b16 %v2332, %v2330
        %2365 = vmatprep.subr.bf16.mxu0 %v2334
        %2366 = vmatpush1.bf16.msra.mxu0 %v2333
        %2367 = vmatprep.subr.bf16.mxu0 %v2336
        %2368 = vmatpush1.bf16.msra.mxu0 %v2335
        %2369 = vmatprep.subr.bf16.mxu0 %v2338
        %2370 = vmatpush1.bf16.msra.mxu0 %v2337
        %2371 = vmatprep.subr.bf16.mxu0 %v2340
        %2372 = vmatpush1.bf16.msra.mxu0 %v2339
        %2373 = vmatprep.subr.bf16.mxu0 %v2342
        %2374 = vmatpush1.bf16.msra.mxu0 %v2341
        %2375 = vmatprep.subr.bf16.mxu0 %v2344
        %2376 = vmatpush1.bf16.msra.mxu0 %v2343
        %2377 = vmatprep.subr.bf16.mxu0 %v2346
        %2378 = vmatpush1.bf16.msra.mxu0 %v2345
        %2379 = vmatprep.subr.bf16.mxu0 %v2348
        %2380 = vmatpush1.bf16.msra.mxu0 %v2347
        %2381 = vmatprep.subr.bf16.mxu0 0
        %2382 = vmatpush1.bf16.msra.mxu0 0
        %2383 = vmatprep.subr.bf16.mxu0 0
        %2384 = vmatpush1.bf16.msra.mxu0 0
        %2385 = vmatprep.subr.bf16.mxu0 0
        %2386 = vmatpush1.bf16.msra.mxu0 0
        %2387 = vmatprep.subr.bf16.mxu0 0
        %2388 = vmatpush1.bf16.msra.mxu0 0
        %2389 = vmatprep.subr.bf16.mxu0 0
        %2390 = vmatpush1.bf16.msra.mxu0 0
        %2391 = vmatprep.subr.bf16.mxu0 0
        %2392 = vmatpush1.bf16.msra.mxu0 0
        %2393 = vmatprep.subr.bf16.mxu0 0
        %2394 = vmatpush1.bf16.msra.mxu0 0
        %2395 = vmatprep.subr.bf16.mxu0 0
        %2396 = vmatpush1.bf16.msra.mxu0 0
        %2397 = vmatprep.mubr.bf16.mxu0 0
        %2398 = vmatmul.mubr.bf16.gmra.mrb[0].mxu0 %v2028
        %v2399 = vpop.f32.mrb[0].mxu0
        %v2400 = vadd.f32 %v2279, %v2399
        %v2401 = vpop.f32.mrb[0].mxu0
        %v2402 = vadd.f32 %v2281, %v2401
        %v2403 = vpop.f32.mrb[0].mxu0
        %v2404 = vpop.f32.mrb[0].mxu0
        %2405 = vdwg.mxu0
        %v2406 = vld [vmem:[%s27] sm:$0x3]
        %v2408 = vlaneseq
        %v2409 = vshrl.u32 %v2408, 7
        %v2410 = vsub.s32 0, %v2409
        %v2411 = vrot.slane %v2406, %v2410
        %v2412 = vlaneseq
        %v2413 = vshrl.u32 %v2412, 7
        %v2414 = vsub.s32 1, %v2413
        %v2415 = vrot.slane %v2406, %v2414
        %v2418 = vadd.f32 %v2400, %v2411
        %v2419 = vadd.f32 %v2402, %v2415
        %v2420 = vadd.f32 %v1129, %v2418
        %v2421 = vadd.f32 %v1130, %v2419
        %v2422 = vld [vmem:[%s29] sm:$0x3]
        %v2423 = vld [vmem:[%s31] sm:$0x3]
        %v2424 = vadd.f32 %v2420, %v2421
        %2425 = vadd.xlane.f32.xlu0 %v2424
        %v2426 = vpop.xlane.xlu0 %2425
        %v2427 = vmul.f32 %v2426, %v1144
        %v2428 = vsub.f32 %v2420, %v2427
        %v2429 = vsub.f32 %v2421, %v2427
        %v2430 = vmul.f32 %v2428, %v2428
        %v2431 = vmul.f32 %v2429, %v2429
        %v2432 = vadd.f32 %v2430, %v2431
        %2433 = vadd.xlane.f32.xlu0 %v2432
        %v2434 = vpop.xlane.xlu0 %2433
        %v2435 = vmul.f32 %v2434, %v1144
        %v2436 = vadd.f32 %v2435, 1e-05
        %v2437 = vrsqrt.pop %v2436
        %v2438 = vmul.f32 %v2428, %v2437
        %v2439 = vmul.f32 %v2429, %v2437
        %v2441 = vlaneseq
        %v2442 = vshrl.u32 %v2441, 7
        %v2443 = vsub.s32 0, %v2442
        %v2444 = vrot.slane %v2422, %v2443
        %v2445 = vlaneseq
        %v2446 = vshrl.u32 %v2445, 7
        %v2447 = vsub.s32 1, %v2446
        %v2448 = vrot.slane %v2422, %v2447
        %v2451 = vmul.f32 %v2438, %v2444
        %v2452 = vmul.f32 %v2439, %v2448
        %v2454 = vlaneseq
        %v2455 = vshrl.u32 %v2454, 7
        %v2456 = vsub.s32 0, %v2455
        %v2457 = vrot.slane %v2423, %v2456
        %v2458 = vlaneseq
        %v2459 = vshrl.u32 %v2458, 7
        %v2460 = vsub.s32 1, %v2459
        %v2461 = vrot.slane %v2423, %v2460
        %v2464 = vadd.f32 %v2451, %v2457
        %v2465 = vadd.f32 %v2452, %v2461
        %v2466 = vpack.c.bf16 %v2464, %v2464
        %v2467 = vpack.c.bf16 %v2465, %v2465
        %v2468 = vpack.c.bf16 %v1133, %v1131
        %v2469 = vpack.c.bf16 %v1134, %v1132
        %v2470 = vld [vmem:[#allocation11] sm:$0xff]
        %v2471 = vld [vmem:[#allocation11 + $0x8] sm:$0xff]
        %v2472 = vld [vmem:[#allocation11 + $0x10] sm:$0xff]
        %v2473 = vld [vmem:[#allocation11 + $0x18] sm:$0xff]
        %v2474 = vld [vmem:[#allocation11 + $0x20] sm:$0xff]
        %v2475 = vld [vmem:[#allocation11 + $0x28] sm:$0xff]
        %v2476 = vld [vmem:[#allocation11 + $0x30] sm:$0xff]
        %v2477 = vld [vmem:[#allocation11 + $0x38] sm:$0xff]
        %v2478 = vld [vmem:[#allocation11 + $0x40] sm:$0xff]
        %v2479 = vld [vmem:[#allocation11 + $0x48] sm:$0xff]
        %v2480 = vld [vmem:[#allocation11 + $0x50] sm:$0xff]
        %v2481 = vld [vmem:[#allocation11 + $0x58] sm:$0xff]
        %v2482 = vld [vmem:[#allocation11 + $0x60] sm:$0xff]
        %v2483 = vld [vmem:[#allocation11 + $0x68] sm:$0xff]
        %v2484 = vld [vmem:[#allocation11 + $0x70] sm:$0xff]
        %v2485 = vld [vmem:[#allocation11 + $0x78] sm:$0xff]
        %v2486 = vld [vmem:[#allocation11 + $0x80] sm:$0xff]
        %v2487 = vld [vmem:[#allocation11 + $0x88] sm:$0xff]
        %v2488 = vld [vmem:[#allocation11 + $0x90] sm:$0xff]
        %v2489 = vld [vmem:[#allocation11 + $0x98] sm:$0xff]
        %v2490 = vld [vmem:[#allocation11 + $0xa0] sm:$0xff]
        %v2491 = vld [vmem:[#allocation11 + $0xa8] sm:$0xff]
        %v2492 = vld [vmem:[#allocation11 + $0xb0] sm:$0xff]
        %v2493 = vld [vmem:[#allocation11 + $0xb8] sm:$0xff]
        %v2494 = vld [vmem:[#allocation11 + $0xc0] sm:$0xff]
        %v2495 = vld [vmem:[#allocation11 + $0xc8] sm:$0xff]
        %v2496 = vld [vmem:[#allocation11 + $0xd0] sm:$0xff]
        %v2497 = vld [vmem:[#allocation11 + $0xd8] sm:$0xff]
        %v2498 = vld [vmem:[#allocation11 + $0xe0] sm:$0xff]
        %v2499 = vld [vmem:[#allocation11 + $0xe8] sm:$0xff]
        %v2500 = vld [vmem:[#allocation11 + $0xf0] sm:$0xff]
        %v2501 = vld [vmem:[#allocation11 + $0xf8] sm:$0xff]
        %v2502 = vld [vmem:[%s35] sm:$0x3]
        %v2504 = vlaneseq
        %v2505 = vshrl.u32 %v2504, 7
        %v2506 = vsub.s32 0, %v2505
        %v2507 = vrot.slane %v2502, %v2506
        %v2508 = vlaneseq
        %v2509 = vshrl.u32 %v2508, 7
        %v2510 = vsub.s32 1, %v2509
        %v2511 = vrot.slane %v2502, %v2510
        %v2546 = vunpack.c.l.b16 %v2470
        %v2547 = vunpack.c.h.b16 %v2470
        %v2548 = vunpack.c.l.b16 %v2471
        %v2549 = vunpack.c.h.b16 %v2471
        %v2550 = vunpack.c.l.b16 %v2472
        %v2551 = vunpack.c.h.b16 %v2472
        %v2552 = vunpack.c.l.b16 %v2473
        %v2553 = vunpack.c.h.b16 %v2473
        %v2554 = vunpack.c.l.b16 %v2474
        %v2555 = vunpack.c.h.b16 %v2474
        %v2556 = vunpack.c.l.b16 %v2475
        %v2557 = vunpack.c.h.b16 %v2475
        %v2558 = vunpack.c.l.b16 %v2476
        %v2559 = vunpack.c.h.b16 %v2476
        %v2560 = vunpack.c.l.b16 %v2477
        %v2561 = vunpack.c.h.b16 %v2477
        %v2562 = vunpack.c.l.b16 %v2478
        %v2563 = vunpack.c.h.b16 %v2478
        %v2564 = vunpack.c.l.b16 %v2479
        %v2565 = vunpack.c.h.b16 %v2479
        %v2566 = vunpack.c.l.b16 %v2480
        %v2567 = vunpack.c.h.b16 %v2480
        %v2568 = vunpack.c.l.b16 %v2481
        %v2569 = vunpack.c.h.b16 %v2481
        %v2570 = vunpack.c.l.b16 %v2482
        %v2571 = vunpack.c.h.b16 %v2482
        %v2572 = vunpack.c.l.b16 %v2483
        %v2573 = vunpack.c.h.b16 %v2483
        %v2574 = vunpack.c.l.b16 %v2484
        %v2575 = vunpack.c.h.b16 %v2484
        %v2576 = vunpack.c.l.b16 %v2485
        %v2577 = vunpack.c.h.b16 %v2485
        %v2578 = vunpack.c.l.b16 %v2486
        %v2579 = vunpack.c.h.b16 %v2486
        %v2580 = vunpack.c.l.b16 %v2487
        %v2581 = vunpack.c.h.b16 %v2487
        %v2582 = vunpack.c.l.b16 %v2488
        %v2583 = vunpack.c.h.b16 %v2488
        %v2584 = vunpack.c.l.b16 %v2489
        %v2585 = vunpack.c.h.b16 %v2489
        %v2586 = vunpack.c.l.b16 %v2490
        %v2587 = vunpack.c.h.b16 %v2490
        %v2588 = vunpack.c.l.b16 %v2491
        %v2589 = vunpack.c.h.b16 %v2491
        %v2590 = vunpack.c.l.b16 %v2492
        %v2591 = vunpack.c.h.b16 %v2492
        %v2592 = vunpack.c.l.b16 %v2493
        %v2593 = vunpack.c.h.b16 %v2493
        %v2594 = vunpack.c.l.b16 %v2494
        %v2595 = vunpack.c.h.b16 %v2494
        %v2596 = vunpack.c.l.b16 %v2495
        %v2597 = vunpack.c.h.b16 %v2495
        %v2598 = vunpack.c.l.b16 %v2496
        %v2599 = vunpack.c.h.b16 %v2496
        %v2600 = vunpack.c.l.b16 %v2497
        %v2601 = vunpack.c.h.b16 %v2497
        %v2602 = vunpack.c.l.b16 %v2498
        %v2603 = vunpack.c.h.b16 %v2498
        %v2604 = vunpack.c.l.b16 %v2499
        %v2605 = vunpack.c.h.b16 %v2499
        %v2606 = vunpack.c.l.b16 %v2500
        %v2607 = vunpack.c.h.b16 %v2500
        %v2608 = vunpack.c.l.b16 %v2501
        %v2609 = vunpack.c.h.b16 %v2501
        %v2610 = vpack.c.b16 %v2548, %v2546
        %v2611 = vpack.c.b16 %v2549, %v2547
        %v2612 = vpack.c.b16 %v2552, %v2550
        %v2613 = vpack.c.b16 %v2553, %v2551
        %v2614 = vpack.c.b16 %v2556, %v2554
        %v2615 = vpack.c.b16 %v2557, %v2555
        %v2616 = vpack.c.b16 %v2560, %v2558
        %v2617 = vpack.c.b16 %v2561, %v2559
        %v2618 = vpack.c.b16 %v2564, %v2562
        %v2619 = vpack.c.b16 %v2565, %v2563
        %v2620 = vpack.c.b16 %v2568, %v2566
        %v2621 = vpack.c.b16 %v2569, %v2567
        %v2622 = vpack.c.b16 %v2572, %v2570
        %v2623 = vpack.c.b16 %v2573, %v2571
        %v2624 = vpack.c.b16 %v2576, %v2574
        %v2625 = vpack.c.b16 %v2577, %v2575
        %v2626 = vpack.c.b16 %v2580, %v2578
        %v2627 = vpack.c.b16 %v2581, %v2579
        %v2628 = vpack.c.b16 %v2584, %v2582
        %v2629 = vpack.c.b16 %v2585, %v2583
        %v2630 = vpack.c.b16 %v2588, %v2586
        %v2631 = vpack.c.b16 %v2589, %v2587
        %v2632 = vpack.c.b16 %v2592, %v2590
        %v2633 = vpack.c.b16 %v2593, %v2591
        %v2634 = vpack.c.b16 %v2596, %v2594
        %v2635 = vpack.c.b16 %v2597, %v2595
        %v2636 = vpack.c.b16 %v2600, %v2598
        %v2637 = vpack.c.b16 %v2601, %v2599
        %v2638 = vpack.c.b16 %v2604, %v2602
        %v2639 = vpack.c.b16 %v2605, %v2603
        %v2640 = vpack.c.b16 %v2608, %v2606
        %v2641 = vpack.c.b16 %v2609, %v2607
        %2674 = vmatprep.subr.bf16.mxu0 %v2611
        %2675 = vmatpush1.bf16.msra.mxu0 %v2610
        %2676 = vmatprep.subr.bf16.mxu0 %v2613
        %2677 = vmatpush1.bf16.msra.mxu0 %v2612
        %2678 = vmatprep.subr.bf16.mxu0 %v2615
        %2679 = vmatpush1.bf16.msra.mxu0 %v2614
        %2680 = vmatprep.subr.bf16.mxu0 %v2617
        %2681 = vmatpush1.bf16.msra.mxu0 %v2616
        %2682 = vmatprep.subr.bf16.mxu0 %v2619
        %2683 = vmatpush1.bf16.msra.mxu0 %v2618
        %2684 = vmatprep.subr.bf16.mxu0 %v2621
        %2685 = vmatpush1.bf16.msra.mxu0 %v2620
        %2686 = vmatprep.subr.bf16.mxu0 %v2623
        %2687 = vmatpush1.bf16.msra.mxu0 %v2622
        %2688 = vmatprep.subr.bf16.mxu0 %v2625
        %2689 = vmatpush1.bf16.msra.mxu0 %v2624
        %2690 = vmatprep.subr.bf16.mxu0 %v2627
        %2691 = vmatpush1.bf16.msra.mxu0 %v2626
        %2692 = vmatprep.subr.bf16.mxu0 %v2629
        %2693 = vmatpush1.bf16.msra.mxu0 %v2628
        %2694 = vmatprep.subr.bf16.mxu0 %v2631
        %2695 = vmatpush1.bf16.msra.mxu0 %v2630
        %2696 = vmatprep.subr.bf16.mxu0 %v2633
        %2697 = vmatpush1.bf16.msra.mxu0 %v2632
        %2698 = vmatprep.subr.bf16.mxu0 %v2635
        %2699 = vmatpush1.bf16.msra.mxu0 %v2634
        %2700 = vmatprep.subr.bf16.mxu0 %v2637
        %2701 = vmatpush1.bf16.msra.mxu0 %v2636
        %2702 = vmatprep.subr.bf16.mxu0 %v2639
        %2703 = vmatpush1.bf16.msra.mxu0 %v2638
        %2704 = vmatprep.subr.bf16.mxu0 %v2641
        %2705 = vmatpush1.bf16.msra.mxu0 %v2640
        %2706 = vmatprep.mubr.bf16.mxu0 %v2467
        %2707 = vmatmul.mubr.bf16.gmra.mrb[0].mxu0 %v2466
        %v2708 = vpop.f32.mrb[0].mxu0
        %v2709 = vadd.f32 %v2507, %v2708
        %v2710 = vpop.f32.mrb[0].mxu0
        %v2711 = vadd.f32 %v2511, %v2710
        %v2712 = vpop.f32.mrb[0].mxu0
        %v2713 = vpop.f32.mrb[0].mxu0
        %2714 = vdwg.mxu0
        %v2715 = vld [vmem:[#allocation13] sm:$0xff]
        %v2716 = vld [vmem:[#allocation13 + $0x8] sm:$0xff]
        %v2717 = vld [vmem:[#allocation13 + $0x10] sm:$0xff]
        %v2718 = vld [vmem:[#allocation13 + $0x18] sm:$0xff]
        %v2719 = vld [vmem:[#allocation13 + $0x20] sm:$0xff]
        %v2720 = vld [vmem:[#allocation13 + $0x28] sm:$0xff]
        %v2721 = vld [vmem:[#allocation13 + $0x30] sm:$0xff]
        %v2722 = vld [vmem:[#allocation13 + $0x38] sm:$0xff]
        %v2723 = vld [vmem:[#allocation13 + $0x40] sm:$0xff]
        %v2724 = vld [vmem:[#allocation13 + $0x48] sm:$0xff]
        %v2725 = vld [vmem:[#allocation13 + $0x50] sm:$0xff]
        %v2726 = vld [vmem:[#allocation13 + $0x58] sm:$0xff]
        %v2727 = vld [vmem:[#allocation13 + $0x60] sm:$0xff]
        %v2728 = vld [vmem:[#allocation13 + $0x68] sm:$0xff]
        %v2729 = vld [vmem:[#allocation13 + $0x70] sm:$0xff]
        %v2730 = vld [vmem:[#allocation13 + $0x78] sm:$0xff]
        %v2731 = vld [vmem:[#allocation13 + $0x80] sm:$0xff]
        %v2732 = vld [vmem:[#allocation13 + $0x88] sm:$0xff]
        %v2733 = vld [vmem:[#allocation13 + $0x90] sm:$0xff]
        %v2734 = vld [vmem:[#allocation13 + $0x98] sm:$0xff]
        %v2735 = vld [vmem:[#allocation13 + $0xa0] sm:$0xff]
        %v2736 = vld [vmem:[#allocation13 + $0xa8] sm:$0xff]
        %v2737 = vld [vmem:[#allocation13 + $0xb0] sm:$0xff]
        %v2738 = vld [vmem:[#allocation13 + $0xb8] sm:$0xff]
        %v2739 = vld [vmem:[#allocation13 + $0xc0] sm:$0xff]
        %v2740 = vld [vmem:[#allocation13 + $0xc8] sm:$0xff]
        %v2741 = vld [vmem:[#allocation13 + $0xd0] sm:$0xff]
        %v2742 = vld [vmem:[#allocation13 + $0xd8] sm:$0xff]
        %v2743 = vld [vmem:[#allocation13 + $0xe0] sm:$0xff]
        %v2744 = vld [vmem:[#allocation13 + $0xe8] sm:$0xff]
        %v2745 = vld [vmem:[#allocation13 + $0xf0] sm:$0xff]
        %v2746 = vld [vmem:[#allocation13 + $0xf8] sm:$0xff]
        %v2747 = vld [vmem:[%s39] sm:$0x3]
        %v2749 = vlaneseq
        %v2750 = vshrl.u32 %v2749, 7
        %v2751 = vsub.s32 0, %v2750
        %v2752 = vrot.slane %v2747, %v2751
        %v2753 = vlaneseq
        %v2754 = vshrl.u32 %v2753, 7
        %v2755 = vsub.s32 1, %v2754
        %v2756 = vrot.slane %v2747, %v2755
        %v2791 = vunpack.c.l.b16 %v2715
        %v2792 = vunpack.c.h.b16 %v2715
        %v2793 = vunpack.c.l.b16 %v2716
        %v2794 = vunpack.c.h.b16 %v2716
        %v2795 = vunpack.c.l.b16 %v2717
        %v2796 = vunpack.c.h.b16 %v2717
        %v2797 = vunpack.c.l.b16 %v2718
        %v2798 = vunpack.c.h.b16 %v2718
        %v2799 = vunpack.c.l.b16 %v2719
        %v2800 = vunpack.c.h.b16 %v2719
        %v2801 = vunpack.c.l.b16 %v2720
        %v2802 = vunpack.c.h.b16 %v2720
        %v2803 = vunpack.c.l.b16 %v2721
        %v2804 = vunpack.c.h.b16 %v2721
        %v2805 = vunpack.c.l.b16 %v2722
        %v2806 = vunpack.c.h.b16 %v2722
        %v2807 = vunpack.c.l.b16 %v2723
        %v2808 = vunpack.c.h.b16 %v2723
        %v2809 = vunpack.c.l.b16 %v2724
        %v2810 = vunpack.c.h.b16 %v2724
        %v2811 = vunpack.c.l.b16 %v2725
        %v2812 = vunpack.c.h.b16 %v2725
        %v2813 = vunpack.c.l.b16 %v2726
        %v2814 = vunpack.c.h.b16 %v2726
        %v2815 = vunpack.c.l.b16 %v2727
        %v2816 = vunpack.c.h.b16 %v2727
        %v2817 = vunpack.c.l.b16 %v2728
        %v2818 = vunpack.c.h.b16 %v2728
        %v2819 = vunpack.c.l.b16 %v2729
        %v2820 = vunpack.c.h.b16 %v2729
        %v2821 = vunpack.c.l.b16 %v2730
        %v2822 = vunpack.c.h.b16 %v2730
        %v2823 = vunpack.c.l.b16 %v2731
        %v2824 = vunpack.c.h.b16 %v2731
        %v2825 = vunpack.c.l.b16 %v2732
        %v2826 = vunpack.c.h.b16 %v2732
        %v2827 = vunpack.c.l.b16 %v2733
        %v2828 = vunpack.c.h.b16 %v2733
        %v2829 = vunpack.c.l.b16 %v2734
        %v2830 = vunpack.c.h.b16 %v2734
        %v2831 = vunpack.c.l.b16 %v2735
        %v2832 = vunpack.c.h.b16 %v2735
        %v2833 = vunpack.c.l.b16 %v2736
        %v2834 = vunpack.c.h.b16 %v2736
        %v2835 = vunpack.c.l.b16 %v2737
        %v2836 = vunpack.c.h.b16 %v2737
        %v2837 = vunpack.c.l.b16 %v2738
        %v2838 = vunpack.c.h.b16 %v2738
        %v2839 = vunpack.c.l.b16 %v2739
        %v2840 = vunpack.c.h.b16 %v2739
        %v2841 = vunpack.c.l.b16 %v2740
        %v2842 = vunpack.c.h.b16 %v2740
        %v2843 = vunpack.c.l.b16 %v2741
        %v2844 = vunpack.c.h.b16 %v2741
        %v2845 = vunpack.c.l.b16 %v2742
        %v2846 = vunpack.c.h.b16 %v2742
        %v2847 = vunpack.c.l.b16 %v2743
        %v2848 = vunpack.c.h.b16 %v2743
        %v2849 = vunpack.c.l.b16 %v2744
        %v2850 = vunpack.c.h.b16 %v2744
        %v2851 = vunpack.c.l.b16 %v2745
        %v2852 = vunpack.c.h.b16 %v2745
        %v2853 = vunpack.c.l.b16 %v2746
        %v2854 = vunpack.c.h.b16 %v2746
        %v2855 = vpack.c.b16 %v2793, %v2791
        %v2856 = vpack.c.b16 %v2794, %v2792
        %v2857 = vpack.c.b16 %v2797, %v2795
        %v2858 = vpack.c.b16 %v2798, %v2796
        %v2859 = vpack.c.b16 %v2801, %v2799
        %v2860 = vpack.c.b16 %v2802, %v2800
        %v2861 = vpack.c.b16 %v2805, %v2803
        %v2862 = vpack.c.b16 %v2806, %v2804
        %v2863 = vpack.c.b16 %v2809, %v2807
        %v2864 = vpack.c.b16 %v2810, %v2808
        %v2865 = vpack.c.b16 %v2813, %v2811
        %v2866 = vpack.c.b16 %v2814, %v2812
        %v2867 = vpack.c.b16 %v2817, %v2815
        %v2868 = vpack.c.b16 %v2818, %v2816
        %v2869 = vpack.c.b16 %v2821, %v2819
        %v2870 = vpack.c.b16 %v2822, %v2820
        %v2871 = vpack.c.b16 %v2825, %v2823
        %v2872 = vpack.c.b16 %v2826, %v2824
        %v2873 = vpack.c.b16 %v2829, %v2827
        %v2874 = vpack.c.b16 %v2830, %v2828
        %v2875 = vpack.c.b16 %v2833, %v2831
        %v2876 = vpack.c.b16 %v2834, %v2832
        %v2877 = vpack.c.b16 %v2837, %v2835
        %v2878 = vpack.c.b16 %v2838, %v2836
        %v2879 = vpack.c.b16 %v2841, %v2839
        %v2880 = vpack.c.b16 %v2842, %v2840
        %v2881 = vpack.c.b16 %v2845, %v2843
        %v2882 = vpack.c.b16 %v2846, %v2844
        %v2883 = vpack.c.b16 %v2849, %v2847
        %v2884 = vpack.c.b16 %v2850, %v2848
        %v2885 = vpack.c.b16 %v2853, %v2851
        %v2886 = vpack.c.b16 %v2854, %v2852
        %2919 = vmatprep.subr.bf16.mxu0 %v2856
        %2920 = vmatpush1.bf16.msra.mxu0 %v2855
        %2921 = vmatprep.subr.bf16.mxu0 %v2858
        %2922 = vmatpush1.bf16.msra.mxu0 %v2857
        %2923 = vmatprep.subr.bf16.mxu0 %v2860
        %2924 = vmatpush1.bf16.msra.mxu0 %v2859
        %2925 = vmatprep.subr.bf16.mxu0 %v2862
        %2926 = vmatpush1.bf16.msra.mxu0 %v2861
        %2927 = vmatprep.subr.bf16.mxu0 %v2864
        %2928 = vmatpush1.bf16.msra.mxu0 %v2863
        %2929 = vmatprep.subr.bf16.mxu0 %v2866
        %2930 = vmatpush1.bf16.msra.mxu0 %v2865
        %2931 = vmatprep.subr.bf16.mxu0 %v2868
        %2932 = vmatpush1.bf16.msra.mxu0 %v2867
        %2933 = vmatprep.subr.bf16.mxu0 %v2870
        %2934 = vmatpush1.bf16.msra.mxu0 %v2869
        %2935 = vmatprep.subr.bf16.mxu0 %v2872
        %2936 = vmatpush1.bf16.msra.mxu0 %v2871
        %2937 = vmatprep.subr.bf16.mxu0 %v2874
        %2938 = vmatpush1.bf16.msra.mxu0 %v2873
        %2939 = vmatprep.subr.bf16.mxu0 %v2876
        %2940 = vmatpush1.bf16.msra.mxu0 %v2875
        %2941 = vmatprep.subr.bf16.mxu0 %v2878
        %2942 = vmatpush1.bf16.msra.mxu0 %v2877
        %2943 = vmatprep.subr.bf16.mxu0 %v2880
        %2944 = vmatpush1.bf16.msra.mxu0 %v2879
        %2945 = vmatprep.subr.bf16.mxu0 %v2882
        %2946 = vmatpush1.bf16.msra.mxu0 %v2881
        %2947 = vmatprep.subr.bf16.mxu0 %v2884
        %2948 = vmatpush1.bf16.msra.mxu0 %v2883
        %2949 = vmatprep.subr.bf16.mxu0 %v2886
        %2950 = vmatpush1.bf16.msra.mxu0 %v2885
        %2951 = vmatprep.mubr.bf16.mxu0 %v2469
        %2952 = vmatmul.mubr.bf16.gmra.mrb[0].mxu0 %v2468
        %v2953 = vpop.f32.mrb[0].mxu0
        %v2954 = vadd.f32 %v2752, %v2953
        %v2955 = vpop.f32.mrb[0].mxu0
        %v2956 = vadd.f32 %v2756, %v2955
        %v2957 = vpop.f32.mrb[0].mxu0
        %v2958 = vadd.f32 %v2752, %v2957
        %v2959 = vpop.f32.mrb[0].mxu0
        %v2960 = vadd.f32 %v2756, %v2959
        %2961 = vdwg.mxu0
        %v2962 = vld [vmem:[#allocation14] sm:$0xff]
        %v2963 = vld [vmem:[#allocation14 + $0x8] sm:$0xff]
        %v2964 = vld [vmem:[#allocation14 + $0x10] sm:$0xff]
        %v2965 = vld [vmem:[#allocation14 + $0x18] sm:$0xff]
        %v2966 = vld [vmem:[#allocation14 + $0x20] sm:$0xff]
        %v2967 = vld [vmem:[#allocation14 + $0x28] sm:$0xff]
        %v2968 = vld [vmem:[#allocation14 + $0x30] sm:$0xff]
        %v2969 = vld [vmem:[#allocation14 + $0x38] sm:$0xff]
        %v2970 = vld [vmem:[#allocation14 + $0x40] sm:$0xff]
        %v2971 = vld [vmem:[#allocation14 + $0x48] sm:$0xff]
        %v2972 = vld [vmem:[#allocation14 + $0x50] sm:$0xff]
        %v2973 = vld [vmem:[#allocation14 + $0x58] sm:$0xff]
        %v2974 = vld [vmem:[#allocation14 + $0x60] sm:$0xff]
        %v2975 = vld [vmem:[#allocation14 + $0x68] sm:$0xff]
        %v2976 = vld [vmem:[#allocation14 + $0x70] sm:$0xff]
        %v2977 = vld [vmem:[#allocation14 + $0x78] sm:$0xff]
        %v2978 = vld [vmem:[#allocation14 + $0x80] sm:$0xff]
        %v2979 = vld [vmem:[#allocation14 + $0x88] sm:$0xff]
        %v2980 = vld [vmem:[#allocation14 + $0x90] sm:$0xff]
        %v2981 = vld [vmem:[#allocation14 + $0x98] sm:$0xff]
        %v2982 = vld [vmem:[#allocation14 + $0xa0] sm:$0xff]
        %v2983 = vld [vmem:[#allocation14 + $0xa8] sm:$0xff]
        %v2984 = vld [vmem:[#allocation14 + $0xb0] sm:$0xff]
        %v2985 = vld [vmem:[#allocation14 + $0xb8] sm:$0xff]
        %v2986 = vld [vmem:[#allocation14 + $0xc0] sm:$0xff]
        %v2987 = vld [vmem:[#allocation14 + $0xc8] sm:$0xff]
        %v2988 = vld [vmem:[#allocation14 + $0xd0] sm:$0xff]
        %v2989 = vld [vmem:[#allocation14 + $0xd8] sm:$0xff]
        %v2990 = vld [vmem:[#allocation14 + $0xe0] sm:$0xff]
        %v2991 = vld [vmem:[#allocation14 + $0xe8] sm:$0xff]
        %v2992 = vld [vmem:[#allocation14 + $0xf0] sm:$0xff]
        %v2993 = vld [vmem:[#allocation14 + $0xf8] sm:$0xff]
        %v2994 = vld [vmem:[%s43] sm:$0x3]
        %v2996 = vlaneseq
        %v2997 = vshrl.u32 %v2996, 7
        %v2998 = vsub.s32 0, %v2997
        %v2999 = vrot.slane %v2994, %v2998
        %v3000 = vlaneseq
        %v3001 = vshrl.u32 %v3000, 7
        %v3002 = vsub.s32 1, %v3001
        %v3003 = vrot.slane %v2994, %v3002
        %v3038 = vunpack.c.l.b16 %v2962
        %v3039 = vunpack.c.h.b16 %v2962
        %v3040 = vunpack.c.l.b16 %v2963
        %v3041 = vunpack.c.h.b16 %v2963
        %v3042 = vunpack.c.l.b16 %v2964
        %v3043 = vunpack.c.h.b16 %v2964
        %v3044 = vunpack.c.l.b16 %v2965
        %v3045 = vunpack.c.h.b16 %v2965
        %v3046 = vunpack.c.l.b16 %v2966
        %v3047 = vunpack.c.h.b16 %v2966
        %v3048 = vunpack.c.l.b16 %v2967
        %v3049 = vunpack.c.h.b16 %v2967
        %v3050 = vunpack.c.l.b16 %v2968
        %v3051 = vunpack.c.h.b16 %v2968
        %v3052 = vunpack.c.l.b16 %v2969
        %v3053 = vunpack.c.h.b16 %v2969
        %v3054 = vunpack.c.l.b16 %v2970
        %v3055 = vunpack.c.h.b16 %v2970
        %v3056 = vunpack.c.l.b16 %v2971
        %v3057 = vunpack.c.h.b16 %v2971
        %v3058 = vunpack.c.l.b16 %v2972
        %v3059 = vunpack.c.h.b16 %v2972
        %v3060 = vunpack.c.l.b16 %v2973
        %v3061 = vunpack.c.h.b16 %v2973
        %v3062 = vunpack.c.l.b16 %v2974
        %v3063 = vunpack.c.h.b16 %v2974
        %v3064 = vunpack.c.l.b16 %v2975
        %v3065 = vunpack.c.h.b16 %v2975
        %v3066 = vunpack.c.l.b16 %v2976
        %v3067 = vunpack.c.h.b16 %v2976
        %v3068 = vunpack.c.l.b16 %v2977
        %v3069 = vunpack.c.h.b16 %v2977
        %v3070 = vunpack.c.l.b16 %v2978
        %v3071 = vunpack.c.h.b16 %v2978
        %v3072 = vunpack.c.l.b16 %v2979
        %v3073 = vunpack.c.h.b16 %v2979
        %v3074 = vunpack.c.l.b16 %v2980
        %v3075 = vunpack.c.h.b16 %v2980
        %v3076 = vunpack.c.l.b16 %v2981
        %v3077 = vunpack.c.h.b16 %v2981
        %v3078 = vunpack.c.l.b16 %v2982
        %v3079 = vunpack.c.h.b16 %v2982
        %v3080 = vunpack.c.l.b16 %v2983
        %v3081 = vunpack.c.h.b16 %v2983
        %v3082 = vunpack.c.l.b16 %v2984
        %v3083 = vunpack.c.h.b16 %v2984
        %v3084 = vunpack.c.l.b16 %v2985
        %v3085 = vunpack.c.h.b16 %v2985
        %v3086 = vunpack.c.l.b16 %v2986
        %v3087 = vunpack.c.h.b16 %v2986
        %v3088 = vunpack.c.l.b16 %v2987
        %v3089 = vunpack.c.h.b16 %v2987
        %v3090 = vunpack.c.l.b16 %v2988
        %v3091 = vunpack.c.h.b16 %v2988
        %v3092 = vunpack.c.l.b16 %v2989
        %v3093 = vunpack.c.h.b16 %v2989
        %v3094 = vunpack.c.l.b16 %v2990
        %v3095 = vunpack.c.h.b16 %v2990
        %v3096 = vunpack.c.l.b16 %v2991
        %v3097 = vunpack.c.h.b16 %v2991
        %v3098 = vunpack.c.l.b16 %v2992
        %v3099 = vunpack.c.h.b16 %v2992
        %v3100 = vunpack.c.l.b16 %v2993
        %v3101 = vunpack.c.h.b16 %v2993
        %v3102 = vpack.c.b16 %v3040, %v3038
        %v3103 = vpack.c.b16 %v3041, %v3039
        %v3104 = vpack.c.b16 %v3044, %v3042
        %v3105 = vpack.c.b16 %v3045, %v3043
        %v3106 = vpack.c.b16 %v3048, %v3046
        %v3107 = vpack.c.b16 %v3049, %v3047
        %v3108 = vpack.c.b16 %v3052, %v3050
        %v3109 = vpack.c.b16 %v3053, %v3051
        %v3110 = vpack.c.b16 %v3056, %v3054
        %v3111 = vpack.c.b16 %v3057, %v3055
        %v3112 = vpack.c.b16 %v3060, %v3058
        %v3113 = vpack.c.b16 %v3061, %v3059
        %v3114 = vpack.c.b16 %v3064, %v3062
        %v3115 = vpack.c.b16 %v3065, %v3063
        %v3116 = vpack.c.b16 %v3068, %v3066
        %v3117 = vpack.c.b16 %v3069, %v3067
        %v3118 = vpack.c.b16 %v3072, %v3070
        %v3119 = vpack.c.b16 %v3073, %v3071
        %v3120 = vpack.c.b16 %v3076, %v3074
        %v3121 = vpack.c.b16 %v3077, %v3075
        %v3122 = vpack.c.b16 %v3080, %v3078
        %v3123 = vpack.c.b16 %v3081, %v3079
        %v3124 = vpack.c.b16 %v3084, %v3082
        %v3125 = vpack.c.b16 %v3085, %v3083
        %v3126 = vpack.c.b16 %v3088, %v3086
        %v3127 = vpack.c.b16 %v3089, %v3087
        %v3128 = vpack.c.b16 %v3092, %v3090
        %v3129 = vpack.c.b16 %v3093, %v3091
        %v3130 = vpack.c.b16 %v3096, %v3094
        %v3131 = vpack.c.b16 %v3097, %v3095
        %v3132 = vpack.c.b16 %v3100, %v3098
        %v3133 = vpack.c.b16 %v3101, %v3099
        %3166 = vmatprep.subr.bf16.mxu0 %v3103
        %3167 = vmatpush1.bf16.msra.mxu0 %v3102
        %3168 = vmatprep.subr.bf16.mxu0 %v3105
        %3169 = vmatpush1.bf16.msra.mxu0 %v3104
        %3170 = vmatprep.subr.bf16.mxu0 %v3107
        %3171 = vmatpush1.bf16.msra.mxu0 %v3106
        %3172 = vmatprep.subr.bf16.mxu0 %v3109
        %3173 = vmatpush1.bf16.msra.mxu0 %v3108
        %3174 = vmatprep.subr.bf16.mxu0 %v3111
        %3175 = vmatpush1.bf16.msra.mxu0 %v3110
        %3176 = vmatprep.subr.bf16.mxu0 %v3113
        %3177 = vmatpush1.bf16.msra.mxu0 %v3112
        %3178 = vmatprep.subr.bf16.mxu0 %v3115
        %3179 = vmatpush1.bf16.msra.mxu0 %v3114
        %3180 = vmatprep.subr.bf16.mxu0 %v3117
        %3181 = vmatpush1.bf16.msra.mxu0 %v3116
        %3182 = vmatprep.subr.bf16.mxu0 %v3119
        %3183 = vmatpush1.bf16.msra.mxu0 %v3118
        %3184 = vmatprep.subr.bf16.mxu0 %v3121
        %3185 = vmatpush1.bf16.msra.mxu0 %v3120
        %3186 = vmatprep.subr.bf16.mxu0 %v3123
        %3187 = vmatpush1.bf16.msra.mxu0 %v3122
        %3188 = vmatprep.subr.bf16.mxu0 %v3125
        %3189 = vmatpush1.bf16.msra.mxu0 %v3124
        %3190 = vmatprep.subr.bf16.mxu0 %v3127
        %3191 = vmatpush1.bf16.msra.mxu0 %v3126
        %3192 = vmatprep.subr.bf16.mxu0 %v3129
        %3193 = vmatpush1.bf16.msra.mxu0 %v3128
        %3194 = vmatprep.subr.bf16.mxu0 %v3131
        %3195 = vmatpush1.bf16.msra.mxu0 %v3130
        %3196 = vmatprep.subr.bf16.mxu0 %v3133
        %3197 = vmatpush1.bf16.msra.mxu0 %v3132
        %3198 = vmatprep.mubr.bf16.mxu0 %v2469
        %3199 = vmatmul.mubr.bf16.gmra.mrb[0].mxu0 %v2468
        %v3200 = vpop.f32.mrb[0].mxu0
        %v3201 = vadd.f32 %v2999, %v3200
        %v3202 = vpop.f32.mrb[0].mxu0
        %v3203 = vadd.f32 %v3003, %v3202
        %v3204 = vpop.f32.mrb[0].mxu0
        %v3205 = vadd.f32 %v2999, %v3204
        %v3206 = vpop.f32.mrb[0].mxu0
        %v3207 = vadd.f32 %v3003, %v3206
        %3208 = vdwg.mxu0
        %v3209 = vpack.c.bf16 %v2709, %v2709
        %v3210 = vpack.c.bf16 %v2958, %v2954
        %v3211 = vpack.c.bf16 %v3205, %v3201
        %3212 = vmatprep.subr.bf16.mxu0 0
        %3213 = vmatpush1.bf16.xpose.msra.mxu0 %v3210
        %3214 = vmatprep.subr.bf16.mxu0 0
        %3215 = vmatpush1.bf16.xpose.msra.mxu0 0
        %3216 = vmatprep.subr.bf16.mxu0 0
        %3217 = vmatpush1.bf16.xpose.msra.mxu0 0
        %3218 = vmatprep.subr.bf16.mxu0 0
        %3219 = vmatpush1.bf16.xpose.msra.mxu0 0
        %3220 = vmatprep.subr.bf16.mxu0 0
        %3221 = vmatpush1.bf16.xpose.msra.mxu0 0
        %3222 = vmatprep.subr.bf16.mxu0 0
        %3223 = vmatpush1.bf16.xpose.msra.mxu0 0
        %3224 = vmatprep.subr.bf16.mxu0 0
        %3225 = vmatpush1.bf16.xpose.msra.mxu0 0
        %3226 = vmatprep.subr.bf16.mxu0 0
        %3227 = vmatpush1.bf16.xpose.msra.mxu0 0
        %3228 = vmatprep.subr.bf16.mxu0 0
        %3229 = vmatpush1.bf16.xpose.msra.mxu0 0
        %3230 = vmatprep.subr.bf16.mxu0 0
        %3231 = vmatpush1.bf16.xpose.msra.mxu0 0
        %3232 = vmatprep.subr.bf16.mxu0 0
        %3233 = vmatpush1.bf16.xpose.msra.mxu0 0
        %3234 = vmatprep.subr.bf16.mxu0 0
        %3235 = vmatpush1.bf16.xpose.msra.mxu0 0
        %3236 = vmatprep.subr.bf16.mxu0 0
        %3237 = vmatpush1.bf16.xpose.msra.mxu0 0
        %3238 = vmatprep.subr.bf16.mxu0 0
        %3239 = vmatpush1.bf16.xpose.msra.mxu0 0
        %3240 = vmatprep.subr.bf16.mxu0 0
        %3241 = vmatpush1.bf16.xpose.msra.mxu0 0
        %3242 = vmatprep.subr.bf16.mxu0 0
        %3243 = vmatpush1.bf16.xpose.msra.mxu0 0
        %3244 = vmatprep.mubr.bf16.mxu0 0
        %3245 = vmatmul.mubr.bf16.gmra.mrb[0].mxu0 %v3209
        %v3246 = vpop.f32.mrb[0].mxu0
        %v3247 = vadd.f32 0.0, %v3246
        %v3248 = vpop.f32.mrb[0].mxu0
        %v3249 = vpop.f32.mrb[0].mxu0
        %v3250 = vpop.f32.mrb[0].mxu0
        %3251 = vdwg.mxu0
        %v3252 = vsel %vm1138, 16843009, 0
        %v3253 = vunpack.c.0.s8 %v3252
        %vm3254 = vcmp.ne.s32.totalorder %v3253, 0
        %v3255 = vsel %vm3254, 1, 0
        %v3256 = vlaneseq
        %v3257 = vshrl.u32 %v3256, 7
        %v3258 = vsub.s32 0, %v3257
        %v3259 = vrot.slane %v3255, %v3258
        %vm3260 = vcmp.eq.s32.totalorder %v3259, 1
        %v3261 = vsel %vm3260, %v3247, -1e+09
        %vm3262 = vcmask 130048
        %v3263 = vsel %vm3262, %v3261, -inf
        %3264 = vmax.xlane.f32.xlu0 %v3263
        %v3265 = vpop.xlane.xlu0 %3264
        %v3266 = vsub.f32 %v3261, %v3265
        %v3267 = vmul.f32 %v3266, 1.442695
        %v3268 = vpow.pop %v3267
        %v3269 = vsel %vm3262, %v3268, 0.0
        %3270 = vadd.xlane.f32.xlu0 %v3269
        %v3271 = vpop.xlane.xlu0 %3270
        %v3272 = vrcp.pop %v3271
        %v3273 = vmul.f32 %v3268, %v3272
        %v3274 = vpack.c.bf16 %v3273, %v3273
        %v3276 = vsel %vm3262, %v3274, 0
        %3278 = vmatprep.subr.bf16.mxu0 0
        %3279 = vmatpush1.bf16.msra.mxu0 %v3211
        %3280 = vmatprep.subr.bf16.mxu0 0
        %3281 = vmatpush1.bf16.msra.mxu0 0
        %3282 = vmatprep.subr.bf16.mxu0 0
        %3283 = vmatpush1.bf16.msra.mxu0 0
        %3284 = vmatprep.subr.bf16.mxu0 0
        %3285 = vmatpush1.bf16.msra.mxu0 0
        %3286 = vmatprep.subr.bf16.mxu0 0
        %3287 = vmatpush1.bf16.msra.mxu0 0
        %3288 = vmatprep.subr.bf16.mxu0 0
        %3289 = vmatpush1.bf16.msra.mxu0 0
        %3290 = vmatprep.subr.bf16.mxu0 0
        %3291 = vmatpush1.bf16.msra.mxu0 0
        %3292 = vmatprep.subr.bf16.mxu0 0
        %3293 = vmatpush1.bf16.msra.mxu0 0
        %3294 = vmatprep.subr.bf16.mxu0 0
        %3295 = vmatpush1.bf16.msra.mxu0 0
        %3296 = vmatprep.subr.bf16.mxu0 0
        %3297 = vmatpush1.bf16.msra.mxu0 0
        %3298 = vmatprep.subr.bf16.mxu0 0
        %3299 = vmatpush1.bf16.msra.mxu0 0
        %3300 = vmatprep.subr.bf16.mxu0 0
        %3301 = vmatpush1.bf16.msra.mxu0 0
        %3302 = vmatprep.subr.bf16.mxu0 0
        %3303 = vmatpush1.bf16.msra.mxu0 0
        %3304 = vmatprep.subr.bf16.mxu0 0
        %3305 = vmatpush1.bf16.msra.mxu0 0
        %3306 = vmatprep.subr.bf16.mxu0 0
        %3307 = vmatpush1.bf16.msra.mxu0 0
        %3308 = vmatprep.subr.bf16.mxu0 0
        %3309 = vmatpush1.bf16.msra.mxu0 0
        %3310 = vmatprep.mubr.bf16.mxu0 0
        %3311 = vmatmul.mubr.bf16.gmra.mrb[0].mxu0 %v3276
        %v3312 = vpop.f32.mrb[0].mxu0
        %v3313 = vadd.f32 0.0, %v3312
        %v3314 = vpop.f32.mrb[0].mxu0
        %v3315 = vpop.f32.mrb[0].mxu0
        %v3316 = vpop.f32.mrb[0].mxu0
        %3317 = vdwg.mxu0
        %v3318 = vpack.c.bf16 %v3313, %v3313
        %v3319 = vld [vmem:[#allocation16] sm:$0xff]
        %v3320 = vld [vmem:[#allocation16 + $0x8] sm:$0xff]
        %v3321 = vld [vmem:[#allocation16 + $0x10] sm:$0xff]
        %v3322 = vld [vmem:[#allocation16 + $0x18] sm:$0xff]
        %v3323 = vld [vmem:[#allocation16 + $0x20] sm:$0xff]
        %v3324 = vld [vmem:[#allocation16 + $0x28] sm:$0xff]
        %v3325 = vld [vmem:[#allocation16 + $0x30] sm:$0xff]
        %v3326 = vld [vmem:[#allocation16 + $0x38] sm:$0xff]
        %v3327 = vld [vmem:[#allocation16 + $0x40] sm:$0xff]
        %v3328 = vld [vmem:[#allocation16 + $0x48] sm:$0xff]
        %v3329 = vld [vmem:[#allocation16 + $0x50] sm:$0xff]
        %v3330 = vld [vmem:[#allocation16 + $0x58] sm:$0xff]
        %v3331 = vld [vmem:[#allocation16 + $0x60] sm:$0xff]
        %v3332 = vld [vmem:[#allocation16 + $0x68] sm:$0xff]
        %v3333 = vld [vmem:[#allocation16 + $0x70] sm:$0xff]
        %v3334 = vld [vmem:[#allocation16 + $0x78] sm:$0xff]
        %v3335 = vpack.c.bf16 %v2711, %v2711
        %v3336 = vpack.c.bf16 %v2960, %v2956
        %v3337 = vpack.c.bf16 %v3207, %v3203
        %3338 = vmatprep.subr.bf16.mxu0 0
        %3339 = vmatpush1.bf16.xpose.msra.mxu0 %v3336
        %3340 = vmatprep.subr.bf16.mxu0 0
        %3341 = vmatpush1.bf16.xpose.msra.mxu0 0
        %3342 = vmatprep.subr.bf16.mxu0 0
        %3343 = vmatpush1.bf16.xpose.msra.mxu0 0
        %3344 = vmatprep.subr.bf16.mxu0 0
        %3345 = vmatpush1.bf16.xpose.msra.mxu0 0
        %3346 = vmatprep.subr.bf16.mxu0 0
        %3347 = vmatpush1.bf16.xpose.msra.mxu0 0
        %3348 = vmatprep.subr.bf16.mxu0 0
        %3349 = vmatpush1.bf16.xpose.msra.mxu0 0
        %3350 = vmatprep.subr.bf16.mxu0 0
        %3351 = vmatpush1.bf16.xpose.msra.mxu0 0
        %3352 = vmatprep.subr.bf16.mxu0 0
        %3353 = vmatpush1.bf16.xpose.msra.mxu0 0
        %3354 = vmatprep.subr.bf16.mxu0 0
        %3355 = vmatpush1.bf16.xpose.msra.mxu0 0
        %3356 = vmatprep.subr.bf16.mxu0 0
        %3357 = vmatpush1.bf16.xpose.msra.mxu0 0
        %3358 = vmatprep.subr.bf16.mxu0 0
        %3359 = vmatpush1.bf16.xpose.msra.mxu0 0
        %3360 = vmatprep.subr.bf16.mxu0 0
        %3361 = vmatpush1.bf16.xpose.msra.mxu0 0
        %3362 = vmatprep.subr.bf16.mxu0 0
        %3363 = vmatpush1.bf16.xpose.msra.mxu0 0
        %3364 = vmatprep.subr.bf16.mxu0 0
        %3365 = vmatpush1.bf16.xpose.msra.mxu0 0
        %3366 = vmatprep.subr.bf16.mxu0 0
        %3367 = vmatpush1.bf16.xpose.msra.mxu0 0
        %3368 = vmatprep.subr.bf16.mxu0 0
        %3369 = vmatpush1.bf16.xpose.msra.mxu0 0
        %3370 = vmatprep.mubr.bf16.mxu0 0
        %3371 = vmatmul.mubr.bf16.gmra.mrb[0].mxu0 %v3335
        %v3372 = vpop.f32.mrb[0].mxu0
        %v3373 = vadd.f32 0.0, %v3372
        %v3374 = vpop.f32.mrb[0].mxu0
        %v3375 = vpop.f32.mrb[0].mxu0
        %v3376 = vpop.f32.mrb[0].mxu0
        %3377 = vdwg.mxu0
        %v3378 = vsel %vm3260, %v3373, -1e+09
        %v3379 = vsel %vm3262, %v3378, -inf
        %3380 = vmax.xlane.f32.xlu0 %v3379
        %v3381 = vpop.xlane.xlu0 %3380
        %v3382 = vsub.f32 %v3378, %v3381
        %v3383 = vmul.f32 %v3382, 1.442695
        %v3384 = vpow.pop %v3383
        %v3385 = vsel %vm3262, %v3384, 0.0
        %3386 = vadd.xlane.f32.xlu0 %v3385
        %v3387 = vpop.xlane.xlu0 %3386
        %v3388 = vrcp.pop %v3387
        %v3389 = vmul.f32 %v3384, %v3388
        %v3390 = vpack.c.bf16 %v3389, %v3389
        %v3392 = vsel %vm3262, %v3390, 0
        %3394 = vmatprep.subr.bf16.mxu0 0
        %3395 = vmatpush1.bf16.msra.mxu0 %v3337
        %3396 = vmatprep.subr.bf16.mxu0 0
        %3397 = vmatpush1.bf16.msra.mxu0 0
        %3398 = vmatprep.subr.bf16.mxu0 0
        %3399 = vmatpush1.bf16.msra.mxu0 0
        %3400 = vmatprep.subr.bf16.mxu0 0
        %3401 = vmatpush1.bf16.msra.mxu0 0
        %3402 = vmatprep.subr.bf16.mxu0 0
        %3403 = vmatpush1.bf16.msra.mxu0 0
        %3404 = vmatprep.subr.bf16.mxu0 0
        %3405 = vmatpush1.bf16.msra.mxu0 0
        %3406 = vmatprep.subr.bf16.mxu0 0
        %3407 = vmatpush1.bf16.msra.mxu0 0
        %3408 = vmatprep.subr.bf16.mxu0 0
        %3409 = vmatpush1.bf16.msra.mxu0 0
        %3410 = vmatprep.subr.bf16.mxu0 0
        %3411 = vmatpush1.bf16.msra.mxu0 0
        %3412 = vmatprep.subr.bf16.mxu0 0
        %3413 = vmatpush1.bf16.msra.mxu0 0
        %3414 = vmatprep.subr.bf16.mxu0 0
        %3415 = vmatpush1.bf16.msra.mxu0 0
        %3416 = vmatprep.subr.bf16.mxu0 0
        %3417 = vmatpush1.bf16.msra.mxu0 0
        %3418 = vmatprep.subr.bf16.mxu0 0
        %3419 = vmatpush1.bf16.msra.mxu0 0
        %3420 = vmatprep.subr.bf16.mxu0 0
        %3421 = vmatpush1.bf16.msra.mxu0 0
        %3422 = vmatprep.subr.bf16.mxu0 0
        %3423 = vmatpush1.bf16.msra.mxu0 0
        %3424 = vmatprep.subr.bf16.mxu0 0
        %3425 = vmatpush1.bf16.msra.mxu0 0
        %3426 = vmatprep.mubr.bf16.mxu0 0
        %3427 = vmatmul.mubr.bf16.gmra.mrb[0].mxu0 %v3392
        %v3428 = vpop.f32.mrb[0].mxu0
        %v3429 = vadd.f32 0.0, %v3428
        %v3430 = vpop.f32.mrb[0].mxu0
        %v3431 = vpop.f32.mrb[0].mxu0
        %v3432 = vpop.f32.mrb[0].mxu0
        %3433 = vdwg.mxu0
        %v3434 = vpack.c.bf16 %v3429, %v3429
        %v3435 = vld [vmem:[#allocation16 + $0x80] sm:$0xff]
        %v3436 = vld [vmem:[#allocation16 + $0x88] sm:$0xff]
        %v3437 = vld [vmem:[#allocation16 + $0x90] sm:$0xff]
        %v3438 = vld [vmem:[#allocation16 + $0x98] sm:$0xff]
        %v3439 = vld [vmem:[#allocation16 + $0xa0] sm:$0xff]
        %v3440 = vld [vmem:[#allocation16 + $0xa8] sm:$0xff]
        %v3441 = vld [vmem:[#allocation16 + $0xb0] sm:$0xff]
        %v3442 = vld [vmem:[#allocation16 + $0xb8] sm:$0xff]
        %v3443 = vld [vmem:[#allocation16 + $0xc0] sm:$0xff]
        %v3444 = vld [vmem:[#allocation16 + $0xc8] sm:$0xff]
        %v3445 = vld [vmem:[#allocation16 + $0xd0] sm:$0xff]
        %v3446 = vld [vmem:[#allocation16 + $0xd8] sm:$0xff]
        %v3447 = vld [vmem:[#allocation16 + $0xe0] sm:$0xff]
        %v3448 = vld [vmem:[#allocation16 + $0xe8] sm:$0xff]
        %v3449 = vld [vmem:[#allocation16 + $0xf0] sm:$0xff]
        %v3450 = vld [vmem:[#allocation16 + $0xf8] sm:$0xff]
        %v3467 = vunpack.c.l.b16 %v3435
        %v3468 = vunpack.c.h.b16 %v3435
        %v3469 = vunpack.c.l.b16 %v3436
        %v3470 = vunpack.c.h.b16 %v3436
        %v3471 = vunpack.c.l.b16 %v3437
        %v3472 = vunpack.c.h.b16 %v3437
        %v3473 = vunpack.c.l.b16 %v3438
        %v3474 = vunpack.c.h.b16 %v3438
        %v3475 = vunpack.c.l.b16 %v3439
        %v3476 = vunpack.c.h.b16 %v3439
        %v3477 = vunpack.c.l.b16 %v3440
        %v3478 = vunpack.c.h.b16 %v3440
        %v3479 = vunpack.c.l.b16 %v3441
        %v3480 = vunpack.c.h.b16 %v3441
        %v3481 = vunpack.c.l.b16 %v3442
        %v3482 = vunpack.c.h.b16 %v3442
        %v3483 = vunpack.c.l.b16 %v3443
        %v3484 = vunpack.c.h.b16 %v3443
        %v3485 = vunpack.c.l.b16 %v3444
        %v3486 = vunpack.c.h.b16 %v3444
        %v3487 = vunpack.c.l.b16 %v3445
        %v3488 = vunpack.c.h.b16 %v3445
        %v3489 = vunpack.c.l.b16 %v3446
        %v3490 = vunpack.c.h.b16 %v3446
        %v3491 = vunpack.c.l.b16 %v3447
        %v3492 = vunpack.c.h.b16 %v3447
        %v3493 = vunpack.c.l.b16 %v3448
        %v3494 = vunpack.c.h.b16 %v3448
        %v3495 = vunpack.c.l.b16 %v3449
        %v3496 = vunpack.c.h.b16 %v3449
        %v3497 = vunpack.c.l.b16 %v3450
        %v3498 = vunpack.c.h.b16 %v3450
        %v3499 = vpack.c.b16 %v3469, %v3467
        %v3500 = vpack.c.b16 %v3470, %v3468
        %v3501 = vpack.c.b16 %v3473, %v3471
        %v3502 = vpack.c.b16 %v3474, %v3472
        %v3503 = vpack.c.b16 %v3477, %v3475
        %v3504 = vpack.c.b16 %v3478, %v3476
        %v3505 = vpack.c.b16 %v3481, %v3479
        %v3506 = vpack.c.b16 %v3482, %v3480
        %v3507 = vpack.c.b16 %v3485, %v3483
        %v3508 = vpack.c.b16 %v3486, %v3484
        %v3509 = vpack.c.b16 %v3489, %v3487
        %v3510 = vpack.c.b16 %v3490, %v3488
        %v3511 = vpack.c.b16 %v3493, %v3491
        %v3512 = vpack.c.b16 %v3494, %v3492
        %v3513 = vpack.c.b16 %v3497, %v3495
        %v3514 = vpack.c.b16 %v3498, %v3496
        %3531 = vmatprep.subr.bf16.mxu0 %v3500
        %3532 = vmatpush1.bf16.msra.mxu0 %v3499
        %3533 = vmatprep.subr.bf16.mxu0 %v3502
        %3534 = vmatpush1.bf16.msra.mxu0 %v3501
        %3535 = vmatprep.subr.bf16.mxu0 %v3504
        %3536 = vmatpush1.bf16.msra.mxu0 %v3503
        %3537 = vmatprep.subr.bf16.mxu0 %v3506
        %3538 = vmatpush1.bf16.msra.mxu0 %v3505
        %3539 = vmatprep.subr.bf16.mxu0 %v3508
        %3540 = vmatpush1.bf16.msra.mxu0 %v3507
        %3541 = vmatprep.subr.bf16.mxu0 %v3510
        %3542 = vmatpush1.bf16.msra.mxu0 %v3509
        %3543 = vmatprep.subr.bf16.mxu0 %v3512
        %3544 = vmatpush1.bf16.msra.mxu0 %v3511
        %3545 = vmatprep.subr.bf16.mxu0 %v3514
        %3546 = vmatpush1.bf16.msra.mxu0 %v3513
        %3547 = vmatprep.subr.bf16.mxu0 0
        %3548 = vmatpush1.bf16.msra.mxu0 0
        %3549 = vmatprep.subr.bf16.mxu0 0
        %3550 = vmatpush1.bf16.msra.mxu0 0
        %3551 = vmatprep.subr.bf16.mxu0 0
        %3552 = vmatpush1.bf16.msra.mxu0 0
        %3553 = vmatprep.subr.bf16.mxu0 0
        %3554 = vmatpush1.bf16.msra.mxu0 0
        %3555 = vmatprep.subr.bf16.mxu0 0
        %3556 = vmatpush1.bf16.msra.mxu0 0
        %3557 = vmatprep.subr.bf16.mxu0 0
        %3558 = vmatpush1.bf16.msra.mxu0 0
        %3559 = vmatprep.subr.bf16.mxu0 0
        %3560 = vmatpush1.bf16.msra.mxu0 0
        %3561 = vmatprep.subr.bf16.mxu0 0
        %3562 = vmatpush1.bf16.msra.mxu0 0
        %3563 = vmatprep.mubr.bf16.mxu0 0
        %3564 = vmatmul.mubr.bf16.gmra.mrb[0].mxu0 %v3434
        %v3565 = vpop.f32.mrb[0].mxu0
        %v3566 = vadd.f32 0.0, %v3565
        %v3567 = vpop.f32.mrb[0].mxu0
        %v3568 = vadd.f32 0.0, %v3567
        %v3569 = vpop.f32.mrb[0].mxu0
        %v3570 = vpop.f32.mrb[0].mxu0
        %3571 = vdwg.mxu0
        %v3588 = vunpack.c.l.b16 %v3319
        %v3589 = vunpack.c.h.b16 %v3319
        %v3590 = vunpack.c.l.b16 %v3320
        %v3591 = vunpack.c.h.b16 %v3320
        %v3592 = vunpack.c.l.b16 %v3321
        %v3593 = vunpack.c.h.b16 %v3321
        %v3594 = vunpack.c.l.b16 %v3322
        %v3595 = vunpack.c.h.b16 %v3322
        %v3596 = vunpack.c.l.b16 %v3323
        %v3597 = vunpack.c.h.b16 %v3323
        %v3598 = vunpack.c.l.b16 %v3324
        %v3599 = vunpack.c.h.b16 %v3324
        %v3600 = vunpack.c.l.b16 %v3325
        %v3601 = vunpack.c.h.b16 %v3325
        %v3602 = vunpack.c.l.b16 %v3326
        %v3603 = vunpack.c.h.b16 %v3326
        %v3604 = vunpack.c.l.b16 %v3327
        %v3605 = vunpack.c.h.b16 %v3327
        %v3606 = vunpack.c.l.b16 %v3328
        %v3607 = vunpack.c.h.b16 %v3328
        %v3608 = vunpack.c.l.b16 %v3329
        %v3609 = vunpack.c.h.b16 %v3329
        %v3610 = vunpack.c.l.b16 %v3330
        %v3611 = vunpack.c.h.b16 %v3330
        %v3612 = vunpack.c.l.b16 %v3331
        %v3613 = vunpack.c.h.b16 %v3331
        %v3614 = vunpack.c.l.b16 %v3332
        %v3615 = vunpack.c.h.b16 %v3332
        %v3616 = vunpack.c.l.b16 %v3333
        %v3617 = vunpack.c.h.b16 %v3333
        %v3618 = vunpack.c.l.b16 %v3334
        %v3619 = vunpack.c.h.b16 %v3334
        %v3620 = vpack.c.b16 %v3590, %v3588
        %v3621 = vpack.c.b16 %v3591, %v3589
        %v3622 = vpack.c.b16 %v3594, %v3592
        %v3623 = vpack.c.b16 %v3595, %v3593
        %v3624 = vpack.c.b16 %v3598, %v3596
        %v3625 = vpack.c.b16 %v3599, %v3597
        %v3626 = vpack.c.b16 %v3602, %v3600
        %v3627 = vpack.c.b16 %v3603, %v3601
        %v3628 = vpack.c.b16 %v3606, %v3604
        %v3629 = vpack.c.b16 %v3607, %v3605
        %v3630 = vpack.c.b16 %v3610, %v3608
        %v3631 = vpack.c.b16 %v3611, %v3609
        %v3632 = vpack.c.b16 %v3614, %v3612
        %v3633 = vpack.c.b16 %v3615, %v3613
        %v3634 = vpack.c.b16 %v3618, %v3616
        %v3635 = vpack.c.b16 %v3619, %v3617
        %3652 = vmatprep.subr.bf16.mxu0 %v3621
        %3653 = vmatpush1.bf16.msra.mxu0 %v3620
        %3654 = vmatprep.subr.bf16.mxu0 %v3623
        %3655 = vmatpush1.bf16.msra.mxu0 %v3622
        %3656 = vmatprep.subr.bf16.mxu0 %v3625
        %3657 = vmatpush1.bf16.msra.mxu0 %v3624
        %3658 = vmatprep.subr.bf16.mxu0 %v3627
        %3659 = vmatpush1.bf16.msra.mxu0 %v3626
        %3660 = vmatprep.subr.bf16.mxu0 %v3629
        %3661 = vmatpush1.bf16.msra.mxu0 %v3628
        %3662 = vmatprep.subr.bf16.mxu0 %v3631
        %3663 = vmatpush1.bf16.msra.mxu0 %v3630
        %3664 = vmatprep.subr.bf16.mxu0 %v3633
        %3665 = vmatpush1.bf16.msra.mxu0 %v3632
        %3666 = vmatprep.subr.bf16.mxu0 %v3635
        %3667 = vmatpush1.bf16.msra.mxu0 %v3634
        %3668 = vmatprep.subr.bf16.mxu0 0
        %3669 = vmatpush1.bf16.msra.mxu0 0
        %3670 = vmatprep.subr.bf16.mxu0 0
        %3671 = vmatpush1.bf16.msra.mxu0 0
        %3672 = vmatprep.subr.bf16.mxu0 0
        %3673 = vmatpush1.bf16.msra.mxu0 0
        %3674 = vmatprep.subr.bf16.mxu0 0
        %3675 = vmatpush1.bf16.msra.mxu0 0
        %3676 = vmatprep.subr.bf16.mxu0 0
        %3677 = vmatpush1.bf16.msra.mxu0 0
        %3678 = vmatprep.subr.bf16.mxu0 0
        %3679 = vmatpush1.bf16.msra.mxu0 0
        %3680 = vmatprep.subr.bf16.mxu0 0
        %3681 = vmatpush1.bf16.msra.mxu0 0
        %3682 = vmatprep.subr.bf16.mxu0 0
        %3683 = vmatpush1.bf16.msra.mxu0 0
        %3684 = vmatprep.mubr.bf16.mxu0 0
        %3685 = vmatmul.mubr.bf16.gmra.mrb[0].mxu0 %v3318
        %v3686 = vpop.f32.mrb[0].mxu0
        %v3687 = vadd.f32 %v3566, %v3686
        %v3688 = vpop.f32.mrb[0].mxu0
        %v3689 = vadd.f32 %v3568, %v3688
        %v3690 = vpop.f32.mrb[0].mxu0
        %v3691 = vpop.f32.mrb[0].mxu0
        %3692 = vdwg.mxu0
        %v3693 = vld [vmem:[%s47] sm:$0x3]
        %v3695 = vlaneseq
        %v3696 = vshrl.u32 %v3695, 7
        %v3697 = vsub.s32 0, %v3696
        %v3698 = vrot.slane %v3693, %v3697
        %v3699 = vlaneseq
        %v3700 = vshrl.u32 %v3699, 7
        %v3701 = vsub.s32 1, %v3700
        %v3702 = vrot.slane %v3693, %v3701
        %v3705 = vadd.f32 %v3687, %v3698
        %v3706 = vadd.f32 %v3689, %v3702
        %v3707 = vadd.f32 %v2420, %v3705
        %v3708 = vadd.f32 %v2421, %v3706
        %v3709 = vld [vmem:[%s49] sm:$0x3]
        %v3710 = vld [vmem:[%s51] sm:$0x3]
        %v3711 = vadd.f32 %v3707, %v3708
        %3712 = vadd.xlane.f32.xlu0 %v3711
        %v3713 = vpop.xlane.xlu0 %3712
        %v3714 = vmul.f32 %v3713, %v1144
        %v3715 = vsub.f32 %v3707, %v3714
        %v3716 = vsub.f32 %v3708, %v3714
        %v3717 = vmul.f32 %v3715, %v3715
        %v3718 = vmul.f32 %v3716, %v3716
        %v3719 = vadd.f32 %v3717, %v3718
        %3720 = vadd.xlane.f32.xlu0 %v3719
        %v3721 = vpop.xlane.xlu0 %3720
        %v3722 = vmul.f32 %v3721, %v1144
        %v3723 = vadd.f32 %v3722, 1e-05
        %v3724 = vrsqrt.pop %v3723
        %v3725 = vmul.f32 %v3715, %v3724
        %v3726 = vmul.f32 %v3716, %v3724
        %v3728 = vlaneseq
        %v3729 = vshrl.u32 %v3728, 7
        %v3730 = vsub.s32 0, %v3729
        %v3731 = vrot.slane %v3709, %v3730
        %v3732 = vlaneseq
        %v3733 = vshrl.u32 %v3732, 7
        %v3734 = vsub.s32 1, %v3733
        %v3735 = vrot.slane %v3709, %v3734
        %v3738 = vmul.f32 %v3725, %v3731
        %v3739 = vmul.f32 %v3726, %v3735
        %v3741 = vlaneseq
        %v3742 = vshrl.u32 %v3741, 7
        %v3743 = vsub.s32 0, %v3742
        %v3744 = vrot.slane %v3710, %v3743
        %v3745 = vlaneseq
        %v3746 = vshrl.u32 %v3745, 7
        %v3747 = vsub.s32 1, %v3746
        %v3748 = vrot.slane %v3710, %v3747
        %v3751 = vadd.f32 %v3738, %v3744
        %v3752 = vadd.f32 %v3739, %v3748
        %v3753 = vpack.c.bf16 %v3751, %v3751
        %v3754 = vpack.c.bf16 %v3752, %v3752
        %v3755 = vld [vmem:[#allocation17] sm:$0xff]
        %v3756 = vld [vmem:[#allocation17 + $0x10] sm:$0xff]
        %v3757 = vld [vmem:[#allocation17 + $0x20] sm:$0xff]
        %v3758 = vld [vmem:[#allocation17 + $0x30] sm:$0xff]
        %v3759 = vld [vmem:[#allocation17 + $0x40] sm:$0xff]
        %v3760 = vld [vmem:[#allocation17 + $0x50] sm:$0xff]
        %v3761 = vld [vmem:[#allocation17 + $0x60] sm:$0xff]
        %v3762 = vld [vmem:[#allocation17 + $0x70] sm:$0xff]
        %v3763 = vld [vmem:[#allocation17 + $0x80] sm:$0xff]
        %v3764 = vld [vmem:[#allocation17 + $0x90] sm:$0xff]
        %v3765 = vld [vmem:[#allocation17 + $0xa0] sm:$0xff]
        %v3766 = vld [vmem:[#allocation17 + $0xb0] sm:$0xff]
        %v3767 = vld [vmem:[#allocation17 + $0xc0] sm:$0xff]
        %v3768 = vld [vmem:[#allocation17 + $0xd0] sm:$0xff]
        %v3769 = vld [vmem:[#allocation17 + $0xe0] sm:$0xff]
        %v3770 = vld [vmem:[#allocation17 + $0xf0] sm:$0xff]
        %v3771 = vld [vmem:[#allocation17 + $0x100] sm:$0xff]
        %v3772 = vld [vmem:[#allocation17 + $0x110] sm:$0xff]
        %v3773 = vld [vmem:[#allocation17 + $0x120] sm:$0xff]
        %v3774 = vld [vmem:[#allocation17 + $0x130] sm:$0xff]
        %v3775 = vld [vmem:[#allocation17 + $0x140] sm:$0xff]
        %v3776 = vld [vmem:[#allocation17 + $0x150] sm:$0xff]
        %v3777 = vld [vmem:[#allocation17 + $0x160] sm:$0xff]
        %v3778 = vld [vmem:[#allocation17 + $0x170] sm:$0xff]
        %v3779 = vld [vmem:[#allocation17 + $0x180] sm:$0xff]
        %v3780 = vld [vmem:[#allocation17 + $0x190] sm:$0xff]
        %v3781 = vld [vmem:[#allocation17 + $0x1a0] sm:$0xff]
        %v3782 = vld [vmem:[#allocation17 + $0x1b0] sm:$0xff]
        %v3783 = vld [vmem:[#allocation17 + $0x1c0] sm:$0xff]
        %v3784 = vld [vmem:[#allocation17 + $0x1d0] sm:$0xff]
        %v3785 = vld [vmem:[#allocation17 + $0x1e0] sm:$0xff]
        %v3786 = vld [vmem:[#allocation17 + $0x1f0] sm:$0xff]
        %v3787 = vld [vmem:[%s55] sm:$0x3]
        %v3789 = vlaneseq
        %v3790 = vshrl.u32 %v3789, 7
        %v3791 = vsub.s32 0, %v3790
        %v3792 = vrot.slane %v3787, %v3791
        %v3793 = vlaneseq
        %v3794 = vshrl.u32 %v3793, 7
        %v3795 = vsub.s32 1, %v3794
        %v3796 = vrot.slane %v3787, %v3795
        %v3831 = vunpack.c.l.b16 %v3755
        %v3832 = vunpack.c.h.b16 %v3755
        %v3833 = vunpack.c.l.b16 %v3756
        %v3834 = vunpack.c.h.b16 %v3756
        %v3835 = vunpack.c.l.b16 %v3757
        %v3836 = vunpack.c.h.b16 %v3757
        %v3837 = vunpack.c.l.b16 %v3758
        %v3838 = vunpack.c.h.b16 %v3758
        %v3839 = vunpack.c.l.b16 %v3759
        %v3840 = vunpack.c.h.b16 %v3759
        %v3841 = vunpack.c.l.b16 %v3760
        %v3842 = vunpack.c.h.b16 %v3760
        %v3843 = vunpack.c.l.b16 %v3761
        %v3844 = vunpack.c.h.b16 %v3761
        %v3845 = vunpack.c.l.b16 %v3762
        %v3846 = vunpack.c.h.b16 %v3762
        %v3847 = vunpack.c.l.b16 %v3763
        %v3848 = vunpack.c.h.b16 %v3763
        %v3849 = vunpack.c.l.b16 %v3764
        %v3850 = vunpack.c.h.b16 %v3764
        %v3851 = vunpack.c.l.b16 %v3765
        %v3852 = vunpack.c.h.b16 %v3765
        %v3853 = vunpack.c.l.b16 %v3766
        %v3854 = vunpack.c.h.b16 %v3766
        %v3855 = vunpack.c.l.b16 %v3767
        %v3856 = vunpack.c.h.b16 %v3767
        %v3857 = vunpack.c.l.b16 %v3768
        %v3858 = vunpack.c.h.b16 %v3768
        %v3859 = vunpack.c.l.b16 %v3769
        %v3860 = vunpack.c.h.b16 %v3769
        %v3861 = vunpack.c.l.b16 %v3770
        %v3862 = vunpack.c.h.b16 %v3770
        %v3863 = vunpack.c.l.b16 %v3771
        %v3864 = vunpack.c.h.b16 %v3771
        %v3865 = vunpack.c.l.b16 %v3772
        %v3866 = vunpack.c.h.b16 %v3772
        %v3867 = vunpack.c.l.b16 %v3773
        %v3868 = vunpack.c.h.b16 %v3773
        %v3869 = vunpack.c.l.b16 %v3774
        %v3870 = vunpack.c.h.b16 %v3774
        %v3871 = vunpack.c.l.b16 %v3775
        %v3872 = vunpack.c.h.b16 %v3775
        %v3873 = vunpack.c.l.b16 %v3776
        %v3874 = vunpack.c.h.b16 %v3776
        %v3875 = vunpack.c.l.b16 %v3777
        %v3876 = vunpack.c.h.b16 %v3777
        %v3877 = vunpack.c.l.b16 %v3778
        %v3878 = vunpack.c.h.b16 %v3778
        %v3879 = vunpack.c.l.b16 %v3779
        %v3880 = vunpack.c.h.b16 %v3779
        %v3881 = vunpack.c.l.b16 %v3780
        %v3882 = vunpack.c.h.b16 %v3780
        %v3883 = vunpack.c.l.b16 %v3781
        %v3884 = vunpack.c.h.b16 %v3781
        %v3885 = vunpack.c.l.b16 %v3782
        %v3886 = vunpack.c.h.b16 %v3782
        %v3887 = vunpack.c.l.b16 %v3783
        %v3888 = vunpack.c.h.b16 %v3783
        %v3889 = vunpack.c.l.b16 %v3784
        %v3890 = vunpack.c.h.b16 %v3784
        %v3891 = vunpack.c.l.b16 %v3785
        %v3892 = vunpack.c.h.b16 %v3785
        %v3893 = vunpack.c.l.b16 %v3786
        %v3894 = vunpack.c.h.b16 %v3786
        %v3895 = vpack.c.b16 %v3833, %v3831
        %v3896 = vpack.c.b16 %v3834, %v3832
        %v3897 = vpack.c.b16 %v3837, %v3835
        %v3898 = vpack.c.b16 %v3838, %v3836
        %v3899 = vpack.c.b16 %v3841, %v3839
        %v3900 = vpack.c.b16 %v3842, %v3840
        %v3901 = vpack.c.b16 %v3845, %v3843
        %v3902 = vpack.c.b16 %v3846, %v3844
        %v3903 = vpack.c.b16 %v3849, %v3847
        %v3904 = vpack.c.b16 %v3850, %v3848
        %v3905 = vpack.c.b16 %v3853, %v3851
        %v3906 = vpack.c.b16 %v3854, %v3852
        %v3907 = vpack.c.b16 %v3857, %v3855
        %v3908 = vpack.c.b16 %v3858, %v3856
        %v3909 = vpack.c.b16 %v3861, %v3859
        %v3910 = vpack.c.b16 %v3862, %v3860
        %v3911 = vpack.c.b16 %v3865, %v3863
        %v3912 = vpack.c.b16 %v3866, %v3864
        %v3913 = vpack.c.b16 %v3869, %v3867
        %v3914 = vpack.c.b16 %v3870, %v3868
        %v3915 = vpack.c.b16 %v3873, %v3871
        %v3916 = vpack.c.b16 %v3874, %v3872
        %v3917 = vpack.c.b16 %v3877, %v3875
        %v3918 = vpack.c.b16 %v3878, %v3876
        %v3919 = vpack.c.b16 %v3881, %v3879
        %v3920 = vpack.c.b16 %v3882, %v3880
        %v3921 = vpack.c.b16 %v3885, %v3883
        %v3922 = vpack.c.b16 %v3886, %v3884
        %v3923 = vpack.c.b16 %v3889, %v3887
        %v3924 = vpack.c.b16 %v3890, %v3888
        %v3925 = vpack.c.b16 %v3893, %v3891
        %v3926 = vpack.c.b16 %v3894, %v3892
        %3959 = vmatprep.subr.bf16.mxu0 %v3896
        %3960 = vmatpush1.bf16.msra.mxu0 %v3895
        %3961 = vmatprep.subr.bf16.mxu0 %v3898
        %3962 = vmatpush1.bf16.msra.mxu0 %v3897
        %3963 = vmatprep.subr.bf16.mxu0 %v3900
        %3964 = vmatpush1.bf16.msra.mxu0 %v3899
        %3965 = vmatprep.subr.bf16.mxu0 %v3902
        %3966 = vmatpush1.bf16.msra.mxu0 %v3901
        %3967 = vmatprep.subr.bf16.mxu0 %v3904
        %3968 = vmatpush1.bf16.msra.mxu0 %v3903
        %3969 = vmatprep.subr.bf16.mxu0 %v3906
        %3970 = vmatpush1.bf16.msra.mxu0 %v3905
        %3971 = vmatprep.subr.bf16.mxu0 %v3908
        %3972 = vmatpush1.bf16.msra.mxu0 %v3907
        %3973 = vmatprep.subr.bf16.mxu0 %v3910
        %3974 = vmatpush1.bf16.msra.mxu0 %v3909
        %3975 = vmatprep.subr.bf16.mxu0 %v3912
        %3976 = vmatpush1.bf16.msra.mxu0 %v3911
        %3977 = vmatprep.subr.bf16.mxu0 %v3914
        %3978 = vmatpush1.bf16.msra.mxu0 %v3913
        %3979 = vmatprep.subr.bf16.mxu0 %v3916
        %3980 = vmatpush1.bf16.msra.mxu0 %v3915
        %3981 = vmatprep.subr.bf16.mxu0 %v3918
        %3982 = vmatpush1.bf16.msra.mxu0 %v3917
        %3983 = vmatprep.subr.bf16.mxu0 %v3920
        %3984 = vmatpush1.bf16.msra.mxu0 %v3919
        %3985 = vmatprep.subr.bf16.mxu0 %v3922
        %3986 = vmatpush1.bf16.msra.mxu0 %v3921
        %3987 = vmatprep.subr.bf16.mxu0 %v3924
        %3988 = vmatpush1.bf16.msra.mxu0 %v3923
        %3989 = vmatprep.subr.bf16.mxu0 %v3926
        %3990 = vmatpush1.bf16.msra.mxu0 %v3925
        %3991 = vmatprep.mubr.bf16.mxu0 %v3754
        %3992 = vmatmul.mubr.bf16.gmra.mrb[0].mxu0 %v3753
        %v3993 = vpop.f32.mrb[0].mxu0
        %v3994 = vadd.f32 %v3792, %v3993
        %v3995 = vpop.f32.mrb[0].mxu0
        %v3996 = vadd.f32 %v3796, %v3995
        %v3997 = vpop.f32.mrb[0].mxu0
        %v3998 = vpop.f32.mrb[0].mxu0
        %3999 = vdwg.mxu0
        %v4000 = vmax.f32 %v3994, 0.0
        %v4001 = vmax.f32 %v3996, 0.0
        %v4002 = vpack.c.bf16 %v4000, %v4000
        %v4003 = vpack.c.bf16 %v4001, %v4001
        %v4004 = vld [vmem:[#allocation19] sm:$0xff]
        %v4005 = vld [vmem:[#allocation19 + $0x8] sm:$0xff]
        %v4006 = vld [vmem:[#allocation19 + $0x10] sm:$0xff]
        %v4007 = vld [vmem:[#allocation19 + $0x18] sm:$0xff]
        %v4008 = vld [vmem:[#allocation19 + $0x20] sm:$0xff]
        %v4009 = vld [vmem:[#allocation19 + $0x28] sm:$0xff]
        %v4010 = vld [vmem:[#allocation19 + $0x30] sm:$0xff]
        %v4011 = vld [vmem:[#allocation19 + $0x38] sm:$0xff]
        %v4012 = vld [vmem:[#allocation19 + $0x40] sm:$0xff]
        %v4013 = vld [vmem:[#allocation19 + $0x48] sm:$0xff]
        %v4014 = vld [vmem:[#allocation19 + $0x50] sm:$0xff]
        %v4015 = vld [vmem:[#allocation19 + $0x58] sm:$0xff]
        %v4016 = vld [vmem:[#allocation19 + $0x60] sm:$0xff]
        %v4017 = vld [vmem:[#allocation19 + $0x68] sm:$0xff]
        %v4018 = vld [vmem:[#allocation19 + $0x70] sm:$0xff]
        %v4019 = vld [vmem:[#allocation19 + $0x78] sm:$0xff]
        %v4020 = vld [vmem:[#allocation19 + $0x80] sm:$0xff]
        %v4021 = vld [vmem:[#allocation19 + $0x88] sm:$0xff]
        %v4022 = vld [vmem:[#allocation19 + $0x90] sm:$0xff]
        %v4023 = vld [vmem:[#allocation19 + $0x98] sm:$0xff]
        %v4024 = vld [vmem:[#allocation19 + $0xa0] sm:$0xff]
        %v4025 = vld [vmem:[#allocation19 + $0xa8] sm:$0xff]
        %v4026 = vld [vmem:[#allocation19 + $0xb0] sm:$0xff]
        %v4027 = vld [vmem:[#allocation19 + $0xb8] sm:$0xff]
        %v4028 = vld [vmem:[#allocation19 + $0xc0] sm:$0xff]
        %v4029 = vld [vmem:[#allocation19 + $0xc8] sm:$0xff]
        %v4030 = vld [vmem:[#allocation19 + $0xd0] sm:$0xff]
        %v4031 = vld [vmem:[#allocation19 + $0xd8] sm:$0xff]
        %v4032 = vld [vmem:[#allocation19 + $0xe0] sm:$0xff]
        %v4033 = vld [vmem:[#allocation19 + $0xe8] sm:$0xff]
        %v4034 = vld [vmem:[#allocation19 + $0xf0] sm:$0xff]
        %v4035 = vld [vmem:[#allocation19 + $0xf8] sm:$0xff]
        %v4036 = vld [vmem:[#allocation17 + $0x8] sm:$0xff]
        %v4037 = vld [vmem:[#allocation17 + $0x18] sm:$0xff]
        %v4038 = vld [vmem:[#allocation17 + $0x28] sm:$0xff]
        %v4039 = vld [vmem:[#allocation17 + $0x38] sm:$0xff]
        %v4040 = vld [vmem:[#allocation17 + $0x48] sm:$0xff]
        %v4041 = vld [vmem:[#allocation17 + $0x58] sm:$0xff]
        %v4042 = vld [vmem:[#allocation17 + $0x68] sm:$0xff]
        %v4043 = vld [vmem:[#allocation17 + $0x78] sm:$0xff]
        %v4044 = vld [vmem:[#allocation17 + $0x88] sm:$0xff]
        %v4045 = vld [vmem:[#allocation17 + $0x98] sm:$0xff]
        %v4046 = vld [vmem:[#allocation17 + $0xa8] sm:$0xff]
        %v4047 = vld [vmem:[#allocation17 + $0xb8] sm:$0xff]
        %v4048 = vld [vmem:[#allocation17 + $0xc8] sm:$0xff]
        %v4049 = vld [vmem:[#allocation17 + $0xd8] sm:$0xff]
        %v4050 = vld [vmem:[#allocation17 + $0xe8] sm:$0xff]
        %v4051 = vld [vmem:[#allocation17 + $0xf8] sm:$0xff]
        %v4052 = vld [vmem:[#allocation17 + $0x108] sm:$0xff]
        %v4053 = vld [vmem:[#allocation17 + $0x118] sm:$0xff]
        %v4054 = vld [vmem:[#allocation17 + $0x128] sm:$0xff]
        %v4055 = vld [vmem:[#allocation17 + $0x138] sm:$0xff]
        %v4056 = vld [vmem:[#allocation17 + $0x148] sm:$0xff]
        %v4057 = vld [vmem:[#allocation17 + $0x158] sm:$0xff]
        %v4058 = vld [vmem:[#allocation17 + $0x168] sm:$0xff]
        %v4059 = vld [vmem:[#allocation17 + $0x178] sm:$0xff]
        %v4060 = vld [vmem:[#allocation17 + $0x188] sm:$0xff]
        %v4061 = vld [vmem:[#allocation17 + $0x198] sm:$0xff]
        %v4062 = vld [vmem:[#allocation17 + $0x1a8] sm:$0xff]
        %v4063 = vld [vmem:[#allocation17 + $0x1b8] sm:$0xff]
        %v4064 = vld [vmem:[#allocation17 + $0x1c8] sm:$0xff]
        %v4065 = vld [vmem:[#allocation17 + $0x1d8] sm:$0xff]
        %v4066 = vld [vmem:[#allocation17 + $0x1e8] sm:$0xff]
        %v4067 = vld [vmem:[#allocation17 + $0x1f8] sm:$0xff]
        %v4068 = vld [vmem:[%s55 + $0x2] sm:$0x3]
        %v4070 = vlaneseq
        %v4071 = vshrl.u32 %v4070, 7
        %v4072 = vsub.s32 0, %v4071
        %v4073 = vrot.slane %v4068, %v4072
        %v4074 = vlaneseq
        %v4075 = vshrl.u32 %v4074, 7
        %v4076 = vsub.s32 1, %v4075
        %v4077 = vrot.slane %v4068, %v4076
        %v4112 = vunpack.c.l.b16 %v4036
        %v4113 = vunpack.c.h.b16 %v4036
        %v4114 = vunpack.c.l.b16 %v4037
        %v4115 = vunpack.c.h.b16 %v4037
        %v4116 = vunpack.c.l.b16 %v4038
        %v4117 = vunpack.c.h.b16 %v4038
        %v4118 = vunpack.c.l.b16 %v4039
        %v4119 = vunpack.c.h.b16 %v4039
        %v4120 = vunpack.c.l.b16 %v4040
        %v4121 = vunpack.c.h.b16 %v4040
        %v4122 = vunpack.c.l.b16 %v4041
        %v4123 = vunpack.c.h.b16 %v4041
        %v4124 = vunpack.c.l.b16 %v4042
        %v4125 = vunpack.c.h.b16 %v4042
        %v4126 = vunpack.c.l.b16 %v4043
        %v4127 = vunpack.c.h.b16 %v4043
        %v4128 = vunpack.c.l.b16 %v4044
        %v4129 = vunpack.c.h.b16 %v4044
        %v4130 = vunpack.c.l.b16 %v4045
        %v4131 = vunpack.c.h.b16 %v4045
        %v4132 = vunpack.c.l.b16 %v4046
        %v4133 = vunpack.c.h.b16 %v4046
        %v4134 = vunpack.c.l.b16 %v4047
        %v4135 = vunpack.c.h.b16 %v4047
        %v4136 = vunpack.c.l.b16 %v4048
        %v4137 = vunpack.c.h.b16 %v4048
        %v4138 = vunpack.c.l.b16 %v4049
        %v4139 = vunpack.c.h.b16 %v4049
        %v4140 = vunpack.c.l.b16 %v4050
        %v4141 = vunpack.c.h.b16 %v4050
        %v4142 = vunpack.c.l.b16 %v4051
        %v4143 = vunpack.c.h.b16 %v4051
        %v4144 = vunpack.c.l.b16 %v4052
        %v4145 = vunpack.c.h.b16 %v4052
        %v4146 = vunpack.c.l.b16 %v4053
        %v4147 = vunpack.c.h.b16 %v4053
        %v4148 = vunpack.c.l.b16 %v4054
        %v4149 = vunpack.c.h.b16 %v4054
        %v4150 = vunpack.c.l.b16 %v4055
        %v4151 = vunpack.c.h.b16 %v4055
        %v4152 = vunpack.c.l.b16 %v4056
        %v4153 = vunpack.c.h.b16 %v4056
        %v4154 = vunpack.c.l.b16 %v4057
        %v4155 = vunpack.c.h.b16 %v4057
        %v4156 = vunpack.c.l.b16 %v4058
        %v4157 = vunpack.c.h.b16 %v4058
        %v4158 = vunpack.c.l.b16 %v4059
        %v4159 = vunpack.c.h.b16 %v4059
        %v4160 = vunpack.c.l.b16 %v4060
        %v4161 = vunpack.c.h.b16 %v4060
        %v4162 = vunpack.c.l.b16 %v4061
        %v4163 = vunpack.c.h.b16 %v4061
        %v4164 = vunpack.c.l.b16 %v4062
        %v4165 = vunpack.c.h.b16 %v4062
        %v4166 = vunpack.c.l.b16 %v4063
        %v4167 = vunpack.c.h.b16 %v4063
        %v4168 = vunpack.c.l.b16 %v4064
        %v4169 = vunpack.c.h.b16 %v4064
        %v4170 = vunpack.c.l.b16 %v4065
        %v4171 = vunpack.c.h.b16 %v4065
        %v4172 = vunpack.c.l.b16 %v4066
        %v4173 = vunpack.c.h.b16 %v4066
        %v4174 = vunpack.c.l.b16 %v4067
        %v4175 = vunpack.c.h.b16 %v4067
        %v4176 = vpack.c.b16 %v4114, %v4112
        %v4177 = vpack.c.b16 %v4115, %v4113
        %v4178 = vpack.c.b16 %v4118, %v4116
        %v4179 = vpack.c.b16 %v4119, %v4117
        %v4180 = vpack.c.b16 %v4122, %v4120
        %v4181 = vpack.c.b16 %v4123, %v4121
        %v4182 = vpack.c.b16 %v4126, %v4124
        %v4183 = vpack.c.b16 %v4127, %v4125
        %v4184 = vpack.c.b16 %v4130, %v4128
        %v4185 = vpack.c.b16 %v4131, %v4129
        %v4186 = vpack.c.b16 %v4134, %v4132
        %v4187 = vpack.c.b16 %v4135, %v4133
        %v4188 = vpack.c.b16 %v4138, %v4136
        %v4189 = vpack.c.b16 %v4139, %v4137
        %v4190 = vpack.c.b16 %v4142, %v4140
        %v4191 = vpack.c.b16 %v4143, %v4141
        %v4192 = vpack.c.b16 %v4146, %v4144
        %v4193 = vpack.c.b16 %v4147, %v4145
        %v4194 = vpack.c.b16 %v4150, %v4148
        %v4195 = vpack.c.b16 %v4151, %v4149
        %v4196 = vpack.c.b16 %v4154, %v4152
        %v4197 = vpack.c.b16 %v4155, %v4153
        %v4198 = vpack.c.b16 %v4158, %v4156
        %v4199 = vpack.c.b16 %v4159, %v4157
        %v4200 = vpack.c.b16 %v4162, %v4160
        %v4201 = vpack.c.b16 %v4163, %v4161
        %v4202 = vpack.c.b16 %v4166, %v4164
        %v4203 = vpack.c.b16 %v4167, %v4165
        %v4204 = vpack.c.b16 %v4170, %v4168
        %v4205 = vpack.c.b16 %v4171, %v4169
        %v4206 = vpack.c.b16 %v4174, %v4172
        %v4207 = vpack.c.b16 %v4175, %v4173
        %4240 = vmatprep.subr.bf16.mxu0 %v4177
        %4241 = vmatpush1.bf16.msra.mxu0 %v4176
        %4242 = vmatprep.subr.bf16.mxu0 %v4179
        %4243 = vmatpush1.bf16.msra.mxu0 %v4178
        %4244 = vmatprep.subr.bf16.mxu0 %v4181
        %4245 = vmatpush1.bf16.msra.mxu0 %v4180
        %4246 = vmatprep.subr.bf16.mxu0 %v4183
        %4247 = vmatpush1.bf16.msra.mxu0 %v4182
        %4248 = vmatprep.subr.bf16.mxu0 %v4185
        %4249 = vmatpush1.bf16.msra.mxu0 %v4184
        %4250 = vmatprep.subr.bf16.mxu0 %v4187
        %4251 = vmatpush1.bf16.msra.mxu0 %v4186
        %4252 = vmatprep.subr.bf16.mxu0 %v4189
        %4253 = vmatpush1.bf16.msra.mxu0 %v4188
        %4254 = vmatprep.subr.bf16.mxu0 %v4191
        %4255 = vmatpush1.bf16.msra.mxu0 %v4190
        %4256 = vmatprep.subr.bf16.mxu0 %v4193
        %4257 = vmatpush1.bf16.msra.mxu0 %v4192
        %4258 = vmatprep.subr.bf16.mxu0 %v4195
        %4259 = vmatpush1.bf16.msra.mxu0 %v4194
        %4260 = vmatprep.subr.bf16.mxu0 %v4197
        %4261 = vmatpush1.bf16.msra.mxu0 %v4196
        %4262 = vmatprep.subr.bf16.mxu0 %v4199
        %4263 = vmatpush1.bf16.msra.mxu0 %v4198
        %4264 = vmatprep.subr.bf16.mxu0 %v4201
        %4265 = vmatpush1.bf16.msra.mxu0 %v4200
        %4266 = vmatprep.subr.bf16.mxu0 %v4203
        %4267 = vmatpush1.bf16.msra.mxu0 %v4202
        %4268 = vmatprep.subr.bf16.mxu0 %v4205
        %4269 = vmatpush1.bf16.msra.mxu0 %v4204
        %4270 = vmatprep.subr.bf16.mxu0 %v4207
        %4271 = vmatpush1.bf16.msra.mxu0 %v4206
        %4272 = vmatprep.mubr.bf16.mxu0 %v3754
        %4273 = vmatmul.mubr.bf16.gmra.mrb[0].mxu0 %v3753
        %v4274 = vpop.f32.mrb[0].mxu0
        %v4275 = vadd.f32 %v4073, %v4274
        %v4276 = vpop.f32.mrb[0].mxu0
        %v4277 = vadd.f32 %v4077, %v4276
        %v4278 = vpop.f32.mrb[0].mxu0
        %v4279 = vpop.f32.mrb[0].mxu0
        %4280 = vdwg.mxu0
        %v4281 = vmax.f32 %v4275, 0.0
        %v4282 = vmax.f32 %v4277, 0.0
        %v4283 = vpack.c.bf16 %v4281, %v4281
        %v4284 = vpack.c.bf16 %v4282, %v4282
        %v4285 = vld [vmem:[#allocation19 + $0x100] sm:$0xff]
        %v4286 = vld [vmem:[#allocation19 + $0x108] sm:$0xff]
        %v4287 = vld [vmem:[#allocation19 + $0x110] sm:$0xff]
        %v4288 = vld [vmem:[#allocation19 + $0x118] sm:$0xff]
        %v4289 = vld [vmem:[#allocation19 + $0x120] sm:$0xff]
        %v4290 = vld [vmem:[#allocation19 + $0x128] sm:$0xff]
        %v4291 = vld [vmem:[#allocation19 + $0x130] sm:$0xff]
        %v4292 = vld [vmem:[#allocation19 + $0x138] sm:$0xff]
        %v4293 = vld [vmem:[#allocation19 + $0x140] sm:$0xff]
        %v4294 = vld [vmem:[#allocation19 + $0x148] sm:$0xff]
        %v4295 = vld [vmem:[#allocation19 + $0x150] sm:$0xff]
        %v4296 = vld [vmem:[#allocation19 + $0x158] sm:$0xff]
        %v4297 = vld [vmem:[#allocation19 + $0x160] sm:$0xff]
        %v4298 = vld [vmem:[#allocation19 + $0x168] sm:$0xff]
        %v4299 = vld [vmem:[#allocation19 + $0x170] sm:$0xff]
        %v4300 = vld [vmem:[#allocation19 + $0x178] sm:$0xff]
        %v4301 = vld [vmem:[#allocation19 + $0x180] sm:$0xff]
        %v4302 = vld [vmem:[#allocation19 + $0x188] sm:$0xff]
        %v4303 = vld [vmem:[#allocation19 + $0x190] sm:$0xff]
        %v4304 = vld [vmem:[#allocation19 + $0x198] sm:$0xff]
        %v4305 = vld [vmem:[#allocation19 + $0x1a0] sm:$0xff]
        %v4306 = vld [vmem:[#allocation19 + $0x1a8] sm:$0xff]
        %v4307 = vld [vmem:[#allocation19 + $0x1b0] sm:$0xff]
        %v4308 = vld [vmem:[#allocation19 + $0x1b8] sm:$0xff]
        %v4309 = vld [vmem:[#allocation19 + $0x1c0] sm:$0xff]
        %v4310 = vld [vmem:[#allocation19 + $0x1c8] sm:$0xff]
        %v4311 = vld [vmem:[#allocation19 + $0x1d0] sm:$0xff]
        %v4312 = vld [vmem:[#allocation19 + $0x1d8] sm:$0xff]
        %v4313 = vld [vmem:[#allocation19 + $0x1e0] sm:$0xff]
        %v4314 = vld [vmem:[#allocation19 + $0x1e8] sm:$0xff]
        %v4315 = vld [vmem:[#allocation19 + $0x1f0] sm:$0xff]
        %v4316 = vld [vmem:[#allocation19 + $0x1f8] sm:$0xff]
        %v4349 = vunpack.c.l.b16 %v4285
        %v4350 = vunpack.c.h.b16 %v4285
        %v4351 = vunpack.c.l.b16 %v4286
        %v4352 = vunpack.c.h.b16 %v4286
        %v4353 = vunpack.c.l.b16 %v4287
        %v4354 = vunpack.c.h.b16 %v4287
        %v4355 = vunpack.c.l.b16 %v4288
        %v4356 = vunpack.c.h.b16 %v4288
        %v4357 = vunpack.c.l.b16 %v4289
        %v4358 = vunpack.c.h.b16 %v4289
        %v4359 = vunpack.c.l.b16 %v4290
        %v4360 = vunpack.c.h.b16 %v4290
        %v4361 = vunpack.c.l.b16 %v4291
        %v4362 = vunpack.c.h.b16 %v4291
        %v4363 = vunpack.c.l.b16 %v4292
        %v4364 = vunpack.c.h.b16 %v4292
        %v4365 = vunpack.c.l.b16 %v4293
        %v4366 = vunpack.c.h.b16 %v4293
        %v4367 = vunpack.c.l.b16 %v4294
        %v4368 = vunpack.c.h.b16 %v4294
        %v4369 = vunpack.c.l.b16 %v4295
        %v4370 = vunpack.c.h.b16 %v4295
        %v4371 = vunpack.c.l.b16 %v4296
        %v4372 = vunpack.c.h.b16 %v4296
        %v4373 = vunpack.c.l.b16 %v4297
        %v4374 = vunpack.c.h.b16 %v4297
        %v4375 = vunpack.c.l.b16 %v4298
        %v4376 = vunpack.c.h.b16 %v4298
        %v4377 = vunpack.c.l.b16 %v4299
        %v4378 = vunpack.c.h.b16 %v4299
        %v4379 = vunpack.c.l.b16 %v4300
        %v4380 = vunpack.c.h.b16 %v4300
        %v4381 = vunpack.c.l.b16 %v4301
        %v4382 = vunpack.c.h.b16 %v4301
        %v4383 = vunpack.c.l.b16 %v4302
        %v4384 = vunpack.c.h.b16 %v4302
        %v4385 = vunpack.c.l.b16 %v4303
        %v4386 = vunpack.c.h.b16 %v4303
        %v4387 = vunpack.c.l.b16 %v4304
        %v4388 = vunpack.c.h.b16 %v4304
        %v4389 = vunpack.c.l.b16 %v4305
        %v4390 = vunpack.c.h.b16 %v4305
        %v4391 = vunpack.c.l.b16 %v4306
        %v4392 = vunpack.c.h.b16 %v4306
        %v4393 = vunpack.c.l.b16 %v4307
        %v4394 = vunpack.c.h.b16 %v4307
        %v4395 = vunpack.c.l.b16 %v4308
        %v4396 = vunpack.c.h.b16 %v4308
        %v4397 = vunpack.c.l.b16 %v4309
        %v4398 = vunpack.c.h.b16 %v4309
        %v4399 = vunpack.c.l.b16 %v4310
        %v4400 = vunpack.c.h.b16 %v4310
        %v4401 = vunpack.c.l.b16 %v4311
        %v4402 = vunpack.c.h.b16 %v4311
        %v4403 = vunpack.c.l.b16 %v4312
        %v4404 = vunpack.c.h.b16 %v4312
        %v4405 = vunpack.c.l.b16 %v4313
        %v4406 = vunpack.c.h.b16 %v4313
        %v4407 = vunpack.c.l.b16 %v4314
        %v4408 = vunpack.c.h.b16 %v4314
        %v4409 = vunpack.c.l.b16 %v4315
        %v4410 = vunpack.c.h.b16 %v4315
        %v4411 = vunpack.c.l.b16 %v4316
        %v4412 = vunpack.c.h.b16 %v4316
        %v4413 = vpack.c.b16 %v4351, %v4349
        %v4414 = vpack.c.b16 %v4352, %v4350
        %v4415 = vpack.c.b16 %v4355, %v4353
        %v4416 = vpack.c.b16 %v4356, %v4354
        %v4417 = vpack.c.b16 %v4359, %v4357
        %v4418 = vpack.c.b16 %v4360, %v4358
        %v4419 = vpack.c.b16 %v4363, %v4361
        %v4420 = vpack.c.b16 %v4364, %v4362
        %v4421 = vpack.c.b16 %v4367, %v4365
        %v4422 = vpack.c.b16 %v4368, %v4366
        %v4423 = vpack.c.b16 %v4371, %v4369
        %v4424 = vpack.c.b16 %v4372, %v4370
        %v4425 = vpack.c.b16 %v4375, %v4373
        %v4426 = vpack.c.b16 %v4376, %v4374
        %v4427 = vpack.c.b16 %v4379, %v4377
        %v4428 = vpack.c.b16 %v4380, %v4378
        %v4429 = vpack.c.b16 %v4383, %v4381
        %v4430 = vpack.c.b16 %v4384, %v4382
        %v4431 = vpack.c.b16 %v4387, %v4385
        %v4432 = vpack.c.b16 %v4388, %v4386
        %v4433 = vpack.c.b16 %v4391, %v4389
        %v4434 = vpack.c.b16 %v4392, %v4390
        %v4435 = vpack.c.b16 %v4395, %v4393
        %v4436 = vpack.c.b16 %v4396, %v4394
        %v4437 = vpack.c.b16 %v4399, %v4397
        %v4438 = vpack.c.b16 %v4400, %v4398
        %v4439 = vpack.c.b16 %v4403, %v4401
        %v4440 = vpack.c.b16 %v4404, %v4402
        %v4441 = vpack.c.b16 %v4407, %v4405
        %v4442 = vpack.c.b16 %v4408, %v4406
        %v4443 = vpack.c.b16 %v4411, %v4409
        %v4444 = vpack.c.b16 %v4412, %v4410
        %4477 = vmatprep.subr.bf16.mxu0 %v4414
        %4478 = vmatpush1.bf16.msra.mxu0 %v4413
        %4479 = vmatprep.subr.bf16.mxu0 %v4416
        %4480 = vmatpush1.bf16.msra.mxu0 %v4415
        %4481 = vmatprep.subr.bf16.mxu0 %v4418
        %4482 = vmatpush1.bf16.msra.mxu0 %v4417
        %4483 = vmatprep.subr.bf16.mxu0 %v4420
        %4484 = vmatpush1.bf16.msra.mxu0 %v4419
        %4485 = vmatprep.subr.bf16.mxu0 %v4422
        %4486 = vmatpush1.bf16.msra.mxu0 %v4421
        %4487 = vmatprep.subr.bf16.mxu0 %v4424
        %4488 = vmatpush1.bf16.msra.mxu0 %v4423
        %4489 = vmatprep.subr.bf16.mxu0 %v4426
        %4490 = vmatpush1.bf16.msra.mxu0 %v4425
        %4491 = vmatprep.subr.bf16.mxu0 %v4428
        %4492 = vmatpush1.bf16.msra.mxu0 %v4427
        %4493 = vmatprep.subr.bf16.mxu0 %v4430
        %4494 = vmatpush1.bf16.msra.mxu0 %v4429
        %4495 = vmatprep.subr.bf16.mxu0 %v4432
        %4496 = vmatpush1.bf16.msra.mxu0 %v4431
        %4497 = vmatprep.subr.bf16.mxu0 %v4434
        %4498 = vmatpush1.bf16.msra.mxu0 %v4433
        %4499 = vmatprep.subr.bf16.mxu0 %v4436
        %4500 = vmatpush1.bf16.msra.mxu0 %v4435
        %4501 = vmatprep.subr.bf16.mxu0 %v4438
        %4502 = vmatpush1.bf16.msra.mxu0 %v4437
        %4503 = vmatprep.subr.bf16.mxu0 %v4440
        %4504 = vmatpush1.bf16.msra.mxu0 %v4439
        %4505 = vmatprep.subr.bf16.mxu0 %v4442
        %4506 = vmatpush1.bf16.msra.mxu0 %v4441
        %4507 = vmatprep.subr.bf16.mxu0 %v4444
        %4508 = vmatpush1.bf16.msra.mxu0 %v4443
        %4509 = vmatprep.mubr.bf16.mxu0 %v4284
        %4510 = vmatmul.mubr.bf16.gmra.mrb[0].mxu0 %v4283
        %v4511 = vpop.f32.mrb[0].mxu0
        %v4512 = vadd.f32 0.0, %v4511
        %v4513 = vpop.f32.mrb[0].mxu0
        %v4514 = vadd.f32 0.0, %v4513
        %v4515 = vpop.f32.mrb[0].mxu0
        %v4516 = vpop.f32.mrb[0].mxu0
        %4517 = vdwg.mxu0
        %v4550 = vunpack.c.l.b16 %v4004
        %v4551 = vunpack.c.h.b16 %v4004
        %v4552 = vunpack.c.l.b16 %v4005
        %v4553 = vunpack.c.h.b16 %v4005
        %v4554 = vunpack.c.l.b16 %v4006
        %v4555 = vunpack.c.h.b16 %v4006
        %v4556 = vunpack.c.l.b16 %v4007
        %v4557 = vunpack.c.h.b16 %v4007
        %v4558 = vunpack.c.l.b16 %v4008
        %v4559 = vunpack.c.h.b16 %v4008
        %v4560 = vunpack.c.l.b16 %v4009
        %v4561 = vunpack.c.h.b16 %v4009
        %v4562 = vunpack.c.l.b16 %v4010
        %v4563 = vunpack.c.h.b16 %v4010
        %v4564 = vunpack.c.l.b16 %v4011
        %v4565 = vunpack.c.h.b16 %v4011
        %v4566 = vunpack.c.l.b16 %v4012
        %v4567 = vunpack.c.h.b16 %v4012
        %v4568 = vunpack.c.l.b16 %v4013
        %v4569 = vunpack.c.h.b16 %v4013
        %v4570 = vunpack.c.l.b16 %v4014
        %v4571 = vunpack.c.h.b16 %v4014
        %v4572 = vunpack.c.l.b16 %v4015
        %v4573 = vunpack.c.h.b16 %v4015
        %v4574 = vunpack.c.l.b16 %v4016
        %v4575 = vunpack.c.h.b16 %v4016
        %v4576 = vunpack.c.l.b16 %v4017
        %v4577 = vunpack.c.h.b16 %v4017
        %v4578 = vunpack.c.l.b16 %v4018
        %v4579 = vunpack.c.h.b16 %v4018
        %v4580 = vunpack.c.l.b16 %v4019
        %v4581 = vunpack.c.h.b16 %v4019
        %v4582 = vunpack.c.l.b16 %v4020
        %v4583 = vunpack.c.h.b16 %v4020
        %v4584 = vunpack.c.l.b16 %v4021
        %v4585 = vunpack.c.h.b16 %v4021
        %v4586 = vunpack.c.l.b16 %v4022
        %v4587 = vunpack.c.h.b16 %v4022
        %v4588 = vunpack.c.l.b16 %v4023
        %v4589 = vunpack.c.h.b16 %v4023
        %v4590 = vunpack.c.l.b16 %v4024
        %v4591 = vunpack.c.h.b16 %v4024
        %v4592 = vunpack.c.l.b16 %v4025
        %v4593 = vunpack.c.h.b16 %v4025
        %v4594 = vunpack.c.l.b16 %v4026
        %v4595 = vunpack.c.h.b16 %v4026
        %v4596 = vunpack.c.l.b16 %v4027
        %v4597 = vunpack.c.h.b16 %v4027
        %v4598 = vunpack.c.l.b16 %v4028
        %v4599 = vunpack.c.h.b16 %v4028
        %v4600 = vunpack.c.l.b16 %v4029
        %v4601 = vunpack.c.h.b16 %v4029
        %v4602 = vunpack.c.l.b16 %v4030
        %v4603 = vunpack.c.h.b16 %v4030
        %v4604 = vunpack.c.l.b16 %v4031
        %v4605 = vunpack.c.h.b16 %v4031
        %v4606 = vunpack.c.l.b16 %v4032
        %v4607 = vunpack.c.h.b16 %v4032
        %v4608 = vunpack.c.l.b16 %v4033
        %v4609 = vunpack.c.h.b16 %v4033
        %v4610 = vunpack.c.l.b16 %v4034
        %v4611 = vunpack.c.h.b16 %v4034
        %v4612 = vunpack.c.l.b16 %v4035
        %v4613 = vunpack.c.h.b16 %v4035
        %v4614 = vpack.c.b16 %v4552, %v4550
        %v4615 = vpack.c.b16 %v4553, %v4551
        %v4616 = vpack.c.b16 %v4556, %v4554
        %v4617 = vpack.c.b16 %v4557, %v4555
        %v4618 = vpack.c.b16 %v4560, %v4558
        %v4619 = vpack.c.b16 %v4561, %v4559
        %v4620 = vpack.c.b16 %v4564, %v4562
        %v4621 = vpack.c.b16 %v4565, %v4563
        %v4622 = vpack.c.b16 %v4568, %v4566
        %v4623 = vpack.c.b16 %v4569, %v4567
        %v4624 = vpack.c.b16 %v4572, %v4570
        %v4625 = vpack.c.b16 %v4573, %v4571
        %v4626 = vpack.c.b16 %v4576, %v4574
        %v4627 = vpack.c.b16 %v4577, %v4575
        %v4628 = vpack.c.b16 %v4580, %v4578
        %v4629 = vpack.c.b16 %v4581, %v4579
        %v4630 = vpack.c.b16 %v4584, %v4582
        %v4631 = vpack.c.b16 %v4585, %v4583
        %v4632 = vpack.c.b16 %v4588, %v4586
        %v4633 = vpack.c.b16 %v4589, %v4587
        %v4634 = vpack.c.b16 %v4592, %v4590
        %v4635 = vpack.c.b16 %v4593, %v4591
        %v4636 = vpack.c.b16 %v4596, %v4594
        %v4637 = vpack.c.b16 %v4597, %v4595
        %v4638 = vpack.c.b16 %v4600, %v4598
        %v4639 = vpack.c.b16 %v4601, %v4599
        %v4640 = vpack.c.b16 %v4604, %v4602
        %v4641 = vpack.c.b16 %v4605, %v4603
        %v4642 = vpack.c.b16 %v4608, %v4606
        %v4643 = vpack.c.b16 %v4609, %v4607
        %v4644 = vpack.c.b16 %v4612, %v4610
        %v4645 = vpack.c.b16 %v4613, %v4611
        %4678 = vmatprep.subr.bf16.mxu0 %v4615
        %4679 = vmatpush1.bf16.msra.mxu0 %v4614
        %4680 = vmatprep.subr.bf16.mxu0 %v4617
        %4681 = vmatpush1.bf16.msra.mxu0 %v4616
        %4682 = vmatprep.subr.bf16.mxu0 %v4619
        %4683 = vmatpush1.bf16.msra.mxu0 %v4618
        %4684 = vmatprep.subr.bf16.mxu0 %v4621
        %4685 = vmatpush1.bf16.msra.mxu0 %v4620
        %4686 = vmatprep.subr.bf16.mxu0 %v4623
        %4687 = vmatpush1.bf16.msra.mxu0 %v4622
        %4688 = vmatprep.subr.bf16.mxu0 %v4625
        %4689 = vmatpush1.bf16.msra.mxu0 %v4624
        %4690 = vmatprep.subr.bf16.mxu0 %v4627
        %4691 = vmatpush1.bf16.msra.mxu0 %v4626
        %4692 = vmatprep.subr.bf16.mxu0 %v4629
        %4693 = vmatpush1.bf16.msra.mxu0 %v4628
        %4694 = vmatprep.subr.bf16.mxu0 %v4631
        %4695 = vmatpush1.bf16.msra.mxu0 %v4630
        %4696 = vmatprep.subr.bf16.mxu0 %v4633
        %4697 = vmatpush1.bf16.msra.mxu0 %v4632
        %4698 = vmatprep.subr.bf16.mxu0 %v4635
        %4699 = vmatpush1.bf16.msra.mxu0 %v4634
        %4700 = vmatprep.subr.bf16.mxu0 %v4637
        %4701 = vmatpush1.bf16.msra.mxu0 %v4636
        %4702 = vmatprep.subr.bf16.mxu0 %v4639
        %4703 = vmatpush1.bf16.msra.mxu0 %v4638
        %4704 = vmatprep.subr.bf16.mxu0 %v4641
        %4705 = vmatpush1.bf16.msra.mxu0 %v4640
        %4706 = vmatprep.subr.bf16.mxu0 %v4643
        %4707 = vmatpush1.bf16.msra.mxu0 %v4642
        %4708 = vmatprep.subr.bf16.mxu0 %v4645
        %4709 = vmatpush1.bf16.msra.mxu0 %v4644
        %4710 = vmatprep.mubr.bf16.mxu0 %v4003
        %4711 = vmatmul.mubr.bf16.gmra.mrb[0].mxu0 %v4002
        %v4712 = vpop.f32.mrb[0].mxu0
        %v4713 = vadd.f32 %v4512, %v4712
        %v4714 = vpop.f32.mrb[0].mxu0
        %v4715 = vadd.f32 %v4514, %v4714
        %v4716 = vpop.f32.mrb[0].mxu0
        %v4717 = vpop.f32.mrb[0].mxu0
        %4718 = vdwg.mxu0
        %v4719 = vld [vmem:[%s59] sm:$0x3]
        %v4721 = vlaneseq
        %v4722 = vshrl.u32 %v4721, 7
        %v4723 = vsub.s32 0, %v4722
        %v4724 = vrot.slane %v4719, %v4723
        %v4725 = vlaneseq
        %v4726 = vshrl.u32 %v4725, 7
        %v4727 = vsub.s32 1, %v4726
        %v4728 = vrot.slane %v4719, %v4727
        %v4731 = vadd.f32 %v4713, %v4724
        %v4732 = vadd.f32 %v4715, %v4728
        %v4733 = vadd.f32 %v3707, %v4731
        %v4734 = vadd.f32 %v3708, %v4732
        %4735 = vst [vmem:[%s1117] sm:$0xff] %v4733
        %4736 = vst [vmem:[%s1117 + $0x8] sm:$0xff] %v4734
        %s4737 = sand.u32 %s736, 1
        %s4738 = scalar_lea.sflag [#allocation4], %s4737
        %s4739 = sand.u32 %s736, 1
        %s4740 = smul.addr %s4739, 16
        %s4741 = scalar_lea.vmem [#allocation20], %s4740
        // Predicated region
        $region185: #{tpu_custom_call.1} parent=139 // pred_check
          %p4742 = pneg %p746
        $region186: #{tpu_custom_call.1} parent=139 // pred_check_branch
          %4744 = sbr.rel (%p4742) target = $region188
        $region187: #{tpu_custom_call.1} parent=139 // pred_region
          %s4746 = ssub.s32 256, 256
          %4747 = vsyncadd %s4738, %s4746
          %s4748 = smul.addr %s83, 2
          %s4749 = smul.addr %s4748, 128
          %s4750 = scalar_lea.hbm %s61, %s4749
          %s4752 = sshll.u32 %s4741, 4
          %s4753 = int_to_ptr.vmem [resolvable:$true] %s4752
          %4755 = dma.vmem_to_hbm [thread:$0]  %s4753, 256, %s4750, %s4738
        $region188: #{tpu_custom_call.1} parent=139 // pred_fallthru
          _
      $region140: #{tpu_custom_call.1} parent=5 // pred_fallthru
        _
      %p4756 = scmp.le.s32.totalorder 2, %s78
      // Predicated region
      $region189: #{tpu_custom_call.1} parent=5 // pred_check
        %p4757 = pneg %p4756
      $region190: #{tpu_custom_call.1} parent=5 // pred_check_branch
        %4759 = sbr.rel (%p4757) target = $region192
      $region191: #{tpu_custom_call.1} parent=5 // pred_region
        %s4760 = ssub.s32 %s78, 2
        // Predicated region
        $region193: #{tpu_custom_call.1} parent=191 // pred_check
          %p4761 = pneg %p752
        $region194: #{tpu_custom_call.1} parent=191 // pred_check_branch
          %4763 = sbr.rel (%p4761) target = $region196
        $region195: #{tpu_custom_call.1} parent=191 // pred_region
          %s4764 = sand.u32 %s737, 1
          %s4765 = scalar_lea.sflag [#allocation4], %s4764
          %s4766 = sand.u32 %s737, 1
          %s4767 = smul.addr %s4766, 16
          %s4768 = scalar_lea.vmem [#allocation20], %s4767
          %4769 = dma.done %s4765, 256
        $region196: #{tpu_custom_call.1} parent=191 // pred_fallthru
          _
      $region192: #{tpu_custom_call.1} parent=5 // pred_fallthru
        _
    $region6: #{tpu_custom_call.1} parent=1 // loop_footer
      %s82 = sadd.s32 1, %s78
    $region7: #{tpu_custom_call.1} parent=1 // loop_footer_branch
      %77 = sbr.rel target = $region3
    $region8: #{tpu_custom_call.1} parent=1 // loop_exit
      _
    %4770 = vsyncpa [#allocation3], 1
    %s4771 = scalar_lea.sflag [#allocation3], 1
    %4772 = vsyncpa %s4771, 1
    %4773 = vsyncpa [#allocation6], 1
    %4774 = vsyncpa [#allocation9], 1
    %4775 = vsyncpa [#allocation12], 1
    %4776 = vsyncpa [#allocation15], 1
    %4777 = vsyncpa [#allocation18], 1
    %4778 = vsyncpa [#allocation4], 1
    %s4779 = scalar_lea.sflag [#allocation4], 1
    %4780 = vsyncpa %s4779, 1

</llo_original>
